<compile_context>
chip_gen: v6e
topology: v6e:2x2x1
jax: 0.10.0
libtpu: 0.0.40
codegen_flags: <defaults>
</compile_context>

<pallas_src>
import jax
import jax.numpy as jnp
import numpy as np
from jax.experimental import pallas as pl
from jax.experimental.pallas import tpu as pltpu

LANE = 128


def _round_up(x, m):
    return (x + m - 1) // m * m


# ----------------------------------------------------------------------------
# Fused kernel: depth LSTM layers + FC + tanh, all in VMEM.
# Gate order follows PyTorch: [i, f, g, o]; gate g lives in lanes
# [g*HP, g*HP + H) of the 4*HP-wide gate vector.
# ----------------------------------------------------------------------------
def make_lstm_fc_kernel(depth, T, B, HP):
    def kernel(*refs):
        x_ref = refs[0]                          # (T*B, IN)  time-major rows
        layer_refs = refs[1:1 + 3 * depth]       # (wih, whh, b) per layer
        fcw_ref = refs[1 + 3 * depth]            # (HP, OUTP)
        fcb_ref = refs[2 + 3 * depth]            # (1, OUTP)
        out_ref = refs[3 + 3 * depth]            # (T*B, OUTP)
        hseq = refs[4 + 3 * depth]               # VMEM scratch (T*B, HP)

        for layer in range(depth):
            wih_ref, whh_ref, b_ref = layer_refs[3 * layer:3 * layer + 3]

            # ---- hoisted input projection for the whole sequence ----------
            # (no time dependency: one big MXU matmul, off the serial chain)
            inp = x_ref[...] if layer == 0 else hseq[...]        # (T*B, Din)
            gx = jnp.dot(inp, wih_ref[...],
                         preferred_element_type=jnp.float32) + b_ref[...]
            # gx: (T*B, 4*HP)

            whh = whh_ref[...]                                   # (HP, 4*HP)
            h = jnp.zeros((B, HP), jnp.float32)
            c = jnp.zeros((B, HP), jnp.float32)

            # ---- serial recurrence: only h @ W_hh + elementwise per step --
            for t in range(T):                                   # static unroll
                gates = gx[t * B:(t + 1) * B, :] + jnp.dot(
                    h, whh, preferred_element_type=jnp.float32)  # (B, 4*HP)
                i_g = jax.nn.sigmoid(gates[:, 0 * HP:1 * HP])    # lane-aligned
                f_g = jax.nn.sigmoid(gates[:, 1 * HP:2 * HP])
                g_g = jnp.tanh(gates[:, 2 * HP:3 * HP])
                o_g = jax.nn.sigmoid(gates[:, 3 * HP:4 * HP])
                c = f_g * c + i_g * g_g
                h = o_g * jnp.tanh(c)
                hseq[t * B:(t + 1) * B, :] = h                   # feed next layer

        # ---- fused FC head: tanh(h_seq @ W^T + b), lane-dense output -------
        y = jnp.dot(hseq[...], fcw_ref[...],
                    preferred_element_type=jnp.float32) + fcb_ref[...]
        out_ref[...] = jnp.tanh(y)

    return kernel


# ----------------------------------------------------------------------------
# Wrapper: batch_first (B, T, IN) -> (B, T, OUT)
# ----------------------------------------------------------------------------
def lstm_fc_forward(x_btd, packed):
    B, T, IN = x_btd.shape
    depth = len(packed["layers"])
    HP = packed["HP"]
    OUTP = packed["fc_w"].shape[1]
    OUT = packed["out_features"]

    # time-major 2-D view: row t*B + b  <->  x[b, t, :]   (tiny, done in XLA)
    x2d = jnp.transpose(x_btd, (1, 0, 2)).reshape(T * B, IN)

    flat_weights = []
    for (wih, whh, b) in packed["layers"]:
        flat_weights += [wih, whh, b]

    out2d = pl.pallas_call(
        make_lstm_fc_kernel(depth, T, B, HP),
        out_shape=jax.ShapeDtypeStruct((T * B, OUTP), jnp.float32),
        scratch_shapes=[pltpu.VMEM((T * B, HP), jnp.float32)],
    )(x2d, *flat_weights, packed["fc_w"], packed["fc_b"])

    out = out2d.reshape(T, B, OUTP)[:, :, :OUT]      # drop lane padding
    return jnp.transpose(out, (1, 0, 2))             # back to (B, T, OUT)


# ----------------------------------------------------------------------------
# Parameters: PyTorch-shaped raw params + packing (transpose / lane padding).
# ----------------------------------------------------------------------------
def init_params(key, input_size, hidden, output_size, depth):
    """Raw PyTorch-shaped parameters, uniform(-1/sqrt(H), 1/sqrt(H))."""
    k = 1.0 / np.sqrt(hidden)
    layers = []
    for layer in range(depth):
        din = input_size if layer == 0 else hidden
        key, k1, k2, k3, k4 = jax.random.split(key, 5)
        w_ih = jax.random.uniform(k1, (4 * hidden, din), jnp.float32, -k, k)
        w_hh = jax.random.uniform(k2, (4 * hidden, hidden), jnp.float32, -k, k)
        b_ih = jax.random.uniform(k3, (4 * hidden,), jnp.float32, -k, k)
        b_hh = jax.random.uniform(k4, (4 * hidden,), jnp.float32, -k, k)
        layers.append((w_ih, w_hh, b_ih, b_hh))
    key, k5, k6 = jax.random.split(key, 3)
    fc_w = jax.random.uniform(k5, (output_size, hidden), jnp.float32, -k, k)
    fc_b = jax.random.uniform(k6, (output_size,), jnp.float32, -k, k)
    return {"layers": layers, "fc_w": fc_w, "fc_b": fc_b}


def pack_params(raw, input_size, hidden, output_size):
    """Lay weights out for the fused kernel (x @ W layout, 128-lane gate blocks).

    Padded rows/cols and padded bias lanes are zero, so padded h/c lanes stay
    exactly 0 through the recurrence (sigmoid(0)*0 etc.) and the real lanes
    reproduce the unpadded computation.
    """
    H = hidden
    HP = _round_up(max(H, LANE), LANE)
    OUTP = _round_up(max(output_size, LANE), LANE)

    def pack_gate_matrix(w, din_pad):
        # w: (4H, Din) PyTorch layout -> (din_pad, 4*HP)
        w_t = jnp.asarray(w).T                              # (Din, 4H)
        out = jnp.zeros((din_pad, 4 * HP), jnp.float32)
        for g in range(4):
            out = out.at[:w_t.shape[0], g * HP:g * HP + H].set(
                w_t[:, g * H:(g + 1) * H])
        return out

    def pack_gate_bias(b):
        out = jnp.zeros((1, 4 * HP), jnp.float32)
        for g in range(4):
            out = out.at[0, g * HP:g * HP + H].set(b[g * H:(g + 1) * H])
        return out

    layers = []
    for li, (w_ih, w_hh, b_ih, b_hh) in enumerate(raw["layers"]):
        din_pad = input_size if li == 0 else HP
        layers.append((pack_gate_matrix(w_ih, din_pad),
                       pack_gate_matrix(w_hh, HP),
                       pack_gate_bias(b_ih + b_hh)))

    fc_w = jnp.zeros((HP, OUTP), jnp.float32).at[:H, :output_size].set(
        raw["fc_w"].T)
    fc_b = jnp.zeros((1, OUTP), jnp.float32).at[0, :output_size].set(
        raw["fc_b"])

    return {"layers": layers, "fc_w": fc_w, "fc_b": fc_b,
            "HP": HP, "out_features": output_size}


# ----------------------------------------------------------------------------
# Pure-JAX reference (unpadded math) for the correctness check.
# ----------------------------------------------------------------------------
def reference_forward(x_btd, raw):
    h_seq = jnp.transpose(x_btd, (1, 0, 2))               # (T, B, Din)
    for (w_ih, w_hh, b_ih, b_hh) in raw["layers"]:
        _, B, _ = h_seq.shape
        H = w_hh.shape[1]
        wih_t, whh_t, bias = w_ih.T, w_hh.T, (b_ih + b_hh)[None, :]

        def step(carry, x_t, wih_t=wih_t, whh_t=whh_t, bias=bias, H=H):
            h, c = carry
            gates = x_t @ wih_t + h @ whh_t + bias
            i = jax.nn.sigmoid(gates[:, 0 * H:1 * H])
            f = jax.nn.sigmoid(gates[:, 1 * H:2 * H])
            g = jnp.tanh(gates[:, 2 * H:3 * H])
            o = jax.nn.sigmoid(gates[:, 3 * H:4 * H])
            c = f * c + i * g
            h = o * jnp.tanh(c)
            return (h, c), h

        init = (jnp.zeros((B, H), jnp.float32), jnp.zeros((B, H), jnp.float32))
        _, h_seq = jax.lax.scan(step, init, h_seq)
    out = jnp.tanh(h_seq @ raw["fc_w"].T + raw["fc_b"][None, :])
    return jnp.transpose(out, (1, 0, 2))


if __name__ == "__main__":
    # batch=2, seq=8, input_size=8, hidden=32, output=4, depth=3
    B, T, IN, H, OUT, DEPTH = 2, 8, 8, 32, 4, 3

    key = jax.random.PRNGKey(0)
    key, kx = jax.random.split(key)
    x = jax.random.normal(kx, (B, T, IN), jnp.float32)

    raw = init_params(key, IN, H, OUT, DEPTH)
    packed = pack_params(raw, IN, H, OUT)

    out = jax.block_until_ready(lstm_fc_forward(x, packed))
    ref = jax.block_until_ready(reference_forward(x, raw))

    np.testing.assert_allclose(np.asarray(out), np.asarray(ref),
                               rtol=1e-5, atol=1e-5)
    assert out.shape == (B, T, OUT)

    print("KERNEL_OK")
</pallas_src>

<mosaic_0001>
module attributes {stable_mosaic.version = 11 : i64} {
  func.func @kernel(%arg0: memref<16x8xf32, #tpu.memory_space<vmem>>, %arg1: memref<8x512xf32, #tpu.memory_space<vmem>>, %arg2: memref<128x512xf32, #tpu.memory_space<vmem>>, %arg3: memref<1x512xf32, #tpu.memory_space<vmem>>, %arg4: memref<128x512xf32, #tpu.memory_space<vmem>>, %arg5: memref<128x512xf32, #tpu.memory_space<vmem>>, %arg6: memref<1x512xf32, #tpu.memory_space<vmem>>, %arg7: memref<128x512xf32, #tpu.memory_space<vmem>>, %arg8: memref<128x512xf32, #tpu.memory_space<vmem>>, %arg9: memref<1x512xf32, #tpu.memory_space<vmem>>, %arg10: memref<128x128xf32, #tpu.memory_space<vmem>>, %arg11: memref<1x128xf32, #tpu.memory_space<vmem>>, %arg12: memref<16x128xf32, #tpu.memory_space<vmem>>, %arg13: memref<16x128xf32, #tpu.memory_space<vmem>>) attributes {dimension_semantics = [], scalar_prefetch = 0 : i64, scratch_operands = 1 : i64, tpu.core_type = #tpu.core_type<tc>} {
    %c0 = arith.constant 0 : index
    %c0_0 = arith.constant 0 : index
    %0 = vector.load %arg0[%c0, %c0_0] : memref<16x8xf32, #tpu.memory_space<vmem>>, vector<16x8xf32>
    %c0_1 = arith.constant 0 : index
    %c0_2 = arith.constant 0 : index
    %1 = vector.load %arg1[%c0_1, %c0_2] : memref<8x512xf32, #tpu.memory_space<vmem>>, vector<8x512xf32>
    %cst = arith.constant dense<0.000000e+00> : vector<16x512xf32>
    %2 = tpu.matmul %0, %1, %cst {dimension_numbers = #tpu.dot_dimension_numbers<[1], [0], [0], [1], [0, 0, 1, 1], [], []>} : vector<16x8xf32>, vector<8x512xf32>, vector<16x512xf32> -> vector<16x512xf32>
    %c0_3 = arith.constant 0 : index
    %c0_4 = arith.constant 0 : index
    %3 = vector.load %arg3[%c0_3, %c0_4] : memref<1x512xf32, #tpu.memory_space<vmem>>, vector<1x512xf32>
    %4 = vector.broadcast %3 : vector<1x512xf32> to vector<16x512xf32>
    %5 = arith.addf %2, %4 : vector<16x512xf32>
    %c0_5 = arith.constant 0 : index
    %c0_6 = arith.constant 0 : index
    %6 = vector.load %arg2[%c0_5, %c0_6] : memref<128x512xf32, #tpu.memory_space<vmem>>, vector<128x512xf32>
    %cst_7 = arith.constant 0.000000e+00 : f32
    %7 = vector.broadcast %cst_7 : f32 to vector<2x128xf32>
    %cst_8 = arith.constant 0.000000e+00 : f32
    %8 = vector.broadcast %cst_8 : f32 to vector<2x128xf32>
    %9 = vector.extract_strided_slice %5 {offsets = [0, 0], sizes = [2, 512], strides = [1, 1]} : vector<16x512xf32> to vector<2x512xf32>
    %cst_9 = arith.constant dense<0.000000e+00> : vector<2x512xf32>
    %10 = tpu.matmul %7, %6, %cst_9 {dimension_numbers = #tpu.dot_dimension_numbers<[1], [0], [0], [1], [0, 0, 1, 1], [], []>} : vector<2x128xf32>, vector<128x512xf32>, vector<2x512xf32> -> vector<2x512xf32>
    %11 = arith.addf %9, %10 : vector<2x512xf32>
    %12 = vector.extract_strided_slice %11 {offsets = [0, 0], sizes = [2, 128], strides = [1, 1]} : vector<2x512xf32> to vector<2x128xf32>
    %13 = arith.negf %12 : vector<2x128xf32>
    %14 = math.exp %13 : vector<2x128xf32>
    %cst_10 = arith.constant 1.000000e+00 : f32
    %15 = vector.broadcast %cst_10 : f32 to vector<2x128xf32>
    %16 = arith.addf %15, %14 : vector<2x128xf32>
    %17 = arith.divf %15, %16 : vector<2x128xf32>
    %18 = vector.extract_strided_slice %11 {offsets = [0, 128], sizes = [2, 128], strides = [1, 1]} : vector<2x512xf32> to vector<2x128xf32>
    %19 = arith.negf %18 : vector<2x128xf32>
    %20 = math.exp %19 : vector<2x128xf32>
    %cst_11 = arith.constant 1.000000e+00 : f32
    %21 = vector.broadcast %cst_11 : f32 to vector<2x128xf32>
    %22 = arith.addf %21, %20 : vector<2x128xf32>
    %23 = arith.divf %21, %22 : vector<2x128xf32>
    %24 = vector.extract_strided_slice %11 {offsets = [0, 256], sizes = [2, 128], strides = [1, 1]} : vector<2x512xf32> to vector<2x128xf32>
    %25 = math.tanh %24 : vector<2x128xf32>
    %26 = vector.extract_strided_slice %11 {offsets = [0, 384], sizes = [2, 128], strides = [1, 1]} : vector<2x512xf32> to vector<2x128xf32>
    %27 = arith.negf %26 : vector<2x128xf32>
    %28 = math.exp %27 : vector<2x128xf32>
    %cst_12 = arith.constant 1.000000e+00 : f32
    %29 = vector.broadcast %cst_12 : f32 to vector<2x128xf32>
    %30 = arith.addf %29, %28 : vector<2x128xf32>
    %31 = arith.divf %29, %30 : vector<2x128xf32>
    %32 = arith.mulf %23, %8 : vector<2x128xf32>
    %33 = arith.mulf %17, %25 : vector<2x128xf32>
    %34 = arith.addf %32, %33 : vector<2x128xf32>
    %35 = math.tanh %34 : vector<2x128xf32>
    %36 = arith.mulf %31, %35 : vector<2x128xf32>
    %c0_13 = arith.constant 0 : index
    %c0_14 = arith.constant 0 : index
    %37 = vector.load %arg13[%c0_13, %c0_14] : memref<16x128xf32, #tpu.memory_space<vmem>>, vector<2x128xf32>
    tpu.vector_store %arg13[%c0_13, %c0_14], %36 {strides = array<i32>} : memref<16x128xf32, #tpu.memory_space<vmem>>, vector<2x128xf32>,
    %38 = vector.extract_strided_slice %5 {offsets = [2, 0], sizes = [2, 512], strides = [1, 1]} : vector<16x512xf32> to vector<2x512xf32>
    %cst_15 = arith.constant dense<0.000000e+00> : vector<2x512xf32>
    %39 = tpu.matmul %36, %6, %cst_15 {dimension_numbers = #tpu.dot_dimension_numbers<[1], [0], [0], [1], [0, 0, 1, 1], [], []>} : vector<2x128xf32>, vector<128x512xf32>, vector<2x512xf32> -> vector<2x512xf32>
    %40 = arith.addf %38, %39 : vector<2x512xf32>
    %41 = vector.extract_strided_slice %40 {offsets = [0, 0], sizes = [2, 128], strides = [1, 1]} : vector<2x512xf32> to vector<2x128xf32>
    %42 = arith.negf %41 : vector<2x128xf32>
    %43 = math.exp %42 : vector<2x128xf32>
    %cst_16 = arith.constant 1.000000e+00 : f32
    %44 = vector.broadcast %cst_16 : f32 to vector<2x128xf32>
    %45 = arith.addf %44, %43 : vector<2x128xf32>
    %46 = arith.divf %44, %45 : vector<2x128xf32>
    %47 = vector.extract_strided_slice %40 {offsets = [0, 128], sizes = [2, 128], strides = [1, 1]} : vector<2x512xf32> to vector<2x128xf32>
    %48 = arith.negf %47 : vector<2x128xf32>
    %49 = math.exp %48 : vector<2x128xf32>
    %cst_17 = arith.constant 1.000000e+00 : f32
    %50 = vector.broadcast %cst_17 : f32 to vector<2x128xf32>
    %51 = arith.addf %50, %49 : vector<2x128xf32>
    %52 = arith.divf %50, %51 : vector<2x128xf32>
    %53 = vector.extract_strided_slice %40 {offsets = [0, 256], sizes = [2, 128], strides = [1, 1]} : vector<2x512xf32> to vector<2x128xf32>
    %54 = math.tanh %53 : vector<2x128xf32>
    %55 = vector.extract_strided_slice %40 {offsets = [0, 384], sizes = [2, 128], strides = [1, 1]} : vector<2x512xf32> to vector<2x128xf32>
    %56 = arith.negf %55 : vector<2x128xf32>
    %57 = math.exp %56 : vector<2x128xf32>
    %cst_18 = arith.constant 1.000000e+00 : f32
    %58 = vector.broadcast %cst_18 : f32 to vector<2x128xf32>
    %59 = arith.addf %58, %57 : vector<2x128xf32>
    %60 = arith.divf %58, %59 : vector<2x128xf32>
    %61 = arith.mulf %52, %34 : vector<2x128xf32>
    %62 = arith.mulf %46, %54 : vector<2x128xf32>
    %63 = arith.addf %61, %62 : vector<2x128xf32>
    %64 = math.tanh %63 : vector<2x128xf32>
    %65 = arith.mulf %60, %64 : vector<2x128xf32>
    %c2 = arith.constant 2 : index
    %c0_19 = arith.constant 0 : index
    %66 = vector.load %arg13[%c2, %c0_19] : memref<16x128xf32, #tpu.memory_space<vmem>>, vector<2x128xf32>
    tpu.vector_store %arg13[%c2, %c0_19], %65 {strides = array<i32>} : memref<16x128xf32, #tpu.memory_space<vmem>>, vector<2x128xf32>,
    %67 = vector.extract_strided_slice %5 {offsets = [4, 0], sizes = [2, 512], strides = [1, 1]} : vector<16x512xf32> to vector<2x512xf32>
    %cst_20 = arith.constant dense<0.000000e+00> : vector<2x512xf32>
    %68 = tpu.matmul %65, %6, %cst_20 {dimension_numbers = #tpu.dot_dimension_numbers<[1], [0], [0], [1], [0, 0, 1, 1], [], []>} : vector<2x128xf32>, vector<128x512xf32>, vector<2x512xf32> -> vector<2x512xf32>
    %69 = arith.addf %67, %68 : vector<2x512xf32>
    %70 = vector.extract_strided_slice %69 {offsets = [0, 0], sizes = [2, 128], strides = [1, 1]} : vector<2x512xf32> to vector<2x128xf32>
    %71 = arith.negf %70 : vector<2x128xf32>
    %72 = math.exp %71 : vector<2x128xf32>
    %cst_21 = arith.constant 1.000000e+00 : f32
    %73 = vector.broadcast %cst_21 : f32 to vector<2x128xf32>
    %74 = arith.addf %73, %72 : vector<2x128xf32>
    %75 = arith.divf %73, %74 : vector<2x128xf32>
    %76 = vector.extract_strided_slice %69 {offsets = [0, 128], sizes = [2, 128], strides = [1, 1]} : vector<2x512xf32> to vector<2x128xf32>
    %77 = arith.negf %76 : vector<2x128xf32>
    %78 = math.exp %77 : vector<2x128xf32>
    %cst_22 = arith.constant 1.000000e+00 : f32
    %79 = vector.broadcast %cst_22 : f32 to vector<2x128xf32>
    %80 = arith.addf %79, %78 : vector<2x128xf32>
    %81 = arith.divf %79, %80 : vector<2x128xf32>
    %82 = vector.extract_strided_slice %69 {offsets = [0, 256], sizes = [2, 128], strides = [1, 1]} : vector<2x512xf32> to vector<2x128xf32>
    %83 = math.tanh %82 : vector<2x128xf32>
    %84 = vector.extract_strided_slice %69 {offsets = [0, 384], sizes = [2, 128], strides = [1, 1]} : vector<2x512xf32> to vector<2x128xf32>
    %85 = arith.negf %84 : vector<2x128xf32>
    %86 = math.exp %85 : vector<2x128xf32>
    %cst_23 = arith.constant 1.000000e+00 : f32
    %87 = vector.broadcast %cst_23 : f32 to vector<2x128xf32>
    %88 = arith.addf %87, %86 : vector<2x128xf32>
    %89 = arith.divf %87, %88 : vector<2x128xf32>
    %90 = arith.mulf %81, %63 : vector<2x128xf32>
    %91 = arith.mulf %75, %83 : vector<2x128xf32>
    %92 = arith.addf %90, %91 : vector<2x128xf32>
    %93 = math.tanh %92 : vector<2x128xf32>
    %94 = arith.mulf %89, %93 : vector<2x128xf32>
    %c4 = arith.constant 4 : index
    %c0_24 = arith.constant 0 : index
    %95 = vector.load %arg13[%c4, %c0_24] : memref<16x128xf32, #tpu.memory_space<vmem>>, vector<2x128xf32>
    tpu.vector_store %arg13[%c4, %c0_24], %94 {strides = array<i32>} : memref<16x128xf32, #tpu.memory_space<vmem>>, vector<2x128xf32>,
    %96 = vector.extract_strided_slice %5 {offsets = [6, 0], sizes = [2, 512], strides = [1, 1]} : vector<16x512xf32> to vector<2x512xf32>
    %cst_25 = arith.constant dense<0.000000e+00> : vector<2x512xf32>
    %97 = tpu.matmul %94, %6, %cst_25 {dimension_numbers = #tpu.dot_dimension_numbers<[1], [0], [0], [1], [0, 0, 1, 1], [], []>} : vector<2x128xf32>, vector<128x512xf32>, vector<2x512xf32> -> vector<2x512xf32>
    %98 = arith.addf %96, %97 : vector<2x512xf32>
    %99 = vector.extract_strided_slice %98 {offsets = [0, 0], sizes = [2, 128], strides = [1, 1]} : vector<2x512xf32> to vector<2x128xf32>
    %100 = arith.negf %99 : vector<2x128xf32>
    %101 = math.exp %100 : vector<2x128xf32>
    %cst_26 = arith.constant 1.000000e+00 : f32
    %102 = vector.broadcast %cst_26 : f32 to vector<2x128xf32>
    %103 = arith.addf %102, %101 : vector<2x128xf32>
    %104 = arith.divf %102, %103 : vector<2x128xf32>
    %105 = vector.extract_strided_slice %98 {offsets = [0, 128], sizes = [2, 128], strides = [1, 1]} : vector<2x512xf32> to vector<2x128xf32>
    %106 = arith.negf %105 : vector<2x128xf32>
    %107 = math.exp %106 : vector<2x128xf32>
    %cst_27 = arith.constant 1.000000e+00 : f32
    %108 = vector.broadcast %cst_27 : f32 to vector<2x128xf32>
    %109 = arith.addf %108, %107 : vector<2x128xf32>
    %110 = arith.divf %108, %109 : vector<2x128xf32>
    %111 = vector.extract_strided_slice %98 {offsets = [0, 256], sizes = [2, 128], strides = [1, 1]} : vector<2x512xf32> to vector<2x128xf32>
    %112 = math.tanh %111 : vector<2x128xf32>
    %113 = vector.extract_strided_slice %98 {offsets = [0, 384], sizes = [2, 128], strides = [1, 1]} : vector<2x512xf32> to vector<2x128xf32>
    %114 = arith.negf %113 : vector<2x128xf32>
    %115 = math.exp %114 : vector<2x128xf32>
    %cst_28 = arith.constant 1.000000e+00 : f32
    %116 = vector.broadcast %cst_28 : f32 to vector<2x128xf32>
    %117 = arith.addf %116, %115 : vector<2x128xf32>
    %118 = arith.divf %116, %117 : vector<2x128xf32>
    %119 = arith.mulf %110, %92 : vector<2x128xf32>
    %120 = arith.mulf %104, %112 : vector<2x128xf32>
    %121 = arith.addf %119, %120 : vector<2x128xf32>
    %122 = math.tanh %121 : vector<2x128xf32>
    %123 = arith.mulf %118, %122 : vector<2x128xf32>
    %c6 = arith.constant 6 : index
    %c0_29 = arith.constant 0 : index
    %124 = vector.load %arg13[%c6, %c0_29] : memref<16x128xf32, #tpu.memory_space<vmem>>, vector<2x128xf32>
    tpu.vector_store %arg13[%c6, %c0_29], %123 {strides = array<i32>} : memref<16x128xf32, #tpu.memory_space<vmem>>, vector<2x128xf32>,
    %125 = vector.extract_strided_slice %5 {offsets = [8, 0], sizes = [2, 512], strides = [1, 1]} : vector<16x512xf32> to vector<2x512xf32>
    %cst_30 = arith.constant dense<0.000000e+00> : vector<2x512xf32>
    %126 = tpu.matmul %123, %6, %cst_30 {dimension_numbers = #tpu.dot_dimension_numbers<[1], [0], [0], [1], [0, 0, 1, 1], [], []>} : vector<2x128xf32>, vector<128x512xf32>, vector<2x512xf32> -> vector<2x512xf32>
    %127 = arith.addf %125, %126 : vector<2x512xf32>
    %128 = vector.extract_strided_slice %127 {offsets = [0, 0], sizes = [2, 128], strides = [1, 1]} : vector<2x512xf32> to vector<2x128xf32>
    %129 = arith.negf %128 : vector<2x128xf32>
    %130 = math.exp %129 : vector<2x128xf32>
    %cst_31 = arith.constant 1.000000e+00 : f32
    %131 = vector.broadcast %cst_31 : f32 to vector<2x128xf32>
    %132 = arith.addf %131, %130 : vector<2x128xf32>
    %133 = arith.divf %131, %132 : vector<2x128xf32>
    %134 = vector.extract_strided_slice %127 {offsets = [0, 128], sizes = [2, 128], strides = [1, 1]} : vector<2x512xf32> to vector<2x128xf32>
    %135 = arith.negf %134 : vector<2x128xf32>
    %136 = math.exp %135 : vector<2x128xf32>
    %cst_32 = arith.constant 1.000000e+00 : f32
    %137 = vector.broadcast %cst_32 : f32 to vector<2x128xf32>
    %138 = arith.addf %137, %136 : vector<2x128xf32>
    %139 = arith.divf %137, %138 : vector<2x128xf32>
    %140 = vector.extract_strided_slice %127 {offsets = [0, 256], sizes = [2, 128], strides = [1, 1]} : vector<2x512xf32> to vector<2x128xf32>
    %141 = math.tanh %140 : vector<2x128xf32>
    %142 = vector.extract_strided_slice %127 {offsets = [0, 384], sizes = [2, 128], strides = [1, 1]} : vector<2x512xf32> to vector<2x128xf32>
    %143 = arith.negf %142 : vector<2x128xf32>
    %144 = math.exp %143 : vector<2x128xf32>
    %cst_33 = arith.constant 1.000000e+00 : f32
    %145 = vector.broadcast %cst_33 : f32 to vector<2x128xf32>
    %146 = arith.addf %145, %144 : vector<2x128xf32>
    %147 = arith.divf %145, %146 : vector<2x128xf32>
    %148 = arith.mulf %139, %121 : vector<2x128xf32>
    %149 = arith.mulf %133, %141 : vector<2x128xf32>
    %150 = arith.addf %148, %149 : vector<2x128xf32>
    %151 = math.tanh %150 : vector<2x128xf32>
    %152 = arith.mulf %147, %151 : vector<2x128xf32>
    %c8 = arith.constant 8 : index
    %c0_34 = arith.constant 0 : index
    %153 = vector.load %arg13[%c8, %c0_34] : memref<16x128xf32, #tpu.memory_space<vmem>>, vector<2x128xf32>
    tpu.vector_store %arg13[%c8, %c0_34], %152 {strides = array<i32>} : memref<16x128xf32, #tpu.memory_space<vmem>>, vector<2x128xf32>,
    %154 = vector.extract_strided_slice %5 {offsets = [10, 0], sizes = [2, 512], strides = [1, 1]} : vector<16x512xf32> to vector<2x512xf32>
    %cst_35 = arith.constant dense<0.000000e+00> : vector<2x512xf32>
    %155 = tpu.matmul %152, %6, %cst_35 {dimension_numbers = #tpu.dot_dimension_numbers<[1], [0], [0], [1], [0, 0, 1, 1], [], []>} : vector<2x128xf32>, vector<128x512xf32>, vector<2x512xf32> -> vector<2x512xf32>
    %156 = arith.addf %154, %155 : vector<2x512xf32>
    %157 = vector.extract_strided_slice %156 {offsets = [0, 0], sizes = [2, 128], strides = [1, 1]} : vector<2x512xf32> to vector<2x128xf32>
    %158 = arith.negf %157 : vector<2x128xf32>
    %159 = math.exp %158 : vector<2x128xf32>
    %cst_36 = arith.constant 1.000000e+00 : f32
    %160 = vector.broadcast %cst_36 : f32 to vector<2x128xf32>
    %161 = arith.addf %160, %159 : vector<2x128xf32>
    %162 = arith.divf %160, %161 : vector<2x128xf32>
    %163 = vector.extract_strided_slice %156 {offsets = [0, 128], sizes = [2, 128], strides = [1, 1]} : vector<2x512xf32> to vector<2x128xf32>
    %164 = arith.negf %163 : vector<2x128xf32>
    %165 = math.exp %164 : vector<2x128xf32>
    %cst_37 = arith.constant 1.000000e+00 : f32
    %166 = vector.broadcast %cst_37 : f32 to vector<2x128xf32>
    %167 = arith.addf %166, %165 : vector<2x128xf32>
    %168 = arith.divf %166, %167 : vector<2x128xf32>
    %169 = vector.extract_strided_slice %156 {offsets = [0, 256], sizes = [2, 128], strides = [1, 1]} : vector<2x512xf32> to vector<2x128xf32>
    %170 = math.tanh %169 : vector<2x128xf32>
    %171 = vector.extract_strided_slice %156 {offsets = [0, 384], sizes = [2, 128], strides = [1, 1]} : vector<2x512xf32> to vector<2x128xf32>
    %172 = arith.negf %171 : vector<2x128xf32>
    %173 = math.exp %172 : vector<2x128xf32>
    %cst_38 = arith.constant 1.000000e+00 : f32
    %174 = vector.broadcast %cst_38 : f32 to vector<2x128xf32>
    %175 = arith.addf %174, %173 : vector<2x128xf32>
    %176 = arith.divf %174, %175 : vector<2x128xf32>
    %177 = arith.mulf %168, %150 : vector<2x128xf32>
    %178 = arith.mulf %162, %170 : vector<2x128xf32>
    %179 = arith.addf %177, %178 : vector<2x128xf32>
    %180 = math.tanh %179 : vector<2x128xf32>
    %181 = arith.mulf %176, %180 : vector<2x128xf32>
    %c10 = arith.constant 10 : index
    %c0_39 = arith.constant 0 : index
    %182 = vector.load %arg13[%c10, %c0_39] : memref<16x128xf32, #tpu.memory_space<vmem>>, vector<2x128xf32>
    tpu.vector_store %arg13[%c10, %c0_39], %181 {strides = array<i32>} : memref<16x128xf32, #tpu.memory_space<vmem>>, vector<2x128xf32>,
    %183 = vector.extract_strided_slice %5 {offsets = [12, 0], sizes = [2, 512], strides = [1, 1]} : vector<16x512xf32> to vector<2x512xf32>
    %cst_40 = arith.constant dense<0.000000e+00> : vector<2x512xf32>
    %184 = tpu.matmul %181, %6, %cst_40 {dimension_numbers = #tpu.dot_dimension_numbers<[1], [0], [0], [1], [0, 0, 1, 1], [], []>} : vector<2x128xf32>, vector<128x512xf32>, vector<2x512xf32> -> vector<2x512xf32>
    %185 = arith.addf %183, %184 : vector<2x512xf32>
    %186 = vector.extract_strided_slice %185 {offsets = [0, 0], sizes = [2, 128], strides = [1, 1]} : vector<2x512xf32> to vector<2x128xf32>
    %187 = arith.negf %186 : vector<2x128xf32>
    %188 = math.exp %187 : vector<2x128xf32>
    %cst_41 = arith.constant 1.000000e+00 : f32
    %189 = vector.broadcast %cst_41 : f32 to vector<2x128xf32>
    %190 = arith.addf %189, %188 : vector<2x128xf32>
    %191 = arith.divf %189, %190 : vector<2x128xf32>
    %192 = vector.extract_strided_slice %185 {offsets = [0, 128], sizes = [2, 128], strides = [1, 1]} : vector<2x512xf32> to vector<2x128xf32>
    %193 = arith.negf %192 : vector<2x128xf32>
    %194 = math.exp %193 : vector<2x128xf32>
    %cst_42 = arith.constant 1.000000e+00 : f32
    %195 = vector.broadcast %cst_42 : f32 to vector<2x128xf32>
    %196 = arith.addf %195, %194 : vector<2x128xf32>
    %197 = arith.divf %195, %196 : vector<2x128xf32>
    %198 = vector.extract_strided_slice %185 {offsets = [0, 256], sizes = [2, 128], strides = [1, 1]} : vector<2x512xf32> to vector<2x128xf32>
    %199 = math.tanh %198 : vector<2x128xf32>
    %200 = vector.extract_strided_slice %185 {offsets = [0, 384], sizes = [2, 128], strides = [1, 1]} : vector<2x512xf32> to vector<2x128xf32>
    %201 = arith.negf %200 : vector<2x128xf32>
    %202 = math.exp %201 : vector<2x128xf32>
    %cst_43 = arith.constant 1.000000e+00 : f32
    %203 = vector.broadcast %cst_43 : f32 to vector<2x128xf32>
    %204 = arith.addf %203, %202 : vector<2x128xf32>
    %205 = arith.divf %203, %204 : vector<2x128xf32>
    %206 = arith.mulf %197, %179 : vector<2x128xf32>
    %207 = arith.mulf %191, %199 : vector<2x128xf32>
    %208 = arith.addf %206, %207 : vector<2x128xf32>
    %209 = math.tanh %208 : vector<2x128xf32>
    %210 = arith.mulf %205, %209 : vector<2x128xf32>
    %c12 = arith.constant 12 : index
    %c0_44 = arith.constant 0 : index
    %211 = vector.load %arg13[%c12, %c0_44] : memref<16x128xf32, #tpu.memory_space<vmem>>, vector<2x128xf32>
    tpu.vector_store %arg13[%c12, %c0_44], %210 {strides = array<i32>} : memref<16x128xf32, #tpu.memory_space<vmem>>, vector<2x128xf32>,
    %212 = vector.extract_strided_slice %5 {offsets = [14, 0], sizes = [2, 512], strides = [1, 1]} : vector<16x512xf32> to vector<2x512xf32>
    %cst_45 = arith.constant dense<0.000000e+00> : vector<2x512xf32>
    %213 = tpu.matmul %210, %6, %cst_45 {dimension_numbers = #tpu.dot_dimension_numbers<[1], [0], [0], [1], [0, 0, 1, 1], [], []>} : vector<2x128xf32>, vector<128x512xf32>, vector<2x512xf32> -> vector<2x512xf32>
    %214 = arith.addf %212, %213 : vector<2x512xf32>
    %215 = vector.extract_strided_slice %214 {offsets = [0, 0], sizes = [2, 128], strides = [1, 1]} : vector<2x512xf32> to vector<2x128xf32>
    %216 = arith.negf %215 : vector<2x128xf32>
    %217 = math.exp %216 : vector<2x128xf32>
    %cst_46 = arith.constant 1.000000e+00 : f32
    %218 = vector.broadcast %cst_46 : f32 to vector<2x128xf32>
    %219 = arith.addf %218, %217 : vector<2x128xf32>
    %220 = arith.divf %218, %219 : vector<2x128xf32>
    %221 = vector.extract_strided_slice %214 {offsets = [0, 128], sizes = [2, 128], strides = [1, 1]} : vector<2x512xf32> to vector<2x128xf32>
    %222 = arith.negf %221 : vector<2x128xf32>
    %223 = math.exp %222 : vector<2x128xf32>
    %cst_47 = arith.constant 1.000000e+00 : f32
    %224 = vector.broadcast %cst_47 : f32 to vector<2x128xf32>
    %225 = arith.addf %224, %223 : vector<2x128xf32>
    %226 = arith.divf %224, %225 : vector<2x128xf32>
    %227 = vector.extract_strided_slice %214 {offsets = [0, 256], sizes = [2, 128], strides = [1, 1]} : vector<2x512xf32> to vector<2x128xf32>
    %228 = math.tanh %227 : vector<2x128xf32>
    %229 = vector.extract_strided_slice %214 {offsets = [0, 384], sizes = [2, 128], strides = [1, 1]} : vector<2x512xf32> to vector<2x128xf32>
    %230 = arith.negf %229 : vector<2x128xf32>
    %231 = math.exp %230 : vector<2x128xf32>
    %cst_48 = arith.constant 1.000000e+00 : f32
    %232 = vector.broadcast %cst_48 : f32 to vector<2x128xf32>
    %233 = arith.addf %232, %231 : vector<2x128xf32>
    %234 = arith.divf %232, %233 : vector<2x128xf32>
    %235 = arith.mulf %226, %208 : vector<2x128xf32>
    %236 = arith.mulf %220, %228 : vector<2x128xf32>
    %237 = arith.addf %235, %236 : vector<2x128xf32>
    %238 = math.tanh %237 : vector<2x128xf32>
    %239 = arith.mulf %234, %238 : vector<2x128xf32>
    %c14 = arith.constant 14 : index
    %c0_49 = arith.constant 0 : index
    %240 = vector.load %arg13[%c14, %c0_49] : memref<16x128xf32, #tpu.memory_space<vmem>>, vector<2x128xf32>
    tpu.vector_store %arg13[%c14, %c0_49], %239 {strides = array<i32>} : memref<16x128xf32, #tpu.memory_space<vmem>>, vector<2x128xf32>,
    %c0_50 = arith.constant 0 : index
    %c0_51 = arith.constant 0 : index
    %241 = vector.load %arg13[%c0_50, %c0_51] : memref<16x128xf32, #tpu.memory_space<vmem>>, vector<16x128xf32>
    %c0_52 = arith.constant 0 : index
    %c0_53 = arith.constant 0 : index
    %242 = vector.load %arg4[%c0_52, %c0_53] : memref<128x512xf32, #tpu.memory_space<vmem>>, vector<128x512xf32>
    %cst_54 = arith.constant dense<0.000000e+00> : vector<16x512xf32>
    %243 = tpu.matmul %241, %242, %cst_54 {dimension_numbers = #tpu.dot_dimension_numbers<[1], [0], [0], [1], [0, 0, 1, 1], [], []>} : vector<16x128xf32>, vector<128x512xf32>, vector<16x512xf32> -> vector<16x512xf32>
    %c0_55 = arith.constant 0 : index
    %c0_56 = arith.constant 0 : index
    %244 = vector.load %arg6[%c0_55, %c0_56] : memref<1x512xf32, #tpu.memory_space<vmem>>, vector<1x512xf32>
    %245 = vector.broadcast %244 : vector<1x512xf32> to vector<16x512xf32>
    %246 = arith.addf %243, %245 : vector<16x512xf32>
    %c0_57 = arith.constant 0 : index
    %c0_58 = arith.constant 0 : index
    %247 = vector.load %arg5[%c0_57, %c0_58] : memref<128x512xf32, #tpu.memory_space<vmem>>, vector<128x512xf32>
    %cst_59 = arith.constant 0.000000e+00 : f32
    %248 = vector.broadcast %cst_59 : f32 to vector<2x128xf32>
    %cst_60 = arith.constant 0.000000e+00 : f32
    %249 = vector.broadcast %cst_60 : f32 to vector<2x128xf32>
    %250 = vector.extract_strided_slice %246 {offsets = [0, 0], sizes = [2, 512], strides = [1, 1]} : vector<16x512xf32> to vector<2x512xf32>
    %cst_61 = arith.constant dense<0.000000e+00> : vector<2x512xf32>
    %251 = tpu.matmul %248, %247, %cst_61 {dimension_numbers = #tpu.dot_dimension_numbers<[1], [0], [0], [1], [0, 0, 1, 1], [], []>} : vector<2x128xf32>, vector<128x512xf32>, vector<2x512xf32> -> vector<2x512xf32>
    %252 = arith.addf %250, %251 : vector<2x512xf32>
    %253 = vector.extract_strided_slice %252 {offsets = [0, 0], sizes = [2, 128], strides = [1, 1]} : vector<2x512xf32> to vector<2x128xf32>
    %254 = arith.negf %253 : vector<2x128xf32>
    %255 = math.exp %254 : vector<2x128xf32>
    %cst_62 = arith.constant 1.000000e+00 : f32
    %256 = vector.broadcast %cst_62 : f32 to vector<2x128xf32>
    %257 = arith.addf %256, %255 : vector<2x128xf32>
    %258 = arith.divf %256, %257 : vector<2x128xf32>
    %259 = vector.extract_strided_slice %252 {offsets = [0, 128], sizes = [2, 128], strides = [1, 1]} : vector<2x512xf32> to vector<2x128xf32>
    %260 = arith.negf %259 : vector<2x128xf32>
    %261 = math.exp %260 : vector<2x128xf32>
    %cst_63 = arith.constant 1.000000e+00 : f32
    %262 = vector.broadcast %cst_63 : f32 to vector<2x128xf32>
    %263 = arith.addf %262, %261 : vector<2x128xf32>
    %264 = arith.divf %262, %263 : vector<2x128xf32>
    %265 = vector.extract_strided_slice %252 {offsets = [0, 256], sizes = [2, 128], strides = [1, 1]} : vector<2x512xf32> to vector<2x128xf32>
    %266 = math.tanh %265 : vector<2x128xf32>
    %267 = vector.extract_strided_slice %252 {offsets = [0, 384], sizes = [2, 128], strides = [1, 1]} : vector<2x512xf32> to vector<2x128xf32>
    %268 = arith.negf %267 : vector<2x128xf32>
    %269 = math.exp %268 : vector<2x128xf32>
    %cst_64 = arith.constant 1.000000e+00 : f32
    %270 = vector.broadcast %cst_64 : f32 to vector<2x128xf32>
    %271 = arith.addf %270, %269 : vector<2x128xf32>
    %272 = arith.divf %270, %271 : vector<2x128xf32>
    %273 = arith.mulf %264, %249 : vector<2x128xf32>
    %274 = arith.mulf %258, %266 : vector<2x128xf32>
    %275 = arith.addf %273, %274 : vector<2x128xf32>
    %276 = math.tanh %275 : vector<2x128xf32>
    %277 = arith.mulf %272, %276 : vector<2x128xf32>
    %c0_65 = arith.constant 0 : index
    %c0_66 = arith.constant 0 : index
    %278 = vector.load %arg13[%c0_65, %c0_66] : memref<16x128xf32, #tpu.memory_space<vmem>>, vector<2x128xf32>
    tpu.vector_store %arg13[%c0_65, %c0_66], %277 {strides = array<i32>} : memref<16x128xf32, #tpu.memory_space<vmem>>, vector<2x128xf32>,
    %279 = vector.extract_strided_slice %246 {offsets = [2, 0], sizes = [2, 512], strides = [1, 1]} : vector<16x512xf32> to vector<2x512xf32>
    %cst_67 = arith.constant dense<0.000000e+00> : vector<2x512xf32>
    %280 = tpu.matmul %277, %247, %cst_67 {dimension_numbers = #tpu.dot_dimension_numbers<[1], [0], [0], [1], [0, 0, 1, 1], [], []>} : vector<2x128xf32>, vector<128x512xf32>, vector<2x512xf32> -> vector<2x512xf32>
    %281 = arith.addf %279, %280 : vector<2x512xf32>
    %282 = vector.extract_strided_slice %281 {offsets = [0, 0], sizes = [2, 128], strides = [1, 1]} : vector<2x512xf32> to vector<2x128xf32>
    %283 = arith.negf %282 : vector<2x128xf32>
    %284 = math.exp %283 : vector<2x128xf32>
    %cst_68 = arith.constant 1.000000e+00 : f32
    %285 = vector.broadcast %cst_68 : f32 to vector<2x128xf32>
    %286 = arith.addf %285, %284 : vector<2x128xf32>
    %287 = arith.divf %285, %286 : vector<2x128xf32>
    %288 = vector.extract_strided_slice %281 {offsets = [0, 128], sizes = [2, 128], strides = [1, 1]} : vector<2x512xf32> to vector<2x128xf32>
    %289 = arith.negf %288 : vector<2x128xf32>
    %290 = math.exp %289 : vector<2x128xf32>
    %cst_69 = arith.constant 1.000000e+00 : f32
    %291 = vector.broadcast %cst_69 : f32 to vector<2x128xf32>
    %292 = arith.addf %291, %290 : vector<2x128xf32>
    %293 = arith.divf %291, %292 : vector<2x128xf32>
    %294 = vector.extract_strided_slice %281 {offsets = [0, 256], sizes = [2, 128], strides = [1, 1]} : vector<2x512xf32> to vector<2x128xf32>
    %295 = math.tanh %294 : vector<2x128xf32>
    %296 = vector.extract_strided_slice %281 {offsets = [0, 384], sizes = [2, 128], strides = [1, 1]} : vector<2x512xf32> to vector<2x128xf32>
    %297 = arith.negf %296 : vector<2x128xf32>
    %298 = math.exp %297 : vector<2x128xf32>
    %cst_70 = arith.constant 1.000000e+00 : f32
    %299 = vector.broadcast %cst_70 : f32 to vector<2x128xf32>
    %300 = arith.addf %299, %298 : vector<2x128xf32>
    %301 = arith.divf %299, %300 : vector<2x128xf32>
    %302 = arith.mulf %293, %275 : vector<2x128xf32>
    %303 = arith.mulf %287, %295 : vector<2x128xf32>
    %304 = arith.addf %302, %303 : vector<2x128xf32>
    %305 = math.tanh %304 : vector<2x128xf32>
    %306 = arith.mulf %301, %305 : vector<2x128xf32>
    %c2_71 = arith.constant 2 : index
    %c0_72 = arith.constant 0 : index
    %307 = vector.load %arg13[%c2_71, %c0_72] : memref<16x128xf32, #tpu.memory_space<vmem>>, vector<2x128xf32>
    tpu.vector_store %arg13[%c2_71, %c0_72], %306 {strides = array<i32>} : memref<16x128xf32, #tpu.memory_space<vmem>>, vector<2x128xf32>,
    %308 = vector.extract_strided_slice %246 {offsets = [4, 0], sizes = [2, 512], strides = [1, 1]} : vector<16x512xf32> to vector<2x512xf32>
    %cst_73 = arith.constant dense<0.000000e+00> : vector<2x512xf32>
    %309 = tpu.matmul %306, %247, %cst_73 {dimension_numbers = #tpu.dot_dimension_numbers<[1], [0], [0], [1], [0, 0, 1, 1], [], []>} : vector<2x128xf32>, vector<128x512xf32>, vector<2x512xf32> -> vector<2x512xf32>
    %310 = arith.addf %308, %309 : vector<2x512xf32>
    %311 = vector.extract_strided_slice %310 {offsets = [0, 0], sizes = [2, 128], strides = [1, 1]} : vector<2x512xf32> to vector<2x128xf32>
    %312 = arith.negf %311 : vector<2x128xf32>
    %313 = math.exp %312 : vector<2x128xf32>
    %cst_74 = arith.constant 1.000000e+00 : f32
    %314 = vector.broadcast %cst_74 : f32 to vector<2x128xf32>
    %315 = arith.addf %314, %313 : vector<2x128xf32>
    %316 = arith.divf %314, %315 : vector<2x128xf32>
    %317 = vector.extract_strided_slice %310 {offsets = [0, 128], sizes = [2, 128], strides = [1, 1]} : vector<2x512xf32> to vector<2x128xf32>
    %318 = arith.negf %317 : vector<2x128xf32>
    %319 = math.exp %318 : vector<2x128xf32>
    %cst_75 = arith.constant 1.000000e+00 : f32
    %320 = vector.broadcast %cst_75 : f32 to vector<2x128xf32>
    %321 = arith.addf %320, %319 : vector<2x128xf32>
    %322 = arith.divf %320, %321 : vector<2x128xf32>
    %323 = vector.extract_strided_slice %310 {offsets = [0, 256], sizes = [2, 128], strides = [1, 1]} : vector<2x512xf32> to vector<2x128xf32>
    %324 = math.tanh %323 : vector<2x128xf32>
    %325 = vector.extract_strided_slice %310 {offsets = [0, 384], sizes = [2, 128], strides = [1, 1]} : vector<2x512xf32> to vector<2x128xf32>
    %326 = arith.negf %325 : vector<2x128xf32>
    %327 = math.exp %326 : vector<2x128xf32>
    %cst_76 = arith.constant 1.000000e+00 : f32
    %328 = vector.broadcast %cst_76 : f32 to vector<2x128xf32>
    %329 = arith.addf %328, %327 : vector<2x128xf32>
    %330 = arith.divf %328, %329 : vector<2x128xf32>
    %331 = arith.mulf %322, %304 : vector<2x128xf32>
    %332 = arith.mulf %316, %324 : vector<2x128xf32>
    %333 = arith.addf %331, %332 : vector<2x128xf32>
    %334 = math.tanh %333 : vector<2x128xf32>
    %335 = arith.mulf %330, %334 : vector<2x128xf32>
    %c4_77 = arith.constant 4 : index
    %c0_78 = arith.constant 0 : index
    %336 = vector.load %arg13[%c4_77, %c0_78] : memref<16x128xf32, #tpu.memory_space<vmem>>, vector<2x128xf32>
    tpu.vector_store %arg13[%c4_77, %c0_78], %335 {strides = array<i32>} : memref<16x128xf32, #tpu.memory_space<vmem>>, vector<2x128xf32>,
    %337 = vector.extract_strided_slice %246 {offsets = [6, 0], sizes = [2, 512], strides = [1, 1]} : vector<16x512xf32> to vector<2x512xf32>
    %cst_79 = arith.constant dense<0.000000e+00> : vector<2x512xf32>
    %338 = tpu.matmul %335, %247, %cst_79 {dimension_numbers = #tpu.dot_dimension_numbers<[1], [0], [0], [1], [0, 0, 1, 1], [], []>} : vector<2x128xf32>, vector<128x512xf32>, vector<2x512xf32> -> vector<2x512xf32>
    %339 = arith.addf %337, %338 : vector<2x512xf32>
    %340 = vector.extract_strided_slice %339 {offsets = [0, 0], sizes = [2, 128], strides = [1, 1]} : vector<2x512xf32> to vector<2x128xf32>
    %341 = arith.negf %340 : vector<2x128xf32>
    %342 = math.exp %341 : vector<2x128xf32>
    %cst_80 = arith.constant 1.000000e+00 : f32
    %343 = vector.broadcast %cst_80 : f32 to vector<2x128xf32>
    %344 = arith.addf %343, %342 : vector<2x128xf32>
    %345 = arith.divf %343, %344 : vector<2x128xf32>
    %346 = vector.extract_strided_slice %339 {offsets = [0, 128], sizes = [2, 128], strides = [1, 1]} : vector<2x512xf32> to vector<2x128xf32>
    %347 = arith.negf %346 : vector<2x128xf32>
    %348 = math.exp %347 : vector<2x128xf32>
    %cst_81 = arith.constant 1.000000e+00 : f32
    %349 = vector.broadcast %cst_81 : f32 to vector<2x128xf32>
    %350 = arith.addf %349, %348 : vector<2x128xf32>
    %351 = arith.divf %349, %350 : vector<2x128xf32>
    %352 = vector.extract_strided_slice %339 {offsets = [0, 256], sizes = [2, 128], strides = [1, 1]} : vector<2x512xf32> to vector<2x128xf32>
    %353 = math.tanh %352 : vector<2x128xf32>
    %354 = vector.extract_strided_slice %339 {offsets = [0, 384], sizes = [2, 128], strides = [1, 1]} : vector<2x512xf32> to vector<2x128xf32>
    %355 = arith.negf %354 : vector<2x128xf32>
    %356 = math.exp %355 : vector<2x128xf32>
    %cst_82 = arith.constant 1.000000e+00 : f32
    %357 = vector.broadcast %cst_82 : f32 to vector<2x128xf32>
    %358 = arith.addf %357, %356 : vector<2x128xf32>
    %359 = arith.divf %357, %358 : vector<2x128xf32>
    %360 = arith.mulf %351, %333 : vector<2x128xf32>
    %361 = arith.mulf %345, %353 : vector<2x128xf32>
    %362 = arith.addf %360, %361 : vector<2x128xf32>
    %363 = math.tanh %362 : vector<2x128xf32>
    %364 = arith.mulf %359, %363 : vector<2x128xf32>
    %c6_83 = arith.constant 6 : index
    %c0_84 = arith.constant 0 : index
    %365 = vector.load %arg13[%c6_83, %c0_84] : memref<16x128xf32, #tpu.memory_space<vmem>>, vector<2x128xf32>
    tpu.vector_store %arg13[%c6_83, %c0_84], %364 {strides = array<i32>} : memref<16x128xf32, #tpu.memory_space<vmem>>, vector<2x128xf32>,
    %366 = vector.extract_strided_slice %246 {offsets = [8, 0], sizes = [2, 512], strides = [1, 1]} : vector<16x512xf32> to vector<2x512xf32>
    %cst_85 = arith.constant dense<0.000000e+00> : vector<2x512xf32>
    %367 = tpu.matmul %364, %247, %cst_85 {dimension_numbers = #tpu.dot_dimension_numbers<[1], [0], [0], [1], [0, 0, 1, 1], [], []>} : vector<2x128xf32>, vector<128x512xf32>, vector<2x512xf32> -> vector<2x512xf32>
    %368 = arith.addf %366, %367 : vector<2x512xf32>
    %369 = vector.extract_strided_slice %368 {offsets = [0, 0], sizes = [2, 128], strides = [1, 1]} : vector<2x512xf32> to vector<2x128xf32>
    %370 = arith.negf %369 : vector<2x128xf32>
    %371 = math.exp %370 : vector<2x128xf32>
    %cst_86 = arith.constant 1.000000e+00 : f32
    %372 = vector.broadcast %cst_86 : f32 to vector<2x128xf32>
    %373 = arith.addf %372, %371 : vector<2x128xf32>
    %374 = arith.divf %372, %373 : vector<2x128xf32>
    %375 = vector.extract_strided_slice %368 {offsets = [0, 128], sizes = [2, 128], strides = [1, 1]} : vector<2x512xf32> to vector<2x128xf32>
    %376 = arith.negf %375 : vector<2x128xf32>
    %377 = math.exp %376 : vector<2x128xf32>
    %cst_87 = arith.constant 1.000000e+00 : f32
    %378 = vector.broadcast %cst_87 : f32 to vector<2x128xf32>
    %379 = arith.addf %378, %377 : vector<2x128xf32>
    %380 = arith.divf %378, %379 : vector<2x128xf32>
    %381 = vector.extract_strided_slice %368 {offsets = [0, 256], sizes = [2, 128], strides = [1, 1]} : vector<2x512xf32> to vector<2x128xf32>
    %382 = math.tanh %381 : vector<2x128xf32>
    %383 = vector.extract_strided_slice %368 {offsets = [0, 384], sizes = [2, 128], strides = [1, 1]} : vector<2x512xf32> to vector<2x128xf32>
    %384 = arith.negf %383 : vector<2x128xf32>
    %385 = math.exp %384 : vector<2x128xf32>
    %cst_88 = arith.constant 1.000000e+00 : f32
    %386 = vector.broadcast %cst_88 : f32 to vector<2x128xf32>
    %387 = arith.addf %386, %385 : vector<2x128xf32>
    %388 = arith.divf %386, %387 : vector<2x128xf32>
    %389 = arith.mulf %380, %362 : vector<2x128xf32>
    %390 = arith.mulf %374, %382 : vector<2x128xf32>
    %391 = arith.addf %389, %390 : vector<2x128xf32>
    %392 = math.tanh %391 : vector<2x128xf32>
    %393 = arith.mulf %388, %392 : vector<2x128xf32>
    %c8_89 = arith.constant 8 : index
    %c0_90 = arith.constant 0 : index
    %394 = vector.load %arg13[%c8_89, %c0_90] : memref<16x128xf32, #tpu.memory_space<vmem>>, vector<2x128xf32>
    tpu.vector_store %arg13[%c8_89, %c0_90], %393 {strides = array<i32>} : memref<16x128xf32, #tpu.memory_space<vmem>>, vector<2x128xf32>,
    %395 = vector.extract_strided_slice %246 {offsets = [10, 0], sizes = [2, 512], strides = [1, 1]} : vector<16x512xf32> to vector<2x512xf32>
    %cst_91 = arith.constant dense<0.000000e+00> : vector<2x512xf32>
    %396 = tpu.matmul %393, %247, %cst_91 {dimension_numbers = #tpu.dot_dimension_numbers<[1], [0], [0], [1], [0, 0, 1, 1], [], []>} : vector<2x128xf32>, vector<128x512xf32>, vector<2x512xf32> -> vector<2x512xf32>
    %397 = arith.addf %395, %396 : vector<2x512xf32>
    %398 = vector.extract_strided_slice %397 {offsets = [0, 0], sizes = [2, 128], strides = [1, 1]} : vector<2x512xf32> to vector<2x128xf32>
    %399 = arith.negf %398 : vector<2x128xf32>
    %400 = math.exp %399 : vector<2x128xf32>
    %cst_92 = arith.constant 1.000000e+00 : f32
    %401 = vector.broadcast %cst_92 : f32 to vector<2x128xf32>
    %402 = arith.addf %401, %400 : vector<2x128xf32>
    %403 = arith.divf %401, %402 : vector<2x128xf32>
    %404 = vector.extract_strided_slice %397 {offsets = [0, 128], sizes = [2, 128], strides = [1, 1]} : vector<2x512xf32> to vector<2x128xf32>
    %405 = arith.negf %404 : vector<2x128xf32>
    %406 = math.exp %405 : vector<2x128xf32>
    %cst_93 = arith.constant 1.000000e+00 : f32
    %407 = vector.broadcast %cst_93 : f32 to vector<2x128xf32>
    %408 = arith.addf %407, %406 : vector<2x128xf32>
    %409 = arith.divf %407, %408 : vector<2x128xf32>
    %410 = vector.extract_strided_slice %397 {offsets = [0, 256], sizes = [2, 128], strides = [1, 1]} : vector<2x512xf32> to vector<2x128xf32>
    %411 = math.tanh %410 : vector<2x128xf32>
    %412 = vector.extract_strided_slice %397 {offsets = [0, 384], sizes = [2, 128], strides = [1, 1]} : vector<2x512xf32> to vector<2x128xf32>
    %413 = arith.negf %412 : vector<2x128xf32>
    %414 = math.exp %413 : vector<2x128xf32>
    %cst_94 = arith.constant 1.000000e+00 : f32
    %415 = vector.broadcast %cst_94 : f32 to vector<2x128xf32>
    %416 = arith.addf %415, %414 : vector<2x128xf32>
    %417 = arith.divf %415, %416 : vector<2x128xf32>
    %418 = arith.mulf %409, %391 : vector<2x128xf32>
    %419 = arith.mulf %403, %411 : vector<2x128xf32>
    %420 = arith.addf %418, %419 : vector<2x128xf32>
    %421 = math.tanh %420 : vector<2x128xf32>
    %422 = arith.mulf %417, %421 : vector<2x128xf32>
    %c10_95 = arith.constant 10 : index
    %c0_96 = arith.constant 0 : index
    %423 = vector.load %arg13[%c10_95, %c0_96] : memref<16x128xf32, #tpu.memory_space<vmem>>, vector<2x128xf32>
    tpu.vector_store %arg13[%c10_95, %c0_96], %422 {strides = array<i32>} : memref<16x128xf32, #tpu.memory_space<vmem>>, vector<2x128xf32>,
    %424 = vector.extract_strided_slice %246 {offsets = [12, 0], sizes = [2, 512], strides = [1, 1]} : vector<16x512xf32> to vector<2x512xf32>
    %cst_97 = arith.constant dense<0.000000e+00> : vector<2x512xf32>
    %425 = tpu.matmul %422, %247, %cst_97 {dimension_numbers = #tpu.dot_dimension_numbers<[1], [0], [0], [1], [0, 0, 1, 1], [], []>} : vector<2x128xf32>, vector<128x512xf32>, vector<2x512xf32> -> vector<2x512xf32>
    %426 = arith.addf %424, %425 : vector<2x512xf32>
    %427 = vector.extract_strided_slice %426 {offsets = [0, 0], sizes = [2, 128], strides = [1, 1]} : vector<2x512xf32> to vector<2x128xf32>
    %428 = arith.negf %427 : vector<2x128xf32>
    %429 = math.exp %428 : vector<2x128xf32>
    %cst_98 = arith.constant 1.000000e+00 : f32
    %430 = vector.broadcast %cst_98 : f32 to vector<2x128xf32>
    %431 = arith.addf %430, %429 : vector<2x128xf32>
    %432 = arith.divf %430, %431 : vector<2x128xf32>
    %433 = vector.extract_strided_slice %426 {offsets = [0, 128], sizes = [2, 128], strides = [1, 1]} : vector<2x512xf32> to vector<2x128xf32>
    %434 = arith.negf %433 : vector<2x128xf32>
    %435 = math.exp %434 : vector<2x128xf32>
    %cst_99 = arith.constant 1.000000e+00 : f32
    %436 = vector.broadcast %cst_99 : f32 to vector<2x128xf32>
    %437 = arith.addf %436, %435 : vector<2x128xf32>
    %438 = arith.divf %436, %437 : vector<2x128xf32>
    %439 = vector.extract_strided_slice %426 {offsets = [0, 256], sizes = [2, 128], strides = [1, 1]} : vector<2x512xf32> to vector<2x128xf32>
    %440 = math.tanh %439 : vector<2x128xf32>
    %441 = vector.extract_strided_slice %426 {offsets = [0, 384], sizes = [2, 128], strides = [1, 1]} : vector<2x512xf32> to vector<2x128xf32>
    %442 = arith.negf %441 : vector<2x128xf32>
    %443 = math.exp %442 : vector<2x128xf32>
    %cst_100 = arith.constant 1.000000e+00 : f32
    %444 = vector.broadcast %cst_100 : f32 to vector<2x128xf32>
    %445 = arith.addf %444, %443 : vector<2x128xf32>
    %446 = arith.divf %444, %445 : vector<2x128xf32>
    %447 = arith.mulf %438, %420 : vector<2x128xf32>
    %448 = arith.mulf %432, %440 : vector<2x128xf32>
    %449 = arith.addf %447, %448 : vector<2x128xf32>
    %450 = math.tanh %449 : vector<2x128xf32>
    %451 = arith.mulf %446, %450 : vector<2x128xf32>
    %c12_101 = arith.constant 12 : index
    %c0_102 = arith.constant 0 : index
    %452 = vector.load %arg13[%c12_101, %c0_102] : memref<16x128xf32, #tpu.memory_space<vmem>>, vector<2x128xf32>
    tpu.vector_store %arg13[%c12_101, %c0_102], %451 {strides = array<i32>} : memref<16x128xf32, #tpu.memory_space<vmem>>, vector<2x128xf32>,
    %453 = vector.extract_strided_slice %246 {offsets = [14, 0], sizes = [2, 512], strides = [1, 1]} : vector<16x512xf32> to vector<2x512xf32>
    %cst_103 = arith.constant dense<0.000000e+00> : vector<2x512xf32>
    %454 = tpu.matmul %451, %247, %cst_103 {dimension_numbers = #tpu.dot_dimension_numbers<[1], [0], [0], [1], [0, 0, 1, 1], [], []>} : vector<2x128xf32>, vector<128x512xf32>, vector<2x512xf32> -> vector<2x512xf32>
    %455 = arith.addf %453, %454 : vector<2x512xf32>
    %456 = vector.extract_strided_slice %455 {offsets = [0, 0], sizes = [2, 128], strides = [1, 1]} : vector<2x512xf32> to vector<2x128xf32>
    %457 = arith.negf %456 : vector<2x128xf32>
    %458 = math.exp %457 : vector<2x128xf32>
    %cst_104 = arith.constant 1.000000e+00 : f32
    %459 = vector.broadcast %cst_104 : f32 to vector<2x128xf32>
    %460 = arith.addf %459, %458 : vector<2x128xf32>
    %461 = arith.divf %459, %460 : vector<2x128xf32>
    %462 = vector.extract_strided_slice %455 {offsets = [0, 128], sizes = [2, 128], strides = [1, 1]} : vector<2x512xf32> to vector<2x128xf32>
    %463 = arith.negf %462 : vector<2x128xf32>
    %464 = math.exp %463 : vector<2x128xf32>
    %cst_105 = arith.constant 1.000000e+00 : f32
    %465 = vector.broadcast %cst_105 : f32 to vector<2x128xf32>
    %466 = arith.addf %465, %464 : vector<2x128xf32>
    %467 = arith.divf %465, %466 : vector<2x128xf32>
    %468 = vector.extract_strided_slice %455 {offsets = [0, 256], sizes = [2, 128], strides = [1, 1]} : vector<2x512xf32> to vector<2x128xf32>
    %469 = math.tanh %468 : vector<2x128xf32>
    %470 = vector.extract_strided_slice %455 {offsets = [0, 384], sizes = [2, 128], strides = [1, 1]} : vector<2x512xf32> to vector<2x128xf32>
    %471 = arith.negf %470 : vector<2x128xf32>
    %472 = math.exp %471 : vector<2x128xf32>
    %cst_106 = arith.constant 1.000000e+00 : f32
    %473 = vector.broadcast %cst_106 : f32 to vector<2x128xf32>
    %474 = arith.addf %473, %472 : vector<2x128xf32>
    %475 = arith.divf %473, %474 : vector<2x128xf32>
    %476 = arith.mulf %467, %449 : vector<2x128xf32>
    %477 = arith.mulf %461, %469 : vector<2x128xf32>
    %478 = arith.addf %476, %477 : vector<2x128xf32>
    %479 = math.tanh %478 : vector<2x128xf32>
    %480 = arith.mulf %475, %479 : vector<2x128xf32>
    %c14_107 = arith.constant 14 : index
    %c0_108 = arith.constant 0 : index
    %481 = vector.load %arg13[%c14_107, %c0_108] : memref<16x128xf32, #tpu.memory_space<vmem>>, vector<2x128xf32>
    tpu.vector_store %arg13[%c14_107, %c0_108], %480 {strides = array<i32>} : memref<16x128xf32, #tpu.memory_space<vmem>>, vector<2x128xf32>,
    %c0_109 = arith.constant 0 : index
    %c0_110 = arith.constant 0 : index
    %482 = vector.load %arg13[%c0_109, %c0_110] : memref<16x128xf32, #tpu.memory_space<vmem>>, vector<16x128xf32>
    %c0_111 = arith.constant 0 : index
    %c0_112 = arith.constant 0 : index
    %483 = vector.load %arg7[%c0_111, %c0_112] : memref<128x512xf32, #tpu.memory_space<vmem>>, vector<128x512xf32>
    %cst_113 = arith.constant dense<0.000000e+00> : vector<16x512xf32>
    %484 = tpu.matmul %482, %483, %cst_113 {dimension_numbers = #tpu.dot_dimension_numbers<[1], [0], [0], [1], [0, 0, 1, 1], [], []>} : vector<16x128xf32>, vector<128x512xf32>, vector<16x512xf32> -> vector<16x512xf32>
    %c0_114 = arith.constant 0 : index
    %c0_115 = arith.constant 0 : index
    %485 = vector.load %arg9[%c0_114, %c0_115] : memref<1x512xf32, #tpu.memory_space<vmem>>, vector<1x512xf32>
    %486 = vector.broadcast %485 : vector<1x512xf32> to vector<16x512xf32>
    %487 = arith.addf %484, %486 : vector<16x512xf32>
    %c0_116 = arith.constant 0 : index
    %c0_117 = arith.constant 0 : index
    %488 = vector.load %arg8[%c0_116, %c0_117] : memref<128x512xf32, #tpu.memory_space<vmem>>, vector<128x512xf32>
    %cst_118 = arith.constant 0.000000e+00 : f32
    %489 = vector.broadcast %cst_118 : f32 to vector<2x128xf32>
    %cst_119 = arith.constant 0.000000e+00 : f32
    %490 = vector.broadcast %cst_119 : f32 to vector<2x128xf32>
    %491 = vector.extract_strided_slice %487 {offsets = [0, 0], sizes = [2, 512], strides = [1, 1]} : vector<16x512xf32> to vector<2x512xf32>
    %cst_120 = arith.constant dense<0.000000e+00> : vector<2x512xf32>
    %492 = tpu.matmul %489, %488, %cst_120 {dimension_numbers = #tpu.dot_dimension_numbers<[1], [0], [0], [1], [0, 0, 1, 1], [], []>} : vector<2x128xf32>, vector<128x512xf32>, vector<2x512xf32> -> vector<2x512xf32>
    %493 = arith.addf %491, %492 : vector<2x512xf32>
    %494 = vector.extract_strided_slice %493 {offsets = [0, 0], sizes = [2, 128], strides = [1, 1]} : vector<2x512xf32> to vector<2x128xf32>
    %495 = arith.negf %494 : vector<2x128xf32>
    %496 = math.exp %495 : vector<2x128xf32>
    %cst_121 = arith.constant 1.000000e+00 : f32
    %497 = vector.broadcast %cst_121 : f32 to vector<2x128xf32>
    %498 = arith.addf %497, %496 : vector<2x128xf32>
    %499 = arith.divf %497, %498 : vector<2x128xf32>
    %500 = vector.extract_strided_slice %493 {offsets = [0, 128], sizes = [2, 128], strides = [1, 1]} : vector<2x512xf32> to vector<2x128xf32>
    %501 = arith.negf %500 : vector<2x128xf32>
    %502 = math.exp %501 : vector<2x128xf32>
    %cst_122 = arith.constant 1.000000e+00 : f32
    %503 = vector.broadcast %cst_122 : f32 to vector<2x128xf32>
    %504 = arith.addf %503, %502 : vector<2x128xf32>
    %505 = arith.divf %503, %504 : vector<2x128xf32>
    %506 = vector.extract_strided_slice %493 {offsets = [0, 256], sizes = [2, 128], strides = [1, 1]} : vector<2x512xf32> to vector<2x128xf32>
    %507 = math.tanh %506 : vector<2x128xf32>
    %508 = vector.extract_strided_slice %493 {offsets = [0, 384], sizes = [2, 128], strides = [1, 1]} : vector<2x512xf32> to vector<2x128xf32>
    %509 = arith.negf %508 : vector<2x128xf32>
    %510 = math.exp %509 : vector<2x128xf32>
    %cst_123 = arith.constant 1.000000e+00 : f32
    %511 = vector.broadcast %cst_123 : f32 to vector<2x128xf32>
    %512 = arith.addf %511, %510 : vector<2x128xf32>
    %513 = arith.divf %511, %512 : vector<2x128xf32>
    %514 = arith.mulf %505, %490 : vector<2x128xf32>
    %515 = arith.mulf %499, %507 : vector<2x128xf32>
    %516 = arith.addf %514, %515 : vector<2x128xf32>
    %517 = math.tanh %516 : vector<2x128xf32>
    %518 = arith.mulf %513, %517 : vector<2x128xf32>
    %c0_124 = arith.constant 0 : index
    %c0_125 = arith.constant 0 : index
    %519 = vector.load %arg13[%c0_124, %c0_125] : memref<16x128xf32, #tpu.memory_space<vmem>>, vector<2x128xf32>
    tpu.vector_store %arg13[%c0_124, %c0_125], %518 {strides = array<i32>} : memref<16x128xf32, #tpu.memory_space<vmem>>, vector<2x128xf32>,
    %520 = vector.extract_strided_slice %487 {offsets = [2, 0], sizes = [2, 512], strides = [1, 1]} : vector<16x512xf32> to vector<2x512xf32>
    %cst_126 = arith.constant dense<0.000000e+00> : vector<2x512xf32>
    %521 = tpu.matmul %518, %488, %cst_126 {dimension_numbers = #tpu.dot_dimension_numbers<[1], [0], [0], [1], [0, 0, 1, 1], [], []>} : vector<2x128xf32>, vector<128x512xf32>, vector<2x512xf32> -> vector<2x512xf32>
    %522 = arith.addf %520, %521 : vector<2x512xf32>
    %523 = vector.extract_strided_slice %522 {offsets = [0, 0], sizes = [2, 128], strides = [1, 1]} : vector<2x512xf32> to vector<2x128xf32>
    %524 = arith.negf %523 : vector<2x128xf32>
    %525 = math.exp %524 : vector<2x128xf32>
    %cst_127 = arith.constant 1.000000e+00 : f32
    %526 = vector.broadcast %cst_127 : f32 to vector<2x128xf32>
    %527 = arith.addf %526, %525 : vector<2x128xf32>
    %528 = arith.divf %526, %527 : vector<2x128xf32>
    %529 = vector.extract_strided_slice %522 {offsets = [0, 128], sizes = [2, 128], strides = [1, 1]} : vector<2x512xf32> to vector<2x128xf32>
    %530 = arith.negf %529 : vector<2x128xf32>
    %531 = math.exp %530 : vector<2x128xf32>
    %cst_128 = arith.constant 1.000000e+00 : f32
    %532 = vector.broadcast %cst_128 : f32 to vector<2x128xf32>
    %533 = arith.addf %532, %531 : vector<2x128xf32>
    %534 = arith.divf %532, %533 : vector<2x128xf32>
    %535 = vector.extract_strided_slice %522 {offsets = [0, 256], sizes = [2, 128], strides = [1, 1]} : vector<2x512xf32> to vector<2x128xf32>
    %536 = math.tanh %535 : vector<2x128xf32>
    %537 = vector.extract_strided_slice %522 {offsets = [0, 384], sizes = [2, 128], strides = [1, 1]} : vector<2x512xf32> to vector<2x128xf32>
    %538 = arith.negf %537 : vector<2x128xf32>
    %539 = math.exp %538 : vector<2x128xf32>
    %cst_129 = arith.constant 1.000000e+00 : f32
    %540 = vector.broadcast %cst_129 : f32 to vector<2x128xf32>
    %541 = arith.addf %540, %539 : vector<2x128xf32>
    %542 = arith.divf %540, %541 : vector<2x128xf32>
    %543 = arith.mulf %534, %516 : vector<2x128xf32>
    %544 = arith.mulf %528, %536 : vector<2x128xf32>
    %545 = arith.addf %543, %544 : vector<2x128xf32>
    %546 = math.tanh %545 : vector<2x128xf32>
    %547 = arith.mulf %542, %546 : vector<2x128xf32>
    %c2_130 = arith.constant 2 : index
    %c0_131 = arith.constant 0 : index
    %548 = vector.load %arg13[%c2_130, %c0_131] : memref<16x128xf32, #tpu.memory_space<vmem>>, vector<2x128xf32>
    tpu.vector_store %arg13[%c2_130, %c0_131], %547 {strides = array<i32>} : memref<16x128xf32, #tpu.memory_space<vmem>>, vector<2x128xf32>,
    %549 = vector.extract_strided_slice %487 {offsets = [4, 0], sizes = [2, 512], strides = [1, 1]} : vector<16x512xf32> to vector<2x512xf32>
    %cst_132 = arith.constant dense<0.000000e+00> : vector<2x512xf32>
    %550 = tpu.matmul %547, %488, %cst_132 {dimension_numbers = #tpu.dot_dimension_numbers<[1], [0], [0], [1], [0, 0, 1, 1], [], []>} : vector<2x128xf32>, vector<128x512xf32>, vector<2x512xf32> -> vector<2x512xf32>
    %551 = arith.addf %549, %550 : vector<2x512xf32>
    %552 = vector.extract_strided_slice %551 {offsets = [0, 0], sizes = [2, 128], strides = [1, 1]} : vector<2x512xf32> to vector<2x128xf32>
    %553 = arith.negf %552 : vector<2x128xf32>
    %554 = math.exp %553 : vector<2x128xf32>
    %cst_133 = arith.constant 1.000000e+00 : f32
    %555 = vector.broadcast %cst_133 : f32 to vector<2x128xf32>
    %556 = arith.addf %555, %554 : vector<2x128xf32>
    %557 = arith.divf %555, %556 : vector<2x128xf32>
    %558 = vector.extract_strided_slice %551 {offsets = [0, 128], sizes = [2, 128], strides = [1, 1]} : vector<2x512xf32> to vector<2x128xf32>
    %559 = arith.negf %558 : vector<2x128xf32>
    %560 = math.exp %559 : vector<2x128xf32>
    %cst_134 = arith.constant 1.000000e+00 : f32
    %561 = vector.broadcast %cst_134 : f32 to vector<2x128xf32>
    %562 = arith.addf %561, %560 : vector<2x128xf32>
    %563 = arith.divf %561, %562 : vector<2x128xf32>
    %564 = vector.extract_strided_slice %551 {offsets = [0, 256], sizes = [2, 128], strides = [1, 1]} : vector<2x512xf32> to vector<2x128xf32>
    %565 = math.tanh %564 : vector<2x128xf32>
    %566 = vector.extract_strided_slice %551 {offsets = [0, 384], sizes = [2, 128], strides = [1, 1]} : vector<2x512xf32> to vector<2x128xf32>
    %567 = arith.negf %566 : vector<2x128xf32>
    %568 = math.exp %567 : vector<2x128xf32>
    %cst_135 = arith.constant 1.000000e+00 : f32
    %569 = vector.broadcast %cst_135 : f32 to vector<2x128xf32>
    %570 = arith.addf %569, %568 : vector<2x128xf32>
    %571 = arith.divf %569, %570 : vector<2x128xf32>
    %572 = arith.mulf %563, %545 : vector<2x128xf32>
    %573 = arith.mulf %557, %565 : vector<2x128xf32>
    %574 = arith.addf %572, %573 : vector<2x128xf32>
    %575 = math.tanh %574 : vector<2x128xf32>
    %576 = arith.mulf %571, %575 : vector<2x128xf32>
    %c4_136 = arith.constant 4 : index
    %c0_137 = arith.constant 0 : index
    %577 = vector.load %arg13[%c4_136, %c0_137] : memref<16x128xf32, #tpu.memory_space<vmem>>, vector<2x128xf32>
    tpu.vector_store %arg13[%c4_136, %c0_137], %576 {strides = array<i32>} : memref<16x128xf32, #tpu.memory_space<vmem>>, vector<2x128xf32>,
    %578 = vector.extract_strided_slice %487 {offsets = [6, 0], sizes = [2, 512], strides = [1, 1]} : vector<16x512xf32> to vector<2x512xf32>
    %cst_138 = arith.constant dense<0.000000e+00> : vector<2x512xf32>
    %579 = tpu.matmul %576, %488, %cst_138 {dimension_numbers = #tpu.dot_dimension_numbers<[1], [0], [0], [1], [0, 0, 1, 1], [], []>} : vector<2x128xf32>, vector<128x512xf32>, vector<2x512xf32> -> vector<2x512xf32>
    %580 = arith.addf %578, %579 : vector<2x512xf32>
    %581 = vector.extract_strided_slice %580 {offsets = [0, 0], sizes = [2, 128], strides = [1, 1]} : vector<2x512xf32> to vector<2x128xf32>
    %582 = arith.negf %581 : vector<2x128xf32>
    %583 = math.exp %582 : vector<2x128xf32>
    %cst_139 = arith.constant 1.000000e+00 : f32
    %584 = vector.broadcast %cst_139 : f32 to vector<2x128xf32>
    %585 = arith.addf %584, %583 : vector<2x128xf32>
    %586 = arith.divf %584, %585 : vector<2x128xf32>
    %587 = vector.extract_strided_slice %580 {offsets = [0, 128], sizes = [2, 128], strides = [1, 1]} : vector<2x512xf32> to vector<2x128xf32>
    %588 = arith.negf %587 : vector<2x128xf32>
    %589 = math.exp %588 : vector<2x128xf32>
    %cst_140 = arith.constant 1.000000e+00 : f32
    %590 = vector.broadcast %cst_140 : f32 to vector<2x128xf32>
    %591 = arith.addf %590, %589 : vector<2x128xf32>
    %592 = arith.divf %590, %591 : vector<2x128xf32>
    %593 = vector.extract_strided_slice %580 {offsets = [0, 256], sizes = [2, 128], strides = [1, 1]} : vector<2x512xf32> to vector<2x128xf32>
    %594 = math.tanh %593 : vector<2x128xf32>
    %595 = vector.extract_strided_slice %580 {offsets = [0, 384], sizes = [2, 128], strides = [1, 1]} : vector<2x512xf32> to vector<2x128xf32>
    %596 = arith.negf %595 : vector<2x128xf32>
    %597 = math.exp %596 : vector<2x128xf32>
    %cst_141 = arith.constant 1.000000e+00 : f32
    %598 = vector.broadcast %cst_141 : f32 to vector<2x128xf32>
    %599 = arith.addf %598, %597 : vector<2x128xf32>
    %600 = arith.divf %598, %599 : vector<2x128xf32>
    %601 = arith.mulf %592, %574 : vector<2x128xf32>
    %602 = arith.mulf %586, %594 : vector<2x128xf32>
    %603 = arith.addf %601, %602 : vector<2x128xf32>
    %604 = math.tanh %603 : vector<2x128xf32>
    %605 = arith.mulf %600, %604 : vector<2x128xf32>
    %c6_142 = arith.constant 6 : index
    %c0_143 = arith.constant 0 : index
    %606 = vector.load %arg13[%c6_142, %c0_143] : memref<16x128xf32, #tpu.memory_space<vmem>>, vector<2x128xf32>
    tpu.vector_store %arg13[%c6_142, %c0_143], %605 {strides = array<i32>} : memref<16x128xf32, #tpu.memory_space<vmem>>, vector<2x128xf32>,
    %607 = vector.extract_strided_slice %487 {offsets = [8, 0], sizes = [2, 512], strides = [1, 1]} : vector<16x512xf32> to vector<2x512xf32>
    %cst_144 = arith.constant dense<0.000000e+00> : vector<2x512xf32>
    %608 = tpu.matmul %605, %488, %cst_144 {dimension_numbers = #tpu.dot_dimension_numbers<[1], [0], [0], [1], [0, 0, 1, 1], [], []>} : vector<2x128xf32>, vector<128x512xf32>, vector<2x512xf32> -> vector<2x512xf32>
    %609 = arith.addf %607, %608 : vector<2x512xf32>
    %610 = vector.extract_strided_slice %609 {offsets = [0, 0], sizes = [2, 128], strides = [1, 1]} : vector<2x512xf32> to vector<2x128xf32>
    %611 = arith.negf %610 : vector<2x128xf32>
    %612 = math.exp %611 : vector<2x128xf32>
    %cst_145 = arith.constant 1.000000e+00 : f32
    %613 = vector.broadcast %cst_145 : f32 to vector<2x128xf32>
    %614 = arith.addf %613, %612 : vector<2x128xf32>
    %615 = arith.divf %613, %614 : vector<2x128xf32>
    %616 = vector.extract_strided_slice %609 {offsets = [0, 128], sizes = [2, 128], strides = [1, 1]} : vector<2x512xf32> to vector<2x128xf32>
    %617 = arith.negf %616 : vector<2x128xf32>
    %618 = math.exp %617 : vector<2x128xf32>
    %cst_146 = arith.constant 1.000000e+00 : f32
    %619 = vector.broadcast %cst_146 : f32 to vector<2x128xf32>
    %620 = arith.addf %619, %618 : vector<2x128xf32>
    %621 = arith.divf %619, %620 : vector<2x128xf32>
    %622 = vector.extract_strided_slice %609 {offsets = [0, 256], sizes = [2, 128], strides = [1, 1]} : vector<2x512xf32> to vector<2x128xf32>
    %623 = math.tanh %622 : vector<2x128xf32>
    %624 = vector.extract_strided_slice %609 {offsets = [0, 384], sizes = [2, 128], strides = [1, 1]} : vector<2x512xf32> to vector<2x128xf32>
    %625 = arith.negf %624 : vector<2x128xf32>
    %626 = math.exp %625 : vector<2x128xf32>
    %cst_147 = arith.constant 1.000000e+00 : f32
    %627 = vector.broadcast %cst_147 : f32 to vector<2x128xf32>
    %628 = arith.addf %627, %626 : vector<2x128xf32>
    %629 = arith.divf %627, %628 : vector<2x128xf32>
    %630 = arith.mulf %621, %603 : vector<2x128xf32>
    %631 = arith.mulf %615, %623 : vector<2x128xf32>
    %632 = arith.addf %630, %631 : vector<2x128xf32>
    %633 = math.tanh %632 : vector<2x128xf32>
    %634 = arith.mulf %629, %633 : vector<2x128xf32>
    %c8_148 = arith.constant 8 : index
    %c0_149 = arith.constant 0 : index
    %635 = vector.load %arg13[%c8_148, %c0_149] : memref<16x128xf32, #tpu.memory_space<vmem>>, vector<2x128xf32>
    tpu.vector_store %arg13[%c8_148, %c0_149], %634 {strides = array<i32>} : memref<16x128xf32, #tpu.memory_space<vmem>>, vector<2x128xf32>,
    %636 = vector.extract_strided_slice %487 {offsets = [10, 0], sizes = [2, 512], strides = [1, 1]} : vector<16x512xf32> to vector<2x512xf32>
    %cst_150 = arith.constant dense<0.000000e+00> : vector<2x512xf32>
    %637 = tpu.matmul %634, %488, %cst_150 {dimension_numbers = #tpu.dot_dimension_numbers<[1], [0], [0], [1], [0, 0, 1, 1], [], []>} : vector<2x128xf32>, vector<128x512xf32>, vector<2x512xf32> -> vector<2x512xf32>
    %638 = arith.addf %636, %637 : vector<2x512xf32>
    %639 = vector.extract_strided_slice %638 {offsets = [0, 0], sizes = [2, 128], strides = [1, 1]} : vector<2x512xf32> to vector<2x128xf32>
    %640 = arith.negf %639 : vector<2x128xf32>
    %641 = math.exp %640 : vector<2x128xf32>
    %cst_151 = arith.constant 1.000000e+00 : f32
    %642 = vector.broadcast %cst_151 : f32 to vector<2x128xf32>
    %643 = arith.addf %642, %641 : vector<2x128xf32>
    %644 = arith.divf %642, %643 : vector<2x128xf32>
    %645 = vector.extract_strided_slice %638 {offsets = [0, 128], sizes = [2, 128], strides = [1, 1]} : vector<2x512xf32> to vector<2x128xf32>
    %646 = arith.negf %645 : vector<2x128xf32>
    %647 = math.exp %646 : vector<2x128xf32>
    %cst_152 = arith.constant 1.000000e+00 : f32
    %648 = vector.broadcast %cst_152 : f32 to vector<2x128xf32>
    %649 = arith.addf %648, %647 : vector<2x128xf32>
    %650 = arith.divf %648, %649 : vector<2x128xf32>
    %651 = vector.extract_strided_slice %638 {offsets = [0, 256], sizes = [2, 128], strides = [1, 1]} : vector<2x512xf32> to vector<2x128xf32>
    %652 = math.tanh %651 : vector<2x128xf32>
    %653 = vector.extract_strided_slice %638 {offsets = [0, 384], sizes = [2, 128], strides = [1, 1]} : vector<2x512xf32> to vector<2x128xf32>
    %654 = arith.negf %653 : vector<2x128xf32>
    %655 = math.exp %654 : vector<2x128xf32>
    %cst_153 = arith.constant 1.000000e+00 : f32
    %656 = vector.broadcast %cst_153 : f32 to vector<2x128xf32>
    %657 = arith.addf %656, %655 : vector<2x128xf32>
    %658 = arith.divf %656, %657 : vector<2x128xf32>
    %659 = arith.mulf %650, %632 : vector<2x128xf32>
    %660 = arith.mulf %644, %652 : vector<2x128xf32>
    %661 = arith.addf %659, %660 : vector<2x128xf32>
    %662 = math.tanh %661 : vector<2x128xf32>
    %663 = arith.mulf %658, %662 : vector<2x128xf32>
    %c10_154 = arith.constant 10 : index
    %c0_155 = arith.constant 0 : index
    %664 = vector.load %arg13[%c10_154, %c0_155] : memref<16x128xf32, #tpu.memory_space<vmem>>, vector<2x128xf32>
    tpu.vector_store %arg13[%c10_154, %c0_155], %663 {strides = array<i32>} : memref<16x128xf32, #tpu.memory_space<vmem>>, vector<2x128xf32>,
    %665 = vector.extract_strided_slice %487 {offsets = [12, 0], sizes = [2, 512], strides = [1, 1]} : vector<16x512xf32> to vector<2x512xf32>
    %cst_156 = arith.constant dense<0.000000e+00> : vector<2x512xf32>
    %666 = tpu.matmul %663, %488, %cst_156 {dimension_numbers = #tpu.dot_dimension_numbers<[1], [0], [0], [1], [0, 0, 1, 1], [], []>} : vector<2x128xf32>, vector<128x512xf32>, vector<2x512xf32> -> vector<2x512xf32>
    %667 = arith.addf %665, %666 : vector<2x512xf32>
    %668 = vector.extract_strided_slice %667 {offsets = [0, 0], sizes = [2, 128], strides = [1, 1]} : vector<2x512xf32> to vector<2x128xf32>
    %669 = arith.negf %668 : vector<2x128xf32>
    %670 = math.exp %669 : vector<2x128xf32>
    %cst_157 = arith.constant 1.000000e+00 : f32
    %671 = vector.broadcast %cst_157 : f32 to vector<2x128xf32>
    %672 = arith.addf %671, %670 : vector<2x128xf32>
    %673 = arith.divf %671, %672 : vector<2x128xf32>
    %674 = vector.extract_strided_slice %667 {offsets = [0, 128], sizes = [2, 128], strides = [1, 1]} : vector<2x512xf32> to vector<2x128xf32>
    %675 = arith.negf %674 : vector<2x128xf32>
    %676 = math.exp %675 : vector<2x128xf32>
    %cst_158 = arith.constant 1.000000e+00 : f32
    %677 = vector.broadcast %cst_158 : f32 to vector<2x128xf32>
    %678 = arith.addf %677, %676 : vector<2x128xf32>
    %679 = arith.divf %677, %678 : vector<2x128xf32>
    %680 = vector.extract_strided_slice %667 {offsets = [0, 256], sizes = [2, 128], strides = [1, 1]} : vector<2x512xf32> to vector<2x128xf32>
    %681 = math.tanh %680 : vector<2x128xf32>
    %682 = vector.extract_strided_slice %667 {offsets = [0, 384], sizes = [2, 128], strides = [1, 1]} : vector<2x512xf32> to vector<2x128xf32>
    %683 = arith.negf %682 : vector<2x128xf32>
    %684 = math.exp %683 : vector<2x128xf32>
    %cst_159 = arith.constant 1.000000e+00 : f32
    %685 = vector.broadcast %cst_159 : f32 to vector<2x128xf32>
    %686 = arith.addf %685, %684 : vector<2x128xf32>
    %687 = arith.divf %685, %686 : vector<2x128xf32>
    %688 = arith.mulf %679, %661 : vector<2x128xf32>
    %689 = arith.mulf %673, %681 : vector<2x128xf32>
    %690 = arith.addf %688, %689 : vector<2x128xf32>
    %691 = math.tanh %690 : vector<2x128xf32>
    %692 = arith.mulf %687, %691 : vector<2x128xf32>
    %c12_160 = arith.constant 12 : index
    %c0_161 = arith.constant 0 : index
    %693 = vector.load %arg13[%c12_160, %c0_161] : memref<16x128xf32, #tpu.memory_space<vmem>>, vector<2x128xf32>
    tpu.vector_store %arg13[%c12_160, %c0_161], %692 {strides = array<i32>} : memref<16x128xf32, #tpu.memory_space<vmem>>, vector<2x128xf32>,
    %694 = vector.extract_strided_slice %487 {offsets = [14, 0], sizes = [2, 512], strides = [1, 1]} : vector<16x512xf32> to vector<2x512xf32>
    %cst_162 = arith.constant dense<0.000000e+00> : vector<2x512xf32>
    %695 = tpu.matmul %692, %488, %cst_162 {dimension_numbers = #tpu.dot_dimension_numbers<[1], [0], [0], [1], [0, 0, 1, 1], [], []>} : vector<2x128xf32>, vector<128x512xf32>, vector<2x512xf32> -> vector<2x512xf32>
    %696 = arith.addf %694, %695 : vector<2x512xf32>
    %697 = vector.extract_strided_slice %696 {offsets = [0, 0], sizes = [2, 128], strides = [1, 1]} : vector<2x512xf32> to vector<2x128xf32>
    %698 = arith.negf %697 : vector<2x128xf32>
    %699 = math.exp %698 : vector<2x128xf32>
    %cst_163 = arith.constant 1.000000e+00 : f32
    %700 = vector.broadcast %cst_163 : f32 to vector<2x128xf32>
    %701 = arith.addf %700, %699 : vector<2x128xf32>
    %702 = arith.divf %700, %701 : vector<2x128xf32>
    %703 = vector.extract_strided_slice %696 {offsets = [0, 128], sizes = [2, 128], strides = [1, 1]} : vector<2x512xf32> to vector<2x128xf32>
    %704 = arith.negf %703 : vector<2x128xf32>
    %705 = math.exp %704 : vector<2x128xf32>
    %cst_164 = arith.constant 1.000000e+00 : f32
    %706 = vector.broadcast %cst_164 : f32 to vector<2x128xf32>
    %707 = arith.addf %706, %705 : vector<2x128xf32>
    %708 = arith.divf %706, %707 : vector<2x128xf32>
    %709 = vector.extract_strided_slice %696 {offsets = [0, 256], sizes = [2, 128], strides = [1, 1]} : vector<2x512xf32> to vector<2x128xf32>
    %710 = math.tanh %709 : vector<2x128xf32>
    %711 = vector.extract_strided_slice %696 {offsets = [0, 384], sizes = [2, 128], strides = [1, 1]} : vector<2x512xf32> to vector<2x128xf32>
    %712 = arith.negf %711 : vector<2x128xf32>
    %713 = math.exp %712 : vector<2x128xf32>
    %cst_165 = arith.constant 1.000000e+00 : f32
    %714 = vector.broadcast %cst_165 : f32 to vector<2x128xf32>
    %715 = arith.addf %714, %713 : vector<2x128xf32>
    %716 = arith.divf %714, %715 : vector<2x128xf32>
    %717 = arith.mulf %708, %690 : vector<2x128xf32>
    %718 = arith.mulf %702, %710 : vector<2x128xf32>
    %719 = arith.addf %717, %718 : vector<2x128xf32>
    %720 = math.tanh %719 : vector<2x128xf32>
    %721 = arith.mulf %716, %720 : vector<2x128xf32>
    %c14_166 = arith.constant 14 : index
    %c0_167 = arith.constant 0 : index
    %722 = vector.load %arg13[%c14_166, %c0_167] : memref<16x128xf32, #tpu.memory_space<vmem>>, vector<2x128xf32>
    tpu.vector_store %arg13[%c14_166, %c0_167], %721 {strides = array<i32>} : memref<16x128xf32, #tpu.memory_space<vmem>>, vector<2x128xf32>,
    %c0_168 = arith.constant 0 : index
    %c0_169 = arith.constant 0 : index
    %723 = vector.load %arg13[%c0_168, %c0_169] : memref<16x128xf32, #tpu.memory_space<vmem>>, vector<16x128xf32>
    %c0_170 = arith.constant 0 : index
    %c0_171 = arith.constant 0 : index
    %724 = vector.load %arg10[%c0_170, %c0_171] : memref<128x128xf32, #tpu.memory_space<vmem>>, vector<128x128xf32>
    %cst_172 = arith.constant dense<0.000000e+00> : vector<16x128xf32>
    %725 = tpu.matmul %723, %724, %cst_172 {dimension_numbers = #tpu.dot_dimension_numbers<[1], [0], [0], [1], [0, 0, 1, 1], [], []>} : vector<16x128xf32>, vector<128x128xf32>, vector<16x128xf32> -> vector<16x128xf32>
    %c0_173 = arith.constant 0 : index
    %c0_174 = arith.constant 0 : index
    %726 = vector.load %arg11[%c0_173, %c0_174] : memref<1x128xf32, #tpu.memory_space<vmem>>, vector<1x128xf32>
    %727 = vector.broadcast %726 : vector<1x128xf32> to vector<16x128xf32>
    %728 = arith.addf %725, %727 : vector<16x128xf32>
    %729 = math.tanh %728 : vector<16x128xf32>
    %c0_175 = arith.constant 0 : index
    %c0_176 = arith.constant 0 : index
    %730 = vector.load %arg12[%c0_175, %c0_176] : memref<16x128xf32, #tpu.memory_space<vmem>>, vector<16x128xf32>
    tpu.vector_store %arg12[%c0_175, %c0_176], %729 {strides = array<i32>} : memref<16x128xf32, #tpu.memory_space<vmem>>, vector<16x128xf32>,
    return
  }
}

</mosaic_0001>

<llo_original>
// kernel: tpu_custom_call.1
$region0: #{tpu_custom_call.1}
  #allocation0 [shape = 'u32[]', space=smem, size = 0x4, offset = 0x4, fixed_abs, tag = 'smem constant byte address 0x4 - core index']
  #allocation1 [shape = 'u32[144,128]{1,0:T(1,128)}', space=vmem, size = 0x12000, scoped, tag = 'internal scratch']
  #allocation2 [shape = 'f32[16,128]{1,0:T(8,128)}', space=vmem, size = 0x2000, scoped, tag = 'scratch operand']
  %s0 = inlined_call_operand.vmem [shape: f32[16,8], index: 0, kind: input, shape index: {}]
  %s1 = inlined_call_operand.hbm [shape: f32[8,512], index: 1, kind: input, shape index: {}]
  %s2 = inlined_call_operand.hbm [shape: f32[128,512], index: 2, kind: input, shape index: {}]
  %s3 = inlined_call_operand.vmem [shape: f32[1,512], index: 3, kind: input, shape index: {}]
  %s4 = inlined_call_operand.hbm [shape: f32[128,512], index: 4, kind: input, shape index: {}]
  %s5 = inlined_call_operand.hbm [shape: f32[128,512], index: 5, kind: input, shape index: {}]
  %s6 = inlined_call_operand.vmem [shape: f32[1,512], index: 6, kind: input, shape index: {}]
  %s7 = inlined_call_operand.hbm [shape: f32[128,512], index: 7, kind: input, shape index: {}]
  %s8 = inlined_call_operand.hbm [shape: f32[128,512], index: 8, kind: input, shape index: {}]
  %s9 = inlined_call_operand.vmem [shape: f32[1,512], index: 9, kind: input, shape index: {}]
  %s10 = inlined_call_operand.hbm [shape: f32[128,128], index: 10, kind: input, shape index: {}]
  %s11 = inlined_call_operand.vmem [shape: f32[1,128], index: 11, kind: input, shape index: {}]
  %s12 = inlined_call_operand.hbm [shape: f32[16,128], index: 12, kind: output, shape index: {}]
  %s13 = sld [smem:[#allocation0]]
  $region86: #{tpu_custom_call.1} parent=0
    _
  %s15 = ssub.s32 1, %s13
  %s16 = scalar_select 0, %s15, %s13
  $region1: #{tpu_custom_call.1} parent=0
    #allocation3 [shape = 'u8[16384]{0}', space=vmem, size = 0x4000, scoped, tag = 'input window, operand 1, single buffered']
    #allocation4 [shape = 's32[1]{0}', space=sflag, size = 0x4, scoped, tag = 'scoped memory for tpu_custom_call.1']
    #allocation5 [shape = 's32[1]{0}', space=sflag, size = 0x4, scoped, tag = 'scoped memory for tpu_custom_call.1']
    #allocation6 [shape = 'u8[262144]{0}', space=vmem, size = 0x40000, scoped, tag = 'input window, operand 2, single buffered']
    #allocation7 [shape = 's32[1]{0}', space=sflag, size = 0x4, scoped, tag = 'scoped memory for tpu_custom_call.1']
    #allocation8 [shape = 'u8[262144]{0}', space=vmem, size = 0x40000, scoped, tag = 'input window, operand 4, single buffered']
    #allocation9 [shape = 'u8[262144]{0}', space=vmem, size = 0x40000, scoped, tag = 'input window, operand 5, single buffered']
    #allocation10 [shape = 's32[1]{0}', space=sflag, size = 0x4, scoped, tag = 'scoped memory for tpu_custom_call.1']
    #allocation11 [shape = 'u8[262144]{0}', space=vmem, size = 0x40000, scoped, tag = 'input window, operand 7, single buffered']
    #allocation12 [shape = 'u8[262144]{0}', space=vmem, size = 0x40000, scoped, tag = 'input window, operand 8, single buffered']
    #allocation13 [shape = 's32[1]{0}', space=sflag, size = 0x4, scoped, tag = 'scoped memory for tpu_custom_call.1']
    #allocation14 [shape = 'u8[65536]{0}', space=vmem, size = 0x10000, scoped, tag = 'input window, operand 10, single buffered']
    #allocation15 [shape = 'u8[8192]{0}', space=vmem, size = 0x2000, scoped, tag = 'output window, operand 0, single buffered']
    %17 = vsyncpa [#allocation4], 0
    %18 = vsyncpa [#allocation7], 0
    %19 = vsyncpa [#allocation10], 0
    %20 = vsyncpa [#allocation13], 0
    %21 = vsyncpa [#allocation5], 0
    // Predicated region
    $region2: #{tpu_custom_call.1} parent=1 // pred_check
      _
    $region3: #{tpu_custom_call.1} parent=1 // pred_check_branch
      %23 = sbr.rel (0) target = $region5
    $region4: #{tpu_custom_call.1} parent=1 // pred_region
      _
    $region5: #{tpu_custom_call.1} parent=1 // pred_fallthru
      _
    // Predicated region
    $region6: #{tpu_custom_call.1} parent=1 // pred_check
      _
    $region7: #{tpu_custom_call.1} parent=1 // pred_check_branch
      %25 = sbr.rel (0) target = $region9
    $region8: #{tpu_custom_call.1} parent=1 // pred_region
      %s27 = ssub.s32 512, 512
      %28 = vsyncadd [#allocation4], %s27
      %s30 = sshll.u32 [#allocation3], 4
      %s31 = int_to_ptr.vmem [resolvable:$true] %s30
      %33 = dma.hbm_to_vmem [thread:$0]  %s1, 512, %s31, [#allocation4]
    $region9: #{tpu_custom_call.1} parent=1 // pred_fallthru
      _
    // Predicated region
    $region10: #{tpu_custom_call.1} parent=1 // pred_check
      _
    $region11: #{tpu_custom_call.1} parent=1 // pred_check_branch
      %35 = sbr.rel (0) target = $region13
    $region12: #{tpu_custom_call.1} parent=1 // pred_region
      %s37 = ssub.s32 8192, 8192
      %38 = vsyncadd [#allocation7], %s37
      %s39 = sshll.u32 [#allocation6], 4
      %s40 = int_to_ptr.vmem [resolvable:$true] %s39
      %45 = dma.hbm_to_vmem [thread:$0]  %s2, 8192, %s40, [#allocation7], 512, 512, 32
    $region13: #{tpu_custom_call.1} parent=1 // pred_fallthru
      _
    // Predicated region
    $region14: #{tpu_custom_call.1} parent=1 // pred_check
      _
    $region15: #{tpu_custom_call.1} parent=1 // pred_check_branch
      %47 = sbr.rel (0) target = $region17
    $region16: #{tpu_custom_call.1} parent=1 // pred_region
      _
    $region17: #{tpu_custom_call.1} parent=1 // pred_fallthru
      _
    // Predicated region
    $region18: #{tpu_custom_call.1} parent=1 // pred_check
      _
    $region19: #{tpu_custom_call.1} parent=1 // pred_check_branch
      %49 = sbr.rel (0) target = $region21
    $region20: #{tpu_custom_call.1} parent=1 // pred_region
      %s51 = ssub.s32 8192, 8192
      %52 = vsyncadd [#allocation7], %s51
      %s53 = sshll.u32 [#allocation8], 4
      %s54 = int_to_ptr.vmem [resolvable:$true] %s53
      %59 = dma.hbm_to_vmem [thread:$0]  %s4, 8192, %s54, [#allocation7], 512, 512, 32
    $region21: #{tpu_custom_call.1} parent=1 // pred_fallthru
      _
    // Predicated region
    $region22: #{tpu_custom_call.1} parent=1 // pred_check
      _
    $region23: #{tpu_custom_call.1} parent=1 // pred_check_branch
      %61 = sbr.rel (0) target = $region25
    $region24: #{tpu_custom_call.1} parent=1 // pred_region
      %s63 = ssub.s32 8192, 8192
      %64 = vsyncadd [#allocation10], %s63
      %s65 = sshll.u32 [#allocation9], 4
      %s66 = int_to_ptr.vmem [resolvable:$true] %s65
      %71 = dma.hbm_to_vmem [thread:$0]  %s5, 8192, %s66, [#allocation10], 512, 512, 32
    $region25: #{tpu_custom_call.1} parent=1 // pred_fallthru
      _
    // Predicated region
    $region26: #{tpu_custom_call.1} parent=1 // pred_check
      _
    $region27: #{tpu_custom_call.1} parent=1 // pred_check_branch
      %73 = sbr.rel (0) target = $region29
    $region28: #{tpu_custom_call.1} parent=1 // pred_region
      _
    $region29: #{tpu_custom_call.1} parent=1 // pred_fallthru
      _
    // Predicated region
    $region30: #{tpu_custom_call.1} parent=1 // pred_check
      _
    $region31: #{tpu_custom_call.1} parent=1 // pred_check_branch
      %75 = sbr.rel (0) target = $region33
    $region32: #{tpu_custom_call.1} parent=1 // pred_region
      %s77 = ssub.s32 8192, 8192
      %78 = vsyncadd [#allocation10], %s77
      %s79 = sshll.u32 [#allocation11], 4
      %s80 = int_to_ptr.vmem [resolvable:$true] %s79
      %85 = dma.hbm_to_vmem [thread:$0]  %s7, 8192, %s80, [#allocation10], 512, 512, 32
    $region33: #{tpu_custom_call.1} parent=1 // pred_fallthru
      _
    // Predicated region
    $region34: #{tpu_custom_call.1} parent=1 // pred_check
      _
    $region35: #{tpu_custom_call.1} parent=1 // pred_check_branch
      %87 = sbr.rel (0) target = $region37
    $region36: #{tpu_custom_call.1} parent=1 // pred_region
      %s89 = ssub.s32 8192, 8192
      %90 = vsyncadd [#allocation13], %s89
      %s91 = sshll.u32 [#allocation12], 4
      %s92 = int_to_ptr.vmem [resolvable:$true] %s91
      %97 = dma.hbm_to_vmem [thread:$0]  %s8, 8192, %s92, [#allocation13], 512, 512, 32
    $region37: #{tpu_custom_call.1} parent=1 // pred_fallthru
      _
    // Predicated region
    $region38: #{tpu_custom_call.1} parent=1 // pred_check
      _
    $region39: #{tpu_custom_call.1} parent=1 // pred_check_branch
      %99 = sbr.rel (0) target = $region41
    $region40: #{tpu_custom_call.1} parent=1 // pred_region
      _
    $region41: #{tpu_custom_call.1} parent=1 // pred_fallthru
      _
    // Predicated region
    $region42: #{tpu_custom_call.1} parent=1 // pred_check
      _
    $region43: #{tpu_custom_call.1} parent=1 // pred_check_branch
      %101 = sbr.rel (0) target = $region45
    $region44: #{tpu_custom_call.1} parent=1 // pred_region
      %s103 = ssub.s32 2048, 2048
      %104 = vsyncadd [#allocation13], %s103
      %s105 = sshll.u32 [#allocation14], 4
      %s106 = int_to_ptr.vmem [resolvable:$true] %s105
      %111 = dma.hbm_to_vmem [thread:$0]  %s10, 2048, %s106, [#allocation13], 128, 128, 8
    $region45: #{tpu_custom_call.1} parent=1 // pred_fallthru
      _
    // Predicated region
    $region46: #{tpu_custom_call.1} parent=1 // pred_check
      _
    $region47: #{tpu_custom_call.1} parent=1 // pred_check_branch
      %113 = sbr.rel (0) target = $region49
    $region48: #{tpu_custom_call.1} parent=1 // pred_region
      _
    $region49: #{tpu_custom_call.1} parent=1 // pred_fallthru
      _
    // Predicated region
    $region50: #{tpu_custom_call.1} parent=1 // pred_check
      _
    $region51: #{tpu_custom_call.1} parent=1 // pred_check_branch
      %115 = sbr.rel (0) target = $region53
    $region52: #{tpu_custom_call.1} parent=1 // pred_region
      %116 = dma.done [#allocation4], 512
    $region53: #{tpu_custom_call.1} parent=1 // pred_fallthru
      _
    // Predicated region
    $region54: #{tpu_custom_call.1} parent=1 // pred_check
      _
    $region55: #{tpu_custom_call.1} parent=1 // pred_check_branch
      %118 = sbr.rel (0) target = $region57
    $region56: #{tpu_custom_call.1} parent=1 // pred_region
      %119 = dma.done [#allocation7], 8192
    $region57: #{tpu_custom_call.1} parent=1 // pred_fallthru
      _
    // Predicated region
    $region58: #{tpu_custom_call.1} parent=1 // pred_check
      _
    $region59: #{tpu_custom_call.1} parent=1 // pred_check_branch
      %121 = sbr.rel (0) target = $region61
    $region60: #{tpu_custom_call.1} parent=1 // pred_region
      %122 = dma.done [#allocation7], 8192
    $region61: #{tpu_custom_call.1} parent=1 // pred_fallthru
      _
    // Predicated region
    $region62: #{tpu_custom_call.1} parent=1 // pred_check
      _
    $region63: #{tpu_custom_call.1} parent=1 // pred_check_branch
      %124 = sbr.rel (0) target = $region65
    $region64: #{tpu_custom_call.1} parent=1 // pred_region
      %125 = dma.done [#allocation10], 8192
    $region65: #{tpu_custom_call.1} parent=1 // pred_fallthru
      _
    // Predicated region
    $region66: #{tpu_custom_call.1} parent=1 // pred_check
      _
    $region67: #{tpu_custom_call.1} parent=1 // pred_check_branch
      %127 = sbr.rel (0) target = $region69
    $region68: #{tpu_custom_call.1} parent=1 // pred_region
      %128 = dma.done [#allocation10], 8192
    $region69: #{tpu_custom_call.1} parent=1 // pred_fallthru
      _
    // Predicated region
    $region70: #{tpu_custom_call.1} parent=1 // pred_check
      _
    $region71: #{tpu_custom_call.1} parent=1 // pred_check_branch
      %130 = sbr.rel (0) target = $region73
    $region72: #{tpu_custom_call.1} parent=1 // pred_region
      %131 = dma.done [#allocation13], 8192
    $region73: #{tpu_custom_call.1} parent=1 // pred_fallthru
      _
    // Predicated region
    $region74: #{tpu_custom_call.1} parent=1 // pred_check
      _
    $region75: #{tpu_custom_call.1} parent=1 // pred_check_branch
      %133 = sbr.rel (0) target = $region77
    $region76: #{tpu_custom_call.1} parent=1 // pred_region
      %134 = dma.done [#allocation13], 2048
    $region77: #{tpu_custom_call.1} parent=1 // pred_fallthru
      _
    %v135 = vld [vmem:[%s0] sm:$0xff]
    %v136 = vld [vmem:[%s0 + $0x8] sm:$0xff]
    %v137 = vld [vmem:[#allocation3] sm:$0xff]
    %v138 = vld [vmem:[#allocation3 + $0x8] sm:$0xff]
    %v139 = vld [vmem:[#allocation3 + $0x10] sm:$0xff]
    %v140 = vld [vmem:[#allocation3 + $0x18] sm:$0xff]
    %v141 = vld [vmem:[%s3] sm:$0xf]
    %v143 = vlaneseq
    %v144 = vshrl.u32 %v143, 7
    %v145 = vsub.s32 0, %v144
    %v146 = vrot.slane %v141, %v145
    %v147 = vlaneseq
    %v148 = vshrl.u32 %v147, 7
    %v149 = vsub.s32 1, %v148
    %v150 = vrot.slane %v141, %v149
    %v151 = vlaneseq
    %v152 = vshrl.u32 %v151, 7
    %v153 = vsub.s32 2, %v152
    %v154 = vrot.slane %v141, %v153
    %v155 = vlaneseq
    %v156 = vshrl.u32 %v155, 7
    %v157 = vsub.s32 3, %v156
    %v158 = vrot.slane %v141, %v157
    %vm163 = vcmask 64512
    %v165 = vsel %vm163, %v135, 0
    %v168 = vsel %vm163, %v136, 0
    %170 = vmatprep.subr.mxu0 0.0
    %171 = vmatpush1.msra.mxu0 0.0
    %172 = vmatprep.subr.mxu0 0.0
    %173 = vmatpush1.msra.mxu0 0.0
    %174 = vmatprep.subr.mxu0 0.0
    %175 = vmatpush1.msra.mxu0 0.0
    %176 = vmatprep.subr.mxu0 0.0
    %177 = vmatpush1.msra.mxu0 0.0
    %178 = vmatprep.subr.mxu0 0.0
    %179 = vmatpush1.msra.mxu0 0.0
    %180 = vmatprep.subr.mxu0 0.0
    %181 = vmatpush1.msra.mxu0 0.0
    %182 = vmatprep.subr.mxu0 0.0
    %183 = vmatpush1.msra.mxu0 0.0
    %184 = vmatprep.subr.mxu0 0.0
    %185 = vmatpush1.msra.mxu0 0.0
    %186 = vmatprep.subr.mxu0 0.0
    %187 = vmatpush1.msra.mxu0 0.0
    %188 = vmatprep.subr.mxu0 0.0
    %189 = vmatpush1.msra.mxu0 0.0
    %190 = vmatprep.subr.mxu0 0.0
    %191 = vmatpush1.msra.mxu0 0.0
    %192 = vmatprep.subr.mxu0 0.0
    %193 = vmatpush1.msra.mxu0 0.0
    %194 = vmatprep.subr.mxu0 0.0
    %195 = vmatpush1.msra.mxu0 0.0
    %196 = vmatprep.subr.mxu0 0.0
    %197 = vmatpush1.msra.mxu0 0.0
    %198 = vmatprep.subr.mxu0 0.0
    %199 = vmatpush1.msra.mxu0 0.0
    %200 = vmatprep.subr.mxu0 %v138
    %201 = vmatpush1.msra.mxu0 %v137
    %202 = vmatprep.subr.mxu0 0.0
    %203 = vmatpush2.msra.mxu0 0.0
    %204 = vmatprep.subr.mxu0 0.0
    %205 = vmatpush2.msra.mxu0 0.0
    %206 = vmatprep.subr.mxu0 0.0
    %207 = vmatpush2.msra.mxu0 0.0
    %208 = vmatprep.subr.mxu0 0.0
    %209 = vmatpush2.msra.mxu0 0.0
    %210 = vmatprep.subr.mxu0 0.0
    %211 = vmatpush2.msra.mxu0 0.0
    %212 = vmatprep.subr.mxu0 0.0
    %213 = vmatpush2.msra.mxu0 0.0
    %214 = vmatprep.subr.mxu0 0.0
    %215 = vmatpush2.msra.mxu0 0.0
    %216 = vmatprep.subr.mxu0 0.0
    %217 = vmatpush2.msra.mxu0 0.0
    %218 = vmatprep.subr.mxu0 0.0
    %219 = vmatpush2.msra.mxu0 0.0
    %220 = vmatprep.subr.mxu0 0.0
    %221 = vmatpush2.msra.mxu0 0.0
    %222 = vmatprep.subr.mxu0 0.0
    %223 = vmatpush2.msra.mxu0 0.0
    %224 = vmatprep.subr.mxu0 0.0
    %225 = vmatpush2.msra.mxu0 0.0
    %226 = vmatprep.subr.mxu0 0.0
    %227 = vmatpush2.msra.mxu0 0.0
    %228 = vmatprep.subr.mxu0 0.0
    %229 = vmatpush2.msra.mxu0 0.0
    %230 = vmatprep.subr.mxu0 0.0
    %231 = vmatpush2.msra.mxu0 0.0
    %232 = vmatprep.subr.mxu0 0.0
    %233 = vmatpush2.msra.mxu0 0.0
    %234 = vmatprep.mubr.f32.mxu0 0.0
    %235 = vmatmul.mubr.f32.gmra.mxu0 %v165
    %v236 = vpop.f32.mrf.mxu0
    %v237 = vadd.f32 %v146, %v236
    %v238 = vpop.f32.mrf.mxu0
    %v239 = vadd.f32 %v150, %v238
    %240 = vmatprep.mubr.f32.mxu0 0.0
    %241 = vmatmul.mubr.f32.gmra.mxu0 %v168
    %v242 = vpop.f32.mrf.mxu0
    %v243 = vadd.f32 %v146, %v242
    %v244 = vpop.f32.mrf.mxu0
    %v245 = vadd.f32 %v150, %v244
    %246 = vdwg.mxu0
    %247 = vmatprep.subr.mxu0 0.0
    %248 = vmatpush1.msra.mxu0 0.0
    %249 = vmatprep.subr.mxu0 0.0
    %250 = vmatpush1.msra.mxu0 0.0
    %251 = vmatprep.subr.mxu0 0.0
    %252 = vmatpush1.msra.mxu0 0.0
    %253 = vmatprep.subr.mxu0 0.0
    %254 = vmatpush1.msra.mxu0 0.0
    %255 = vmatprep.subr.mxu0 0.0
    %256 = vmatpush1.msra.mxu0 0.0
    %257 = vmatprep.subr.mxu0 0.0
    %258 = vmatpush1.msra.mxu0 0.0
    %259 = vmatprep.subr.mxu0 0.0
    %260 = vmatpush1.msra.mxu0 0.0
    %261 = vmatprep.subr.mxu0 0.0
    %262 = vmatpush1.msra.mxu0 0.0
    %263 = vmatprep.subr.mxu0 0.0
    %264 = vmatpush1.msra.mxu0 0.0
    %265 = vmatprep.subr.mxu0 0.0
    %266 = vmatpush1.msra.mxu0 0.0
    %267 = vmatprep.subr.mxu0 0.0
    %268 = vmatpush1.msra.mxu0 0.0
    %269 = vmatprep.subr.mxu0 0.0
    %270 = vmatpush1.msra.mxu0 0.0
    %271 = vmatprep.subr.mxu0 0.0
    %272 = vmatpush1.msra.mxu0 0.0
    %273 = vmatprep.subr.mxu0 0.0
    %274 = vmatpush1.msra.mxu0 0.0
    %275 = vmatprep.subr.mxu0 0.0
    %276 = vmatpush1.msra.mxu0 0.0
    %277 = vmatprep.subr.mxu0 %v140
    %278 = vmatpush1.msra.mxu0 %v139
    %279 = vmatprep.subr.mxu0 0.0
    %280 = vmatpush2.msra.mxu0 0.0
    %281 = vmatprep.subr.mxu0 0.0
    %282 = vmatpush2.msra.mxu0 0.0
    %283 = vmatprep.subr.mxu0 0.0
    %284 = vmatpush2.msra.mxu0 0.0
    %285 = vmatprep.subr.mxu0 0.0
    %286 = vmatpush2.msra.mxu0 0.0
    %287 = vmatprep.subr.mxu0 0.0
    %288 = vmatpush2.msra.mxu0 0.0
    %289 = vmatprep.subr.mxu0 0.0
    %290 = vmatpush2.msra.mxu0 0.0
    %291 = vmatprep.subr.mxu0 0.0
    %292 = vmatpush2.msra.mxu0 0.0
    %293 = vmatprep.subr.mxu0 0.0
    %294 = vmatpush2.msra.mxu0 0.0
    %295 = vmatprep.subr.mxu0 0.0
    %296 = vmatpush2.msra.mxu0 0.0
    %297 = vmatprep.subr.mxu0 0.0
    %298 = vmatpush2.msra.mxu0 0.0
    %299 = vmatprep.subr.mxu0 0.0
    %300 = vmatpush2.msra.mxu0 0.0
    %301 = vmatprep.subr.mxu0 0.0
    %302 = vmatpush2.msra.mxu0 0.0
    %303 = vmatprep.subr.mxu0 0.0
    %304 = vmatpush2.msra.mxu0 0.0
    %305 = vmatprep.subr.mxu0 0.0
    %306 = vmatpush2.msra.mxu0 0.0
    %307 = vmatprep.subr.mxu0 0.0
    %308 = vmatpush2.msra.mxu0 0.0
    %309 = vmatprep.subr.mxu0 0.0
    %310 = vmatpush2.msra.mxu0 0.0
    %311 = vmatprep.mubr.f32.mxu0 0.0
    %312 = vmatmul.mubr.f32.gmra.mxu0 %v165
    %v313 = vpop.f32.mrf.mxu0
    %v314 = vadd.f32 %v154, %v313
    %v315 = vpop.f32.mrf.mxu0
    %v316 = vadd.f32 %v158, %v315
    %317 = vmatprep.mubr.f32.mxu0 0.0
    %318 = vmatmul.mubr.f32.gmra.mxu0 %v168
    %v319 = vpop.f32.mrf.mxu0
    %v320 = vadd.f32 %v154, %v319
    %v321 = vpop.f32.mrf.mxu0
    %v322 = vadd.f32 %v158, %v321
    %323 = vdwg.mxu0
    %v324 = vld [vmem:[#allocation6] sm:$0xff]
    %v325 = vld [vmem:[#allocation6 + $0x8] sm:$0xff]
    %v326 = vld [vmem:[#allocation6 + $0x10] sm:$0xff]
    %v327 = vld [vmem:[#allocation6 + $0x18] sm:$0xff]
    %v328 = vld [vmem:[#allocation6 + $0x20] sm:$0xff]
    %v329 = vld [vmem:[#allocation6 + $0x28] sm:$0xff]
    %v330 = vld [vmem:[#allocation6 + $0x30] sm:$0xff]
    %v331 = vld [vmem:[#allocation6 + $0x38] sm:$0xff]
    %v332 = vld [vmem:[#allocation6 + $0x40] sm:$0xff]
    %v333 = vld [vmem:[#allocation6 + $0x48] sm:$0xff]
    %v334 = vld [vmem:[#allocation6 + $0x50] sm:$0xff]
    %v335 = vld [vmem:[#allocation6 + $0x58] sm:$0xff]
    %v336 = vld [vmem:[#allocation6 + $0x60] sm:$0xff]
    %v337 = vld [vmem:[#allocation6 + $0x68] sm:$0xff]
    %v338 = vld [vmem:[#allocation6 + $0x70] sm:$0xff]
    %v339 = vld [vmem:[#allocation6 + $0x78] sm:$0xff]
    %v340 = vld [vmem:[#allocation6 + $0x80] sm:$0xff]
    %v341 = vld [vmem:[#allocation6 + $0x88] sm:$0xff]
    %v342 = vld [vmem:[#allocation6 + $0x90] sm:$0xff]
    %v343 = vld [vmem:[#allocation6 + $0x98] sm:$0xff]
    %v344 = vld [vmem:[#allocation6 + $0xa0] sm:$0xff]
    %v345 = vld [vmem:[#allocation6 + $0xa8] sm:$0xff]
    %v346 = vld [vmem:[#allocation6 + $0xb0] sm:$0xff]
    %v347 = vld [vmem:[#allocation6 + $0xb8] sm:$0xff]
    %v348 = vld [vmem:[#allocation6 + $0xc0] sm:$0xff]
    %v349 = vld [vmem:[#allocation6 + $0xc8] sm:$0xff]
    %v350 = vld [vmem:[#allocation6 + $0xd0] sm:$0xff]
    %v351 = vld [vmem:[#allocation6 + $0xd8] sm:$0xff]
    %v352 = vld [vmem:[#allocation6 + $0xe0] sm:$0xff]
    %v353 = vld [vmem:[#allocation6 + $0xe8] sm:$0xff]
    %v354 = vld [vmem:[#allocation6 + $0xf0] sm:$0xff]
    %v355 = vld [vmem:[#allocation6 + $0xf8] sm:$0xff]
    %v356 = vld [vmem:[#allocation6 + $0x100] sm:$0xff]
    %v357 = vld [vmem:[#allocation6 + $0x108] sm:$0xff]
    %v358 = vld [vmem:[#allocation6 + $0x110] sm:$0xff]
    %v359 = vld [vmem:[#allocation6 + $0x118] sm:$0xff]
    %v360 = vld [vmem:[#allocation6 + $0x120] sm:$0xff]
    %v361 = vld [vmem:[#allocation6 + $0x128] sm:$0xff]
    %v362 = vld [vmem:[#allocation6 + $0x130] sm:$0xff]
    %v363 = vld [vmem:[#allocation6 + $0x138] sm:$0xff]
    %v364 = vld [vmem:[#allocation6 + $0x140] sm:$0xff]
    %v365 = vld [vmem:[#allocation6 + $0x148] sm:$0xff]
    %v366 = vld [vmem:[#allocation6 + $0x150] sm:$0xff]
    %v367 = vld [vmem:[#allocation6 + $0x158] sm:$0xff]
    %v368 = vld [vmem:[#allocation6 + $0x160] sm:$0xff]
    %v369 = vld [vmem:[#allocation6 + $0x168] sm:$0xff]
    %v370 = vld [vmem:[#allocation6 + $0x170] sm:$0xff]
    %v371 = vld [vmem:[#allocation6 + $0x178] sm:$0xff]
    %v372 = vld [vmem:[#allocation6 + $0x180] sm:$0xff]
    %v373 = vld [vmem:[#allocation6 + $0x188] sm:$0xff]
    %v374 = vld [vmem:[#allocation6 + $0x190] sm:$0xff]
    %v375 = vld [vmem:[#allocation6 + $0x198] sm:$0xff]
    %v376 = vld [vmem:[#allocation6 + $0x1a0] sm:$0xff]
    %v377 = vld [vmem:[#allocation6 + $0x1a8] sm:$0xff]
    %v378 = vld [vmem:[#allocation6 + $0x1b0] sm:$0xff]
    %v379 = vld [vmem:[#allocation6 + $0x1b8] sm:$0xff]
    %v380 = vld [vmem:[#allocation6 + $0x1c0] sm:$0xff]
    %v381 = vld [vmem:[#allocation6 + $0x1c8] sm:$0xff]
    %v382 = vld [vmem:[#allocation6 + $0x1d0] sm:$0xff]
    %v383 = vld [vmem:[#allocation6 + $0x1d8] sm:$0xff]
    %v384 = vld [vmem:[#allocation6 + $0x1e0] sm:$0xff]
    %v385 = vld [vmem:[#allocation6 + $0x1e8] sm:$0xff]
    %v386 = vld [vmem:[#allocation6 + $0x1f0] sm:$0xff]
    %v387 = vld [vmem:[#allocation6 + $0x1f8] sm:$0xff]
    %388 = vmatprep.subr.mxu0 %v385
    %389 = vmatpush1.msra.mxu0 %v384
    %390 = vmatprep.subr.mxu0 %v381
    %391 = vmatpush1.msra.mxu0 %v380
    %392 = vmatprep.subr.mxu0 %v377
    %393 = vmatpush1.msra.mxu0 %v376
    %394 = vmatprep.subr.mxu0 %v373
    %395 = vmatpush1.msra.mxu0 %v372
    %396 = vmatprep.subr.mxu0 %v369
    %397 = vmatpush1.msra.mxu0 %v368
    %398 = vmatprep.subr.mxu0 %v365
    %399 = vmatpush1.msra.mxu0 %v364
    %400 = vmatprep.subr.mxu0 %v361
    %401 = vmatpush1.msra.mxu0 %v360
    %402 = vmatprep.subr.mxu0 %v357
    %403 = vmatpush1.msra.mxu0 %v356
    %404 = vmatprep.subr.mxu0 %v353
    %405 = vmatpush1.msra.mxu0 %v352
    %406 = vmatprep.subr.mxu0 %v349
    %407 = vmatpush1.msra.mxu0 %v348
    %408 = vmatprep.subr.mxu0 %v345
    %409 = vmatpush1.msra.mxu0 %v344
    %410 = vmatprep.subr.mxu0 %v341
    %411 = vmatpush1.msra.mxu0 %v340
    %412 = vmatprep.subr.mxu0 %v337
    %413 = vmatpush1.msra.mxu0 %v336
    %414 = vmatprep.subr.mxu0 %v333
    %415 = vmatpush1.msra.mxu0 %v332
    %416 = vmatprep.subr.mxu0 %v329
    %417 = vmatpush1.msra.mxu0 %v328
    %418 = vmatprep.subr.mxu0 %v325
    %419 = vmatpush1.msra.mxu0 %v324
    %420 = vmatprep.subr.mxu0 0.0
    %421 = vmatpush2.msra.mxu0 0.0
    %422 = vmatprep.subr.mxu0 0.0
    %423 = vmatpush2.msra.mxu0 0.0
    %424 = vmatprep.subr.mxu0 0.0
    %425 = vmatpush2.msra.mxu0 0.0
    %426 = vmatprep.subr.mxu0 0.0
    %427 = vmatpush2.msra.mxu0 0.0
    %428 = vmatprep.subr.mxu0 0.0
    %429 = vmatpush2.msra.mxu0 0.0
    %430 = vmatprep.subr.mxu0 0.0
    %431 = vmatpush2.msra.mxu0 0.0
    %432 = vmatprep.subr.mxu0 0.0
    %433 = vmatpush2.msra.mxu0 0.0
    %434 = vmatprep.subr.mxu0 0.0
    %435 = vmatpush2.msra.mxu0 0.0
    %436 = vmatprep.subr.mxu0 0.0
    %437 = vmatpush2.msra.mxu0 0.0
    %438 = vmatprep.subr.mxu0 0.0
    %439 = vmatpush2.msra.mxu0 0.0
    %440 = vmatprep.subr.mxu0 0.0
    %441 = vmatpush2.msra.mxu0 0.0
    %442 = vmatprep.subr.mxu0 0.0
    %443 = vmatpush2.msra.mxu0 0.0
    %444 = vmatprep.subr.mxu0 0.0
    %445 = vmatpush2.msra.mxu0 0.0
    %446 = vmatprep.subr.mxu0 0.0
    %447 = vmatpush2.msra.mxu0 0.0
    %448 = vmatprep.subr.mxu0 0.0
    %449 = vmatpush2.msra.mxu0 0.0
    %450 = vmatprep.subr.mxu0 0.0
    %451 = vmatpush2.msra.mxu0 0.0
    %452 = vmatprep.mubr.f32.mxu0 0.0
    %453 = vmatmul.mubr.f32.gmra.mxu0 0.0
    %v454 = vpop.f32.mrf.mxu0
    %v455 = vadd.f32 0.0, %v454
    %v456 = vpop.f32.mrf.mxu0
    %v457 = vadd.f32 0.0, %v456
    %458 = vdwg.mxu0
    %459 = vmatprep.subr.mxu0 %v387
    %460 = vmatpush1.msra.mxu0 %v386
    %461 = vmatprep.subr.mxu0 %v383
    %462 = vmatpush1.msra.mxu0 %v382
    %463 = vmatprep.subr.mxu0 %v379
    %464 = vmatpush1.msra.mxu0 %v378
    %465 = vmatprep.subr.mxu0 %v375
    %466 = vmatpush1.msra.mxu0 %v374
    %467 = vmatprep.subr.mxu0 %v371
    %468 = vmatpush1.msra.mxu0 %v370
    %469 = vmatprep.subr.mxu0 %v367
    %470 = vmatpush1.msra.mxu0 %v366
    %471 = vmatprep.subr.mxu0 %v363
    %472 = vmatpush1.msra.mxu0 %v362
    %473 = vmatprep.subr.mxu0 %v359
    %474 = vmatpush1.msra.mxu0 %v358
    %475 = vmatprep.subr.mxu0 %v355
    %476 = vmatpush1.msra.mxu0 %v354
    %477 = vmatprep.subr.mxu0 %v351
    %478 = vmatpush1.msra.mxu0 %v350
    %479 = vmatprep.subr.mxu0 %v347
    %480 = vmatpush1.msra.mxu0 %v346
    %481 = vmatprep.subr.mxu0 %v343
    %482 = vmatpush1.msra.mxu0 %v342
    %483 = vmatprep.subr.mxu0 %v339
    %484 = vmatpush1.msra.mxu0 %v338
    %485 = vmatprep.subr.mxu0 %v335
    %486 = vmatpush1.msra.mxu0 %v334
    %487 = vmatprep.subr.mxu0 %v331
    %488 = vmatpush1.msra.mxu0 %v330
    %489 = vmatprep.subr.mxu0 %v327
    %490 = vmatpush1.msra.mxu0 %v326
    %491 = vmatprep.subr.mxu0 0.0
    %492 = vmatpush2.msra.mxu0 0.0
    %493 = vmatprep.subr.mxu0 0.0
    %494 = vmatpush2.msra.mxu0 0.0
    %495 = vmatprep.subr.mxu0 0.0
    %496 = vmatpush2.msra.mxu0 0.0
    %497 = vmatprep.subr.mxu0 0.0
    %498 = vmatpush2.msra.mxu0 0.0
    %499 = vmatprep.subr.mxu0 0.0
    %500 = vmatpush2.msra.mxu0 0.0
    %501 = vmatprep.subr.mxu0 0.0
    %502 = vmatpush2.msra.mxu0 0.0
    %503 = vmatprep.subr.mxu0 0.0
    %504 = vmatpush2.msra.mxu0 0.0
    %505 = vmatprep.subr.mxu0 0.0
    %506 = vmatpush2.msra.mxu0 0.0
    %507 = vmatprep.subr.mxu0 0.0
    %508 = vmatpush2.msra.mxu0 0.0
    %509 = vmatprep.subr.mxu0 0.0
    %510 = vmatpush2.msra.mxu0 0.0
    %511 = vmatprep.subr.mxu0 0.0
    %512 = vmatpush2.msra.mxu0 0.0
    %513 = vmatprep.subr.mxu0 0.0
    %514 = vmatpush2.msra.mxu0 0.0
    %515 = vmatprep.subr.mxu0 0.0
    %516 = vmatpush2.msra.mxu0 0.0
    %517 = vmatprep.subr.mxu0 0.0
    %518 = vmatpush2.msra.mxu0 0.0
    %519 = vmatprep.subr.mxu0 0.0
    %520 = vmatpush2.msra.mxu0 0.0
    %521 = vmatprep.subr.mxu0 0.0
    %522 = vmatpush2.msra.mxu0 0.0
    %523 = vmatprep.mubr.f32.mxu0 0.0
    %524 = vmatmul.mubr.f32.gmra.mxu0 0.0
    %v525 = vpop.f32.mrf.mxu0
    %v526 = vadd.f32 0.0, %v525
    %v527 = vpop.f32.mrf.mxu0
    %v528 = vadd.f32 0.0, %v527
    %529 = vdwg.mxu0
    %v530 = vadd.f32 %v237, %v455
    %v531 = vadd.f32 %v239, %v457
    %v532 = vadd.f32 %v314, %v526
    %v533 = vadd.f32 %v316, %v528
    %v534 = vxor.u32 %v530, 2147483648
    %v535 = vmul.f32 %v534, 1.442695
    %v536 = vpow.pop %v535
    %v537 = vadd.f32 %v536, 1.0
    %v538 = vrcp.pop %v537
    %v539 = vmul.f32 1.0, %v538
    %v540 = vxor.u32 %v531, 2147483648
    %v541 = vmul.f32 %v540, 1.442695
    %v542 = vpow.pop %v541
    %v543 = vadd.f32 %v542, 1.0
    %v544 = vrcp.pop %v543
    %v545 = vmul.f32 1.0, %v544
    %v546 = vtanh.pop %v532
    %v547 = vxor.u32 %v533, 2147483648
    %v548 = vmul.f32 %v547, 1.442695
    %v549 = vpow.pop %v548
    %v550 = vadd.f32 %v549, 1.0
    %v551 = vrcp.pop %v550
    %v552 = vmul.f32 1.0, %v551
    %v553 = vmul.f32 %v545, 0.0
    %v554 = vmul.f32 %v539, %v546
    %v555 = vadd.f32 %v553, %v554
    %v556 = vtanh.pop %v555
    %v557 = vmul.f32 %v552, %v556
    %558 = vst [vmem:[#allocation2] sm:$0x3] %v557
    %559 = vmatprep.subr.mxu0 %v385
    %560 = vmatpush1.msra.mxu0 %v384
    %561 = vmatprep.subr.mxu0 %v381
    %562 = vmatpush1.msra.mxu0 %v380
    %563 = vmatprep.subr.mxu0 %v377
    %564 = vmatpush1.msra.mxu0 %v376
    %565 = vmatprep.subr.mxu0 %v373
    %566 = vmatpush1.msra.mxu0 %v372
    %567 = vmatprep.subr.mxu0 %v369
    %568 = vmatpush1.msra.mxu0 %v368
    %569 = vmatprep.subr.mxu0 %v365
    %570 = vmatpush1.msra.mxu0 %v364
    %571 = vmatprep.subr.mxu0 %v361
    %572 = vmatpush1.msra.mxu0 %v360
    %573 = vmatprep.subr.mxu0 %v357
    %574 = vmatpush1.msra.mxu0 %v356
    %575 = vmatprep.subr.mxu0 %v353
    %576 = vmatpush1.msra.mxu0 %v352
    %577 = vmatprep.subr.mxu0 %v349
    %578 = vmatpush1.msra.mxu0 %v348
    %579 = vmatprep.subr.mxu0 %v345
    %580 = vmatpush1.msra.mxu0 %v344
    %581 = vmatprep.subr.mxu0 %v341
    %582 = vmatpush1.msra.mxu0 %v340
    %583 = vmatprep.subr.mxu0 %v337
    %584 = vmatpush1.msra.mxu0 %v336
    %585 = vmatprep.subr.mxu0 %v333
    %586 = vmatpush1.msra.mxu0 %v332
    %587 = vmatprep.subr.mxu0 %v329
    %588 = vmatpush1.msra.mxu0 %v328
    %589 = vmatprep.subr.mxu0 %v325
    %590 = vmatpush1.msra.mxu0 %v324
    %591 = vmatprep.subr.mxu0 0.0
    %592 = vmatpush2.msra.mxu0 0.0
    %593 = vmatprep.subr.mxu0 0.0
    %594 = vmatpush2.msra.mxu0 0.0
    %595 = vmatprep.subr.mxu0 0.0
    %596 = vmatpush2.msra.mxu0 0.0
    %597 = vmatprep.subr.mxu0 0.0
    %598 = vmatpush2.msra.mxu0 0.0
    %599 = vmatprep.subr.mxu0 0.0
    %600 = vmatpush2.msra.mxu0 0.0
    %601 = vmatprep.subr.mxu0 0.0
    %602 = vmatpush2.msra.mxu0 0.0
    %603 = vmatprep.subr.mxu0 0.0
    %604 = vmatpush2.msra.mxu0 0.0
    %605 = vmatprep.subr.mxu0 0.0
    %606 = vmatpush2.msra.mxu0 0.0
    %607 = vmatprep.subr.mxu0 0.0
    %608 = vmatpush2.msra.mxu0 0.0
    %609 = vmatprep.subr.mxu0 0.0
    %610 = vmatpush2.msra.mxu0 0.0
    %611 = vmatprep.subr.mxu0 0.0
    %612 = vmatpush2.msra.mxu0 0.0
    %613 = vmatprep.subr.mxu0 0.0
    %614 = vmatpush2.msra.mxu0 0.0
    %615 = vmatprep.subr.mxu0 0.0
    %616 = vmatpush2.msra.mxu0 0.0
    %617 = vmatprep.subr.mxu0 0.0
    %618 = vmatpush2.msra.mxu0 0.0
    %619 = vmatprep.subr.mxu0 0.0
    %620 = vmatpush2.msra.mxu0 0.0
    %621 = vmatprep.subr.mxu0 0.0
    %622 = vmatpush2.msra.mxu0 0.0
    %623 = vmatprep.mubr.f32.mxu0 0.0
    %624 = vmatmul.mubr.f32.gmra.mxu0 %v557
    %v625 = vpop.f32.mrf.mxu0
    %v626 = vadd.f32 0.0, %v625
    %v627 = vpop.f32.mrf.mxu0
    %v628 = vadd.f32 0.0, %v627
    %629 = vdwg.mxu0
    %630 = vmatprep.subr.mxu0 %v387
    %631 = vmatpush1.msra.mxu0 %v386
    %632 = vmatprep.subr.mxu0 %v383
    %633 = vmatpush1.msra.mxu0 %v382
    %634 = vmatprep.subr.mxu0 %v379
    %635 = vmatpush1.msra.mxu0 %v378
    %636 = vmatprep.subr.mxu0 %v375
    %637 = vmatpush1.msra.mxu0 %v374
    %638 = vmatprep.subr.mxu0 %v371
    %639 = vmatpush1.msra.mxu0 %v370
    %640 = vmatprep.subr.mxu0 %v367
    %641 = vmatpush1.msra.mxu0 %v366
    %642 = vmatprep.subr.mxu0 %v363
    %643 = vmatpush1.msra.mxu0 %v362
    %644 = vmatprep.subr.mxu0 %v359
    %645 = vmatpush1.msra.mxu0 %v358
    %646 = vmatprep.subr.mxu0 %v355
    %647 = vmatpush1.msra.mxu0 %v354
    %648 = vmatprep.subr.mxu0 %v351
    %649 = vmatpush1.msra.mxu0 %v350
    %650 = vmatprep.subr.mxu0 %v347
    %651 = vmatpush1.msra.mxu0 %v346
    %652 = vmatprep.subr.mxu0 %v343
    %653 = vmatpush1.msra.mxu0 %v342
    %654 = vmatprep.subr.mxu0 %v339
    %655 = vmatpush1.msra.mxu0 %v338
    %656 = vmatprep.subr.mxu0 %v335
    %657 = vmatpush1.msra.mxu0 %v334
    %658 = vmatprep.subr.mxu0 %v331
    %659 = vmatpush1.msra.mxu0 %v330
    %660 = vmatprep.subr.mxu0 %v327
    %661 = vmatpush1.msra.mxu0 %v326
    %662 = vmatprep.subr.mxu0 0.0
    %663 = vmatpush2.msra.mxu0 0.0
    %664 = vmatprep.subr.mxu0 0.0
    %665 = vmatpush2.msra.mxu0 0.0
    %666 = vmatprep.subr.mxu0 0.0
    %667 = vmatpush2.msra.mxu0 0.0
    %668 = vmatprep.subr.mxu0 0.0
    %669 = vmatpush2.msra.mxu0 0.0
    %670 = vmatprep.subr.mxu0 0.0
    %671 = vmatpush2.msra.mxu0 0.0
    %672 = vmatprep.subr.mxu0 0.0
    %673 = vmatpush2.msra.mxu0 0.0
    %674 = vmatprep.subr.mxu0 0.0
    %675 = vmatpush2.msra.mxu0 0.0
    %676 = vmatprep.subr.mxu0 0.0
    %677 = vmatpush2.msra.mxu0 0.0
    %678 = vmatprep.subr.mxu0 0.0
    %679 = vmatpush2.msra.mxu0 0.0
    %680 = vmatprep.subr.mxu0 0.0
    %681 = vmatpush2.msra.mxu0 0.0
    %682 = vmatprep.subr.mxu0 0.0
    %683 = vmatpush2.msra.mxu0 0.0
    %684 = vmatprep.subr.mxu0 0.0
    %685 = vmatpush2.msra.mxu0 0.0
    %686 = vmatprep.subr.mxu0 0.0
    %687 = vmatpush2.msra.mxu0 0.0
    %688 = vmatprep.subr.mxu0 0.0
    %689 = vmatpush2.msra.mxu0 0.0
    %690 = vmatprep.subr.mxu0 0.0
    %691 = vmatpush2.msra.mxu0 0.0
    %692 = vmatprep.subr.mxu0 0.0
    %693 = vmatpush2.msra.mxu0 0.0
    %694 = vmatprep.mubr.f32.mxu0 0.0
    %695 = vmatmul.mubr.f32.gmra.mxu0 %v557
    %v696 = vpop.f32.mrf.mxu0
    %v697 = vadd.f32 0.0, %v696
    %v698 = vpop.f32.mrf.mxu0
    %v699 = vadd.f32 0.0, %v698
    %700 = vdwg.mxu0
    %v705 = vrot.slane %v626, 6
    %v706 = vrot.slane %v628, 6
    %v707 = vrot.slane %v697, 6
    %v708 = vrot.slane %v699, 6
    %v713 = vadd.f32 %v237, %v705
    %v714 = vadd.f32 %v239, %v706
    %v715 = vadd.f32 %v314, %v707
    %v716 = vadd.f32 %v316, %v708
    %v717 = vxor.u32 %v713, 2147483648
    %v718 = vmul.f32 %v717, 1.442695
    %v719 = vpow.pop %v718
    %v720 = vadd.f32 %v719, 1.0
    %v721 = vrcp.pop %v720
    %v722 = vmul.f32 1.0, %v721
    %v723 = vxor.u32 %v714, 2147483648
    %v724 = vmul.f32 %v723, 1.442695
    %v725 = vpow.pop %v724
    %v726 = vadd.f32 %v725, 1.0
    %v727 = vrcp.pop %v726
    %v728 = vmul.f32 1.0, %v727
    %v729 = vtanh.pop %v715
    %v730 = vxor.u32 %v716, 2147483648
    %v731 = vmul.f32 %v730, 1.442695
    %v732 = vpow.pop %v731
    %v733 = vadd.f32 %v732, 1.0
    %v734 = vrcp.pop %v733
    %v735 = vmul.f32 1.0, %v734
    %v737 = vrot.slane %v555, 6
    %v739 = vmul.f32 %v728, %v737
    %v740 = vmul.f32 %v722, %v729
    %v741 = vadd.f32 %v739, %v740
    %v742 = vtanh.pop %v741
    %v743 = vmul.f32 %v735, %v742
    %744 = vst [vmem:[#allocation2] sm:$0xc] %v743
    %v746 = vrot.slane %v743, 2
    %748 = vmatprep.subr.mxu0 %v385
    %749 = vmatpush1.msra.mxu0 %v384
    %750 = vmatprep.subr.mxu0 %v381
    %751 = vmatpush1.msra.mxu0 %v380
    %752 = vmatprep.subr.mxu0 %v377
    %753 = vmatpush1.msra.mxu0 %v376
    %754 = vmatprep.subr.mxu0 %v373
    %755 = vmatpush1.msra.mxu0 %v372
    %756 = vmatprep.subr.mxu0 %v369
    %757 = vmatpush1.msra.mxu0 %v368
    %758 = vmatprep.subr.mxu0 %v365
    %759 = vmatpush1.msra.mxu0 %v364
    %760 = vmatprep.subr.mxu0 %v361
    %761 = vmatpush1.msra.mxu0 %v360
    %762 = vmatprep.subr.mxu0 %v357
    %763 = vmatpush1.msra.mxu0 %v356
    %764 = vmatprep.subr.mxu0 %v353
    %765 = vmatpush1.msra.mxu0 %v352
    %766 = vmatprep.subr.mxu0 %v349
    %767 = vmatpush1.msra.mxu0 %v348
    %768 = vmatprep.subr.mxu0 %v345
    %769 = vmatpush1.msra.mxu0 %v344
    %770 = vmatprep.subr.mxu0 %v341
    %771 = vmatpush1.msra.mxu0 %v340
    %772 = vmatprep.subr.mxu0 %v337
    %773 = vmatpush1.msra.mxu0 %v336
    %774 = vmatprep.subr.mxu0 %v333
    %775 = vmatpush1.msra.mxu0 %v332
    %776 = vmatprep.subr.mxu0 %v329
    %777 = vmatpush1.msra.mxu0 %v328
    %778 = vmatprep.subr.mxu0 %v325
    %779 = vmatpush1.msra.mxu0 %v324
    %780 = vmatprep.subr.mxu0 0.0
    %781 = vmatpush2.msra.mxu0 0.0
    %782 = vmatprep.subr.mxu0 0.0
    %783 = vmatpush2.msra.mxu0 0.0
    %784 = vmatprep.subr.mxu0 0.0
    %785 = vmatpush2.msra.mxu0 0.0
    %786 = vmatprep.subr.mxu0 0.0
    %787 = vmatpush2.msra.mxu0 0.0
    %788 = vmatprep.subr.mxu0 0.0
    %789 = vmatpush2.msra.mxu0 0.0
    %790 = vmatprep.subr.mxu0 0.0
    %791 = vmatpush2.msra.mxu0 0.0
    %792 = vmatprep.subr.mxu0 0.0
    %793 = vmatpush2.msra.mxu0 0.0
    %794 = vmatprep.subr.mxu0 0.0
    %795 = vmatpush2.msra.mxu0 0.0
    %796 = vmatprep.subr.mxu0 0.0
    %797 = vmatpush2.msra.mxu0 0.0
    %798 = vmatprep.subr.mxu0 0.0
    %799 = vmatpush2.msra.mxu0 0.0
    %800 = vmatprep.subr.mxu0 0.0
    %801 = vmatpush2.msra.mxu0 0.0
    %802 = vmatprep.subr.mxu0 0.0
    %803 = vmatpush2.msra.mxu0 0.0
    %804 = vmatprep.subr.mxu0 0.0
    %805 = vmatpush2.msra.mxu0 0.0
    %806 = vmatprep.subr.mxu0 0.0
    %807 = vmatpush2.msra.mxu0 0.0
    %808 = vmatprep.subr.mxu0 0.0
    %809 = vmatpush2.msra.mxu0 0.0
    %810 = vmatprep.subr.mxu0 0.0
    %811 = vmatpush2.msra.mxu0 0.0
    %812 = vmatprep.mubr.f32.mxu0 0.0
    %813 = vmatmul.mubr.f32.gmra.mxu0 %v746
    %v814 = vpop.f32.mrf.mxu0
    %v815 = vadd.f32 0.0, %v814
    %v816 = vpop.f32.mrf.mxu0
    %v817 = vadd.f32 0.0, %v816
    %818 = vdwg.mxu0
    %819 = vmatprep.subr.mxu0 %v387
    %820 = vmatpush1.msra.mxu0 %v386
    %821 = vmatprep.subr.mxu0 %v383
    %822 = vmatpush1.msra.mxu0 %v382
    %823 = vmatprep.subr.mxu0 %v379
    %824 = vmatpush1.msra.mxu0 %v378
    %825 = vmatprep.subr.mxu0 %v375
    %826 = vmatpush1.msra.mxu0 %v374
    %827 = vmatprep.subr.mxu0 %v371
    %828 = vmatpush1.msra.mxu0 %v370
    %829 = vmatprep.subr.mxu0 %v367
    %830 = vmatpush1.msra.mxu0 %v366
    %831 = vmatprep.subr.mxu0 %v363
    %832 = vmatpush1.msra.mxu0 %v362
    %833 = vmatprep.subr.mxu0 %v359
    %834 = vmatpush1.msra.mxu0 %v358
    %835 = vmatprep.subr.mxu0 %v355
    %836 = vmatpush1.msra.mxu0 %v354
    %837 = vmatprep.subr.mxu0 %v351
    %838 = vmatpush1.msra.mxu0 %v350
    %839 = vmatprep.subr.mxu0 %v347
    %840 = vmatpush1.msra.mxu0 %v346
    %841 = vmatprep.subr.mxu0 %v343
    %842 = vmatpush1.msra.mxu0 %v342
    %843 = vmatprep.subr.mxu0 %v339
    %844 = vmatpush1.msra.mxu0 %v338
    %845 = vmatprep.subr.mxu0 %v335
    %846 = vmatpush1.msra.mxu0 %v334
    %847 = vmatprep.subr.mxu0 %v331
    %848 = vmatpush1.msra.mxu0 %v330
    %849 = vmatprep.subr.mxu0 %v327
    %850 = vmatpush1.msra.mxu0 %v326
    %851 = vmatprep.subr.mxu0 0.0
    %852 = vmatpush2.msra.mxu0 0.0
    %853 = vmatprep.subr.mxu0 0.0
    %854 = vmatpush2.msra.mxu0 0.0
    %855 = vmatprep.subr.mxu0 0.0
    %856 = vmatpush2.msra.mxu0 0.0
    %857 = vmatprep.subr.mxu0 0.0
    %858 = vmatpush2.msra.mxu0 0.0
    %859 = vmatprep.subr.mxu0 0.0
    %860 = vmatpush2.msra.mxu0 0.0
    %861 = vmatprep.subr.mxu0 0.0
    %862 = vmatpush2.msra.mxu0 0.0
    %863 = vmatprep.subr.mxu0 0.0
    %864 = vmatpush2.msra.mxu0 0.0
    %865 = vmatprep.subr.mxu0 0.0
    %866 = vmatpush2.msra.mxu0 0.0
    %867 = vmatprep.subr.mxu0 0.0
    %868 = vmatpush2.msra.mxu0 0.0
    %869 = vmatprep.subr.mxu0 0.0
    %870 = vmatpush2.msra.mxu0 0.0
    %871 = vmatprep.subr.mxu0 0.0
    %872 = vmatpush2.msra.mxu0 0.0
    %873 = vmatprep.subr.mxu0 0.0
    %874 = vmatpush2.msra.mxu0 0.0
    %875 = vmatprep.subr.mxu0 0.0
    %876 = vmatpush2.msra.mxu0 0.0
    %877 = vmatprep.subr.mxu0 0.0
    %878 = vmatpush2.msra.mxu0 0.0
    %879 = vmatprep.subr.mxu0 0.0
    %880 = vmatpush2.msra.mxu0 0.0
    %881 = vmatprep.subr.mxu0 0.0
    %882 = vmatpush2.msra.mxu0 0.0
    %883 = vmatprep.mubr.f32.mxu0 0.0
    %884 = vmatmul.mubr.f32.gmra.mxu0 %v746
    %v885 = vpop.f32.mrf.mxu0
    %v886 = vadd.f32 0.0, %v885
    %v887 = vpop.f32.mrf.mxu0
    %v888 = vadd.f32 0.0, %v887
    %889 = vdwg.mxu0
    %v894 = vrot.slane %v815, 4
    %v895 = vrot.slane %v817, 4
    %v896 = vrot.slane %v886, 4
    %v897 = vrot.slane %v888, 4
    %v902 = vadd.f32 %v237, %v894
    %v903 = vadd.f32 %v239, %v895
    %v904 = vadd.f32 %v314, %v896
    %v905 = vadd.f32 %v316, %v897
    %v906 = vxor.u32 %v902, 2147483648
    %v907 = vmul.f32 %v906, 1.442695
    %v908 = vpow.pop %v907
    %v909 = vadd.f32 %v908, 1.0
    %v910 = vrcp.pop %v909
    %v911 = vmul.f32 1.0, %v910
    %v912 = vxor.u32 %v903, 2147483648
    %v913 = vmul.f32 %v912, 1.442695
    %v914 = vpow.pop %v913
    %v915 = vadd.f32 %v914, 1.0
    %v916 = vrcp.pop %v915
    %v917 = vmul.f32 1.0, %v916
    %v918 = vtanh.pop %v904
    %v919 = vxor.u32 %v905, 2147483648
    %v920 = vmul.f32 %v919, 1.442695
    %v921 = vpow.pop %v920
    %v922 = vadd.f32 %v921, 1.0
    %v923 = vrcp.pop %v922
    %v924 = vmul.f32 1.0, %v923
    %v926 = vrot.slane %v741, 6
    %v928 = vmul.f32 %v917, %v926
    %v929 = vmul.f32 %v911, %v918
    %v930 = vadd.f32 %v928, %v929
    %v931 = vtanh.pop %v930
    %v932 = vmul.f32 %v924, %v931
    %933 = vst [vmem:[#allocation2] sm:$0x30] %v932
    %v935 = vrot.slane %v932, 4
    %937 = vmatprep.subr.mxu0 %v385
    %938 = vmatpush1.msra.mxu0 %v384
    %939 = vmatprep.subr.mxu0 %v381
    %940 = vmatpush1.msra.mxu0 %v380
    %941 = vmatprep.subr.mxu0 %v377
    %942 = vmatpush1.msra.mxu0 %v376
    %943 = vmatprep.subr.mxu0 %v373
    %944 = vmatpush1.msra.mxu0 %v372
    %945 = vmatprep.subr.mxu0 %v369
    %946 = vmatpush1.msra.mxu0 %v368
    %947 = vmatprep.subr.mxu0 %v365
    %948 = vmatpush1.msra.mxu0 %v364
    %949 = vmatprep.subr.mxu0 %v361
    %950 = vmatpush1.msra.mxu0 %v360
    %951 = vmatprep.subr.mxu0 %v357
    %952 = vmatpush1.msra.mxu0 %v356
    %953 = vmatprep.subr.mxu0 %v353
    %954 = vmatpush1.msra.mxu0 %v352
    %955 = vmatprep.subr.mxu0 %v349
    %956 = vmatpush1.msra.mxu0 %v348
    %957 = vmatprep.subr.mxu0 %v345
    %958 = vmatpush1.msra.mxu0 %v344
    %959 = vmatprep.subr.mxu0 %v341
    %960 = vmatpush1.msra.mxu0 %v340
    %961 = vmatprep.subr.mxu0 %v337
    %962 = vmatpush1.msra.mxu0 %v336
    %963 = vmatprep.subr.mxu0 %v333
    %964 = vmatpush1.msra.mxu0 %v332
    %965 = vmatprep.subr.mxu0 %v329
    %966 = vmatpush1.msra.mxu0 %v328
    %967 = vmatprep.subr.mxu0 %v325
    %968 = vmatpush1.msra.mxu0 %v324
    %969 = vmatprep.subr.mxu0 0.0
    %970 = vmatpush2.msra.mxu0 0.0
    %971 = vmatprep.subr.mxu0 0.0
    %972 = vmatpush2.msra.mxu0 0.0
    %973 = vmatprep.subr.mxu0 0.0
    %974 = vmatpush2.msra.mxu0 0.0
    %975 = vmatprep.subr.mxu0 0.0
    %976 = vmatpush2.msra.mxu0 0.0
    %977 = vmatprep.subr.mxu0 0.0
    %978 = vmatpush2.msra.mxu0 0.0
    %979 = vmatprep.subr.mxu0 0.0
    %980 = vmatpush2.msra.mxu0 0.0
    %981 = vmatprep.subr.mxu0 0.0
    %982 = vmatpush2.msra.mxu0 0.0
    %983 = vmatprep.subr.mxu0 0.0
    %984 = vmatpush2.msra.mxu0 0.0
    %985 = vmatprep.subr.mxu0 0.0
    %986 = vmatpush2.msra.mxu0 0.0
    %987 = vmatprep.subr.mxu0 0.0
    %988 = vmatpush2.msra.mxu0 0.0
    %989 = vmatprep.subr.mxu0 0.0
    %990 = vmatpush2.msra.mxu0 0.0
    %991 = vmatprep.subr.mxu0 0.0
    %992 = vmatpush2.msra.mxu0 0.0
    %993 = vmatprep.subr.mxu0 0.0
    %994 = vmatpush2.msra.mxu0 0.0
    %995 = vmatprep.subr.mxu0 0.0
    %996 = vmatpush2.msra.mxu0 0.0
    %997 = vmatprep.subr.mxu0 0.0
    %998 = vmatpush2.msra.mxu0 0.0
    %999 = vmatprep.subr.mxu0 0.0
    %1000 = vmatpush2.msra.mxu0 0.0
    %1001 = vmatprep.mubr.f32.mxu0 0.0
    %1002 = vmatmul.mubr.f32.gmra.mxu0 %v935
    %v1003 = vpop.f32.mrf.mxu0
    %v1004 = vadd.f32 0.0, %v1003
    %v1005 = vpop.f32.mrf.mxu0
    %v1006 = vadd.f32 0.0, %v1005
    %1007 = vdwg.mxu0
    %1008 = vmatprep.subr.mxu0 %v387
    %1009 = vmatpush1.msra.mxu0 %v386
    %1010 = vmatprep.subr.mxu0 %v383
    %1011 = vmatpush1.msra.mxu0 %v382
    %1012 = vmatprep.subr.mxu0 %v379
    %1013 = vmatpush1.msra.mxu0 %v378
    %1014 = vmatprep.subr.mxu0 %v375
    %1015 = vmatpush1.msra.mxu0 %v374
    %1016 = vmatprep.subr.mxu0 %v371
    %1017 = vmatpush1.msra.mxu0 %v370
    %1018 = vmatprep.subr.mxu0 %v367
    %1019 = vmatpush1.msra.mxu0 %v366
    %1020 = vmatprep.subr.mxu0 %v363
    %1021 = vmatpush1.msra.mxu0 %v362
    %1022 = vmatprep.subr.mxu0 %v359
    %1023 = vmatpush1.msra.mxu0 %v358
    %1024 = vmatprep.subr.mxu0 %v355
    %1025 = vmatpush1.msra.mxu0 %v354
    %1026 = vmatprep.subr.mxu0 %v351
    %1027 = vmatpush1.msra.mxu0 %v350
    %1028 = vmatprep.subr.mxu0 %v347
    %1029 = vmatpush1.msra.mxu0 %v346
    %1030 = vmatprep.subr.mxu0 %v343
    %1031 = vmatpush1.msra.mxu0 %v342
    %1032 = vmatprep.subr.mxu0 %v339
    %1033 = vmatpush1.msra.mxu0 %v338
    %1034 = vmatprep.subr.mxu0 %v335
    %1035 = vmatpush1.msra.mxu0 %v334
    %1036 = vmatprep.subr.mxu0 %v331
    %1037 = vmatpush1.msra.mxu0 %v330
    %1038 = vmatprep.subr.mxu0 %v327
    %1039 = vmatpush1.msra.mxu0 %v326
    %1040 = vmatprep.subr.mxu0 0.0
    %1041 = vmatpush2.msra.mxu0 0.0
    %1042 = vmatprep.subr.mxu0 0.0
    %1043 = vmatpush2.msra.mxu0 0.0
    %1044 = vmatprep.subr.mxu0 0.0
    %1045 = vmatpush2.msra.mxu0 0.0
    %1046 = vmatprep.subr.mxu0 0.0
    %1047 = vmatpush2.msra.mxu0 0.0
    %1048 = vmatprep.subr.mxu0 0.0
    %1049 = vmatpush2.msra.mxu0 0.0
    %1050 = vmatprep.subr.mxu0 0.0
    %1051 = vmatpush2.msra.mxu0 0.0
    %1052 = vmatprep.subr.mxu0 0.0
    %1053 = vmatpush2.msra.mxu0 0.0
    %1054 = vmatprep.subr.mxu0 0.0
    %1055 = vmatpush2.msra.mxu0 0.0
    %1056 = vmatprep.subr.mxu0 0.0
    %1057 = vmatpush2.msra.mxu0 0.0
    %1058 = vmatprep.subr.mxu0 0.0
    %1059 = vmatpush2.msra.mxu0 0.0
    %1060 = vmatprep.subr.mxu0 0.0
    %1061 = vmatpush2.msra.mxu0 0.0
    %1062 = vmatprep.subr.mxu0 0.0
    %1063 = vmatpush2.msra.mxu0 0.0
    %1064 = vmatprep.subr.mxu0 0.0
    %1065 = vmatpush2.msra.mxu0 0.0
    %1066 = vmatprep.subr.mxu0 0.0
    %1067 = vmatpush2.msra.mxu0 0.0
    %1068 = vmatprep.subr.mxu0 0.0
    %1069 = vmatpush2.msra.mxu0 0.0
    %1070 = vmatprep.subr.mxu0 0.0
    %1071 = vmatpush2.msra.mxu0 0.0
    %1072 = vmatprep.mubr.f32.mxu0 0.0
    %1073 = vmatmul.mubr.f32.gmra.mxu0 %v935
    %v1074 = vpop.f32.mrf.mxu0
    %v1075 = vadd.f32 0.0, %v1074
    %v1076 = vpop.f32.mrf.mxu0
    %v1077 = vadd.f32 0.0, %v1076
    %1078 = vdwg.mxu0
    %v1083 = vrot.slane %v1004, 2
    %v1084 = vrot.slane %v1006, 2
    %v1085 = vrot.slane %v1075, 2
    %v1086 = vrot.slane %v1077, 2
    %v1091 = vadd.f32 %v237, %v1083
    %v1092 = vadd.f32 %v239, %v1084
    %v1093 = vadd.f32 %v314, %v1085
    %v1094 = vadd.f32 %v316, %v1086
    %v1095 = vxor.u32 %v1091, 2147483648
    %v1096 = vmul.f32 %v1095, 1.442695
    %v1097 = vpow.pop %v1096
    %v1098 = vadd.f32 %v1097, 1.0
    %v1099 = vrcp.pop %v1098
    %v1100 = vmul.f32 1.0, %v1099
    %v1101 = vxor.u32 %v1092, 2147483648
    %v1102 = vmul.f32 %v1101, 1.442695
    %v1103 = vpow.pop %v1102
    %v1104 = vadd.f32 %v1103, 1.0
    %v1105 = vrcp.pop %v1104
    %v1106 = vmul.f32 1.0, %v1105
    %v1107 = vtanh.pop %v1093
    %v1108 = vxor.u32 %v1094, 2147483648
    %v1109 = vmul.f32 %v1108, 1.442695
    %v1110 = vpow.pop %v1109
    %v1111 = vadd.f32 %v1110, 1.0
    %v1112 = vrcp.pop %v1111
    %v1113 = vmul.f32 1.0, %v1112
    %v1115 = vrot.slane %v930, 6
    %v1117 = vmul.f32 %v1106, %v1115
    %v1118 = vmul.f32 %v1100, %v1107
    %v1119 = vadd.f32 %v1117, %v1118
    %v1120 = vtanh.pop %v1119
    %v1121 = vmul.f32 %v1113, %v1120
    %1122 = vst [vmem:[#allocation2] sm:$0xc0] %v1121
    %v1124 = vrot.slane %v1121, 6
    %1126 = vmatprep.subr.mxu0 %v385
    %1127 = vmatpush1.msra.mxu0 %v384
    %1128 = vmatprep.subr.mxu0 %v381
    %1129 = vmatpush1.msra.mxu0 %v380
    %1130 = vmatprep.subr.mxu0 %v377
    %1131 = vmatpush1.msra.mxu0 %v376
    %1132 = vmatprep.subr.mxu0 %v373
    %1133 = vmatpush1.msra.mxu0 %v372
    %1134 = vmatprep.subr.mxu0 %v369
    %1135 = vmatpush1.msra.mxu0 %v368
    %1136 = vmatprep.subr.mxu0 %v365
    %1137 = vmatpush1.msra.mxu0 %v364
    %1138 = vmatprep.subr.mxu0 %v361
    %1139 = vmatpush1.msra.mxu0 %v360
    %1140 = vmatprep.subr.mxu0 %v357
    %1141 = vmatpush1.msra.mxu0 %v356
    %1142 = vmatprep.subr.mxu0 %v353
    %1143 = vmatpush1.msra.mxu0 %v352
    %1144 = vmatprep.subr.mxu0 %v349
    %1145 = vmatpush1.msra.mxu0 %v348
    %1146 = vmatprep.subr.mxu0 %v345
    %1147 = vmatpush1.msra.mxu0 %v344
    %1148 = vmatprep.subr.mxu0 %v341
    %1149 = vmatpush1.msra.mxu0 %v340
    %1150 = vmatprep.subr.mxu0 %v337
    %1151 = vmatpush1.msra.mxu0 %v336
    %1152 = vmatprep.subr.mxu0 %v333
    %1153 = vmatpush1.msra.mxu0 %v332
    %1154 = vmatprep.subr.mxu0 %v329
    %1155 = vmatpush1.msra.mxu0 %v328
    %1156 = vmatprep.subr.mxu0 %v325
    %1157 = vmatpush1.msra.mxu0 %v324
    %1158 = vmatprep.subr.mxu0 0.0
    %1159 = vmatpush2.msra.mxu0 0.0
    %1160 = vmatprep.subr.mxu0 0.0
    %1161 = vmatpush2.msra.mxu0 0.0
    %1162 = vmatprep.subr.mxu0 0.0
    %1163 = vmatpush2.msra.mxu0 0.0
    %1164 = vmatprep.subr.mxu0 0.0
    %1165 = vmatpush2.msra.mxu0 0.0
    %1166 = vmatprep.subr.mxu0 0.0
    %1167 = vmatpush2.msra.mxu0 0.0
    %1168 = vmatprep.subr.mxu0 0.0
    %1169 = vmatpush2.msra.mxu0 0.0
    %1170 = vmatprep.subr.mxu0 0.0
    %1171 = vmatpush2.msra.mxu0 0.0
    %1172 = vmatprep.subr.mxu0 0.0
    %1173 = vmatpush2.msra.mxu0 0.0
    %1174 = vmatprep.subr.mxu0 0.0
    %1175 = vmatpush2.msra.mxu0 0.0
    %1176 = vmatprep.subr.mxu0 0.0
    %1177 = vmatpush2.msra.mxu0 0.0
    %1178 = vmatprep.subr.mxu0 0.0
    %1179 = vmatpush2.msra.mxu0 0.0
    %1180 = vmatprep.subr.mxu0 0.0
    %1181 = vmatpush2.msra.mxu0 0.0
    %1182 = vmatprep.subr.mxu0 0.0
    %1183 = vmatpush2.msra.mxu0 0.0
    %1184 = vmatprep.subr.mxu0 0.0
    %1185 = vmatpush2.msra.mxu0 0.0
    %1186 = vmatprep.subr.mxu0 0.0
    %1187 = vmatpush2.msra.mxu0 0.0
    %1188 = vmatprep.subr.mxu0 0.0
    %1189 = vmatpush2.msra.mxu0 0.0
    %1190 = vmatprep.mubr.f32.mxu0 0.0
    %1191 = vmatmul.mubr.f32.gmra.mxu0 %v1124
    %v1192 = vpop.f32.mrf.mxu0
    %v1193 = vadd.f32 0.0, %v1192
    %v1194 = vpop.f32.mrf.mxu0
    %v1195 = vadd.f32 0.0, %v1194
    %1196 = vdwg.mxu0
    %1197 = vmatprep.subr.mxu0 %v387
    %1198 = vmatpush1.msra.mxu0 %v386
    %1199 = vmatprep.subr.mxu0 %v383
    %1200 = vmatpush1.msra.mxu0 %v382
    %1201 = vmatprep.subr.mxu0 %v379
    %1202 = vmatpush1.msra.mxu0 %v378
    %1203 = vmatprep.subr.mxu0 %v375
    %1204 = vmatpush1.msra.mxu0 %v374
    %1205 = vmatprep.subr.mxu0 %v371
    %1206 = vmatpush1.msra.mxu0 %v370
    %1207 = vmatprep.subr.mxu0 %v367
    %1208 = vmatpush1.msra.mxu0 %v366
    %1209 = vmatprep.subr.mxu0 %v363
    %1210 = vmatpush1.msra.mxu0 %v362
    %1211 = vmatprep.subr.mxu0 %v359
    %1212 = vmatpush1.msra.mxu0 %v358
    %1213 = vmatprep.subr.mxu0 %v355
    %1214 = vmatpush1.msra.mxu0 %v354
    %1215 = vmatprep.subr.mxu0 %v351
    %1216 = vmatpush1.msra.mxu0 %v350
    %1217 = vmatprep.subr.mxu0 %v347
    %1218 = vmatpush1.msra.mxu0 %v346
    %1219 = vmatprep.subr.mxu0 %v343
    %1220 = vmatpush1.msra.mxu0 %v342
    %1221 = vmatprep.subr.mxu0 %v339
    %1222 = vmatpush1.msra.mxu0 %v338
    %1223 = vmatprep.subr.mxu0 %v335
    %1224 = vmatpush1.msra.mxu0 %v334
    %1225 = vmatprep.subr.mxu0 %v331
    %1226 = vmatpush1.msra.mxu0 %v330
    %1227 = vmatprep.subr.mxu0 %v327
    %1228 = vmatpush1.msra.mxu0 %v326
    %1229 = vmatprep.subr.mxu0 0.0
    %1230 = vmatpush2.msra.mxu0 0.0
    %1231 = vmatprep.subr.mxu0 0.0
    %1232 = vmatpush2.msra.mxu0 0.0
    %1233 = vmatprep.subr.mxu0 0.0
    %1234 = vmatpush2.msra.mxu0 0.0
    %1235 = vmatprep.subr.mxu0 0.0
    %1236 = vmatpush2.msra.mxu0 0.0
    %1237 = vmatprep.subr.mxu0 0.0
    %1238 = vmatpush2.msra.mxu0 0.0
    %1239 = vmatprep.subr.mxu0 0.0
    %1240 = vmatpush2.msra.mxu0 0.0
    %1241 = vmatprep.subr.mxu0 0.0
    %1242 = vmatpush2.msra.mxu0 0.0
    %1243 = vmatprep.subr.mxu0 0.0
    %1244 = vmatpush2.msra.mxu0 0.0
    %1245 = vmatprep.subr.mxu0 0.0
    %1246 = vmatpush2.msra.mxu0 0.0
    %1247 = vmatprep.subr.mxu0 0.0
    %1248 = vmatpush2.msra.mxu0 0.0
    %1249 = vmatprep.subr.mxu0 0.0
    %1250 = vmatpush2.msra.mxu0 0.0
    %1251 = vmatprep.subr.mxu0 0.0
    %1252 = vmatpush2.msra.mxu0 0.0
    %1253 = vmatprep.subr.mxu0 0.0
    %1254 = vmatpush2.msra.mxu0 0.0
    %1255 = vmatprep.subr.mxu0 0.0
    %1256 = vmatpush2.msra.mxu0 0.0
    %1257 = vmatprep.subr.mxu0 0.0
    %1258 = vmatpush2.msra.mxu0 0.0
    %1259 = vmatprep.subr.mxu0 0.0
    %1260 = vmatpush2.msra.mxu0 0.0
    %1261 = vmatprep.mubr.f32.mxu0 0.0
    %1262 = vmatmul.mubr.f32.gmra.mxu0 %v1124
    %v1263 = vpop.f32.mrf.mxu0
    %v1264 = vadd.f32 0.0, %v1263
    %v1265 = vpop.f32.mrf.mxu0
    %v1266 = vadd.f32 0.0, %v1265
    %1267 = vdwg.mxu0
    %v1268 = vadd.f32 %v243, %v1193
    %v1269 = vadd.f32 %v245, %v1195
    %v1270 = vadd.f32 %v320, %v1264
    %v1271 = vadd.f32 %v322, %v1266
    %v1272 = vxor.u32 %v1268, 2147483648
    %v1273 = vmul.f32 %v1272, 1.442695
    %v1274 = vpow.pop %v1273
    %v1275 = vadd.f32 %v1274, 1.0
    %v1276 = vrcp.pop %v1275
    %v1277 = vmul.f32 1.0, %v1276
    %v1278 = vxor.u32 %v1269, 2147483648
    %v1279 = vmul.f32 %v1278, 1.442695
    %v1280 = vpow.pop %v1279
    %v1281 = vadd.f32 %v1280, 1.0
    %v1282 = vrcp.pop %v1281
    %v1283 = vmul.f32 1.0, %v1282
    %v1284 = vtanh.pop %v1270
    %v1285 = vxor.u32 %v1271, 2147483648
    %v1286 = vmul.f32 %v1285, 1.442695
    %v1287 = vpow.pop %v1286
    %v1288 = vadd.f32 %v1287, 1.0
    %v1289 = vrcp.pop %v1288
    %v1290 = vmul.f32 1.0, %v1289
    %v1292 = vrot.slane %v1119, 6
    %v1294 = vmul.f32 %v1283, %v1292
    %v1295 = vmul.f32 %v1277, %v1284
    %v1296 = vadd.f32 %v1294, %v1295
    %v1297 = vtanh.pop %v1296
    %v1298 = vmul.f32 %v1290, %v1297
    %1299 = vst [vmem:[#allocation2 + $0x8] sm:$0x3] %v1298
    %1300 = vmatprep.subr.mxu0 %v385
    %1301 = vmatpush1.msra.mxu0 %v384
    %1302 = vmatprep.subr.mxu0 %v381
    %1303 = vmatpush1.msra.mxu0 %v380
    %1304 = vmatprep.subr.mxu0 %v377
    %1305 = vmatpush1.msra.mxu0 %v376
    %1306 = vmatprep.subr.mxu0 %v373
    %1307 = vmatpush1.msra.mxu0 %v372
    %1308 = vmatprep.subr.mxu0 %v369
    %1309 = vmatpush1.msra.mxu0 %v368
    %1310 = vmatprep.subr.mxu0 %v365
    %1311 = vmatpush1.msra.mxu0 %v364
    %1312 = vmatprep.subr.mxu0 %v361
    %1313 = vmatpush1.msra.mxu0 %v360
    %1314 = vmatprep.subr.mxu0 %v357
    %1315 = vmatpush1.msra.mxu0 %v356
    %1316 = vmatprep.subr.mxu0 %v353
    %1317 = vmatpush1.msra.mxu0 %v352
    %1318 = vmatprep.subr.mxu0 %v349
    %1319 = vmatpush1.msra.mxu0 %v348
    %1320 = vmatprep.subr.mxu0 %v345
    %1321 = vmatpush1.msra.mxu0 %v344
    %1322 = vmatprep.subr.mxu0 %v341
    %1323 = vmatpush1.msra.mxu0 %v340
    %1324 = vmatprep.subr.mxu0 %v337
    %1325 = vmatpush1.msra.mxu0 %v336
    %1326 = vmatprep.subr.mxu0 %v333
    %1327 = vmatpush1.msra.mxu0 %v332
    %1328 = vmatprep.subr.mxu0 %v329
    %1329 = vmatpush1.msra.mxu0 %v328
    %1330 = vmatprep.subr.mxu0 %v325
    %1331 = vmatpush1.msra.mxu0 %v324
    %1332 = vmatprep.subr.mxu0 0.0
    %1333 = vmatpush2.msra.mxu0 0.0
    %1334 = vmatprep.subr.mxu0 0.0
    %1335 = vmatpush2.msra.mxu0 0.0
    %1336 = vmatprep.subr.mxu0 0.0
    %1337 = vmatpush2.msra.mxu0 0.0
    %1338 = vmatprep.subr.mxu0 0.0
    %1339 = vmatpush2.msra.mxu0 0.0
    %1340 = vmatprep.subr.mxu0 0.0
    %1341 = vmatpush2.msra.mxu0 0.0
    %1342 = vmatprep.subr.mxu0 0.0
    %1343 = vmatpush2.msra.mxu0 0.0
    %1344 = vmatprep.subr.mxu0 0.0
    %1345 = vmatpush2.msra.mxu0 0.0
    %1346 = vmatprep.subr.mxu0 0.0
    %1347 = vmatpush2.msra.mxu0 0.0
    %1348 = vmatprep.subr.mxu0 0.0
    %1349 = vmatpush2.msra.mxu0 0.0
    %1350 = vmatprep.subr.mxu0 0.0
    %1351 = vmatpush2.msra.mxu0 0.0
    %1352 = vmatprep.subr.mxu0 0.0
    %1353 = vmatpush2.msra.mxu0 0.0
    %1354 = vmatprep.subr.mxu0 0.0
    %1355 = vmatpush2.msra.mxu0 0.0
    %1356 = vmatprep.subr.mxu0 0.0
    %1357 = vmatpush2.msra.mxu0 0.0
    %1358 = vmatprep.subr.mxu0 0.0
    %1359 = vmatpush2.msra.mxu0 0.0
    %1360 = vmatprep.subr.mxu0 0.0
    %1361 = vmatpush2.msra.mxu0 0.0
    %1362 = vmatprep.subr.mxu0 0.0
    %1363 = vmatpush2.msra.mxu0 0.0
    %1364 = vmatprep.mubr.f32.mxu0 0.0
    %1365 = vmatmul.mubr.f32.gmra.mxu0 %v1298
    %v1366 = vpop.f32.mrf.mxu0
    %v1367 = vadd.f32 0.0, %v1366
    %v1368 = vpop.f32.mrf.mxu0
    %v1369 = vadd.f32 0.0, %v1368
    %1370 = vdwg.mxu0
    %1371 = vmatprep.subr.mxu0 %v387
    %1372 = vmatpush1.msra.mxu0 %v386
    %1373 = vmatprep.subr.mxu0 %v383
    %1374 = vmatpush1.msra.mxu0 %v382
    %1375 = vmatprep.subr.mxu0 %v379
    %1376 = vmatpush1.msra.mxu0 %v378
    %1377 = vmatprep.subr.mxu0 %v375
    %1378 = vmatpush1.msra.mxu0 %v374
    %1379 = vmatprep.subr.mxu0 %v371
    %1380 = vmatpush1.msra.mxu0 %v370
    %1381 = vmatprep.subr.mxu0 %v367
    %1382 = vmatpush1.msra.mxu0 %v366
    %1383 = vmatprep.subr.mxu0 %v363
    %1384 = vmatpush1.msra.mxu0 %v362
    %1385 = vmatprep.subr.mxu0 %v359
    %1386 = vmatpush1.msra.mxu0 %v358
    %1387 = vmatprep.subr.mxu0 %v355
    %1388 = vmatpush1.msra.mxu0 %v354
    %1389 = vmatprep.subr.mxu0 %v351
    %1390 = vmatpush1.msra.mxu0 %v350
    %1391 = vmatprep.subr.mxu0 %v347
    %1392 = vmatpush1.msra.mxu0 %v346
    %1393 = vmatprep.subr.mxu0 %v343
    %1394 = vmatpush1.msra.mxu0 %v342
    %1395 = vmatprep.subr.mxu0 %v339
    %1396 = vmatpush1.msra.mxu0 %v338
    %1397 = vmatprep.subr.mxu0 %v335
    %1398 = vmatpush1.msra.mxu0 %v334
    %1399 = vmatprep.subr.mxu0 %v331
    %1400 = vmatpush1.msra.mxu0 %v330
    %1401 = vmatprep.subr.mxu0 %v327
    %1402 = vmatpush1.msra.mxu0 %v326
    %1403 = vmatprep.subr.mxu0 0.0
    %1404 = vmatpush2.msra.mxu0 0.0
    %1405 = vmatprep.subr.mxu0 0.0
    %1406 = vmatpush2.msra.mxu0 0.0
    %1407 = vmatprep.subr.mxu0 0.0
    %1408 = vmatpush2.msra.mxu0 0.0
    %1409 = vmatprep.subr.mxu0 0.0
    %1410 = vmatpush2.msra.mxu0 0.0
    %1411 = vmatprep.subr.mxu0 0.0
    %1412 = vmatpush2.msra.mxu0 0.0
    %1413 = vmatprep.subr.mxu0 0.0
    %1414 = vmatpush2.msra.mxu0 0.0
    %1415 = vmatprep.subr.mxu0 0.0
    %1416 = vmatpush2.msra.mxu0 0.0
    %1417 = vmatprep.subr.mxu0 0.0
    %1418 = vmatpush2.msra.mxu0 0.0
    %1419 = vmatprep.subr.mxu0 0.0
    %1420 = vmatpush2.msra.mxu0 0.0
    %1421 = vmatprep.subr.mxu0 0.0
    %1422 = vmatpush2.msra.mxu0 0.0
    %1423 = vmatprep.subr.mxu0 0.0
    %1424 = vmatpush2.msra.mxu0 0.0
    %1425 = vmatprep.subr.mxu0 0.0
    %1426 = vmatpush2.msra.mxu0 0.0
    %1427 = vmatprep.subr.mxu0 0.0
    %1428 = vmatpush2.msra.mxu0 0.0
    %1429 = vmatprep.subr.mxu0 0.0
    %1430 = vmatpush2.msra.mxu0 0.0
    %1431 = vmatprep.subr.mxu0 0.0
    %1432 = vmatpush2.msra.mxu0 0.0
    %1433 = vmatprep.subr.mxu0 0.0
    %1434 = vmatpush2.msra.mxu0 0.0
    %1435 = vmatprep.mubr.f32.mxu0 0.0
    %1436 = vmatmul.mubr.f32.gmra.mxu0 %v1298
    %v1437 = vpop.f32.mrf.mxu0
    %v1438 = vadd.f32 0.0, %v1437
    %v1439 = vpop.f32.mrf.mxu0
    %v1440 = vadd.f32 0.0, %v1439
    %1441 = vdwg.mxu0
    %v1446 = vrot.slane %v1367, 6
    %v1447 = vrot.slane %v1369, 6
    %v1448 = vrot.slane %v1438, 6
    %v1449 = vrot.slane %v1440, 6
    %v1454 = vadd.f32 %v243, %v1446
    %v1455 = vadd.f32 %v245, %v1447
    %v1456 = vadd.f32 %v320, %v1448
    %v1457 = vadd.f32 %v322, %v1449
    %v1458 = vxor.u32 %v1454, 2147483648
    %v1459 = vmul.f32 %v1458, 1.442695
    %v1460 = vpow.pop %v1459
    %v1461 = vadd.f32 %v1460, 1.0
    %v1462 = vrcp.pop %v1461
    %v1463 = vmul.f32 1.0, %v1462
    %v1464 = vxor.u32 %v1455, 2147483648
    %v1465 = vmul.f32 %v1464, 1.442695
    %v1466 = vpow.pop %v1465
    %v1467 = vadd.f32 %v1466, 1.0
    %v1468 = vrcp.pop %v1467
    %v1469 = vmul.f32 1.0, %v1468
    %v1470 = vtanh.pop %v1456
    %v1471 = vxor.u32 %v1457, 2147483648
    %v1472 = vmul.f32 %v1471, 1.442695
    %v1473 = vpow.pop %v1472
    %v1474 = vadd.f32 %v1473, 1.0
    %v1475 = vrcp.pop %v1474
    %v1476 = vmul.f32 1.0, %v1475
    %v1478 = vrot.slane %v1296, 6
    %v1480 = vmul.f32 %v1469, %v1478
    %v1481 = vmul.f32 %v1463, %v1470
    %v1482 = vadd.f32 %v1480, %v1481
    %v1483 = vtanh.pop %v1482
    %v1484 = vmul.f32 %v1476, %v1483
    %1485 = vst [vmem:[#allocation2 + $0x8] sm:$0xc] %v1484
    %v1487 = vrot.slane %v1484, 2
    %1489 = vmatprep.subr.mxu0 %v385
    %1490 = vmatpush1.msra.mxu0 %v384
    %1491 = vmatprep.subr.mxu0 %v381
    %1492 = vmatpush1.msra.mxu0 %v380
    %1493 = vmatprep.subr.mxu0 %v377
    %1494 = vmatpush1.msra.mxu0 %v376
    %1495 = vmatprep.subr.mxu0 %v373
    %1496 = vmatpush1.msra.mxu0 %v372
    %1497 = vmatprep.subr.mxu0 %v369
    %1498 = vmatpush1.msra.mxu0 %v368
    %1499 = vmatprep.subr.mxu0 %v365
    %1500 = vmatpush1.msra.mxu0 %v364
    %1501 = vmatprep.subr.mxu0 %v361
    %1502 = vmatpush1.msra.mxu0 %v360
    %1503 = vmatprep.subr.mxu0 %v357
    %1504 = vmatpush1.msra.mxu0 %v356
    %1505 = vmatprep.subr.mxu0 %v353
    %1506 = vmatpush1.msra.mxu0 %v352
    %1507 = vmatprep.subr.mxu0 %v349
    %1508 = vmatpush1.msra.mxu0 %v348
    %1509 = vmatprep.subr.mxu0 %v345
    %1510 = vmatpush1.msra.mxu0 %v344
    %1511 = vmatprep.subr.mxu0 %v341
    %1512 = vmatpush1.msra.mxu0 %v340
    %1513 = vmatprep.subr.mxu0 %v337
    %1514 = vmatpush1.msra.mxu0 %v336
    %1515 = vmatprep.subr.mxu0 %v333
    %1516 = vmatpush1.msra.mxu0 %v332
    %1517 = vmatprep.subr.mxu0 %v329
    %1518 = vmatpush1.msra.mxu0 %v328
    %1519 = vmatprep.subr.mxu0 %v325
    %1520 = vmatpush1.msra.mxu0 %v324
    %1521 = vmatprep.subr.mxu0 0.0
    %1522 = vmatpush2.msra.mxu0 0.0
    %1523 = vmatprep.subr.mxu0 0.0
    %1524 = vmatpush2.msra.mxu0 0.0
    %1525 = vmatprep.subr.mxu0 0.0
    %1526 = vmatpush2.msra.mxu0 0.0
    %1527 = vmatprep.subr.mxu0 0.0
    %1528 = vmatpush2.msra.mxu0 0.0
    %1529 = vmatprep.subr.mxu0 0.0
    %1530 = vmatpush2.msra.mxu0 0.0
    %1531 = vmatprep.subr.mxu0 0.0
    %1532 = vmatpush2.msra.mxu0 0.0
    %1533 = vmatprep.subr.mxu0 0.0
    %1534 = vmatpush2.msra.mxu0 0.0
    %1535 = vmatprep.subr.mxu0 0.0
    %1536 = vmatpush2.msra.mxu0 0.0
    %1537 = vmatprep.subr.mxu0 0.0
    %1538 = vmatpush2.msra.mxu0 0.0
    %1539 = vmatprep.subr.mxu0 0.0
    %1540 = vmatpush2.msra.mxu0 0.0
    %1541 = vmatprep.subr.mxu0 0.0
    %1542 = vmatpush2.msra.mxu0 0.0
    %1543 = vmatprep.subr.mxu0 0.0
    %1544 = vmatpush2.msra.mxu0 0.0
    %1545 = vmatprep.subr.mxu0 0.0
    %1546 = vmatpush2.msra.mxu0 0.0
    %1547 = vmatprep.subr.mxu0 0.0
    %1548 = vmatpush2.msra.mxu0 0.0
    %1549 = vmatprep.subr.mxu0 0.0
    %1550 = vmatpush2.msra.mxu0 0.0
    %1551 = vmatprep.subr.mxu0 0.0
    %1552 = vmatpush2.msra.mxu0 0.0
    %1553 = vmatprep.mubr.f32.mxu0 0.0
    %1554 = vmatmul.mubr.f32.gmra.mxu0 %v1487
    %v1555 = vpop.f32.mrf.mxu0
    %v1556 = vadd.f32 0.0, %v1555
    %v1557 = vpop.f32.mrf.mxu0
    %v1558 = vadd.f32 0.0, %v1557
    %1559 = vdwg.mxu0
    %1560 = vmatprep.subr.mxu0 %v387
    %1561 = vmatpush1.msra.mxu0 %v386
    %1562 = vmatprep.subr.mxu0 %v383
    %1563 = vmatpush1.msra.mxu0 %v382
    %1564 = vmatprep.subr.mxu0 %v379
    %1565 = vmatpush1.msra.mxu0 %v378
    %1566 = vmatprep.subr.mxu0 %v375
    %1567 = vmatpush1.msra.mxu0 %v374
    %1568 = vmatprep.subr.mxu0 %v371
    %1569 = vmatpush1.msra.mxu0 %v370
    %1570 = vmatprep.subr.mxu0 %v367
    %1571 = vmatpush1.msra.mxu0 %v366
    %1572 = vmatprep.subr.mxu0 %v363
    %1573 = vmatpush1.msra.mxu0 %v362
    %1574 = vmatprep.subr.mxu0 %v359
    %1575 = vmatpush1.msra.mxu0 %v358
    %1576 = vmatprep.subr.mxu0 %v355
    %1577 = vmatpush1.msra.mxu0 %v354
    %1578 = vmatprep.subr.mxu0 %v351
    %1579 = vmatpush1.msra.mxu0 %v350
    %1580 = vmatprep.subr.mxu0 %v347
    %1581 = vmatpush1.msra.mxu0 %v346
    %1582 = vmatprep.subr.mxu0 %v343
    %1583 = vmatpush1.msra.mxu0 %v342
    %1584 = vmatprep.subr.mxu0 %v339
    %1585 = vmatpush1.msra.mxu0 %v338
    %1586 = vmatprep.subr.mxu0 %v335
    %1587 = vmatpush1.msra.mxu0 %v334
    %1588 = vmatprep.subr.mxu0 %v331
    %1589 = vmatpush1.msra.mxu0 %v330
    %1590 = vmatprep.subr.mxu0 %v327
    %1591 = vmatpush1.msra.mxu0 %v326
    %1592 = vmatprep.subr.mxu0 0.0
    %1593 = vmatpush2.msra.mxu0 0.0
    %1594 = vmatprep.subr.mxu0 0.0
    %1595 = vmatpush2.msra.mxu0 0.0
    %1596 = vmatprep.subr.mxu0 0.0
    %1597 = vmatpush2.msra.mxu0 0.0
    %1598 = vmatprep.subr.mxu0 0.0
    %1599 = vmatpush2.msra.mxu0 0.0
    %1600 = vmatprep.subr.mxu0 0.0
    %1601 = vmatpush2.msra.mxu0 0.0
    %1602 = vmatprep.subr.mxu0 0.0
    %1603 = vmatpush2.msra.mxu0 0.0
    %1604 = vmatprep.subr.mxu0 0.0
    %1605 = vmatpush2.msra.mxu0 0.0
    %1606 = vmatprep.subr.mxu0 0.0
    %1607 = vmatpush2.msra.mxu0 0.0
    %1608 = vmatprep.subr.mxu0 0.0
    %1609 = vmatpush2.msra.mxu0 0.0
    %1610 = vmatprep.subr.mxu0 0.0
    %1611 = vmatpush2.msra.mxu0 0.0
    %1612 = vmatprep.subr.mxu0 0.0
    %1613 = vmatpush2.msra.mxu0 0.0
    %1614 = vmatprep.subr.mxu0 0.0
    %1615 = vmatpush2.msra.mxu0 0.0
    %1616 = vmatprep.subr.mxu0 0.0
    %1617 = vmatpush2.msra.mxu0 0.0
    %1618 = vmatprep.subr.mxu0 0.0
    %1619 = vmatpush2.msra.mxu0 0.0
    %1620 = vmatprep.subr.mxu0 0.0
    %1621 = vmatpush2.msra.mxu0 0.0
    %1622 = vmatprep.subr.mxu0 0.0
    %1623 = vmatpush2.msra.mxu0 0.0
    %1624 = vmatprep.mubr.f32.mxu0 0.0
    %1625 = vmatmul.mubr.f32.gmra.mxu0 %v1487
    %v1626 = vpop.f32.mrf.mxu0
    %v1627 = vadd.f32 0.0, %v1626
    %v1628 = vpop.f32.mrf.mxu0
    %v1629 = vadd.f32 0.0, %v1628
    %1630 = vdwg.mxu0
    %v1635 = vrot.slane %v1556, 4
    %v1636 = vrot.slane %v1558, 4
    %v1637 = vrot.slane %v1627, 4
    %v1638 = vrot.slane %v1629, 4
    %v1643 = vadd.f32 %v243, %v1635
    %v1644 = vadd.f32 %v245, %v1636
    %v1645 = vadd.f32 %v320, %v1637
    %v1646 = vadd.f32 %v322, %v1638
    %v1647 = vxor.u32 %v1643, 2147483648
    %v1648 = vmul.f32 %v1647, 1.442695
    %v1649 = vpow.pop %v1648
    %v1650 = vadd.f32 %v1649, 1.0
    %v1651 = vrcp.pop %v1650
    %v1652 = vmul.f32 1.0, %v1651
    %v1653 = vxor.u32 %v1644, 2147483648
    %v1654 = vmul.f32 %v1653, 1.442695
    %v1655 = vpow.pop %v1654
    %v1656 = vadd.f32 %v1655, 1.0
    %v1657 = vrcp.pop %v1656
    %v1658 = vmul.f32 1.0, %v1657
    %v1659 = vtanh.pop %v1645
    %v1660 = vxor.u32 %v1646, 2147483648
    %v1661 = vmul.f32 %v1660, 1.442695
    %v1662 = vpow.pop %v1661
    %v1663 = vadd.f32 %v1662, 1.0
    %v1664 = vrcp.pop %v1663
    %v1665 = vmul.f32 1.0, %v1664
    %v1667 = vrot.slane %v1482, 6
    %v1669 = vmul.f32 %v1658, %v1667
    %v1670 = vmul.f32 %v1652, %v1659
    %v1671 = vadd.f32 %v1669, %v1670
    %v1672 = vtanh.pop %v1671
    %v1673 = vmul.f32 %v1665, %v1672
    %1674 = vst [vmem:[#allocation2 + $0x8] sm:$0x30] %v1673
    %v1676 = vrot.slane %v1673, 4
    %1678 = vmatprep.subr.mxu0 %v385
    %1679 = vmatpush1.msra.mxu0 %v384
    %1680 = vmatprep.subr.mxu0 %v381
    %1681 = vmatpush1.msra.mxu0 %v380
    %1682 = vmatprep.subr.mxu0 %v377
    %1683 = vmatpush1.msra.mxu0 %v376
    %1684 = vmatprep.subr.mxu0 %v373
    %1685 = vmatpush1.msra.mxu0 %v372
    %1686 = vmatprep.subr.mxu0 %v369
    %1687 = vmatpush1.msra.mxu0 %v368
    %1688 = vmatprep.subr.mxu0 %v365
    %1689 = vmatpush1.msra.mxu0 %v364
    %1690 = vmatprep.subr.mxu0 %v361
    %1691 = vmatpush1.msra.mxu0 %v360
    %1692 = vmatprep.subr.mxu0 %v357
    %1693 = vmatpush1.msra.mxu0 %v356
    %1694 = vmatprep.subr.mxu0 %v353
    %1695 = vmatpush1.msra.mxu0 %v352
    %1696 = vmatprep.subr.mxu0 %v349
    %1697 = vmatpush1.msra.mxu0 %v348
    %1698 = vmatprep.subr.mxu0 %v345
    %1699 = vmatpush1.msra.mxu0 %v344
    %1700 = vmatprep.subr.mxu0 %v341
    %1701 = vmatpush1.msra.mxu0 %v340
    %1702 = vmatprep.subr.mxu0 %v337
    %1703 = vmatpush1.msra.mxu0 %v336
    %1704 = vmatprep.subr.mxu0 %v333
    %1705 = vmatpush1.msra.mxu0 %v332
    %1706 = vmatprep.subr.mxu0 %v329
    %1707 = vmatpush1.msra.mxu0 %v328
    %1708 = vmatprep.subr.mxu0 %v325
    %1709 = vmatpush1.msra.mxu0 %v324
    %1710 = vmatprep.subr.mxu0 0.0
    %1711 = vmatpush2.msra.mxu0 0.0
    %1712 = vmatprep.subr.mxu0 0.0
    %1713 = vmatpush2.msra.mxu0 0.0
    %1714 = vmatprep.subr.mxu0 0.0
    %1715 = vmatpush2.msra.mxu0 0.0
    %1716 = vmatprep.subr.mxu0 0.0
    %1717 = vmatpush2.msra.mxu0 0.0
    %1718 = vmatprep.subr.mxu0 0.0
    %1719 = vmatpush2.msra.mxu0 0.0
    %1720 = vmatprep.subr.mxu0 0.0
    %1721 = vmatpush2.msra.mxu0 0.0
    %1722 = vmatprep.subr.mxu0 0.0
    %1723 = vmatpush2.msra.mxu0 0.0
    %1724 = vmatprep.subr.mxu0 0.0
    %1725 = vmatpush2.msra.mxu0 0.0
    %1726 = vmatprep.subr.mxu0 0.0
    %1727 = vmatpush2.msra.mxu0 0.0
    %1728 = vmatprep.subr.mxu0 0.0
    %1729 = vmatpush2.msra.mxu0 0.0
    %1730 = vmatprep.subr.mxu0 0.0
    %1731 = vmatpush2.msra.mxu0 0.0
    %1732 = vmatprep.subr.mxu0 0.0
    %1733 = vmatpush2.msra.mxu0 0.0
    %1734 = vmatprep.subr.mxu0 0.0
    %1735 = vmatpush2.msra.mxu0 0.0
    %1736 = vmatprep.subr.mxu0 0.0
    %1737 = vmatpush2.msra.mxu0 0.0
    %1738 = vmatprep.subr.mxu0 0.0
    %1739 = vmatpush2.msra.mxu0 0.0
    %1740 = vmatprep.subr.mxu0 0.0
    %1741 = vmatpush2.msra.mxu0 0.0
    %1742 = vmatprep.mubr.f32.mxu0 0.0
    %1743 = vmatmul.mubr.f32.gmra.mxu0 %v1676
    %v1744 = vpop.f32.mrf.mxu0
    %v1745 = vadd.f32 0.0, %v1744
    %v1746 = vpop.f32.mrf.mxu0
    %v1747 = vadd.f32 0.0, %v1746
    %1748 = vdwg.mxu0
    %1749 = vmatprep.subr.mxu0 %v387
    %1750 = vmatpush1.msra.mxu0 %v386
    %1751 = vmatprep.subr.mxu0 %v383
    %1752 = vmatpush1.msra.mxu0 %v382
    %1753 = vmatprep.subr.mxu0 %v379
    %1754 = vmatpush1.msra.mxu0 %v378
    %1755 = vmatprep.subr.mxu0 %v375
    %1756 = vmatpush1.msra.mxu0 %v374
    %1757 = vmatprep.subr.mxu0 %v371
    %1758 = vmatpush1.msra.mxu0 %v370
    %1759 = vmatprep.subr.mxu0 %v367
    %1760 = vmatpush1.msra.mxu0 %v366
    %1761 = vmatprep.subr.mxu0 %v363
    %1762 = vmatpush1.msra.mxu0 %v362
    %1763 = vmatprep.subr.mxu0 %v359
    %1764 = vmatpush1.msra.mxu0 %v358
    %1765 = vmatprep.subr.mxu0 %v355
    %1766 = vmatpush1.msra.mxu0 %v354
    %1767 = vmatprep.subr.mxu0 %v351
    %1768 = vmatpush1.msra.mxu0 %v350
    %1769 = vmatprep.subr.mxu0 %v347
    %1770 = vmatpush1.msra.mxu0 %v346
    %1771 = vmatprep.subr.mxu0 %v343
    %1772 = vmatpush1.msra.mxu0 %v342
    %1773 = vmatprep.subr.mxu0 %v339
    %1774 = vmatpush1.msra.mxu0 %v338
    %1775 = vmatprep.subr.mxu0 %v335
    %1776 = vmatpush1.msra.mxu0 %v334
    %1777 = vmatprep.subr.mxu0 %v331
    %1778 = vmatpush1.msra.mxu0 %v330
    %1779 = vmatprep.subr.mxu0 %v327
    %1780 = vmatpush1.msra.mxu0 %v326
    %1781 = vmatprep.subr.mxu0 0.0
    %1782 = vmatpush2.msra.mxu0 0.0
    %1783 = vmatprep.subr.mxu0 0.0
    %1784 = vmatpush2.msra.mxu0 0.0
    %1785 = vmatprep.subr.mxu0 0.0
    %1786 = vmatpush2.msra.mxu0 0.0
    %1787 = vmatprep.subr.mxu0 0.0
    %1788 = vmatpush2.msra.mxu0 0.0
    %1789 = vmatprep.subr.mxu0 0.0
    %1790 = vmatpush2.msra.mxu0 0.0
    %1791 = vmatprep.subr.mxu0 0.0
    %1792 = vmatpush2.msra.mxu0 0.0
    %1793 = vmatprep.subr.mxu0 0.0
    %1794 = vmatpush2.msra.mxu0 0.0
    %1795 = vmatprep.subr.mxu0 0.0
    %1796 = vmatpush2.msra.mxu0 0.0
    %1797 = vmatprep.subr.mxu0 0.0
    %1798 = vmatpush2.msra.mxu0 0.0
    %1799 = vmatprep.subr.mxu0 0.0
    %1800 = vmatpush2.msra.mxu0 0.0
    %1801 = vmatprep.subr.mxu0 0.0
    %1802 = vmatpush2.msra.mxu0 0.0
    %1803 = vmatprep.subr.mxu0 0.0
    %1804 = vmatpush2.msra.mxu0 0.0
    %1805 = vmatprep.subr.mxu0 0.0
    %1806 = vmatpush2.msra.mxu0 0.0
    %1807 = vmatprep.subr.mxu0 0.0
    %1808 = vmatpush2.msra.mxu0 0.0
    %1809 = vmatprep.subr.mxu0 0.0
    %1810 = vmatpush2.msra.mxu0 0.0
    %1811 = vmatprep.subr.mxu0 0.0
    %1812 = vmatpush2.msra.mxu0 0.0
    %1813 = vmatprep.mubr.f32.mxu0 0.0
    %1814 = vmatmul.mubr.f32.gmra.mxu0 %v1676
    %v1815 = vpop.f32.mrf.mxu0
    %v1816 = vadd.f32 0.0, %v1815
    %v1817 = vpop.f32.mrf.mxu0
    %v1818 = vadd.f32 0.0, %v1817
    %1819 = vdwg.mxu0
    %v1824 = vrot.slane %v1745, 2
    %v1825 = vrot.slane %v1747, 2
    %v1826 = vrot.slane %v1816, 2
    %v1827 = vrot.slane %v1818, 2
    %v1832 = vadd.f32 %v243, %v1824
    %v1833 = vadd.f32 %v245, %v1825
    %v1834 = vadd.f32 %v320, %v1826
    %v1835 = vadd.f32 %v322, %v1827
    %v1836 = vxor.u32 %v1832, 2147483648
    %v1837 = vmul.f32 %v1836, 1.442695
    %v1838 = vpow.pop %v1837
    %v1839 = vadd.f32 %v1838, 1.0
    %v1840 = vrcp.pop %v1839
    %v1841 = vmul.f32 1.0, %v1840
    %v1842 = vxor.u32 %v1833, 2147483648
    %v1843 = vmul.f32 %v1842, 1.442695
    %v1844 = vpow.pop %v1843
    %v1845 = vadd.f32 %v1844, 1.0
    %v1846 = vrcp.pop %v1845
    %v1847 = vmul.f32 1.0, %v1846
    %v1848 = vtanh.pop %v1834
    %v1849 = vxor.u32 %v1835, 2147483648
    %v1850 = vmul.f32 %v1849, 1.442695
    %v1851 = vpow.pop %v1850
    %v1852 = vadd.f32 %v1851, 1.0
    %v1853 = vrcp.pop %v1852
    %v1854 = vmul.f32 1.0, %v1853
    %v1856 = vrot.slane %v1671, 6
    %v1858 = vmul.f32 %v1847, %v1856
    %v1859 = vmul.f32 %v1841, %v1848
    %v1860 = vadd.f32 %v1858, %v1859
    %v1861 = vtanh.pop %v1860
    %v1862 = vmul.f32 %v1854, %v1861
    %1863 = vst [vmem:[#allocation2 + $0x8] sm:$0xc0] %v1862
    %v1864 = vld [vmem:[#allocation2] sm:$0xff]
    %v1865 = vld [vmem:[#allocation2 + $0x8] sm:$0xff]
    %v1866 = vld [vmem:[#allocation8] sm:$0xff]
    %v1867 = vld [vmem:[#allocation8 + $0x8] sm:$0xff]
    %v1868 = vld [vmem:[#allocation8 + $0x10] sm:$0xff]
    %v1869 = vld [vmem:[#allocation8 + $0x18] sm:$0xff]
    %v1870 = vld [vmem:[#allocation8 + $0x20] sm:$0xff]
    %v1871 = vld [vmem:[#allocation8 + $0x28] sm:$0xff]
    %v1872 = vld [vmem:[#allocation8 + $0x30] sm:$0xff]
    %v1873 = vld [vmem:[#allocation8 + $0x38] sm:$0xff]
    %v1874 = vld [vmem:[#allocation8 + $0x40] sm:$0xff]
    %v1875 = vld [vmem:[#allocation8 + $0x48] sm:$0xff]
    %v1876 = vld [vmem:[#allocation8 + $0x50] sm:$0xff]
    %v1877 = vld [vmem:[#allocation8 + $0x58] sm:$0xff]
    %v1878 = vld [vmem:[#allocation8 + $0x60] sm:$0xff]
    %v1879 = vld [vmem:[#allocation8 + $0x68] sm:$0xff]
    %v1880 = vld [vmem:[#allocation8 + $0x70] sm:$0xff]
    %v1881 = vld [vmem:[#allocation8 + $0x78] sm:$0xff]
    %v1882 = vld [vmem:[#allocation8 + $0x80] sm:$0xff]
    %v1883 = vld [vmem:[#allocation8 + $0x88] sm:$0xff]
    %v1884 = vld [vmem:[#allocation8 + $0x90] sm:$0xff]
    %v1885 = vld [vmem:[#allocation8 + $0x98] sm:$0xff]
    %v1886 = vld [vmem:[#allocation8 + $0xa0] sm:$0xff]
    %v1887 = vld [vmem:[#allocation8 + $0xa8] sm:$0xff]
    %v1888 = vld [vmem:[#allocation8 + $0xb0] sm:$0xff]
    %v1889 = vld [vmem:[#allocation8 + $0xb8] sm:$0xff]
    %v1890 = vld [vmem:[#allocation8 + $0xc0] sm:$0xff]
    %v1891 = vld [vmem:[#allocation8 + $0xc8] sm:$0xff]
    %v1892 = vld [vmem:[#allocation8 + $0xd0] sm:$0xff]
    %v1893 = vld [vmem:[#allocation8 + $0xd8] sm:$0xff]
    %v1894 = vld [vmem:[#allocation8 + $0xe0] sm:$0xff]
    %v1895 = vld [vmem:[#allocation8 + $0xe8] sm:$0xff]
    %v1896 = vld [vmem:[#allocation8 + $0xf0] sm:$0xff]
    %v1897 = vld [vmem:[#allocation8 + $0xf8] sm:$0xff]
    %v1898 = vld [vmem:[#allocation8 + $0x100] sm:$0xff]
    %v1899 = vld [vmem:[#allocation8 + $0x108] sm:$0xff]
    %v1900 = vld [vmem:[#allocation8 + $0x110] sm:$0xff]
    %v1901 = vld [vmem:[#allocation8 + $0x118] sm:$0xff]
    %v1902 = vld [vmem:[#allocation8 + $0x120] sm:$0xff]
    %v1903 = vld [vmem:[#allocation8 + $0x128] sm:$0xff]
    %v1904 = vld [vmem:[#allocation8 + $0x130] sm:$0xff]
    %v1905 = vld [vmem:[#allocation8 + $0x138] sm:$0xff]
    %v1906 = vld [vmem:[#allocation8 + $0x140] sm:$0xff]
    %v1907 = vld [vmem:[#allocation8 + $0x148] sm:$0xff]
    %v1908 = vld [vmem:[#allocation8 + $0x150] sm:$0xff]
    %v1909 = vld [vmem:[#allocation8 + $0x158] sm:$0xff]
    %v1910 = vld [vmem:[#allocation8 + $0x160] sm:$0xff]
    %v1911 = vld [vmem:[#allocation8 + $0x168] sm:$0xff]
    %v1912 = vld [vmem:[#allocation8 + $0x170] sm:$0xff]
    %v1913 = vld [vmem:[#allocation8 + $0x178] sm:$0xff]
    %v1914 = vld [vmem:[#allocation8 + $0x180] sm:$0xff]
    %v1915 = vld [vmem:[#allocation8 + $0x188] sm:$0xff]
    %v1916 = vld [vmem:[#allocation8 + $0x190] sm:$0xff]
    %v1917 = vld [vmem:[#allocation8 + $0x198] sm:$0xff]
    %v1918 = vld [vmem:[#allocation8 + $0x1a0] sm:$0xff]
    %v1919 = vld [vmem:[#allocation8 + $0x1a8] sm:$0xff]
    %v1920 = vld [vmem:[#allocation8 + $0x1b0] sm:$0xff]
    %v1921 = vld [vmem:[#allocation8 + $0x1b8] sm:$0xff]
    %v1922 = vld [vmem:[#allocation8 + $0x1c0] sm:$0xff]
    %v1923 = vld [vmem:[#allocation8 + $0x1c8] sm:$0xff]
    %v1924 = vld [vmem:[#allocation8 + $0x1d0] sm:$0xff]
    %v1925 = vld [vmem:[#allocation8 + $0x1d8] sm:$0xff]
    %v1926 = vld [vmem:[#allocation8 + $0x1e0] sm:$0xff]
    %v1927 = vld [vmem:[#allocation8 + $0x1e8] sm:$0xff]
    %v1928 = vld [vmem:[#allocation8 + $0x1f0] sm:$0xff]
    %v1929 = vld [vmem:[#allocation8 + $0x1f8] sm:$0xff]
    %v1930 = vld [vmem:[%s6] sm:$0xf]
    %v1932 = vlaneseq
    %v1933 = vshrl.u32 %v1932, 7
    %v1934 = vsub.s32 0, %v1933
    %v1935 = vrot.slane %v1930, %v1934
    %v1936 = vlaneseq
    %v1937 = vshrl.u32 %v1936, 7
    %v1938 = vsub.s32 1, %v1937
    %v1939 = vrot.slane %v1930, %v1938
    %v1940 = vlaneseq
    %v1941 = vshrl.u32 %v1940, 7
    %v1942 = vsub.s32 2, %v1941
    %v1943 = vrot.slane %v1930, %v1942
    %v1944 = vlaneseq
    %v1945 = vshrl.u32 %v1944, 7
    %v1946 = vsub.s32 3, %v1945
    %v1947 = vrot.slane %v1930, %v1946
    %1952 = vmatprep.subr.mxu0 %v1927
    %1953 = vmatpush1.msra.mxu0 %v1926
    %1954 = vmatprep.subr.mxu0 %v1923
    %1955 = vmatpush1.msra.mxu0 %v1922
    %1956 = vmatprep.subr.mxu0 %v1919
    %1957 = vmatpush1.msra.mxu0 %v1918
    %1958 = vmatprep.subr.mxu0 %v1915
    %1959 = vmatpush1.msra.mxu0 %v1914
    %1960 = vmatprep.subr.mxu0 %v1911
    %1961 = vmatpush1.msra.mxu0 %v1910
    %1962 = vmatprep.subr.mxu0 %v1907
    %1963 = vmatpush1.msra.mxu0 %v1906
    %1964 = vmatprep.subr.mxu0 %v1903
    %1965 = vmatpush1.msra.mxu0 %v1902
    %1966 = vmatprep.subr.mxu0 %v1899
    %1967 = vmatpush1.msra.mxu0 %v1898
    %1968 = vmatprep.subr.mxu0 %v1895
    %1969 = vmatpush1.msra.mxu0 %v1894
    %1970 = vmatprep.subr.mxu0 %v1891
    %1971 = vmatpush1.msra.mxu0 %v1890
    %1972 = vmatprep.subr.mxu0 %v1887
    %1973 = vmatpush1.msra.mxu0 %v1886
    %1974 = vmatprep.subr.mxu0 %v1883
    %1975 = vmatpush1.msra.mxu0 %v1882
    %1976 = vmatprep.subr.mxu0 %v1879
    %1977 = vmatpush1.msra.mxu0 %v1878
    %1978 = vmatprep.subr.mxu0 %v1875
    %1979 = vmatpush1.msra.mxu0 %v1874
    %1980 = vmatprep.subr.mxu0 %v1871
    %1981 = vmatpush1.msra.mxu0 %v1870
    %1982 = vmatprep.subr.mxu0 %v1867
    %1983 = vmatpush1.msra.mxu0 %v1866
    %1984 = vmatprep.subr.mxu0 0.0
    %1985 = vmatpush2.msra.mxu0 0.0
    %1986 = vmatprep.subr.mxu0 0.0
    %1987 = vmatpush2.msra.mxu0 0.0
    %1988 = vmatprep.subr.mxu0 0.0
    %1989 = vmatpush2.msra.mxu0 0.0
    %1990 = vmatprep.subr.mxu0 0.0
    %1991 = vmatpush2.msra.mxu0 0.0
    %1992 = vmatprep.subr.mxu0 0.0
    %1993 = vmatpush2.msra.mxu0 0.0
    %1994 = vmatprep.subr.mxu0 0.0
    %1995 = vmatpush2.msra.mxu0 0.0
    %1996 = vmatprep.subr.mxu0 0.0
    %1997 = vmatpush2.msra.mxu0 0.0
    %1998 = vmatprep.subr.mxu0 0.0
    %1999 = vmatpush2.msra.mxu0 0.0
    %2000 = vmatprep.subr.mxu0 0.0
    %2001 = vmatpush2.msra.mxu0 0.0
    %2002 = vmatprep.subr.mxu0 0.0
    %2003 = vmatpush2.msra.mxu0 0.0
    %2004 = vmatprep.subr.mxu0 0.0
    %2005 = vmatpush2.msra.mxu0 0.0
    %2006 = vmatprep.subr.mxu0 0.0
    %2007 = vmatpush2.msra.mxu0 0.0
    %2008 = vmatprep.subr.mxu0 0.0
    %2009 = vmatpush2.msra.mxu0 0.0
    %2010 = vmatprep.subr.mxu0 0.0
    %2011 = vmatpush2.msra.mxu0 0.0
    %2012 = vmatprep.subr.mxu0 0.0
    %2013 = vmatpush2.msra.mxu0 0.0
    %2014 = vmatprep.subr.mxu0 0.0
    %2015 = vmatpush2.msra.mxu0 0.0
    %2016 = vmatprep.mubr.f32.mxu0 0.0
    %2017 = vmatmul.mubr.f32.gmra.mxu0 %v1864
    %v2018 = vpop.f32.mrf.mxu0
    %v2019 = vadd.f32 %v1935, %v2018
    %v2020 = vpop.f32.mrf.mxu0
    %v2021 = vadd.f32 %v1939, %v2020
    %2022 = vmatprep.mubr.f32.mxu0 0.0
    %2023 = vmatmul.mubr.f32.gmra.mxu0 %v1865
    %v2024 = vpop.f32.mrf.mxu0
    %v2025 = vadd.f32 %v1935, %v2024
    %v2026 = vpop.f32.mrf.mxu0
    %v2027 = vadd.f32 %v1939, %v2026
    %2028 = vdwg.mxu0
    %2029 = vmatprep.subr.mxu0 %v1929
    %2030 = vmatpush1.msra.mxu0 %v1928
    %2031 = vmatprep.subr.mxu0 %v1925
    %2032 = vmatpush1.msra.mxu0 %v1924
    %2033 = vmatprep.subr.mxu0 %v1921
    %2034 = vmatpush1.msra.mxu0 %v1920
    %2035 = vmatprep.subr.mxu0 %v1917
    %2036 = vmatpush1.msra.mxu0 %v1916
    %2037 = vmatprep.subr.mxu0 %v1913
    %2038 = vmatpush1.msra.mxu0 %v1912
    %2039 = vmatprep.subr.mxu0 %v1909
    %2040 = vmatpush1.msra.mxu0 %v1908
    %2041 = vmatprep.subr.mxu0 %v1905
    %2042 = vmatpush1.msra.mxu0 %v1904
    %2043 = vmatprep.subr.mxu0 %v1901
    %2044 = vmatpush1.msra.mxu0 %v1900
    %2045 = vmatprep.subr.mxu0 %v1897
    %2046 = vmatpush1.msra.mxu0 %v1896
    %2047 = vmatprep.subr.mxu0 %v1893
    %2048 = vmatpush1.msra.mxu0 %v1892
    %2049 = vmatprep.subr.mxu0 %v1889
    %2050 = vmatpush1.msra.mxu0 %v1888
    %2051 = vmatprep.subr.mxu0 %v1885
    %2052 = vmatpush1.msra.mxu0 %v1884
    %2053 = vmatprep.subr.mxu0 %v1881
    %2054 = vmatpush1.msra.mxu0 %v1880
    %2055 = vmatprep.subr.mxu0 %v1877
    %2056 = vmatpush1.msra.mxu0 %v1876
    %2057 = vmatprep.subr.mxu0 %v1873
    %2058 = vmatpush1.msra.mxu0 %v1872
    %2059 = vmatprep.subr.mxu0 %v1869
    %2060 = vmatpush1.msra.mxu0 %v1868
    %2061 = vmatprep.subr.mxu0 0.0
    %2062 = vmatpush2.msra.mxu0 0.0
    %2063 = vmatprep.subr.mxu0 0.0
    %2064 = vmatpush2.msra.mxu0 0.0
    %2065 = vmatprep.subr.mxu0 0.0
    %2066 = vmatpush2.msra.mxu0 0.0
    %2067 = vmatprep.subr.mxu0 0.0
    %2068 = vmatpush2.msra.mxu0 0.0
    %2069 = vmatprep.subr.mxu0 0.0
    %2070 = vmatpush2.msra.mxu0 0.0
    %2071 = vmatprep.subr.mxu0 0.0
    %2072 = vmatpush2.msra.mxu0 0.0
    %2073 = vmatprep.subr.mxu0 0.0
    %2074 = vmatpush2.msra.mxu0 0.0
    %2075 = vmatprep.subr.mxu0 0.0
    %2076 = vmatpush2.msra.mxu0 0.0
    %2077 = vmatprep.subr.mxu0 0.0
    %2078 = vmatpush2.msra.mxu0 0.0
    %2079 = vmatprep.subr.mxu0 0.0
    %2080 = vmatpush2.msra.mxu0 0.0
    %2081 = vmatprep.subr.mxu0 0.0
    %2082 = vmatpush2.msra.mxu0 0.0
    %2083 = vmatprep.subr.mxu0 0.0
    %2084 = vmatpush2.msra.mxu0 0.0
    %2085 = vmatprep.subr.mxu0 0.0
    %2086 = vmatpush2.msra.mxu0 0.0
    %2087 = vmatprep.subr.mxu0 0.0
    %2088 = vmatpush2.msra.mxu0 0.0
    %2089 = vmatprep.subr.mxu0 0.0
    %2090 = vmatpush2.msra.mxu0 0.0
    %2091 = vmatprep.subr.mxu0 0.0
    %2092 = vmatpush2.msra.mxu0 0.0
    %2093 = vmatprep.mubr.f32.mxu0 0.0
    %2094 = vmatmul.mubr.f32.gmra.mxu0 %v1864
    %v2095 = vpop.f32.mrf.mxu0
    %v2096 = vadd.f32 %v1943, %v2095
    %v2097 = vpop.f32.mrf.mxu0
    %v2098 = vadd.f32 %v1947, %v2097
    %2099 = vmatprep.mubr.f32.mxu0 0.0
    %2100 = vmatmul.mubr.f32.gmra.mxu0 %v1865
    %v2101 = vpop.f32.mrf.mxu0
    %v2102 = vadd.f32 %v1943, %v2101
    %v2103 = vpop.f32.mrf.mxu0
    %v2104 = vadd.f32 %v1947, %v2103
    %2105 = vdwg.mxu0
    %v2106 = vld [vmem:[#allocation9] sm:$0xff]
    %v2107 = vld [vmem:[#allocation9 + $0x8] sm:$0xff]
    %v2108 = vld [vmem:[#allocation9 + $0x10] sm:$0xff]
    %v2109 = vld [vmem:[#allocation9 + $0x18] sm:$0xff]
    %v2110 = vld [vmem:[#allocation9 + $0x20] sm:$0xff]
    %v2111 = vld [vmem:[#allocation9 + $0x28] sm:$0xff]
    %v2112 = vld [vmem:[#allocation9 + $0x30] sm:$0xff]
    %v2113 = vld [vmem:[#allocation9 + $0x38] sm:$0xff]
    %v2114 = vld [vmem:[#allocation9 + $0x40] sm:$0xff]
    %v2115 = vld [vmem:[#allocation9 + $0x48] sm:$0xff]
    %v2116 = vld [vmem:[#allocation9 + $0x50] sm:$0xff]
    %v2117 = vld [vmem:[#allocation9 + $0x58] sm:$0xff]
    %v2118 = vld [vmem:[#allocation9 + $0x60] sm:$0xff]
    %v2119 = vld [vmem:[#allocation9 + $0x68] sm:$0xff]
    %v2120 = vld [vmem:[#allocation9 + $0x70] sm:$0xff]
    %v2121 = vld [vmem:[#allocation9 + $0x78] sm:$0xff]
    %v2122 = vld [vmem:[#allocation9 + $0x80] sm:$0xff]
    %v2123 = vld [vmem:[#allocation9 + $0x88] sm:$0xff]
    %v2124 = vld [vmem:[#allocation9 + $0x90] sm:$0xff]
    %v2125 = vld [vmem:[#allocation9 + $0x98] sm:$0xff]
    %v2126 = vld [vmem:[#allocation9 + $0xa0] sm:$0xff]
    %v2127 = vld [vmem:[#allocation9 + $0xa8] sm:$0xff]
    %v2128 = vld [vmem:[#allocation9 + $0xb0] sm:$0xff]
    %v2129 = vld [vmem:[#allocation9 + $0xb8] sm:$0xff]
    %v2130 = vld [vmem:[#allocation9 + $0xc0] sm:$0xff]
    %v2131 = vld [vmem:[#allocation9 + $0xc8] sm:$0xff]
    %v2132 = vld [vmem:[#allocation9 + $0xd0] sm:$0xff]
    %v2133 = vld [vmem:[#allocation9 + $0xd8] sm:$0xff]
    %v2134 = vld [vmem:[#allocation9 + $0xe0] sm:$0xff]
    %v2135 = vld [vmem:[#allocation9 + $0xe8] sm:$0xff]
    %v2136 = vld [vmem:[#allocation9 + $0xf0] sm:$0xff]
    %v2137 = vld [vmem:[#allocation9 + $0xf8] sm:$0xff]
    %v2138 = vld [vmem:[#allocation9 + $0x100] sm:$0xff]
    %v2139 = vld [vmem:[#allocation9 + $0x108] sm:$0xff]
    %v2140 = vld [vmem:[#allocation9 + $0x110] sm:$0xff]
    %v2141 = vld [vmem:[#allocation9 + $0x118] sm:$0xff]
    %v2142 = vld [vmem:[#allocation9 + $0x120] sm:$0xff]
    %v2143 = vld [vmem:[#allocation9 + $0x128] sm:$0xff]
    %v2144 = vld [vmem:[#allocation9 + $0x130] sm:$0xff]
    %v2145 = vld [vmem:[#allocation9 + $0x138] sm:$0xff]
    %v2146 = vld [vmem:[#allocation9 + $0x140] sm:$0xff]
    %v2147 = vld [vmem:[#allocation9 + $0x148] sm:$0xff]
    %v2148 = vld [vmem:[#allocation9 + $0x150] sm:$0xff]
    %v2149 = vld [vmem:[#allocation9 + $0x158] sm:$0xff]
    %v2150 = vld [vmem:[#allocation9 + $0x160] sm:$0xff]
    %v2151 = vld [vmem:[#allocation9 + $0x168] sm:$0xff]
    %v2152 = vld [vmem:[#allocation9 + $0x170] sm:$0xff]
    %v2153 = vld [vmem:[#allocation9 + $0x178] sm:$0xff]
    %v2154 = vld [vmem:[#allocation9 + $0x180] sm:$0xff]
    %v2155 = vld [vmem:[#allocation9 + $0x188] sm:$0xff]
    %v2156 = vld [vmem:[#allocation9 + $0x190] sm:$0xff]
    %v2157 = vld [vmem:[#allocation9 + $0x198] sm:$0xff]
    %v2158 = vld [vmem:[#allocation9 + $0x1a0] sm:$0xff]
    %v2159 = vld [vmem:[#allocation9 + $0x1a8] sm:$0xff]
    %v2160 = vld [vmem:[#allocation9 + $0x1b0] sm:$0xff]
    %v2161 = vld [vmem:[#allocation9 + $0x1b8] sm:$0xff]
    %v2162 = vld [vmem:[#allocation9 + $0x1c0] sm:$0xff]
    %v2163 = vld [vmem:[#allocation9 + $0x1c8] sm:$0xff]
    %v2164 = vld [vmem:[#allocation9 + $0x1d0] sm:$0xff]
    %v2165 = vld [vmem:[#allocation9 + $0x1d8] sm:$0xff]
    %v2166 = vld [vmem:[#allocation9 + $0x1e0] sm:$0xff]
    %v2167 = vld [vmem:[#allocation9 + $0x1e8] sm:$0xff]
    %v2168 = vld [vmem:[#allocation9 + $0x1f0] sm:$0xff]
    %v2169 = vld [vmem:[#allocation9 + $0x1f8] sm:$0xff]
    %2170 = vmatprep.subr.mxu0 %v2167
    %2171 = vmatpush1.msra.mxu0 %v2166
    %2172 = vmatprep.subr.mxu0 %v2163
    %2173 = vmatpush1.msra.mxu0 %v2162
    %2174 = vmatprep.subr.mxu0 %v2159
    %2175 = vmatpush1.msra.mxu0 %v2158
    %2176 = vmatprep.subr.mxu0 %v2155
    %2177 = vmatpush1.msra.mxu0 %v2154
    %2178 = vmatprep.subr.mxu0 %v2151
    %2179 = vmatpush1.msra.mxu0 %v2150
    %2180 = vmatprep.subr.mxu0 %v2147
    %2181 = vmatpush1.msra.mxu0 %v2146
    %2182 = vmatprep.subr.mxu0 %v2143
    %2183 = vmatpush1.msra.mxu0 %v2142
    %2184 = vmatprep.subr.mxu0 %v2139
    %2185 = vmatpush1.msra.mxu0 %v2138
    %2186 = vmatprep.subr.mxu0 %v2135
    %2187 = vmatpush1.msra.mxu0 %v2134
    %2188 = vmatprep.subr.mxu0 %v2131
    %2189 = vmatpush1.msra.mxu0 %v2130
    %2190 = vmatprep.subr.mxu0 %v2127
    %2191 = vmatpush1.msra.mxu0 %v2126
    %2192 = vmatprep.subr.mxu0 %v2123
    %2193 = vmatpush1.msra.mxu0 %v2122
    %2194 = vmatprep.subr.mxu0 %v2119
    %2195 = vmatpush1.msra.mxu0 %v2118
    %2196 = vmatprep.subr.mxu0 %v2115
    %2197 = vmatpush1.msra.mxu0 %v2114
    %2198 = vmatprep.subr.mxu0 %v2111
    %2199 = vmatpush1.msra.mxu0 %v2110
    %2200 = vmatprep.subr.mxu0 %v2107
    %2201 = vmatpush1.msra.mxu0 %v2106
    %2202 = vmatprep.subr.mxu0 0.0
    %2203 = vmatpush2.msra.mxu0 0.0
    %2204 = vmatprep.subr.mxu0 0.0
    %2205 = vmatpush2.msra.mxu0 0.0
    %2206 = vmatprep.subr.mxu0 0.0
    %2207 = vmatpush2.msra.mxu0 0.0
    %2208 = vmatprep.subr.mxu0 0.0
    %2209 = vmatpush2.msra.mxu0 0.0
    %2210 = vmatprep.subr.mxu0 0.0
    %2211 = vmatpush2.msra.mxu0 0.0
    %2212 = vmatprep.subr.mxu0 0.0
    %2213 = vmatpush2.msra.mxu0 0.0
    %2214 = vmatprep.subr.mxu0 0.0
    %2215 = vmatpush2.msra.mxu0 0.0
    %2216 = vmatprep.subr.mxu0 0.0
    %2217 = vmatpush2.msra.mxu0 0.0
    %2218 = vmatprep.subr.mxu0 0.0
    %2219 = vmatpush2.msra.mxu0 0.0
    %2220 = vmatprep.subr.mxu0 0.0
    %2221 = vmatpush2.msra.mxu0 0.0
    %2222 = vmatprep.subr.mxu0 0.0
    %2223 = vmatpush2.msra.mxu0 0.0
    %2224 = vmatprep.subr.mxu0 0.0
    %2225 = vmatpush2.msra.mxu0 0.0
    %2226 = vmatprep.subr.mxu0 0.0
    %2227 = vmatpush2.msra.mxu0 0.0
    %2228 = vmatprep.subr.mxu0 0.0
    %2229 = vmatpush2.msra.mxu0 0.0
    %2230 = vmatprep.subr.mxu0 0.0
    %2231 = vmatpush2.msra.mxu0 0.0
    %2232 = vmatprep.subr.mxu0 0.0
    %2233 = vmatpush2.msra.mxu0 0.0
    %2234 = vmatprep.mubr.f32.mxu0 0.0
    %2235 = vmatmul.mubr.f32.gmra.mxu0 0.0
    %v2236 = vpop.f32.mrf.mxu0
    %v2237 = vadd.f32 0.0, %v2236
    %v2238 = vpop.f32.mrf.mxu0
    %v2239 = vadd.f32 0.0, %v2238
    %2240 = vdwg.mxu0
    %2241 = vmatprep.subr.mxu0 %v2169
    %2242 = vmatpush1.msra.mxu0 %v2168
    %2243 = vmatprep.subr.mxu0 %v2165
    %2244 = vmatpush1.msra.mxu0 %v2164
    %2245 = vmatprep.subr.mxu0 %v2161
    %2246 = vmatpush1.msra.mxu0 %v2160
    %2247 = vmatprep.subr.mxu0 %v2157
    %2248 = vmatpush1.msra.mxu0 %v2156
    %2249 = vmatprep.subr.mxu0 %v2153
    %2250 = vmatpush1.msra.mxu0 %v2152
    %2251 = vmatprep.subr.mxu0 %v2149
    %2252 = vmatpush1.msra.mxu0 %v2148
    %2253 = vmatprep.subr.mxu0 %v2145
    %2254 = vmatpush1.msra.mxu0 %v2144
    %2255 = vmatprep.subr.mxu0 %v2141
    %2256 = vmatpush1.msra.mxu0 %v2140
    %2257 = vmatprep.subr.mxu0 %v2137
    %2258 = vmatpush1.msra.mxu0 %v2136
    %2259 = vmatprep.subr.mxu0 %v2133
    %2260 = vmatpush1.msra.mxu0 %v2132
    %2261 = vmatprep.subr.mxu0 %v2129
    %2262 = vmatpush1.msra.mxu0 %v2128
    %2263 = vmatprep.subr.mxu0 %v2125
    %2264 = vmatpush1.msra.mxu0 %v2124
    %2265 = vmatprep.subr.mxu0 %v2121
    %2266 = vmatpush1.msra.mxu0 %v2120
    %2267 = vmatprep.subr.mxu0 %v2117
    %2268 = vmatpush1.msra.mxu0 %v2116
    %2269 = vmatprep.subr.mxu0 %v2113
    %2270 = vmatpush1.msra.mxu0 %v2112
    %2271 = vmatprep.subr.mxu0 %v2109
    %2272 = vmatpush1.msra.mxu0 %v2108
    %2273 = vmatprep.subr.mxu0 0.0
    %2274 = vmatpush2.msra.mxu0 0.0
    %2275 = vmatprep.subr.mxu0 0.0
    %2276 = vmatpush2.msra.mxu0 0.0
    %2277 = vmatprep.subr.mxu0 0.0
    %2278 = vmatpush2.msra.mxu0 0.0
    %2279 = vmatprep.subr.mxu0 0.0
    %2280 = vmatpush2.msra.mxu0 0.0
    %2281 = vmatprep.subr.mxu0 0.0
    %2282 = vmatpush2.msra.mxu0 0.0
    %2283 = vmatprep.subr.mxu0 0.0
    %2284 = vmatpush2.msra.mxu0 0.0
    %2285 = vmatprep.subr.mxu0 0.0
    %2286 = vmatpush2.msra.mxu0 0.0
    %2287 = vmatprep.subr.mxu0 0.0
    %2288 = vmatpush2.msra.mxu0 0.0
    %2289 = vmatprep.subr.mxu0 0.0
    %2290 = vmatpush2.msra.mxu0 0.0
    %2291 = vmatprep.subr.mxu0 0.0
    %2292 = vmatpush2.msra.mxu0 0.0
    %2293 = vmatprep.subr.mxu0 0.0
    %2294 = vmatpush2.msra.mxu0 0.0
    %2295 = vmatprep.subr.mxu0 0.0
    %2296 = vmatpush2.msra.mxu0 0.0
    %2297 = vmatprep.subr.mxu0 0.0
    %2298 = vmatpush2.msra.mxu0 0.0
    %2299 = vmatprep.subr.mxu0 0.0
    %2300 = vmatpush2.msra.mxu0 0.0
    %2301 = vmatprep.subr.mxu0 0.0
    %2302 = vmatpush2.msra.mxu0 0.0
    %2303 = vmatprep.subr.mxu0 0.0
    %2304 = vmatpush2.msra.mxu0 0.0
    %2305 = vmatprep.mubr.f32.mxu0 0.0
    %2306 = vmatmul.mubr.f32.gmra.mxu0 0.0
    %v2307 = vpop.f32.mrf.mxu0
    %v2308 = vadd.f32 0.0, %v2307
    %v2309 = vpop.f32.mrf.mxu0
    %v2310 = vadd.f32 0.0, %v2309
    %2311 = vdwg.mxu0
    %v2312 = vadd.f32 %v2019, %v2237
    %v2313 = vadd.f32 %v2021, %v2239
    %v2314 = vadd.f32 %v2096, %v2308
    %v2315 = vadd.f32 %v2098, %v2310
    %v2316 = vxor.u32 %v2312, 2147483648
    %v2317 = vmul.f32 %v2316, 1.442695
    %v2318 = vpow.pop %v2317
    %v2319 = vadd.f32 %v2318, 1.0
    %v2320 = vrcp.pop %v2319
    %v2321 = vmul.f32 1.0, %v2320
    %v2322 = vxor.u32 %v2313, 2147483648
    %v2323 = vmul.f32 %v2322, 1.442695
    %v2324 = vpow.pop %v2323
    %v2325 = vadd.f32 %v2324, 1.0
    %v2326 = vrcp.pop %v2325
    %v2327 = vmul.f32 1.0, %v2326
    %v2328 = vtanh.pop %v2314
    %v2329 = vxor.u32 %v2315, 2147483648
    %v2330 = vmul.f32 %v2329, 1.442695
    %v2331 = vpow.pop %v2330
    %v2332 = vadd.f32 %v2331, 1.0
    %v2333 = vrcp.pop %v2332
    %v2334 = vmul.f32 1.0, %v2333
    %v2335 = vmul.f32 %v2327, 0.0
    %v2336 = vmul.f32 %v2321, %v2328
    %v2337 = vadd.f32 %v2335, %v2336
    %v2338 = vtanh.pop %v2337
    %v2339 = vmul.f32 %v2334, %v2338
    %2340 = vst [vmem:[#allocation2] sm:$0x3] %v2339
    %2341 = vmatprep.subr.mxu0 %v2167
    %2342 = vmatpush1.msra.mxu0 %v2166
    %2343 = vmatprep.subr.mxu0 %v2163
    %2344 = vmatpush1.msra.mxu0 %v2162
    %2345 = vmatprep.subr.mxu0 %v2159
    %2346 = vmatpush1.msra.mxu0 %v2158
    %2347 = vmatprep.subr.mxu0 %v2155
    %2348 = vmatpush1.msra.mxu0 %v2154
    %2349 = vmatprep.subr.mxu0 %v2151
    %2350 = vmatpush1.msra.mxu0 %v2150
    %2351 = vmatprep.subr.mxu0 %v2147
    %2352 = vmatpush1.msra.mxu0 %v2146
    %2353 = vmatprep.subr.mxu0 %v2143
    %2354 = vmatpush1.msra.mxu0 %v2142
    %2355 = vmatprep.subr.mxu0 %v2139
    %2356 = vmatpush1.msra.mxu0 %v2138
    %2357 = vmatprep.subr.mxu0 %v2135
    %2358 = vmatpush1.msra.mxu0 %v2134
    %2359 = vmatprep.subr.mxu0 %v2131
    %2360 = vmatpush1.msra.mxu0 %v2130
    %2361 = vmatprep.subr.mxu0 %v2127
    %2362 = vmatpush1.msra.mxu0 %v2126
    %2363 = vmatprep.subr.mxu0 %v2123
    %2364 = vmatpush1.msra.mxu0 %v2122
    %2365 = vmatprep.subr.mxu0 %v2119
    %2366 = vmatpush1.msra.mxu0 %v2118
    %2367 = vmatprep.subr.mxu0 %v2115
    %2368 = vmatpush1.msra.mxu0 %v2114
    %2369 = vmatprep.subr.mxu0 %v2111
    %2370 = vmatpush1.msra.mxu0 %v2110
    %2371 = vmatprep.subr.mxu0 %v2107
    %2372 = vmatpush1.msra.mxu0 %v2106
    %2373 = vmatprep.subr.mxu0 0.0
    %2374 = vmatpush2.msra.mxu0 0.0
    %2375 = vmatprep.subr.mxu0 0.0
    %2376 = vmatpush2.msra.mxu0 0.0
    %2377 = vmatprep.subr.mxu0 0.0
    %2378 = vmatpush2.msra.mxu0 0.0
    %2379 = vmatprep.subr.mxu0 0.0
    %2380 = vmatpush2.msra.mxu0 0.0
    %2381 = vmatprep.subr.mxu0 0.0
    %2382 = vmatpush2.msra.mxu0 0.0
    %2383 = vmatprep.subr.mxu0 0.0
    %2384 = vmatpush2.msra.mxu0 0.0
    %2385 = vmatprep.subr.mxu0 0.0
    %2386 = vmatpush2.msra.mxu0 0.0
    %2387 = vmatprep.subr.mxu0 0.0
    %2388 = vmatpush2.msra.mxu0 0.0
    %2389 = vmatprep.subr.mxu0 0.0
    %2390 = vmatpush2.msra.mxu0 0.0
    %2391 = vmatprep.subr.mxu0 0.0
    %2392 = vmatpush2.msra.mxu0 0.0
    %2393 = vmatprep.subr.mxu0 0.0
    %2394 = vmatpush2.msra.mxu0 0.0
    %2395 = vmatprep.subr.mxu0 0.0
    %2396 = vmatpush2.msra.mxu0 0.0
    %2397 = vmatprep.subr.mxu0 0.0
    %2398 = vmatpush2.msra.mxu0 0.0
    %2399 = vmatprep.subr.mxu0 0.0
    %2400 = vmatpush2.msra.mxu0 0.0
    %2401 = vmatprep.subr.mxu0 0.0
    %2402 = vmatpush2.msra.mxu0 0.0
    %2403 = vmatprep.subr.mxu0 0.0
    %2404 = vmatpush2.msra.mxu0 0.0
    %2405 = vmatprep.mubr.f32.mxu0 0.0
    %2406 = vmatmul.mubr.f32.gmra.mxu0 %v2339
    %v2407 = vpop.f32.mrf.mxu0
    %v2408 = vadd.f32 0.0, %v2407
    %v2409 = vpop.f32.mrf.mxu0
    %v2410 = vadd.f32 0.0, %v2409
    %2411 = vdwg.mxu0
    %2412 = vmatprep.subr.mxu0 %v2169
    %2413 = vmatpush1.msra.mxu0 %v2168
    %2414 = vmatprep.subr.mxu0 %v2165
    %2415 = vmatpush1.msra.mxu0 %v2164
    %2416 = vmatprep.subr.mxu0 %v2161
    %2417 = vmatpush1.msra.mxu0 %v2160
    %2418 = vmatprep.subr.mxu0 %v2157
    %2419 = vmatpush1.msra.mxu0 %v2156
    %2420 = vmatprep.subr.mxu0 %v2153
    %2421 = vmatpush1.msra.mxu0 %v2152
    %2422 = vmatprep.subr.mxu0 %v2149
    %2423 = vmatpush1.msra.mxu0 %v2148
    %2424 = vmatprep.subr.mxu0 %v2145
    %2425 = vmatpush1.msra.mxu0 %v2144
    %2426 = vmatprep.subr.mxu0 %v2141
    %2427 = vmatpush1.msra.mxu0 %v2140
    %2428 = vmatprep.subr.mxu0 %v2137
    %2429 = vmatpush1.msra.mxu0 %v2136
    %2430 = vmatprep.subr.mxu0 %v2133
    %2431 = vmatpush1.msra.mxu0 %v2132
    %2432 = vmatprep.subr.mxu0 %v2129
    %2433 = vmatpush1.msra.mxu0 %v2128
    %2434 = vmatprep.subr.mxu0 %v2125
    %2435 = vmatpush1.msra.mxu0 %v2124
    %2436 = vmatprep.subr.mxu0 %v2121
    %2437 = vmatpush1.msra.mxu0 %v2120
    %2438 = vmatprep.subr.mxu0 %v2117
    %2439 = vmatpush1.msra.mxu0 %v2116
    %2440 = vmatprep.subr.mxu0 %v2113
    %2441 = vmatpush1.msra.mxu0 %v2112
    %2442 = vmatprep.subr.mxu0 %v2109
    %2443 = vmatpush1.msra.mxu0 %v2108
    %2444 = vmatprep.subr.mxu0 0.0
    %2445 = vmatpush2.msra.mxu0 0.0
    %2446 = vmatprep.subr.mxu0 0.0
    %2447 = vmatpush2.msra.mxu0 0.0
    %2448 = vmatprep.subr.mxu0 0.0
    %2449 = vmatpush2.msra.mxu0 0.0
    %2450 = vmatprep.subr.mxu0 0.0
    %2451 = vmatpush2.msra.mxu0 0.0
    %2452 = vmatprep.subr.mxu0 0.0
    %2453 = vmatpush2.msra.mxu0 0.0
    %2454 = vmatprep.subr.mxu0 0.0
    %2455 = vmatpush2.msra.mxu0 0.0
    %2456 = vmatprep.subr.mxu0 0.0
    %2457 = vmatpush2.msra.mxu0 0.0
    %2458 = vmatprep.subr.mxu0 0.0
    %2459 = vmatpush2.msra.mxu0 0.0
    %2460 = vmatprep.subr.mxu0 0.0
    %2461 = vmatpush2.msra.mxu0 0.0
    %2462 = vmatprep.subr.mxu0 0.0
    %2463 = vmatpush2.msra.mxu0 0.0
    %2464 = vmatprep.subr.mxu0 0.0
    %2465 = vmatpush2.msra.mxu0 0.0
    %2466 = vmatprep.subr.mxu0 0.0
    %2467 = vmatpush2.msra.mxu0 0.0
    %2468 = vmatprep.subr.mxu0 0.0
    %2469 = vmatpush2.msra.mxu0 0.0
    %2470 = vmatprep.subr.mxu0 0.0
    %2471 = vmatpush2.msra.mxu0 0.0
    %2472 = vmatprep.subr.mxu0 0.0
    %2473 = vmatpush2.msra.mxu0 0.0
    %2474 = vmatprep.subr.mxu0 0.0
    %2475 = vmatpush2.msra.mxu0 0.0
    %2476 = vmatprep.mubr.f32.mxu0 0.0
    %2477 = vmatmul.mubr.f32.gmra.mxu0 %v2339
    %v2478 = vpop.f32.mrf.mxu0
    %v2479 = vadd.f32 0.0, %v2478
    %v2480 = vpop.f32.mrf.mxu0
    %v2481 = vadd.f32 0.0, %v2480
    %2482 = vdwg.mxu0
    %v2487 = vrot.slane %v2408, 6
    %v2488 = vrot.slane %v2410, 6
    %v2489 = vrot.slane %v2479, 6
    %v2490 = vrot.slane %v2481, 6
    %v2495 = vadd.f32 %v2019, %v2487
    %v2496 = vadd.f32 %v2021, %v2488
    %v2497 = vadd.f32 %v2096, %v2489
    %v2498 = vadd.f32 %v2098, %v2490
    %v2499 = vxor.u32 %v2495, 2147483648
    %v2500 = vmul.f32 %v2499, 1.442695
    %v2501 = vpow.pop %v2500
    %v2502 = vadd.f32 %v2501, 1.0
    %v2503 = vrcp.pop %v2502
    %v2504 = vmul.f32 1.0, %v2503
    %v2505 = vxor.u32 %v2496, 2147483648
    %v2506 = vmul.f32 %v2505, 1.442695
    %v2507 = vpow.pop %v2506
    %v2508 = vadd.f32 %v2507, 1.0
    %v2509 = vrcp.pop %v2508
    %v2510 = vmul.f32 1.0, %v2509
    %v2511 = vtanh.pop %v2497
    %v2512 = vxor.u32 %v2498, 2147483648
    %v2513 = vmul.f32 %v2512, 1.442695
    %v2514 = vpow.pop %v2513
    %v2515 = vadd.f32 %v2514, 1.0
    %v2516 = vrcp.pop %v2515
    %v2517 = vmul.f32 1.0, %v2516
    %v2519 = vrot.slane %v2337, 6
    %v2521 = vmul.f32 %v2510, %v2519
    %v2522 = vmul.f32 %v2504, %v2511
    %v2523 = vadd.f32 %v2521, %v2522
    %v2524 = vtanh.pop %v2523
    %v2525 = vmul.f32 %v2517, %v2524
    %2526 = vst [vmem:[#allocation2] sm:$0xc] %v2525
    %v2528 = vrot.slane %v2525, 2
    %2530 = vmatprep.subr.mxu0 %v2167
    %2531 = vmatpush1.msra.mxu0 %v2166
    %2532 = vmatprep.subr.mxu0 %v2163
    %2533 = vmatpush1.msra.mxu0 %v2162
    %2534 = vmatprep.subr.mxu0 %v2159
    %2535 = vmatpush1.msra.mxu0 %v2158
    %2536 = vmatprep.subr.mxu0 %v2155
    %2537 = vmatpush1.msra.mxu0 %v2154
    %2538 = vmatprep.subr.mxu0 %v2151
    %2539 = vmatpush1.msra.mxu0 %v2150
    %2540 = vmatprep.subr.mxu0 %v2147
    %2541 = vmatpush1.msra.mxu0 %v2146
    %2542 = vmatprep.subr.mxu0 %v2143
    %2543 = vmatpush1.msra.mxu0 %v2142
    %2544 = vmatprep.subr.mxu0 %v2139
    %2545 = vmatpush1.msra.mxu0 %v2138
    %2546 = vmatprep.subr.mxu0 %v2135
    %2547 = vmatpush1.msra.mxu0 %v2134
    %2548 = vmatprep.subr.mxu0 %v2131
    %2549 = vmatpush1.msra.mxu0 %v2130
    %2550 = vmatprep.subr.mxu0 %v2127
    %2551 = vmatpush1.msra.mxu0 %v2126
    %2552 = vmatprep.subr.mxu0 %v2123
    %2553 = vmatpush1.msra.mxu0 %v2122
    %2554 = vmatprep.subr.mxu0 %v2119
    %2555 = vmatpush1.msra.mxu0 %v2118
    %2556 = vmatprep.subr.mxu0 %v2115
    %2557 = vmatpush1.msra.mxu0 %v2114
    %2558 = vmatprep.subr.mxu0 %v2111
    %2559 = vmatpush1.msra.mxu0 %v2110
    %2560 = vmatprep.subr.mxu0 %v2107
    %2561 = vmatpush1.msra.mxu0 %v2106
    %2562 = vmatprep.subr.mxu0 0.0
    %2563 = vmatpush2.msra.mxu0 0.0
    %2564 = vmatprep.subr.mxu0 0.0
    %2565 = vmatpush2.msra.mxu0 0.0
    %2566 = vmatprep.subr.mxu0 0.0
    %2567 = vmatpush2.msra.mxu0 0.0
    %2568 = vmatprep.subr.mxu0 0.0
    %2569 = vmatpush2.msra.mxu0 0.0
    %2570 = vmatprep.subr.mxu0 0.0
    %2571 = vmatpush2.msra.mxu0 0.0
    %2572 = vmatprep.subr.mxu0 0.0
    %2573 = vmatpush2.msra.mxu0 0.0
    %2574 = vmatprep.subr.mxu0 0.0
    %2575 = vmatpush2.msra.mxu0 0.0
    %2576 = vmatprep.subr.mxu0 0.0
    %2577 = vmatpush2.msra.mxu0 0.0
    %2578 = vmatprep.subr.mxu0 0.0
    %2579 = vmatpush2.msra.mxu0 0.0
    %2580 = vmatprep.subr.mxu0 0.0
    %2581 = vmatpush2.msra.mxu0 0.0
    %2582 = vmatprep.subr.mxu0 0.0
    %2583 = vmatpush2.msra.mxu0 0.0
    %2584 = vmatprep.subr.mxu0 0.0
    %2585 = vmatpush2.msra.mxu0 0.0
    %2586 = vmatprep.subr.mxu0 0.0
    %2587 = vmatpush2.msra.mxu0 0.0
    %2588 = vmatprep.subr.mxu0 0.0
    %2589 = vmatpush2.msra.mxu0 0.0
    %2590 = vmatprep.subr.mxu0 0.0
    %2591 = vmatpush2.msra.mxu0 0.0
    %2592 = vmatprep.subr.mxu0 0.0
    %2593 = vmatpush2.msra.mxu0 0.0
    %2594 = vmatprep.mubr.f32.mxu0 0.0
    %2595 = vmatmul.mubr.f32.gmra.mxu0 %v2528
    %v2596 = vpop.f32.mrf.mxu0
    %v2597 = vadd.f32 0.0, %v2596
    %v2598 = vpop.f32.mrf.mxu0
    %v2599 = vadd.f32 0.0, %v2598
    %2600 = vdwg.mxu0
    %2601 = vmatprep.subr.mxu0 %v2169
    %2602 = vmatpush1.msra.mxu0 %v2168
    %2603 = vmatprep.subr.mxu0 %v2165
    %2604 = vmatpush1.msra.mxu0 %v2164
    %2605 = vmatprep.subr.mxu0 %v2161
    %2606 = vmatpush1.msra.mxu0 %v2160
    %2607 = vmatprep.subr.mxu0 %v2157
    %2608 = vmatpush1.msra.mxu0 %v2156
    %2609 = vmatprep.subr.mxu0 %v2153
    %2610 = vmatpush1.msra.mxu0 %v2152
    %2611 = vmatprep.subr.mxu0 %v2149
    %2612 = vmatpush1.msra.mxu0 %v2148
    %2613 = vmatprep.subr.mxu0 %v2145
    %2614 = vmatpush1.msra.mxu0 %v2144
    %2615 = vmatprep.subr.mxu0 %v2141
    %2616 = vmatpush1.msra.mxu0 %v2140
    %2617 = vmatprep.subr.mxu0 %v2137
    %2618 = vmatpush1.msra.mxu0 %v2136
    %2619 = vmatprep.subr.mxu0 %v2133
    %2620 = vmatpush1.msra.mxu0 %v2132
    %2621 = vmatprep.subr.mxu0 %v2129
    %2622 = vmatpush1.msra.mxu0 %v2128
    %2623 = vmatprep.subr.mxu0 %v2125
    %2624 = vmatpush1.msra.mxu0 %v2124
    %2625 = vmatprep.subr.mxu0 %v2121
    %2626 = vmatpush1.msra.mxu0 %v2120
    %2627 = vmatprep.subr.mxu0 %v2117
    %2628 = vmatpush1.msra.mxu0 %v2116
    %2629 = vmatprep.subr.mxu0 %v2113
    %2630 = vmatpush1.msra.mxu0 %v2112
    %2631 = vmatprep.subr.mxu0 %v2109
    %2632 = vmatpush1.msra.mxu0 %v2108
    %2633 = vmatprep.subr.mxu0 0.0
    %2634 = vmatpush2.msra.mxu0 0.0
    %2635 = vmatprep.subr.mxu0 0.0
    %2636 = vmatpush2.msra.mxu0 0.0
    %2637 = vmatprep.subr.mxu0 0.0
    %2638 = vmatpush2.msra.mxu0 0.0
    %2639 = vmatprep.subr.mxu0 0.0
    %2640 = vmatpush2.msra.mxu0 0.0
    %2641 = vmatprep.subr.mxu0 0.0
    %2642 = vmatpush2.msra.mxu0 0.0
    %2643 = vmatprep.subr.mxu0 0.0
    %2644 = vmatpush2.msra.mxu0 0.0
    %2645 = vmatprep.subr.mxu0 0.0
    %2646 = vmatpush2.msra.mxu0 0.0
    %2647 = vmatprep.subr.mxu0 0.0
    %2648 = vmatpush2.msra.mxu0 0.0
    %2649 = vmatprep.subr.mxu0 0.0
    %2650 = vmatpush2.msra.mxu0 0.0
    %2651 = vmatprep.subr.mxu0 0.0
    %2652 = vmatpush2.msra.mxu0 0.0
    %2653 = vmatprep.subr.mxu0 0.0
    %2654 = vmatpush2.msra.mxu0 0.0
    %2655 = vmatprep.subr.mxu0 0.0
    %2656 = vmatpush2.msra.mxu0 0.0
    %2657 = vmatprep.subr.mxu0 0.0
    %2658 = vmatpush2.msra.mxu0 0.0
    %2659 = vmatprep.subr.mxu0 0.0
    %2660 = vmatpush2.msra.mxu0 0.0
    %2661 = vmatprep.subr.mxu0 0.0
    %2662 = vmatpush2.msra.mxu0 0.0
    %2663 = vmatprep.subr.mxu0 0.0
    %2664 = vmatpush2.msra.mxu0 0.0
    %2665 = vmatprep.mubr.f32.mxu0 0.0
    %2666 = vmatmul.mubr.f32.gmra.mxu0 %v2528
    %v2667 = vpop.f32.mrf.mxu0
    %v2668 = vadd.f32 0.0, %v2667
    %v2669 = vpop.f32.mrf.mxu0
    %v2670 = vadd.f32 0.0, %v2669
    %2671 = vdwg.mxu0
    %v2676 = vrot.slane %v2597, 4
    %v2677 = vrot.slane %v2599, 4
    %v2678 = vrot.slane %v2668, 4
    %v2679 = vrot.slane %v2670, 4
    %v2684 = vadd.f32 %v2019, %v2676
    %v2685 = vadd.f32 %v2021, %v2677
    %v2686 = vadd.f32 %v2096, %v2678
    %v2687 = vadd.f32 %v2098, %v2679
    %v2688 = vxor.u32 %v2684, 2147483648
    %v2689 = vmul.f32 %v2688, 1.442695
    %v2690 = vpow.pop %v2689
    %v2691 = vadd.f32 %v2690, 1.0
    %v2692 = vrcp.pop %v2691
    %v2693 = vmul.f32 1.0, %v2692
    %v2694 = vxor.u32 %v2685, 2147483648
    %v2695 = vmul.f32 %v2694, 1.442695
    %v2696 = vpow.pop %v2695
    %v2697 = vadd.f32 %v2696, 1.0
    %v2698 = vrcp.pop %v2697
    %v2699 = vmul.f32 1.0, %v2698
    %v2700 = vtanh.pop %v2686
    %v2701 = vxor.u32 %v2687, 2147483648
    %v2702 = vmul.f32 %v2701, 1.442695
    %v2703 = vpow.pop %v2702
    %v2704 = vadd.f32 %v2703, 1.0
    %v2705 = vrcp.pop %v2704
    %v2706 = vmul.f32 1.0, %v2705
    %v2708 = vrot.slane %v2523, 6
    %v2710 = vmul.f32 %v2699, %v2708
    %v2711 = vmul.f32 %v2693, %v2700
    %v2712 = vadd.f32 %v2710, %v2711
    %v2713 = vtanh.pop %v2712
    %v2714 = vmul.f32 %v2706, %v2713
    %2715 = vst [vmem:[#allocation2] sm:$0x30] %v2714
    %v2717 = vrot.slane %v2714, 4
    %2719 = vmatprep.subr.mxu0 %v2167
    %2720 = vmatpush1.msra.mxu0 %v2166
    %2721 = vmatprep.subr.mxu0 %v2163
    %2722 = vmatpush1.msra.mxu0 %v2162
    %2723 = vmatprep.subr.mxu0 %v2159
    %2724 = vmatpush1.msra.mxu0 %v2158
    %2725 = vmatprep.subr.mxu0 %v2155
    %2726 = vmatpush1.msra.mxu0 %v2154
    %2727 = vmatprep.subr.mxu0 %v2151
    %2728 = vmatpush1.msra.mxu0 %v2150
    %2729 = vmatprep.subr.mxu0 %v2147
    %2730 = vmatpush1.msra.mxu0 %v2146
    %2731 = vmatprep.subr.mxu0 %v2143
    %2732 = vmatpush1.msra.mxu0 %v2142
    %2733 = vmatprep.subr.mxu0 %v2139
    %2734 = vmatpush1.msra.mxu0 %v2138
    %2735 = vmatprep.subr.mxu0 %v2135
    %2736 = vmatpush1.msra.mxu0 %v2134
    %2737 = vmatprep.subr.mxu0 %v2131
    %2738 = vmatpush1.msra.mxu0 %v2130
    %2739 = vmatprep.subr.mxu0 %v2127
    %2740 = vmatpush1.msra.mxu0 %v2126
    %2741 = vmatprep.subr.mxu0 %v2123
    %2742 = vmatpush1.msra.mxu0 %v2122
    %2743 = vmatprep.subr.mxu0 %v2119
    %2744 = vmatpush1.msra.mxu0 %v2118
    %2745 = vmatprep.subr.mxu0 %v2115
    %2746 = vmatpush1.msra.mxu0 %v2114
    %2747 = vmatprep.subr.mxu0 %v2111
    %2748 = vmatpush1.msra.mxu0 %v2110
    %2749 = vmatprep.subr.mxu0 %v2107
    %2750 = vmatpush1.msra.mxu0 %v2106
    %2751 = vmatprep.subr.mxu0 0.0
    %2752 = vmatpush2.msra.mxu0 0.0
    %2753 = vmatprep.subr.mxu0 0.0
    %2754 = vmatpush2.msra.mxu0 0.0
    %2755 = vmatprep.subr.mxu0 0.0
    %2756 = vmatpush2.msra.mxu0 0.0
    %2757 = vmatprep.subr.mxu0 0.0
    %2758 = vmatpush2.msra.mxu0 0.0
    %2759 = vmatprep.subr.mxu0 0.0
    %2760 = vmatpush2.msra.mxu0 0.0
    %2761 = vmatprep.subr.mxu0 0.0
    %2762 = vmatpush2.msra.mxu0 0.0
    %2763 = vmatprep.subr.mxu0 0.0
    %2764 = vmatpush2.msra.mxu0 0.0
    %2765 = vmatprep.subr.mxu0 0.0
    %2766 = vmatpush2.msra.mxu0 0.0
    %2767 = vmatprep.subr.mxu0 0.0
    %2768 = vmatpush2.msra.mxu0 0.0
    %2769 = vmatprep.subr.mxu0 0.0
    %2770 = vmatpush2.msra.mxu0 0.0
    %2771 = vmatprep.subr.mxu0 0.0
    %2772 = vmatpush2.msra.mxu0 0.0
    %2773 = vmatprep.subr.mxu0 0.0
    %2774 = vmatpush2.msra.mxu0 0.0
    %2775 = vmatprep.subr.mxu0 0.0
    %2776 = vmatpush2.msra.mxu0 0.0
    %2777 = vmatprep.subr.mxu0 0.0
    %2778 = vmatpush2.msra.mxu0 0.0
    %2779 = vmatprep.subr.mxu0 0.0
    %2780 = vmatpush2.msra.mxu0 0.0
    %2781 = vmatprep.subr.mxu0 0.0
    %2782 = vmatpush2.msra.mxu0 0.0
    %2783 = vmatprep.mubr.f32.mxu0 0.0
    %2784 = vmatmul.mubr.f32.gmra.mxu0 %v2717
    %v2785 = vpop.f32.mrf.mxu0
    %v2786 = vadd.f32 0.0, %v2785
    %v2787 = vpop.f32.mrf.mxu0
    %v2788 = vadd.f32 0.0, %v2787
    %2789 = vdwg.mxu0
    %2790 = vmatprep.subr.mxu0 %v2169
    %2791 = vmatpush1.msra.mxu0 %v2168
    %2792 = vmatprep.subr.mxu0 %v2165
    %2793 = vmatpush1.msra.mxu0 %v2164
    %2794 = vmatprep.subr.mxu0 %v2161
    %2795 = vmatpush1.msra.mxu0 %v2160
    %2796 = vmatprep.subr.mxu0 %v2157
    %2797 = vmatpush1.msra.mxu0 %v2156
    %2798 = vmatprep.subr.mxu0 %v2153
    %2799 = vmatpush1.msra.mxu0 %v2152
    %2800 = vmatprep.subr.mxu0 %v2149
    %2801 = vmatpush1.msra.mxu0 %v2148
    %2802 = vmatprep.subr.mxu0 %v2145
    %2803 = vmatpush1.msra.mxu0 %v2144
    %2804 = vmatprep.subr.mxu0 %v2141
    %2805 = vmatpush1.msra.mxu0 %v2140
    %2806 = vmatprep.subr.mxu0 %v2137
    %2807 = vmatpush1.msra.mxu0 %v2136
    %2808 = vmatprep.subr.mxu0 %v2133
    %2809 = vmatpush1.msra.mxu0 %v2132
    %2810 = vmatprep.subr.mxu0 %v2129
    %2811 = vmatpush1.msra.mxu0 %v2128
    %2812 = vmatprep.subr.mxu0 %v2125
    %2813 = vmatpush1.msra.mxu0 %v2124
    %2814 = vmatprep.subr.mxu0 %v2121
    %2815 = vmatpush1.msra.mxu0 %v2120
    %2816 = vmatprep.subr.mxu0 %v2117
    %2817 = vmatpush1.msra.mxu0 %v2116
    %2818 = vmatprep.subr.mxu0 %v2113
    %2819 = vmatpush1.msra.mxu0 %v2112
    %2820 = vmatprep.subr.mxu0 %v2109
    %2821 = vmatpush1.msra.mxu0 %v2108
    %2822 = vmatprep.subr.mxu0 0.0
    %2823 = vmatpush2.msra.mxu0 0.0
    %2824 = vmatprep.subr.mxu0 0.0
    %2825 = vmatpush2.msra.mxu0 0.0
    %2826 = vmatprep.subr.mxu0 0.0
    %2827 = vmatpush2.msra.mxu0 0.0
    %2828 = vmatprep.subr.mxu0 0.0
    %2829 = vmatpush2.msra.mxu0 0.0
    %2830 = vmatprep.subr.mxu0 0.0
    %2831 = vmatpush2.msra.mxu0 0.0
    %2832 = vmatprep.subr.mxu0 0.0
    %2833 = vmatpush2.msra.mxu0 0.0
    %2834 = vmatprep.subr.mxu0 0.0
    %2835 = vmatpush2.msra.mxu0 0.0
    %2836 = vmatprep.subr.mxu0 0.0
    %2837 = vmatpush2.msra.mxu0 0.0
    %2838 = vmatprep.subr.mxu0 0.0
    %2839 = vmatpush2.msra.mxu0 0.0
    %2840 = vmatprep.subr.mxu0 0.0
    %2841 = vmatpush2.msra.mxu0 0.0
    %2842 = vmatprep.subr.mxu0 0.0
    %2843 = vmatpush2.msra.mxu0 0.0
    %2844 = vmatprep.subr.mxu0 0.0
    %2845 = vmatpush2.msra.mxu0 0.0
    %2846 = vmatprep.subr.mxu0 0.0
    %2847 = vmatpush2.msra.mxu0 0.0
    %2848 = vmatprep.subr.mxu0 0.0
    %2849 = vmatpush2.msra.mxu0 0.0
    %2850 = vmatprep.subr.mxu0 0.0
    %2851 = vmatpush2.msra.mxu0 0.0
    %2852 = vmatprep.subr.mxu0 0.0
    %2853 = vmatpush2.msra.mxu0 0.0
    %2854 = vmatprep.mubr.f32.mxu0 0.0
    %2855 = vmatmul.mubr.f32.gmra.mxu0 %v2717
    %v2856 = vpop.f32.mrf.mxu0
    %v2857 = vadd.f32 0.0, %v2856
    %v2858 = vpop.f32.mrf.mxu0
    %v2859 = vadd.f32 0.0, %v2858
    %2860 = vdwg.mxu0
    %v2865 = vrot.slane %v2786, 2
    %v2866 = vrot.slane %v2788, 2
    %v2867 = vrot.slane %v2857, 2
    %v2868 = vrot.slane %v2859, 2
    %v2873 = vadd.f32 %v2019, %v2865
    %v2874 = vadd.f32 %v2021, %v2866
    %v2875 = vadd.f32 %v2096, %v2867
    %v2876 = vadd.f32 %v2098, %v2868
    %v2877 = vxor.u32 %v2873, 2147483648
    %v2878 = vmul.f32 %v2877, 1.442695
    %v2879 = vpow.pop %v2878
    %v2880 = vadd.f32 %v2879, 1.0
    %v2881 = vrcp.pop %v2880
    %v2882 = vmul.f32 1.0, %v2881
    %v2883 = vxor.u32 %v2874, 2147483648
    %v2884 = vmul.f32 %v2883, 1.442695
    %v2885 = vpow.pop %v2884
    %v2886 = vadd.f32 %v2885, 1.0
    %v2887 = vrcp.pop %v2886
    %v2888 = vmul.f32 1.0, %v2887
    %v2889 = vtanh.pop %v2875
    %v2890 = vxor.u32 %v2876, 2147483648
    %v2891 = vmul.f32 %v2890, 1.442695
    %v2892 = vpow.pop %v2891
    %v2893 = vadd.f32 %v2892, 1.0
    %v2894 = vrcp.pop %v2893
    %v2895 = vmul.f32 1.0, %v2894
    %v2897 = vrot.slane %v2712, 6
    %v2899 = vmul.f32 %v2888, %v2897
    %v2900 = vmul.f32 %v2882, %v2889
    %v2901 = vadd.f32 %v2899, %v2900
    %v2902 = vtanh.pop %v2901
    %v2903 = vmul.f32 %v2895, %v2902
    %2904 = vst [vmem:[#allocation2] sm:$0xc0] %v2903
    %v2906 = vrot.slane %v2903, 6
    %2908 = vmatprep.subr.mxu0 %v2167
    %2909 = vmatpush1.msra.mxu0 %v2166
    %2910 = vmatprep.subr.mxu0 %v2163
    %2911 = vmatpush1.msra.mxu0 %v2162
    %2912 = vmatprep.subr.mxu0 %v2159
    %2913 = vmatpush1.msra.mxu0 %v2158
    %2914 = vmatprep.subr.mxu0 %v2155
    %2915 = vmatpush1.msra.mxu0 %v2154
    %2916 = vmatprep.subr.mxu0 %v2151
    %2917 = vmatpush1.msra.mxu0 %v2150
    %2918 = vmatprep.subr.mxu0 %v2147
    %2919 = vmatpush1.msra.mxu0 %v2146
    %2920 = vmatprep.subr.mxu0 %v2143
    %2921 = vmatpush1.msra.mxu0 %v2142
    %2922 = vmatprep.subr.mxu0 %v2139
    %2923 = vmatpush1.msra.mxu0 %v2138
    %2924 = vmatprep.subr.mxu0 %v2135
    %2925 = vmatpush1.msra.mxu0 %v2134
    %2926 = vmatprep.subr.mxu0 %v2131
    %2927 = vmatpush1.msra.mxu0 %v2130
    %2928 = vmatprep.subr.mxu0 %v2127
    %2929 = vmatpush1.msra.mxu0 %v2126
    %2930 = vmatprep.subr.mxu0 %v2123
    %2931 = vmatpush1.msra.mxu0 %v2122
    %2932 = vmatprep.subr.mxu0 %v2119
    %2933 = vmatpush1.msra.mxu0 %v2118
    %2934 = vmatprep.subr.mxu0 %v2115
    %2935 = vmatpush1.msra.mxu0 %v2114
    %2936 = vmatprep.subr.mxu0 %v2111
    %2937 = vmatpush1.msra.mxu0 %v2110
    %2938 = vmatprep.subr.mxu0 %v2107
    %2939 = vmatpush1.msra.mxu0 %v2106
    %2940 = vmatprep.subr.mxu0 0.0
    %2941 = vmatpush2.msra.mxu0 0.0
    %2942 = vmatprep.subr.mxu0 0.0
    %2943 = vmatpush2.msra.mxu0 0.0
    %2944 = vmatprep.subr.mxu0 0.0
    %2945 = vmatpush2.msra.mxu0 0.0
    %2946 = vmatprep.subr.mxu0 0.0
    %2947 = vmatpush2.msra.mxu0 0.0
    %2948 = vmatprep.subr.mxu0 0.0
    %2949 = vmatpush2.msra.mxu0 0.0
    %2950 = vmatprep.subr.mxu0 0.0
    %2951 = vmatpush2.msra.mxu0 0.0
    %2952 = vmatprep.subr.mxu0 0.0
    %2953 = vmatpush2.msra.mxu0 0.0
    %2954 = vmatprep.subr.mxu0 0.0
    %2955 = vmatpush2.msra.mxu0 0.0
    %2956 = vmatprep.subr.mxu0 0.0
    %2957 = vmatpush2.msra.mxu0 0.0
    %2958 = vmatprep.subr.mxu0 0.0
    %2959 = vmatpush2.msra.mxu0 0.0
    %2960 = vmatprep.subr.mxu0 0.0
    %2961 = vmatpush2.msra.mxu0 0.0
    %2962 = vmatprep.subr.mxu0 0.0
    %2963 = vmatpush2.msra.mxu0 0.0
    %2964 = vmatprep.subr.mxu0 0.0
    %2965 = vmatpush2.msra.mxu0 0.0
    %2966 = vmatprep.subr.mxu0 0.0
    %2967 = vmatpush2.msra.mxu0 0.0
    %2968 = vmatprep.subr.mxu0 0.0
    %2969 = vmatpush2.msra.mxu0 0.0
    %2970 = vmatprep.subr.mxu0 0.0
    %2971 = vmatpush2.msra.mxu0 0.0
    %2972 = vmatprep.mubr.f32.mxu0 0.0
    %2973 = vmatmul.mubr.f32.gmra.mxu0 %v2906
    %v2974 = vpop.f32.mrf.mxu0
    %v2975 = vadd.f32 0.0, %v2974
    %v2976 = vpop.f32.mrf.mxu0
    %v2977 = vadd.f32 0.0, %v2976
    %2978 = vdwg.mxu0
    %2979 = vmatprep.subr.mxu0 %v2169
    %2980 = vmatpush1.msra.mxu0 %v2168
    %2981 = vmatprep.subr.mxu0 %v2165
    %2982 = vmatpush1.msra.mxu0 %v2164
    %2983 = vmatprep.subr.mxu0 %v2161
    %2984 = vmatpush1.msra.mxu0 %v2160
    %2985 = vmatprep.subr.mxu0 %v2157
    %2986 = vmatpush1.msra.mxu0 %v2156
    %2987 = vmatprep.subr.mxu0 %v2153
    %2988 = vmatpush1.msra.mxu0 %v2152
    %2989 = vmatprep.subr.mxu0 %v2149
    %2990 = vmatpush1.msra.mxu0 %v2148
    %2991 = vmatprep.subr.mxu0 %v2145
    %2992 = vmatpush1.msra.mxu0 %v2144
    %2993 = vmatprep.subr.mxu0 %v2141
    %2994 = vmatpush1.msra.mxu0 %v2140
    %2995 = vmatprep.subr.mxu0 %v2137
    %2996 = vmatpush1.msra.mxu0 %v2136
    %2997 = vmatprep.subr.mxu0 %v2133
    %2998 = vmatpush1.msra.mxu0 %v2132
    %2999 = vmatprep.subr.mxu0 %v2129
    %3000 = vmatpush1.msra.mxu0 %v2128
    %3001 = vmatprep.subr.mxu0 %v2125
    %3002 = vmatpush1.msra.mxu0 %v2124
    %3003 = vmatprep.subr.mxu0 %v2121
    %3004 = vmatpush1.msra.mxu0 %v2120
    %3005 = vmatprep.subr.mxu0 %v2117
    %3006 = vmatpush1.msra.mxu0 %v2116
    %3007 = vmatprep.subr.mxu0 %v2113
    %3008 = vmatpush1.msra.mxu0 %v2112
    %3009 = vmatprep.subr.mxu0 %v2109
    %3010 = vmatpush1.msra.mxu0 %v2108
    %3011 = vmatprep.subr.mxu0 0.0
    %3012 = vmatpush2.msra.mxu0 0.0
    %3013 = vmatprep.subr.mxu0 0.0
    %3014 = vmatpush2.msra.mxu0 0.0
    %3015 = vmatprep.subr.mxu0 0.0
    %3016 = vmatpush2.msra.mxu0 0.0
    %3017 = vmatprep.subr.mxu0 0.0
    %3018 = vmatpush2.msra.mxu0 0.0
    %3019 = vmatprep.subr.mxu0 0.0
    %3020 = vmatpush2.msra.mxu0 0.0
    %3021 = vmatprep.subr.mxu0 0.0
    %3022 = vmatpush2.msra.mxu0 0.0
    %3023 = vmatprep.subr.mxu0 0.0
    %3024 = vmatpush2.msra.mxu0 0.0
    %3025 = vmatprep.subr.mxu0 0.0
    %3026 = vmatpush2.msra.mxu0 0.0
    %3027 = vmatprep.subr.mxu0 0.0
    %3028 = vmatpush2.msra.mxu0 0.0
    %3029 = vmatprep.subr.mxu0 0.0
    %3030 = vmatpush2.msra.mxu0 0.0
    %3031 = vmatprep.subr.mxu0 0.0
    %3032 = vmatpush2.msra.mxu0 0.0
    %3033 = vmatprep.subr.mxu0 0.0
    %3034 = vmatpush2.msra.mxu0 0.0
    %3035 = vmatprep.subr.mxu0 0.0
    %3036 = vmatpush2.msra.mxu0 0.0
    %3037 = vmatprep.subr.mxu0 0.0
    %3038 = vmatpush2.msra.mxu0 0.0
    %3039 = vmatprep.subr.mxu0 0.0
    %3040 = vmatpush2.msra.mxu0 0.0
    %3041 = vmatprep.subr.mxu0 0.0
    %3042 = vmatpush2.msra.mxu0 0.0
    %3043 = vmatprep.mubr.f32.mxu0 0.0
    %3044 = vmatmul.mubr.f32.gmra.mxu0 %v2906
    %v3045 = vpop.f32.mrf.mxu0
    %v3046 = vadd.f32 0.0, %v3045
    %v3047 = vpop.f32.mrf.mxu0
    %v3048 = vadd.f32 0.0, %v3047
    %3049 = vdwg.mxu0
    %v3050 = vadd.f32 %v2025, %v2975
    %v3051 = vadd.f32 %v2027, %v2977
    %v3052 = vadd.f32 %v2102, %v3046
    %v3053 = vadd.f32 %v2104, %v3048
    %v3054 = vxor.u32 %v3050, 2147483648
    %v3055 = vmul.f32 %v3054, 1.442695
    %v3056 = vpow.pop %v3055
    %v3057 = vadd.f32 %v3056, 1.0
    %v3058 = vrcp.pop %v3057
    %v3059 = vmul.f32 1.0, %v3058
    %v3060 = vxor.u32 %v3051, 2147483648
    %v3061 = vmul.f32 %v3060, 1.442695
    %v3062 = vpow.pop %v3061
    %v3063 = vadd.f32 %v3062, 1.0
    %v3064 = vrcp.pop %v3063
    %v3065 = vmul.f32 1.0, %v3064
    %v3066 = vtanh.pop %v3052
    %v3067 = vxor.u32 %v3053, 2147483648
    %v3068 = vmul.f32 %v3067, 1.442695
    %v3069 = vpow.pop %v3068
    %v3070 = vadd.f32 %v3069, 1.0
    %v3071 = vrcp.pop %v3070
    %v3072 = vmul.f32 1.0, %v3071
    %v3074 = vrot.slane %v2901, 6
    %v3076 = vmul.f32 %v3065, %v3074
    %v3077 = vmul.f32 %v3059, %v3066
    %v3078 = vadd.f32 %v3076, %v3077
    %v3079 = vtanh.pop %v3078
    %v3080 = vmul.f32 %v3072, %v3079
    %3081 = vst [vmem:[#allocation2 + $0x8] sm:$0x3] %v3080
    %3082 = vmatprep.subr.mxu0 %v2167
    %3083 = vmatpush1.msra.mxu0 %v2166
    %3084 = vmatprep.subr.mxu0 %v2163
    %3085 = vmatpush1.msra.mxu0 %v2162
    %3086 = vmatprep.subr.mxu0 %v2159
    %3087 = vmatpush1.msra.mxu0 %v2158
    %3088 = vmatprep.subr.mxu0 %v2155
    %3089 = vmatpush1.msra.mxu0 %v2154
    %3090 = vmatprep.subr.mxu0 %v2151
    %3091 = vmatpush1.msra.mxu0 %v2150
    %3092 = vmatprep.subr.mxu0 %v2147
    %3093 = vmatpush1.msra.mxu0 %v2146
    %3094 = vmatprep.subr.mxu0 %v2143
    %3095 = vmatpush1.msra.mxu0 %v2142
    %3096 = vmatprep.subr.mxu0 %v2139
    %3097 = vmatpush1.msra.mxu0 %v2138
    %3098 = vmatprep.subr.mxu0 %v2135
    %3099 = vmatpush1.msra.mxu0 %v2134
    %3100 = vmatprep.subr.mxu0 %v2131
    %3101 = vmatpush1.msra.mxu0 %v2130
    %3102 = vmatprep.subr.mxu0 %v2127
    %3103 = vmatpush1.msra.mxu0 %v2126
    %3104 = vmatprep.subr.mxu0 %v2123
    %3105 = vmatpush1.msra.mxu0 %v2122
    %3106 = vmatprep.subr.mxu0 %v2119
    %3107 = vmatpush1.msra.mxu0 %v2118
    %3108 = vmatprep.subr.mxu0 %v2115
    %3109 = vmatpush1.msra.mxu0 %v2114
    %3110 = vmatprep.subr.mxu0 %v2111
    %3111 = vmatpush1.msra.mxu0 %v2110
    %3112 = vmatprep.subr.mxu0 %v2107
    %3113 = vmatpush1.msra.mxu0 %v2106
    %3114 = vmatprep.subr.mxu0 0.0
    %3115 = vmatpush2.msra.mxu0 0.0
    %3116 = vmatprep.subr.mxu0 0.0
    %3117 = vmatpush2.msra.mxu0 0.0
    %3118 = vmatprep.subr.mxu0 0.0
    %3119 = vmatpush2.msra.mxu0 0.0
    %3120 = vmatprep.subr.mxu0 0.0
    %3121 = vmatpush2.msra.mxu0 0.0
    %3122 = vmatprep.subr.mxu0 0.0
    %3123 = vmatpush2.msra.mxu0 0.0
    %3124 = vmatprep.subr.mxu0 0.0
    %3125 = vmatpush2.msra.mxu0 0.0
    %3126 = vmatprep.subr.mxu0 0.0
    %3127 = vmatpush2.msra.mxu0 0.0
    %3128 = vmatprep.subr.mxu0 0.0
    %3129 = vmatpush2.msra.mxu0 0.0
    %3130 = vmatprep.subr.mxu0 0.0
    %3131 = vmatpush2.msra.mxu0 0.0
    %3132 = vmatprep.subr.mxu0 0.0
    %3133 = vmatpush2.msra.mxu0 0.0
    %3134 = vmatprep.subr.mxu0 0.0
    %3135 = vmatpush2.msra.mxu0 0.0
    %3136 = vmatprep.subr.mxu0 0.0
    %3137 = vmatpush2.msra.mxu0 0.0
    %3138 = vmatprep.subr.mxu0 0.0
    %3139 = vmatpush2.msra.mxu0 0.0
    %3140 = vmatprep.subr.mxu0 0.0
    %3141 = vmatpush2.msra.mxu0 0.0
    %3142 = vmatprep.subr.mxu0 0.0
    %3143 = vmatpush2.msra.mxu0 0.0
    %3144 = vmatprep.subr.mxu0 0.0
    %3145 = vmatpush2.msra.mxu0 0.0
    %3146 = vmatprep.mubr.f32.mxu0 0.0
    %3147 = vmatmul.mubr.f32.gmra.mxu0 %v3080
    %v3148 = vpop.f32.mrf.mxu0
    %v3149 = vadd.f32 0.0, %v3148
    %v3150 = vpop.f32.mrf.mxu0
    %v3151 = vadd.f32 0.0, %v3150
    %3152 = vdwg.mxu0
    %3153 = vmatprep.subr.mxu0 %v2169
    %3154 = vmatpush1.msra.mxu0 %v2168
    %3155 = vmatprep.subr.mxu0 %v2165
    %3156 = vmatpush1.msra.mxu0 %v2164
    %3157 = vmatprep.subr.mxu0 %v2161
    %3158 = vmatpush1.msra.mxu0 %v2160
    %3159 = vmatprep.subr.mxu0 %v2157
    %3160 = vmatpush1.msra.mxu0 %v2156
    %3161 = vmatprep.subr.mxu0 %v2153
    %3162 = vmatpush1.msra.mxu0 %v2152
    %3163 = vmatprep.subr.mxu0 %v2149
    %3164 = vmatpush1.msra.mxu0 %v2148
    %3165 = vmatprep.subr.mxu0 %v2145
    %3166 = vmatpush1.msra.mxu0 %v2144
    %3167 = vmatprep.subr.mxu0 %v2141
    %3168 = vmatpush1.msra.mxu0 %v2140
    %3169 = vmatprep.subr.mxu0 %v2137
    %3170 = vmatpush1.msra.mxu0 %v2136
    %3171 = vmatprep.subr.mxu0 %v2133
    %3172 = vmatpush1.msra.mxu0 %v2132
    %3173 = vmatprep.subr.mxu0 %v2129
    %3174 = vmatpush1.msra.mxu0 %v2128
    %3175 = vmatprep.subr.mxu0 %v2125
    %3176 = vmatpush1.msra.mxu0 %v2124
    %3177 = vmatprep.subr.mxu0 %v2121
    %3178 = vmatpush1.msra.mxu0 %v2120
    %3179 = vmatprep.subr.mxu0 %v2117
    %3180 = vmatpush1.msra.mxu0 %v2116
    %3181 = vmatprep.subr.mxu0 %v2113
    %3182 = vmatpush1.msra.mxu0 %v2112
    %3183 = vmatprep.subr.mxu0 %v2109
    %3184 = vmatpush1.msra.mxu0 %v2108
    %3185 = vmatprep.subr.mxu0 0.0
    %3186 = vmatpush2.msra.mxu0 0.0
    %3187 = vmatprep.subr.mxu0 0.0
    %3188 = vmatpush2.msra.mxu0 0.0
    %3189 = vmatprep.subr.mxu0 0.0
    %3190 = vmatpush2.msra.mxu0 0.0
    %3191 = vmatprep.subr.mxu0 0.0
    %3192 = vmatpush2.msra.mxu0 0.0
    %3193 = vmatprep.subr.mxu0 0.0
    %3194 = vmatpush2.msra.mxu0 0.0
    %3195 = vmatprep.subr.mxu0 0.0
    %3196 = vmatpush2.msra.mxu0 0.0
    %3197 = vmatprep.subr.mxu0 0.0
    %3198 = vmatpush2.msra.mxu0 0.0
    %3199 = vmatprep.subr.mxu0 0.0
    %3200 = vmatpush2.msra.mxu0 0.0
    %3201 = vmatprep.subr.mxu0 0.0
    %3202 = vmatpush2.msra.mxu0 0.0
    %3203 = vmatprep.subr.mxu0 0.0
    %3204 = vmatpush2.msra.mxu0 0.0
    %3205 = vmatprep.subr.mxu0 0.0
    %3206 = vmatpush2.msra.mxu0 0.0
    %3207 = vmatprep.subr.mxu0 0.0
    %3208 = vmatpush2.msra.mxu0 0.0
    %3209 = vmatprep.subr.mxu0 0.0
    %3210 = vmatpush2.msra.mxu0 0.0
    %3211 = vmatprep.subr.mxu0 0.0
    %3212 = vmatpush2.msra.mxu0 0.0
    %3213 = vmatprep.subr.mxu0 0.0
    %3214 = vmatpush2.msra.mxu0 0.0
    %3215 = vmatprep.subr.mxu0 0.0
    %3216 = vmatpush2.msra.mxu0 0.0
    %3217 = vmatprep.mubr.f32.mxu0 0.0
    %3218 = vmatmul.mubr.f32.gmra.mxu0 %v3080
    %v3219 = vpop.f32.mrf.mxu0
    %v3220 = vadd.f32 0.0, %v3219
    %v3221 = vpop.f32.mrf.mxu0
    %v3222 = vadd.f32 0.0, %v3221
    %3223 = vdwg.mxu0
    %v3228 = vrot.slane %v3149, 6
    %v3229 = vrot.slane %v3151, 6
    %v3230 = vrot.slane %v3220, 6
    %v3231 = vrot.slane %v3222, 6
    %v3236 = vadd.f32 %v2025, %v3228
    %v3237 = vadd.f32 %v2027, %v3229
    %v3238 = vadd.f32 %v2102, %v3230
    %v3239 = vadd.f32 %v2104, %v3231
    %v3240 = vxor.u32 %v3236, 2147483648
    %v3241 = vmul.f32 %v3240, 1.442695
    %v3242 = vpow.pop %v3241
    %v3243 = vadd.f32 %v3242, 1.0
    %v3244 = vrcp.pop %v3243
    %v3245 = vmul.f32 1.0, %v3244
    %v3246 = vxor.u32 %v3237, 2147483648
    %v3247 = vmul.f32 %v3246, 1.442695
    %v3248 = vpow.pop %v3247
    %v3249 = vadd.f32 %v3248, 1.0
    %v3250 = vrcp.pop %v3249
    %v3251 = vmul.f32 1.0, %v3250
    %v3252 = vtanh.pop %v3238
    %v3253 = vxor.u32 %v3239, 2147483648
    %v3254 = vmul.f32 %v3253, 1.442695
    %v3255 = vpow.pop %v3254
    %v3256 = vadd.f32 %v3255, 1.0
    %v3257 = vrcp.pop %v3256
    %v3258 = vmul.f32 1.0, %v3257
    %v3260 = vrot.slane %v3078, 6
    %v3262 = vmul.f32 %v3251, %v3260
    %v3263 = vmul.f32 %v3245, %v3252
    %v3264 = vadd.f32 %v3262, %v3263
    %v3265 = vtanh.pop %v3264
    %v3266 = vmul.f32 %v3258, %v3265
    %3267 = vst [vmem:[#allocation2 + $0x8] sm:$0xc] %v3266
    %v3269 = vrot.slane %v3266, 2
    %3271 = vmatprep.subr.mxu0 %v2167
    %3272 = vmatpush1.msra.mxu0 %v2166
    %3273 = vmatprep.subr.mxu0 %v2163
    %3274 = vmatpush1.msra.mxu0 %v2162
    %3275 = vmatprep.subr.mxu0 %v2159
    %3276 = vmatpush1.msra.mxu0 %v2158
    %3277 = vmatprep.subr.mxu0 %v2155
    %3278 = vmatpush1.msra.mxu0 %v2154
    %3279 = vmatprep.subr.mxu0 %v2151
    %3280 = vmatpush1.msra.mxu0 %v2150
    %3281 = vmatprep.subr.mxu0 %v2147
    %3282 = vmatpush1.msra.mxu0 %v2146
    %3283 = vmatprep.subr.mxu0 %v2143
    %3284 = vmatpush1.msra.mxu0 %v2142
    %3285 = vmatprep.subr.mxu0 %v2139
    %3286 = vmatpush1.msra.mxu0 %v2138
    %3287 = vmatprep.subr.mxu0 %v2135
    %3288 = vmatpush1.msra.mxu0 %v2134
    %3289 = vmatprep.subr.mxu0 %v2131
    %3290 = vmatpush1.msra.mxu0 %v2130
    %3291 = vmatprep.subr.mxu0 %v2127
    %3292 = vmatpush1.msra.mxu0 %v2126
    %3293 = vmatprep.subr.mxu0 %v2123
    %3294 = vmatpush1.msra.mxu0 %v2122
    %3295 = vmatprep.subr.mxu0 %v2119
    %3296 = vmatpush1.msra.mxu0 %v2118
    %3297 = vmatprep.subr.mxu0 %v2115
    %3298 = vmatpush1.msra.mxu0 %v2114
    %3299 = vmatprep.subr.mxu0 %v2111
    %3300 = vmatpush1.msra.mxu0 %v2110
    %3301 = vmatprep.subr.mxu0 %v2107
    %3302 = vmatpush1.msra.mxu0 %v2106
    %3303 = vmatprep.subr.mxu0 0.0
    %3304 = vmatpush2.msra.mxu0 0.0
    %3305 = vmatprep.subr.mxu0 0.0
    %3306 = vmatpush2.msra.mxu0 0.0
    %3307 = vmatprep.subr.mxu0 0.0
    %3308 = vmatpush2.msra.mxu0 0.0
    %3309 = vmatprep.subr.mxu0 0.0
    %3310 = vmatpush2.msra.mxu0 0.0
    %3311 = vmatprep.subr.mxu0 0.0
    %3312 = vmatpush2.msra.mxu0 0.0
    %3313 = vmatprep.subr.mxu0 0.0
    %3314 = vmatpush2.msra.mxu0 0.0
    %3315 = vmatprep.subr.mxu0 0.0
    %3316 = vmatpush2.msra.mxu0 0.0
    %3317 = vmatprep.subr.mxu0 0.0
    %3318 = vmatpush2.msra.mxu0 0.0
    %3319 = vmatprep.subr.mxu0 0.0
    %3320 = vmatpush2.msra.mxu0 0.0
    %3321 = vmatprep.subr.mxu0 0.0
    %3322 = vmatpush2.msra.mxu0 0.0
    %3323 = vmatprep.subr.mxu0 0.0
    %3324 = vmatpush2.msra.mxu0 0.0
    %3325 = vmatprep.subr.mxu0 0.0
    %3326 = vmatpush2.msra.mxu0 0.0
    %3327 = vmatprep.subr.mxu0 0.0
    %3328 = vmatpush2.msra.mxu0 0.0
    %3329 = vmatprep.subr.mxu0 0.0
    %3330 = vmatpush2.msra.mxu0 0.0
    %3331 = vmatprep.subr.mxu0 0.0
    %3332 = vmatpush2.msra.mxu0 0.0
    %3333 = vmatprep.subr.mxu0 0.0
    %3334 = vmatpush2.msra.mxu0 0.0
    %3335 = vmatprep.mubr.f32.mxu0 0.0
    %3336 = vmatmul.mubr.f32.gmra.mxu0 %v3269
    %v3337 = vpop.f32.mrf.mxu0
    %v3338 = vadd.f32 0.0, %v3337
    %v3339 = vpop.f32.mrf.mxu0
    %v3340 = vadd.f32 0.0, %v3339
    %3341 = vdwg.mxu0
    %3342 = vmatprep.subr.mxu0 %v2169
    %3343 = vmatpush1.msra.mxu0 %v2168
    %3344 = vmatprep.subr.mxu0 %v2165
    %3345 = vmatpush1.msra.mxu0 %v2164
    %3346 = vmatprep.subr.mxu0 %v2161
    %3347 = vmatpush1.msra.mxu0 %v2160
    %3348 = vmatprep.subr.mxu0 %v2157
    %3349 = vmatpush1.msra.mxu0 %v2156
    %3350 = vmatprep.subr.mxu0 %v2153
    %3351 = vmatpush1.msra.mxu0 %v2152
    %3352 = vmatprep.subr.mxu0 %v2149
    %3353 = vmatpush1.msra.mxu0 %v2148
    %3354 = vmatprep.subr.mxu0 %v2145
    %3355 = vmatpush1.msra.mxu0 %v2144
    %3356 = vmatprep.subr.mxu0 %v2141
    %3357 = vmatpush1.msra.mxu0 %v2140
    %3358 = vmatprep.subr.mxu0 %v2137
    %3359 = vmatpush1.msra.mxu0 %v2136
    %3360 = vmatprep.subr.mxu0 %v2133
    %3361 = vmatpush1.msra.mxu0 %v2132
    %3362 = vmatprep.subr.mxu0 %v2129
    %3363 = vmatpush1.msra.mxu0 %v2128
    %3364 = vmatprep.subr.mxu0 %v2125
    %3365 = vmatpush1.msra.mxu0 %v2124
    %3366 = vmatprep.subr.mxu0 %v2121
    %3367 = vmatpush1.msra.mxu0 %v2120
    %3368 = vmatprep.subr.mxu0 %v2117
    %3369 = vmatpush1.msra.mxu0 %v2116
    %3370 = vmatprep.subr.mxu0 %v2113
    %3371 = vmatpush1.msra.mxu0 %v2112
    %3372 = vmatprep.subr.mxu0 %v2109
    %3373 = vmatpush1.msra.mxu0 %v2108
    %3374 = vmatprep.subr.mxu0 0.0
    %3375 = vmatpush2.msra.mxu0 0.0
    %3376 = vmatprep.subr.mxu0 0.0
    %3377 = vmatpush2.msra.mxu0 0.0
    %3378 = vmatprep.subr.mxu0 0.0
    %3379 = vmatpush2.msra.mxu0 0.0
    %3380 = vmatprep.subr.mxu0 0.0
    %3381 = vmatpush2.msra.mxu0 0.0
    %3382 = vmatprep.subr.mxu0 0.0
    %3383 = vmatpush2.msra.mxu0 0.0
    %3384 = vmatprep.subr.mxu0 0.0
    %3385 = vmatpush2.msra.mxu0 0.0
    %3386 = vmatprep.subr.mxu0 0.0
    %3387 = vmatpush2.msra.mxu0 0.0
    %3388 = vmatprep.subr.mxu0 0.0
    %3389 = vmatpush2.msra.mxu0 0.0
    %3390 = vmatprep.subr.mxu0 0.0
    %3391 = vmatpush2.msra.mxu0 0.0
    %3392 = vmatprep.subr.mxu0 0.0
    %3393 = vmatpush2.msra.mxu0 0.0
    %3394 = vmatprep.subr.mxu0 0.0
    %3395 = vmatpush2.msra.mxu0 0.0
    %3396 = vmatprep.subr.mxu0 0.0
    %3397 = vmatpush2.msra.mxu0 0.0
    %3398 = vmatprep.subr.mxu0 0.0
    %3399 = vmatpush2.msra.mxu0 0.0
    %3400 = vmatprep.subr.mxu0 0.0
    %3401 = vmatpush2.msra.mxu0 0.0
    %3402 = vmatprep.subr.mxu0 0.0
    %3403 = vmatpush2.msra.mxu0 0.0
    %3404 = vmatprep.subr.mxu0 0.0
    %3405 = vmatpush2.msra.mxu0 0.0
    %3406 = vmatprep.mubr.f32.mxu0 0.0
    %3407 = vmatmul.mubr.f32.gmra.mxu0 %v3269
    %v3408 = vpop.f32.mrf.mxu0
    %v3409 = vadd.f32 0.0, %v3408
    %v3410 = vpop.f32.mrf.mxu0
    %v3411 = vadd.f32 0.0, %v3410
    %3412 = vdwg.mxu0
    %v3417 = vrot.slane %v3338, 4
    %v3418 = vrot.slane %v3340, 4
    %v3419 = vrot.slane %v3409, 4
    %v3420 = vrot.slane %v3411, 4
    %v3425 = vadd.f32 %v2025, %v3417
    %v3426 = vadd.f32 %v2027, %v3418
    %v3427 = vadd.f32 %v2102, %v3419
    %v3428 = vadd.f32 %v2104, %v3420
    %v3429 = vxor.u32 %v3425, 2147483648
    %v3430 = vmul.f32 %v3429, 1.442695
    %v3431 = vpow.pop %v3430
    %v3432 = vadd.f32 %v3431, 1.0
    %v3433 = vrcp.pop %v3432
    %v3434 = vmul.f32 1.0, %v3433
    %v3435 = vxor.u32 %v3426, 2147483648
    %v3436 = vmul.f32 %v3435, 1.442695
    %v3437 = vpow.pop %v3436
    %v3438 = vadd.f32 %v3437, 1.0
    %v3439 = vrcp.pop %v3438
    %v3440 = vmul.f32 1.0, %v3439
    %v3441 = vtanh.pop %v3427
    %v3442 = vxor.u32 %v3428, 2147483648
    %v3443 = vmul.f32 %v3442, 1.442695
    %v3444 = vpow.pop %v3443
    %v3445 = vadd.f32 %v3444, 1.0
    %v3446 = vrcp.pop %v3445
    %v3447 = vmul.f32 1.0, %v3446
    %v3449 = vrot.slane %v3264, 6
    %v3451 = vmul.f32 %v3440, %v3449
    %v3452 = vmul.f32 %v3434, %v3441
    %v3453 = vadd.f32 %v3451, %v3452
    %v3454 = vtanh.pop %v3453
    %v3455 = vmul.f32 %v3447, %v3454
    %3456 = vst [vmem:[#allocation2 + $0x8] sm:$0x30] %v3455
    %v3458 = vrot.slane %v3455, 4
    %3460 = vmatprep.subr.mxu0 %v2167
    %3461 = vmatpush1.msra.mxu0 %v2166
    %3462 = vmatprep.subr.mxu0 %v2163
    %3463 = vmatpush1.msra.mxu0 %v2162
    %3464 = vmatprep.subr.mxu0 %v2159
    %3465 = vmatpush1.msra.mxu0 %v2158
    %3466 = vmatprep.subr.mxu0 %v2155
    %3467 = vmatpush1.msra.mxu0 %v2154
    %3468 = vmatprep.subr.mxu0 %v2151
    %3469 = vmatpush1.msra.mxu0 %v2150
    %3470 = vmatprep.subr.mxu0 %v2147
    %3471 = vmatpush1.msra.mxu0 %v2146
    %3472 = vmatprep.subr.mxu0 %v2143
    %3473 = vmatpush1.msra.mxu0 %v2142
    %3474 = vmatprep.subr.mxu0 %v2139
    %3475 = vmatpush1.msra.mxu0 %v2138
    %3476 = vmatprep.subr.mxu0 %v2135
    %3477 = vmatpush1.msra.mxu0 %v2134
    %3478 = vmatprep.subr.mxu0 %v2131
    %3479 = vmatpush1.msra.mxu0 %v2130
    %3480 = vmatprep.subr.mxu0 %v2127
    %3481 = vmatpush1.msra.mxu0 %v2126
    %3482 = vmatprep.subr.mxu0 %v2123
    %3483 = vmatpush1.msra.mxu0 %v2122
    %3484 = vmatprep.subr.mxu0 %v2119
    %3485 = vmatpush1.msra.mxu0 %v2118
    %3486 = vmatprep.subr.mxu0 %v2115
    %3487 = vmatpush1.msra.mxu0 %v2114
    %3488 = vmatprep.subr.mxu0 %v2111
    %3489 = vmatpush1.msra.mxu0 %v2110
    %3490 = vmatprep.subr.mxu0 %v2107
    %3491 = vmatpush1.msra.mxu0 %v2106
    %3492 = vmatprep.subr.mxu0 0.0
    %3493 = vmatpush2.msra.mxu0 0.0
    %3494 = vmatprep.subr.mxu0 0.0
    %3495 = vmatpush2.msra.mxu0 0.0
    %3496 = vmatprep.subr.mxu0 0.0
    %3497 = vmatpush2.msra.mxu0 0.0
    %3498 = vmatprep.subr.mxu0 0.0
    %3499 = vmatpush2.msra.mxu0 0.0
    %3500 = vmatprep.subr.mxu0 0.0
    %3501 = vmatpush2.msra.mxu0 0.0
    %3502 = vmatprep.subr.mxu0 0.0
    %3503 = vmatpush2.msra.mxu0 0.0
    %3504 = vmatprep.subr.mxu0 0.0
    %3505 = vmatpush2.msra.mxu0 0.0
    %3506 = vmatprep.subr.mxu0 0.0
    %3507 = vmatpush2.msra.mxu0 0.0
    %3508 = vmatprep.subr.mxu0 0.0
    %3509 = vmatpush2.msra.mxu0 0.0
    %3510 = vmatprep.subr.mxu0 0.0
    %3511 = vmatpush2.msra.mxu0 0.0
    %3512 = vmatprep.subr.mxu0 0.0
    %3513 = vmatpush2.msra.mxu0 0.0
    %3514 = vmatprep.subr.mxu0 0.0
    %3515 = vmatpush2.msra.mxu0 0.0
    %3516 = vmatprep.subr.mxu0 0.0
    %3517 = vmatpush2.msra.mxu0 0.0
    %3518 = vmatprep.subr.mxu0 0.0
    %3519 = vmatpush2.msra.mxu0 0.0
    %3520 = vmatprep.subr.mxu0 0.0
    %3521 = vmatpush2.msra.mxu0 0.0
    %3522 = vmatprep.subr.mxu0 0.0
    %3523 = vmatpush2.msra.mxu0 0.0
    %3524 = vmatprep.mubr.f32.mxu0 0.0
    %3525 = vmatmul.mubr.f32.gmra.mxu0 %v3458
    %v3526 = vpop.f32.mrf.mxu0
    %v3527 = vadd.f32 0.0, %v3526
    %v3528 = vpop.f32.mrf.mxu0
    %v3529 = vadd.f32 0.0, %v3528
    %3530 = vdwg.mxu0
    %3531 = vmatprep.subr.mxu0 %v2169
    %3532 = vmatpush1.msra.mxu0 %v2168
    %3533 = vmatprep.subr.mxu0 %v2165
    %3534 = vmatpush1.msra.mxu0 %v2164
    %3535 = vmatprep.subr.mxu0 %v2161
    %3536 = vmatpush1.msra.mxu0 %v2160
    %3537 = vmatprep.subr.mxu0 %v2157
    %3538 = vmatpush1.msra.mxu0 %v2156
    %3539 = vmatprep.subr.mxu0 %v2153
    %3540 = vmatpush1.msra.mxu0 %v2152
    %3541 = vmatprep.subr.mxu0 %v2149
    %3542 = vmatpush1.msra.mxu0 %v2148
    %3543 = vmatprep.subr.mxu0 %v2145
    %3544 = vmatpush1.msra.mxu0 %v2144
    %3545 = vmatprep.subr.mxu0 %v2141
    %3546 = vmatpush1.msra.mxu0 %v2140
    %3547 = vmatprep.subr.mxu0 %v2137
    %3548 = vmatpush1.msra.mxu0 %v2136
    %3549 = vmatprep.subr.mxu0 %v2133
    %3550 = vmatpush1.msra.mxu0 %v2132
    %3551 = vmatprep.subr.mxu0 %v2129
    %3552 = vmatpush1.msra.mxu0 %v2128
    %3553 = vmatprep.subr.mxu0 %v2125
    %3554 = vmatpush1.msra.mxu0 %v2124
    %3555 = vmatprep.subr.mxu0 %v2121
    %3556 = vmatpush1.msra.mxu0 %v2120
    %3557 = vmatprep.subr.mxu0 %v2117
    %3558 = vmatpush1.msra.mxu0 %v2116
    %3559 = vmatprep.subr.mxu0 %v2113
    %3560 = vmatpush1.msra.mxu0 %v2112
    %3561 = vmatprep.subr.mxu0 %v2109
    %3562 = vmatpush1.msra.mxu0 %v2108
    %3563 = vmatprep.subr.mxu0 0.0
    %3564 = vmatpush2.msra.mxu0 0.0
    %3565 = vmatprep.subr.mxu0 0.0
    %3566 = vmatpush2.msra.mxu0 0.0
    %3567 = vmatprep.subr.mxu0 0.0
    %3568 = vmatpush2.msra.mxu0 0.0
    %3569 = vmatprep.subr.mxu0 0.0
    %3570 = vmatpush2.msra.mxu0 0.0
    %3571 = vmatprep.subr.mxu0 0.0
    %3572 = vmatpush2.msra.mxu0 0.0
    %3573 = vmatprep.subr.mxu0 0.0
    %3574 = vmatpush2.msra.mxu0 0.0
    %3575 = vmatprep.subr.mxu0 0.0
    %3576 = vmatpush2.msra.mxu0 0.0
    %3577 = vmatprep.subr.mxu0 0.0
    %3578 = vmatpush2.msra.mxu0 0.0
    %3579 = vmatprep.subr.mxu0 0.0
    %3580 = vmatpush2.msra.mxu0 0.0
    %3581 = vmatprep.subr.mxu0 0.0
    %3582 = vmatpush2.msra.mxu0 0.0
    %3583 = vmatprep.subr.mxu0 0.0
    %3584 = vmatpush2.msra.mxu0 0.0
    %3585 = vmatprep.subr.mxu0 0.0
    %3586 = vmatpush2.msra.mxu0 0.0
    %3587 = vmatprep.subr.mxu0 0.0
    %3588 = vmatpush2.msra.mxu0 0.0
    %3589 = vmatprep.subr.mxu0 0.0
    %3590 = vmatpush2.msra.mxu0 0.0
    %3591 = vmatprep.subr.mxu0 0.0
    %3592 = vmatpush2.msra.mxu0 0.0
    %3593 = vmatprep.subr.mxu0 0.0
    %3594 = vmatpush2.msra.mxu0 0.0
    %3595 = vmatprep.mubr.f32.mxu0 0.0
    %3596 = vmatmul.mubr.f32.gmra.mxu0 %v3458
    %v3597 = vpop.f32.mrf.mxu0
    %v3598 = vadd.f32 0.0, %v3597
    %v3599 = vpop.f32.mrf.mxu0
    %v3600 = vadd.f32 0.0, %v3599
    %3601 = vdwg.mxu0
    %v3606 = vrot.slane %v3527, 2
    %v3607 = vrot.slane %v3529, 2
    %v3608 = vrot.slane %v3598, 2
    %v3609 = vrot.slane %v3600, 2
    %v3614 = vadd.f32 %v2025, %v3606
    %v3615 = vadd.f32 %v2027, %v3607
    %v3616 = vadd.f32 %v2102, %v3608
    %v3617 = vadd.f32 %v2104, %v3609
    %v3618 = vxor.u32 %v3614, 2147483648
    %v3619 = vmul.f32 %v3618, 1.442695
    %v3620 = vpow.pop %v3619
    %v3621 = vadd.f32 %v3620, 1.0
    %v3622 = vrcp.pop %v3621
    %v3623 = vmul.f32 1.0, %v3622
    %v3624 = vxor.u32 %v3615, 2147483648
    %v3625 = vmul.f32 %v3624, 1.442695
    %v3626 = vpow.pop %v3625
    %v3627 = vadd.f32 %v3626, 1.0
    %v3628 = vrcp.pop %v3627
    %v3629 = vmul.f32 1.0, %v3628
    %v3630 = vtanh.pop %v3616
    %v3631 = vxor.u32 %v3617, 2147483648
    %v3632 = vmul.f32 %v3631, 1.442695
    %v3633 = vpow.pop %v3632
    %v3634 = vadd.f32 %v3633, 1.0
    %v3635 = vrcp.pop %v3634
    %v3636 = vmul.f32 1.0, %v3635
    %v3638 = vrot.slane %v3453, 6
    %v3640 = vmul.f32 %v3629, %v3638
    %v3641 = vmul.f32 %v3623, %v3630
    %v3642 = vadd.f32 %v3640, %v3641
    %v3643 = vtanh.pop %v3642
    %v3644 = vmul.f32 %v3636, %v3643
    %3645 = vst [vmem:[#allocation2 + $0x8] sm:$0xc0] %v3644
    %v3646 = vld [vmem:[#allocation2] sm:$0xff]
    %v3647 = vld [vmem:[#allocation2 + $0x8] sm:$0xff]
    %v3648 = vld [vmem:[#allocation11] sm:$0xff]
    %v3649 = vld [vmem:[#allocation11 + $0x8] sm:$0xff]
    %v3650 = vld [vmem:[#allocation11 + $0x10] sm:$0xff]
    %v3651 = vld [vmem:[#allocation11 + $0x18] sm:$0xff]
    %v3652 = vld [vmem:[#allocation11 + $0x20] sm:$0xff]
    %v3653 = vld [vmem:[#allocation11 + $0x28] sm:$0xff]
    %v3654 = vld [vmem:[#allocation11 + $0x30] sm:$0xff]
    %v3655 = vld [vmem:[#allocation11 + $0x38] sm:$0xff]
    %v3656 = vld [vmem:[#allocation11 + $0x40] sm:$0xff]
    %v3657 = vld [vmem:[#allocation11 + $0x48] sm:$0xff]
    %v3658 = vld [vmem:[#allocation11 + $0x50] sm:$0xff]
    %v3659 = vld [vmem:[#allocation11 + $0x58] sm:$0xff]
    %v3660 = vld [vmem:[#allocation11 + $0x60] sm:$0xff]
    %v3661 = vld [vmem:[#allocation11 + $0x68] sm:$0xff]
    %v3662 = vld [vmem:[#allocation11 + $0x70] sm:$0xff]
    %v3663 = vld [vmem:[#allocation11 + $0x78] sm:$0xff]
    %v3664 = vld [vmem:[#allocation11 + $0x80] sm:$0xff]
    %v3665 = vld [vmem:[#allocation11 + $0x88] sm:$0xff]
    %v3666 = vld [vmem:[#allocation11 + $0x90] sm:$0xff]
    %v3667 = vld [vmem:[#allocation11 + $0x98] sm:$0xff]
    %v3668 = vld [vmem:[#allocation11 + $0xa0] sm:$0xff]
    %v3669 = vld [vmem:[#allocation11 + $0xa8] sm:$0xff]
    %v3670 = vld [vmem:[#allocation11 + $0xb0] sm:$0xff]
    %v3671 = vld [vmem:[#allocation11 + $0xb8] sm:$0xff]
    %v3672 = vld [vmem:[#allocation11 + $0xc0] sm:$0xff]
    %v3673 = vld [vmem:[#allocation11 + $0xc8] sm:$0xff]
    %v3674 = vld [vmem:[#allocation11 + $0xd0] sm:$0xff]
    %v3675 = vld [vmem:[#allocation11 + $0xd8] sm:$0xff]
    %v3676 = vld [vmem:[#allocation11 + $0xe0] sm:$0xff]
    %v3677 = vld [vmem:[#allocation11 + $0xe8] sm:$0xff]
    %v3678 = vld [vmem:[#allocation11 + $0xf0] sm:$0xff]
    %v3679 = vld [vmem:[#allocation11 + $0xf8] sm:$0xff]
    %v3680 = vld [vmem:[#allocation11 + $0x100] sm:$0xff]
    %v3681 = vld [vmem:[#allocation11 + $0x108] sm:$0xff]
    %v3682 = vld [vmem:[#allocation11 + $0x110] sm:$0xff]
    %v3683 = vld [vmem:[#allocation11 + $0x118] sm:$0xff]
    %v3684 = vld [vmem:[#allocation11 + $0x120] sm:$0xff]
    %v3685 = vld [vmem:[#allocation11 + $0x128] sm:$0xff]
    %v3686 = vld [vmem:[#allocation11 + $0x130] sm:$0xff]
    %v3687 = vld [vmem:[#allocation11 + $0x138] sm:$0xff]
    %v3688 = vld [vmem:[#allocation11 + $0x140] sm:$0xff]
    %v3689 = vld [vmem:[#allocation11 + $0x148] sm:$0xff]
    %v3690 = vld [vmem:[#allocation11 + $0x150] sm:$0xff]
    %v3691 = vld [vmem:[#allocation11 + $0x158] sm:$0xff]
    %v3692 = vld [vmem:[#allocation11 + $0x160] sm:$0xff]
    %v3693 = vld [vmem:[#allocation11 + $0x168] sm:$0xff]
    %v3694 = vld [vmem:[#allocation11 + $0x170] sm:$0xff]
    %v3695 = vld [vmem:[#allocation11 + $0x178] sm:$0xff]
    %v3696 = vld [vmem:[#allocation11 + $0x180] sm:$0xff]
    %v3697 = vld [vmem:[#allocation11 + $0x188] sm:$0xff]
    %v3698 = vld [vmem:[#allocation11 + $0x190] sm:$0xff]
    %v3699 = vld [vmem:[#allocation11 + $0x198] sm:$0xff]
    %v3700 = vld [vmem:[#allocation11 + $0x1a0] sm:$0xff]
    %v3701 = vld [vmem:[#allocation11 + $0x1a8] sm:$0xff]
    %v3702 = vld [vmem:[#allocation11 + $0x1b0] sm:$0xff]
    %v3703 = vld [vmem:[#allocation11 + $0x1b8] sm:$0xff]
    %v3704 = vld [vmem:[#allocation11 + $0x1c0] sm:$0xff]
    %v3705 = vld [vmem:[#allocation11 + $0x1c8] sm:$0xff]
    %v3706 = vld [vmem:[#allocation11 + $0x1d0] sm:$0xff]
    %v3707 = vld [vmem:[#allocation11 + $0x1d8] sm:$0xff]
    %v3708 = vld [vmem:[#allocation11 + $0x1e0] sm:$0xff]
    %v3709 = vld [vmem:[#allocation11 + $0x1e8] sm:$0xff]
    %v3710 = vld [vmem:[#allocation11 + $0x1f0] sm:$0xff]
    %v3711 = vld [vmem:[#allocation11 + $0x1f8] sm:$0xff]
    %v3712 = vld [vmem:[%s9] sm:$0xf]
    %v3714 = vlaneseq
    %v3715 = vshrl.u32 %v3714, 7
    %v3716 = vsub.s32 0, %v3715
    %v3717 = vrot.slane %v3712, %v3716
    %v3718 = vlaneseq
    %v3719 = vshrl.u32 %v3718, 7
    %v3720 = vsub.s32 1, %v3719
    %v3721 = vrot.slane %v3712, %v3720
    %v3722 = vlaneseq
    %v3723 = vshrl.u32 %v3722, 7
    %v3724 = vsub.s32 2, %v3723
    %v3725 = vrot.slane %v3712, %v3724
    %v3726 = vlaneseq
    %v3727 = vshrl.u32 %v3726, 7
    %v3728 = vsub.s32 3, %v3727
    %v3729 = vrot.slane %v3712, %v3728
    %3734 = vmatprep.subr.mxu0 %v3709
    %3735 = vmatpush1.msra.mxu0 %v3708
    %3736 = vmatprep.subr.mxu0 %v3705
    %3737 = vmatpush1.msra.mxu0 %v3704
    %3738 = vmatprep.subr.mxu0 %v3701
    %3739 = vmatpush1.msra.mxu0 %v3700
    %3740 = vmatprep.subr.mxu0 %v3697
    %3741 = vmatpush1.msra.mxu0 %v3696
    %3742 = vmatprep.subr.mxu0 %v3693
    %3743 = vmatpush1.msra.mxu0 %v3692
    %3744 = vmatprep.subr.mxu0 %v3689
    %3745 = vmatpush1.msra.mxu0 %v3688
    %3746 = vmatprep.subr.mxu0 %v3685
    %3747 = vmatpush1.msra.mxu0 %v3684
    %3748 = vmatprep.subr.mxu0 %v3681
    %3749 = vmatpush1.msra.mxu0 %v3680
    %3750 = vmatprep.subr.mxu0 %v3677
    %3751 = vmatpush1.msra.mxu0 %v3676
    %3752 = vmatprep.subr.mxu0 %v3673
    %3753 = vmatpush1.msra.mxu0 %v3672
    %3754 = vmatprep.subr.mxu0 %v3669
    %3755 = vmatpush1.msra.mxu0 %v3668
    %3756 = vmatprep.subr.mxu0 %v3665
    %3757 = vmatpush1.msra.mxu0 %v3664
    %3758 = vmatprep.subr.mxu0 %v3661
    %3759 = vmatpush1.msra.mxu0 %v3660
    %3760 = vmatprep.subr.mxu0 %v3657
    %3761 = vmatpush1.msra.mxu0 %v3656
    %3762 = vmatprep.subr.mxu0 %v3653
    %3763 = vmatpush1.msra.mxu0 %v3652
    %3764 = vmatprep.subr.mxu0 %v3649
    %3765 = vmatpush1.msra.mxu0 %v3648
    %3766 = vmatprep.subr.mxu0 0.0
    %3767 = vmatpush2.msra.mxu0 0.0
    %3768 = vmatprep.subr.mxu0 0.0
    %3769 = vmatpush2.msra.mxu0 0.0
    %3770 = vmatprep.subr.mxu0 0.0
    %3771 = vmatpush2.msra.mxu0 0.0
    %3772 = vmatprep.subr.mxu0 0.0
    %3773 = vmatpush2.msra.mxu0 0.0
    %3774 = vmatprep.subr.mxu0 0.0
    %3775 = vmatpush2.msra.mxu0 0.0
    %3776 = vmatprep.subr.mxu0 0.0
    %3777 = vmatpush2.msra.mxu0 0.0
    %3778 = vmatprep.subr.mxu0 0.0
    %3779 = vmatpush2.msra.mxu0 0.0
    %3780 = vmatprep.subr.mxu0 0.0
    %3781 = vmatpush2.msra.mxu0 0.0
    %3782 = vmatprep.subr.mxu0 0.0
    %3783 = vmatpush2.msra.mxu0 0.0
    %3784 = vmatprep.subr.mxu0 0.0
    %3785 = vmatpush2.msra.mxu0 0.0
    %3786 = vmatprep.subr.mxu0 0.0
    %3787 = vmatpush2.msra.mxu0 0.0
    %3788 = vmatprep.subr.mxu0 0.0
    %3789 = vmatpush2.msra.mxu0 0.0
    %3790 = vmatprep.subr.mxu0 0.0
    %3791 = vmatpush2.msra.mxu0 0.0
    %3792 = vmatprep.subr.mxu0 0.0
    %3793 = vmatpush2.msra.mxu0 0.0
    %3794 = vmatprep.subr.mxu0 0.0
    %3795 = vmatpush2.msra.mxu0 0.0
    %3796 = vmatprep.subr.mxu0 0.0
    %3797 = vmatpush2.msra.mxu0 0.0
    %3798 = vmatprep.mubr.f32.mxu0 0.0
    %3799 = vmatmul.mubr.f32.gmra.mxu0 %v3646
    %v3800 = vpop.f32.mrf.mxu0
    %v3801 = vadd.f32 %v3717, %v3800
    %v3802 = vpop.f32.mrf.mxu0
    %v3803 = vadd.f32 %v3721, %v3802
    %3804 = vmatprep.mubr.f32.mxu0 0.0
    %3805 = vmatmul.mubr.f32.gmra.mxu0 %v3647
    %v3806 = vpop.f32.mrf.mxu0
    %v3807 = vadd.f32 %v3717, %v3806
    %v3808 = vpop.f32.mrf.mxu0
    %v3809 = vadd.f32 %v3721, %v3808
    %3810 = vdwg.mxu0
    %3811 = vmatprep.subr.mxu0 %v3711
    %3812 = vmatpush1.msra.mxu0 %v3710
    %3813 = vmatprep.subr.mxu0 %v3707
    %3814 = vmatpush1.msra.mxu0 %v3706
    %3815 = vmatprep.subr.mxu0 %v3703
    %3816 = vmatpush1.msra.mxu0 %v3702
    %3817 = vmatprep.subr.mxu0 %v3699
    %3818 = vmatpush1.msra.mxu0 %v3698
    %3819 = vmatprep.subr.mxu0 %v3695
    %3820 = vmatpush1.msra.mxu0 %v3694
    %3821 = vmatprep.subr.mxu0 %v3691
    %3822 = vmatpush1.msra.mxu0 %v3690
    %3823 = vmatprep.subr.mxu0 %v3687
    %3824 = vmatpush1.msra.mxu0 %v3686
    %3825 = vmatprep.subr.mxu0 %v3683
    %3826 = vmatpush1.msra.mxu0 %v3682
    %3827 = vmatprep.subr.mxu0 %v3679
    %3828 = vmatpush1.msra.mxu0 %v3678
    %3829 = vmatprep.subr.mxu0 %v3675
    %3830 = vmatpush1.msra.mxu0 %v3674
    %3831 = vmatprep.subr.mxu0 %v3671
    %3832 = vmatpush1.msra.mxu0 %v3670
    %3833 = vmatprep.subr.mxu0 %v3667
    %3834 = vmatpush1.msra.mxu0 %v3666
    %3835 = vmatprep.subr.mxu0 %v3663
    %3836 = vmatpush1.msra.mxu0 %v3662
    %3837 = vmatprep.subr.mxu0 %v3659
    %3838 = vmatpush1.msra.mxu0 %v3658
    %3839 = vmatprep.subr.mxu0 %v3655
    %3840 = vmatpush1.msra.mxu0 %v3654
    %3841 = vmatprep.subr.mxu0 %v3651
    %3842 = vmatpush1.msra.mxu0 %v3650
    %3843 = vmatprep.subr.mxu0 0.0
    %3844 = vmatpush2.msra.mxu0 0.0
    %3845 = vmatprep.subr.mxu0 0.0
    %3846 = vmatpush2.msra.mxu0 0.0
    %3847 = vmatprep.subr.mxu0 0.0
    %3848 = vmatpush2.msra.mxu0 0.0
    %3849 = vmatprep.subr.mxu0 0.0
    %3850 = vmatpush2.msra.mxu0 0.0
    %3851 = vmatprep.subr.mxu0 0.0
    %3852 = vmatpush2.msra.mxu0 0.0
    %3853 = vmatprep.subr.mxu0 0.0
    %3854 = vmatpush2.msra.mxu0 0.0
    %3855 = vmatprep.subr.mxu0 0.0
    %3856 = vmatpush2.msra.mxu0 0.0
    %3857 = vmatprep.subr.mxu0 0.0
    %3858 = vmatpush2.msra.mxu0 0.0
    %3859 = vmatprep.subr.mxu0 0.0
    %3860 = vmatpush2.msra.mxu0 0.0
    %3861 = vmatprep.subr.mxu0 0.0
    %3862 = vmatpush2.msra.mxu0 0.0
    %3863 = vmatprep.subr.mxu0 0.0
    %3864 = vmatpush2.msra.mxu0 0.0
    %3865 = vmatprep.subr.mxu0 0.0
    %3866 = vmatpush2.msra.mxu0 0.0
    %3867 = vmatprep.subr.mxu0 0.0
    %3868 = vmatpush2.msra.mxu0 0.0
    %3869 = vmatprep.subr.mxu0 0.0
    %3870 = vmatpush2.msra.mxu0 0.0
    %3871 = vmatprep.subr.mxu0 0.0
    %3872 = vmatpush2.msra.mxu0 0.0
    %3873 = vmatprep.subr.mxu0 0.0
    %3874 = vmatpush2.msra.mxu0 0.0
    %3875 = vmatprep.mubr.f32.mxu0 0.0
    %3876 = vmatmul.mubr.f32.gmra.mxu0 %v3646
    %v3877 = vpop.f32.mrf.mxu0
    %v3878 = vadd.f32 %v3725, %v3877
    %v3879 = vpop.f32.mrf.mxu0
    %v3880 = vadd.f32 %v3729, %v3879
    %3881 = vmatprep.mubr.f32.mxu0 0.0
    %3882 = vmatmul.mubr.f32.gmra.mxu0 %v3647
    %v3883 = vpop.f32.mrf.mxu0
    %v3884 = vadd.f32 %v3725, %v3883
    %v3885 = vpop.f32.mrf.mxu0
    %v3886 = vadd.f32 %v3729, %v3885
    %3887 = vdwg.mxu0
    %v3888 = vld [vmem:[#allocation12] sm:$0xff]
    %v3889 = vld [vmem:[#allocation12 + $0x8] sm:$0xff]
    %v3890 = vld [vmem:[#allocation12 + $0x10] sm:$0xff]
    %v3891 = vld [vmem:[#allocation12 + $0x18] sm:$0xff]
    %v3892 = vld [vmem:[#allocation12 + $0x20] sm:$0xff]
    %v3893 = vld [vmem:[#allocation12 + $0x28] sm:$0xff]
    %v3894 = vld [vmem:[#allocation12 + $0x30] sm:$0xff]
    %v3895 = vld [vmem:[#allocation12 + $0x38] sm:$0xff]
    %v3896 = vld [vmem:[#allocation12 + $0x40] sm:$0xff]
    %v3897 = vld [vmem:[#allocation12 + $0x48] sm:$0xff]
    %v3898 = vld [vmem:[#allocation12 + $0x50] sm:$0xff]
    %v3899 = vld [vmem:[#allocation12 + $0x58] sm:$0xff]
    %v3900 = vld [vmem:[#allocation12 + $0x60] sm:$0xff]
    %v3901 = vld [vmem:[#allocation12 + $0x68] sm:$0xff]
    %v3902 = vld [vmem:[#allocation12 + $0x70] sm:$0xff]
    %v3903 = vld [vmem:[#allocation12 + $0x78] sm:$0xff]
    %v3904 = vld [vmem:[#allocation12 + $0x80] sm:$0xff]
    %v3905 = vld [vmem:[#allocation12 + $0x88] sm:$0xff]
    %v3906 = vld [vmem:[#allocation12 + $0x90] sm:$0xff]
    %v3907 = vld [vmem:[#allocation12 + $0x98] sm:$0xff]
    %v3908 = vld [vmem:[#allocation12 + $0xa0] sm:$0xff]
    %v3909 = vld [vmem:[#allocation12 + $0xa8] sm:$0xff]
    %v3910 = vld [vmem:[#allocation12 + $0xb0] sm:$0xff]
    %v3911 = vld [vmem:[#allocation12 + $0xb8] sm:$0xff]
    %v3912 = vld [vmem:[#allocation12 + $0xc0] sm:$0xff]
    %v3913 = vld [vmem:[#allocation12 + $0xc8] sm:$0xff]
    %v3914 = vld [vmem:[#allocation12 + $0xd0] sm:$0xff]
    %v3915 = vld [vmem:[#allocation12 + $0xd8] sm:$0xff]
    %v3916 = vld [vmem:[#allocation12 + $0xe0] sm:$0xff]
    %v3917 = vld [vmem:[#allocation12 + $0xe8] sm:$0xff]
    %v3918 = vld [vmem:[#allocation12 + $0xf0] sm:$0xff]
    %v3919 = vld [vmem:[#allocation12 + $0xf8] sm:$0xff]
    %v3920 = vld [vmem:[#allocation12 + $0x100] sm:$0xff]
    %v3921 = vld [vmem:[#allocation12 + $0x108] sm:$0xff]
    %v3922 = vld [vmem:[#allocation12 + $0x110] sm:$0xff]
    %v3923 = vld [vmem:[#allocation12 + $0x118] sm:$0xff]
    %v3924 = vld [vmem:[#allocation12 + $0x120] sm:$0xff]
    %v3925 = vld [vmem:[#allocation12 + $0x128] sm:$0xff]
    %v3926 = vld [vmem:[#allocation12 + $0x130] sm:$0xff]
    %v3927 = vld [vmem:[#allocation12 + $0x138] sm:$0xff]
    %v3928 = vld [vmem:[#allocation12 + $0x140] sm:$0xff]
    %v3929 = vld [vmem:[#allocation12 + $0x148] sm:$0xff]
    %v3930 = vld [vmem:[#allocation12 + $0x150] sm:$0xff]
    %v3931 = vld [vmem:[#allocation12 + $0x158] sm:$0xff]
    %v3932 = vld [vmem:[#allocation12 + $0x160] sm:$0xff]
    %v3933 = vld [vmem:[#allocation12 + $0x168] sm:$0xff]
    %v3934 = vld [vmem:[#allocation12 + $0x170] sm:$0xff]
    %v3935 = vld [vmem:[#allocation12 + $0x178] sm:$0xff]
    %v3936 = vld [vmem:[#allocation12 + $0x180] sm:$0xff]
    %v3937 = vld [vmem:[#allocation12 + $0x188] sm:$0xff]
    %v3938 = vld [vmem:[#allocation12 + $0x190] sm:$0xff]
    %v3939 = vld [vmem:[#allocation12 + $0x198] sm:$0xff]
    %v3940 = vld [vmem:[#allocation12 + $0x1a0] sm:$0xff]
    %v3941 = vld [vmem:[#allocation12 + $0x1a8] sm:$0xff]
    %v3942 = vld [vmem:[#allocation12 + $0x1b0] sm:$0xff]
    %v3943 = vld [vmem:[#allocation12 + $0x1b8] sm:$0xff]
    %v3944 = vld [vmem:[#allocation12 + $0x1c0] sm:$0xff]
    %v3945 = vld [vmem:[#allocation12 + $0x1c8] sm:$0xff]
    %v3946 = vld [vmem:[#allocation12 + $0x1d0] sm:$0xff]
    %v3947 = vld [vmem:[#allocation12 + $0x1d8] sm:$0xff]
    %v3948 = vld [vmem:[#allocation12 + $0x1e0] sm:$0xff]
    %v3949 = vld [vmem:[#allocation12 + $0x1e8] sm:$0xff]
    %v3950 = vld [vmem:[#allocation12 + $0x1f0] sm:$0xff]
    %v3951 = vld [vmem:[#allocation12 + $0x1f8] sm:$0xff]
    %3952 = vmatprep.subr.mxu0 %v3949
    %3953 = vmatpush1.msra.mxu0 %v3948
    %3954 = vmatprep.subr.mxu0 %v3945
    %3955 = vmatpush1.msra.mxu0 %v3944
    %3956 = vmatprep.subr.mxu0 %v3941
    %3957 = vmatpush1.msra.mxu0 %v3940
    %3958 = vmatprep.subr.mxu0 %v3937
    %3959 = vmatpush1.msra.mxu0 %v3936
    %3960 = vmatprep.subr.mxu0 %v3933
    %3961 = vmatpush1.msra.mxu0 %v3932
    %3962 = vmatprep.subr.mxu0 %v3929
    %3963 = vmatpush1.msra.mxu0 %v3928
    %3964 = vmatprep.subr.mxu0 %v3925
    %3965 = vmatpush1.msra.mxu0 %v3924
    %3966 = vmatprep.subr.mxu0 %v3921
    %3967 = vmatpush1.msra.mxu0 %v3920
    %3968 = vmatprep.subr.mxu0 %v3917
    %3969 = vmatpush1.msra.mxu0 %v3916
    %3970 = vmatprep.subr.mxu0 %v3913
    %3971 = vmatpush1.msra.mxu0 %v3912
    %3972 = vmatprep.subr.mxu0 %v3909
    %3973 = vmatpush1.msra.mxu0 %v3908
    %3974 = vmatprep.subr.mxu0 %v3905
    %3975 = vmatpush1.msra.mxu0 %v3904
    %3976 = vmatprep.subr.mxu0 %v3901
    %3977 = vmatpush1.msra.mxu0 %v3900
    %3978 = vmatprep.subr.mxu0 %v3897
    %3979 = vmatpush1.msra.mxu0 %v3896
    %3980 = vmatprep.subr.mxu0 %v3893
    %3981 = vmatpush1.msra.mxu0 %v3892
    %3982 = vmatprep.subr.mxu0 %v3889
    %3983 = vmatpush1.msra.mxu0 %v3888
    %3984 = vmatprep.subr.mxu0 0.0
    %3985 = vmatpush2.msra.mxu0 0.0
    %3986 = vmatprep.subr.mxu0 0.0
    %3987 = vmatpush2.msra.mxu0 0.0
    %3988 = vmatprep.subr.mxu0 0.0
    %3989 = vmatpush2.msra.mxu0 0.0
    %3990 = vmatprep.subr.mxu0 0.0
    %3991 = vmatpush2.msra.mxu0 0.0
    %3992 = vmatprep.subr.mxu0 0.0
    %3993 = vmatpush2.msra.mxu0 0.0
    %3994 = vmatprep.subr.mxu0 0.0
    %3995 = vmatpush2.msra.mxu0 0.0
    %3996 = vmatprep.subr.mxu0 0.0
    %3997 = vmatpush2.msra.mxu0 0.0
    %3998 = vmatprep.subr.mxu0 0.0
    %3999 = vmatpush2.msra.mxu0 0.0
    %4000 = vmatprep.subr.mxu0 0.0
    %4001 = vmatpush2.msra.mxu0 0.0
    %4002 = vmatprep.subr.mxu0 0.0
    %4003 = vmatpush2.msra.mxu0 0.0
    %4004 = vmatprep.subr.mxu0 0.0
    %4005 = vmatpush2.msra.mxu0 0.0
    %4006 = vmatprep.subr.mxu0 0.0
    %4007 = vmatpush2.msra.mxu0 0.0
    %4008 = vmatprep.subr.mxu0 0.0
    %4009 = vmatpush2.msra.mxu0 0.0
    %4010 = vmatprep.subr.mxu0 0.0
    %4011 = vmatpush2.msra.mxu0 0.0
    %4012 = vmatprep.subr.mxu0 0.0
    %4013 = vmatpush2.msra.mxu0 0.0
    %4014 = vmatprep.subr.mxu0 0.0
    %4015 = vmatpush2.msra.mxu0 0.0
    %4016 = vmatprep.mubr.f32.mxu0 0.0
    %4017 = vmatmul.mubr.f32.gmra.mxu0 0.0
    %v4018 = vpop.f32.mrf.mxu0
    %v4019 = vadd.f32 0.0, %v4018
    %v4020 = vpop.f32.mrf.mxu0
    %v4021 = vadd.f32 0.0, %v4020
    %4022 = vdwg.mxu0
    %4023 = vmatprep.subr.mxu0 %v3951
    %4024 = vmatpush1.msra.mxu0 %v3950
    %4025 = vmatprep.subr.mxu0 %v3947
    %4026 = vmatpush1.msra.mxu0 %v3946
    %4027 = vmatprep.subr.mxu0 %v3943
    %4028 = vmatpush1.msra.mxu0 %v3942
    %4029 = vmatprep.subr.mxu0 %v3939
    %4030 = vmatpush1.msra.mxu0 %v3938
    %4031 = vmatprep.subr.mxu0 %v3935
    %4032 = vmatpush1.msra.mxu0 %v3934
    %4033 = vmatprep.subr.mxu0 %v3931
    %4034 = vmatpush1.msra.mxu0 %v3930
    %4035 = vmatprep.subr.mxu0 %v3927
    %4036 = vmatpush1.msra.mxu0 %v3926
    %4037 = vmatprep.subr.mxu0 %v3923
    %4038 = vmatpush1.msra.mxu0 %v3922
    %4039 = vmatprep.subr.mxu0 %v3919
    %4040 = vmatpush1.msra.mxu0 %v3918
    %4041 = vmatprep.subr.mxu0 %v3915
    %4042 = vmatpush1.msra.mxu0 %v3914
    %4043 = vmatprep.subr.mxu0 %v3911
    %4044 = vmatpush1.msra.mxu0 %v3910
    %4045 = vmatprep.subr.mxu0 %v3907
    %4046 = vmatpush1.msra.mxu0 %v3906
    %4047 = vmatprep.subr.mxu0 %v3903
    %4048 = vmatpush1.msra.mxu0 %v3902
    %4049 = vmatprep.subr.mxu0 %v3899
    %4050 = vmatpush1.msra.mxu0 %v3898
    %4051 = vmatprep.subr.mxu0 %v3895
    %4052 = vmatpush1.msra.mxu0 %v3894
    %4053 = vmatprep.subr.mxu0 %v3891
    %4054 = vmatpush1.msra.mxu0 %v3890
    %4055 = vmatprep.subr.mxu0 0.0
    %4056 = vmatpush2.msra.mxu0 0.0
    %4057 = vmatprep.subr.mxu0 0.0
    %4058 = vmatpush2.msra.mxu0 0.0
    %4059 = vmatprep.subr.mxu0 0.0
    %4060 = vmatpush2.msra.mxu0 0.0
    %4061 = vmatprep.subr.mxu0 0.0
    %4062 = vmatpush2.msra.mxu0 0.0
    %4063 = vmatprep.subr.mxu0 0.0
    %4064 = vmatpush2.msra.mxu0 0.0
    %4065 = vmatprep.subr.mxu0 0.0
    %4066 = vmatpush2.msra.mxu0 0.0
    %4067 = vmatprep.subr.mxu0 0.0
    %4068 = vmatpush2.msra.mxu0 0.0
    %4069 = vmatprep.subr.mxu0 0.0
    %4070 = vmatpush2.msra.mxu0 0.0
    %4071 = vmatprep.subr.mxu0 0.0
    %4072 = vmatpush2.msra.mxu0 0.0
    %4073 = vmatprep.subr.mxu0 0.0
    %4074 = vmatpush2.msra.mxu0 0.0
    %4075 = vmatprep.subr.mxu0 0.0
    %4076 = vmatpush2.msra.mxu0 0.0
    %4077 = vmatprep.subr.mxu0 0.0
    %4078 = vmatpush2.msra.mxu0 0.0
    %4079 = vmatprep.subr.mxu0 0.0
    %4080 = vmatpush2.msra.mxu0 0.0
    %4081 = vmatprep.subr.mxu0 0.0
    %4082 = vmatpush2.msra.mxu0 0.0
    %4083 = vmatprep.subr.mxu0 0.0
    %4084 = vmatpush2.msra.mxu0 0.0
    %4085 = vmatprep.subr.mxu0 0.0
    %4086 = vmatpush2.msra.mxu0 0.0
    %4087 = vmatprep.mubr.f32.mxu0 0.0
    %4088 = vmatmul.mubr.f32.gmra.mxu0 0.0
    %v4089 = vpop.f32.mrf.mxu0
    %v4090 = vadd.f32 0.0, %v4089
    %v4091 = vpop.f32.mrf.mxu0
    %v4092 = vadd.f32 0.0, %v4091
    %4093 = vdwg.mxu0
    %v4094 = vadd.f32 %v3801, %v4019
    %v4095 = vadd.f32 %v3803, %v4021
    %v4096 = vadd.f32 %v3878, %v4090
    %v4097 = vadd.f32 %v3880, %v4092
    %v4098 = vxor.u32 %v4094, 2147483648
    %v4099 = vmul.f32 %v4098, 1.442695
    %v4100 = vpow.pop %v4099
    %v4101 = vadd.f32 %v4100, 1.0
    %v4102 = vrcp.pop %v4101
    %v4103 = vmul.f32 1.0, %v4102
    %v4104 = vxor.u32 %v4095, 2147483648
    %v4105 = vmul.f32 %v4104, 1.442695
    %v4106 = vpow.pop %v4105
    %v4107 = vadd.f32 %v4106, 1.0
    %v4108 = vrcp.pop %v4107
    %v4109 = vmul.f32 1.0, %v4108
    %v4110 = vtanh.pop %v4096
    %v4111 = vxor.u32 %v4097, 2147483648
    %v4112 = vmul.f32 %v4111, 1.442695
    %v4113 = vpow.pop %v4112
    %v4114 = vadd.f32 %v4113, 1.0
    %v4115 = vrcp.pop %v4114
    %v4116 = vmul.f32 1.0, %v4115
    %v4117 = vmul.f32 %v4109, 0.0
    %v4118 = vmul.f32 %v4103, %v4110
    %v4119 = vadd.f32 %v4117, %v4118
    %v4120 = vtanh.pop %v4119
    %v4121 = vmul.f32 %v4116, %v4120
    %4122 = vst [vmem:[#allocation2] sm:$0x3] %v4121
    %4123 = vmatprep.subr.mxu0 %v3949
    %4124 = vmatpush1.msra.mxu0 %v3948
    %4125 = vmatprep.subr.mxu0 %v3945
    %4126 = vmatpush1.msra.mxu0 %v3944
    %4127 = vmatprep.subr.mxu0 %v3941
    %4128 = vmatpush1.msra.mxu0 %v3940
    %4129 = vmatprep.subr.mxu0 %v3937
    %4130 = vmatpush1.msra.mxu0 %v3936
    %4131 = vmatprep.subr.mxu0 %v3933
    %4132 = vmatpush1.msra.mxu0 %v3932
    %4133 = vmatprep.subr.mxu0 %v3929
    %4134 = vmatpush1.msra.mxu0 %v3928
    %4135 = vmatprep.subr.mxu0 %v3925
    %4136 = vmatpush1.msra.mxu0 %v3924
    %4137 = vmatprep.subr.mxu0 %v3921
    %4138 = vmatpush1.msra.mxu0 %v3920
    %4139 = vmatprep.subr.mxu0 %v3917
    %4140 = vmatpush1.msra.mxu0 %v3916
    %4141 = vmatprep.subr.mxu0 %v3913
    %4142 = vmatpush1.msra.mxu0 %v3912
    %4143 = vmatprep.subr.mxu0 %v3909
    %4144 = vmatpush1.msra.mxu0 %v3908
    %4145 = vmatprep.subr.mxu0 %v3905
    %4146 = vmatpush1.msra.mxu0 %v3904
    %4147 = vmatprep.subr.mxu0 %v3901
    %4148 = vmatpush1.msra.mxu0 %v3900
    %4149 = vmatprep.subr.mxu0 %v3897
    %4150 = vmatpush1.msra.mxu0 %v3896
    %4151 = vmatprep.subr.mxu0 %v3893
    %4152 = vmatpush1.msra.mxu0 %v3892
    %4153 = vmatprep.subr.mxu0 %v3889
    %4154 = vmatpush1.msra.mxu0 %v3888
    %4155 = vmatprep.subr.mxu0 0.0
    %4156 = vmatpush2.msra.mxu0 0.0
    %4157 = vmatprep.subr.mxu0 0.0
    %4158 = vmatpush2.msra.mxu0 0.0
    %4159 = vmatprep.subr.mxu0 0.0
    %4160 = vmatpush2.msra.mxu0 0.0
    %4161 = vmatprep.subr.mxu0 0.0
    %4162 = vmatpush2.msra.mxu0 0.0
    %4163 = vmatprep.subr.mxu0 0.0
    %4164 = vmatpush2.msra.mxu0 0.0
    %4165 = vmatprep.subr.mxu0 0.0
    %4166 = vmatpush2.msra.mxu0 0.0
    %4167 = vmatprep.subr.mxu0 0.0
    %4168 = vmatpush2.msra.mxu0 0.0
    %4169 = vmatprep.subr.mxu0 0.0
    %4170 = vmatpush2.msra.mxu0 0.0
    %4171 = vmatprep.subr.mxu0 0.0
    %4172 = vmatpush2.msra.mxu0 0.0
    %4173 = vmatprep.subr.mxu0 0.0
    %4174 = vmatpush2.msra.mxu0 0.0
    %4175 = vmatprep.subr.mxu0 0.0
    %4176 = vmatpush2.msra.mxu0 0.0
    %4177 = vmatprep.subr.mxu0 0.0
    %4178 = vmatpush2.msra.mxu0 0.0
    %4179 = vmatprep.subr.mxu0 0.0
    %4180 = vmatpush2.msra.mxu0 0.0
    %4181 = vmatprep.subr.mxu0 0.0
    %4182 = vmatpush2.msra.mxu0 0.0
    %4183 = vmatprep.subr.mxu0 0.0
    %4184 = vmatpush2.msra.mxu0 0.0
    %4185 = vmatprep.subr.mxu0 0.0
    %4186 = vmatpush2.msra.mxu0 0.0
    %4187 = vmatprep.mubr.f32.mxu0 0.0
    %4188 = vmatmul.mubr.f32.gmra.mxu0 %v4121
    %v4189 = vpop.f32.mrf.mxu0
    %v4190 = vadd.f32 0.0, %v4189
    %v4191 = vpop.f32.mrf.mxu0
    %v4192 = vadd.f32 0.0, %v4191
    %4193 = vdwg.mxu0
    %4194 = vmatprep.subr.mxu0 %v3951
    %4195 = vmatpush1.msra.mxu0 %v3950
    %4196 = vmatprep.subr.mxu0 %v3947
    %4197 = vmatpush1.msra.mxu0 %v3946
    %4198 = vmatprep.subr.mxu0 %v3943
    %4199 = vmatpush1.msra.mxu0 %v3942
    %4200 = vmatprep.subr.mxu0 %v3939
    %4201 = vmatpush1.msra.mxu0 %v3938
    %4202 = vmatprep.subr.mxu0 %v3935
    %4203 = vmatpush1.msra.mxu0 %v3934
    %4204 = vmatprep.subr.mxu0 %v3931
    %4205 = vmatpush1.msra.mxu0 %v3930
    %4206 = vmatprep.subr.mxu0 %v3927
    %4207 = vmatpush1.msra.mxu0 %v3926
    %4208 = vmatprep.subr.mxu0 %v3923
    %4209 = vmatpush1.msra.mxu0 %v3922
    %4210 = vmatprep.subr.mxu0 %v3919
    %4211 = vmatpush1.msra.mxu0 %v3918
    %4212 = vmatprep.subr.mxu0 %v3915
    %4213 = vmatpush1.msra.mxu0 %v3914
    %4214 = vmatprep.subr.mxu0 %v3911
    %4215 = vmatpush1.msra.mxu0 %v3910
    %4216 = vmatprep.subr.mxu0 %v3907
    %4217 = vmatpush1.msra.mxu0 %v3906
    %4218 = vmatprep.subr.mxu0 %v3903
    %4219 = vmatpush1.msra.mxu0 %v3902
    %4220 = vmatprep.subr.mxu0 %v3899
    %4221 = vmatpush1.msra.mxu0 %v3898
    %4222 = vmatprep.subr.mxu0 %v3895
    %4223 = vmatpush1.msra.mxu0 %v3894
    %4224 = vmatprep.subr.mxu0 %v3891
    %4225 = vmatpush1.msra.mxu0 %v3890
    %4226 = vmatprep.subr.mxu0 0.0
    %4227 = vmatpush2.msra.mxu0 0.0
    %4228 = vmatprep.subr.mxu0 0.0
    %4229 = vmatpush2.msra.mxu0 0.0
    %4230 = vmatprep.subr.mxu0 0.0
    %4231 = vmatpush2.msra.mxu0 0.0
    %4232 = vmatprep.subr.mxu0 0.0
    %4233 = vmatpush2.msra.mxu0 0.0
    %4234 = vmatprep.subr.mxu0 0.0
    %4235 = vmatpush2.msra.mxu0 0.0
    %4236 = vmatprep.subr.mxu0 0.0
    %4237 = vmatpush2.msra.mxu0 0.0
    %4238 = vmatprep.subr.mxu0 0.0
    %4239 = vmatpush2.msra.mxu0 0.0
    %4240 = vmatprep.subr.mxu0 0.0
    %4241 = vmatpush2.msra.mxu0 0.0
    %4242 = vmatprep.subr.mxu0 0.0
    %4243 = vmatpush2.msra.mxu0 0.0
    %4244 = vmatprep.subr.mxu0 0.0
    %4245 = vmatpush2.msra.mxu0 0.0
    %4246 = vmatprep.subr.mxu0 0.0
    %4247 = vmatpush2.msra.mxu0 0.0
    %4248 = vmatprep.subr.mxu0 0.0
    %4249 = vmatpush2.msra.mxu0 0.0
    %4250 = vmatprep.subr.mxu0 0.0
    %4251 = vmatpush2.msra.mxu0 0.0
    %4252 = vmatprep.subr.mxu0 0.0
    %4253 = vmatpush2.msra.mxu0 0.0
    %4254 = vmatprep.subr.mxu0 0.0
    %4255 = vmatpush2.msra.mxu0 0.0
    %4256 = vmatprep.subr.mxu0 0.0
    %4257 = vmatpush2.msra.mxu0 0.0
    %4258 = vmatprep.mubr.f32.mxu0 0.0
    %4259 = vmatmul.mubr.f32.gmra.mxu0 %v4121
    %v4260 = vpop.f32.mrf.mxu0
    %v4261 = vadd.f32 0.0, %v4260
    %v4262 = vpop.f32.mrf.mxu0
    %v4263 = vadd.f32 0.0, %v4262
    %4264 = vdwg.mxu0
    %v4269 = vrot.slane %v4190, 6
    %v4270 = vrot.slane %v4192, 6
    %v4271 = vrot.slane %v4261, 6
    %v4272 = vrot.slane %v4263, 6
    %v4277 = vadd.f32 %v3801, %v4269
    %v4278 = vadd.f32 %v3803, %v4270
    %v4279 = vadd.f32 %v3878, %v4271
    %v4280 = vadd.f32 %v3880, %v4272
    %v4281 = vxor.u32 %v4277, 2147483648
    %v4282 = vmul.f32 %v4281, 1.442695
    %v4283 = vpow.pop %v4282
    %v4284 = vadd.f32 %v4283, 1.0
    %v4285 = vrcp.pop %v4284
    %v4286 = vmul.f32 1.0, %v4285
    %v4287 = vxor.u32 %v4278, 2147483648
    %v4288 = vmul.f32 %v4287, 1.442695
    %v4289 = vpow.pop %v4288
    %v4290 = vadd.f32 %v4289, 1.0
    %v4291 = vrcp.pop %v4290
    %v4292 = vmul.f32 1.0, %v4291
    %v4293 = vtanh.pop %v4279
    %v4294 = vxor.u32 %v4280, 2147483648
    %v4295 = vmul.f32 %v4294, 1.442695
    %v4296 = vpow.pop %v4295
    %v4297 = vadd.f32 %v4296, 1.0
    %v4298 = vrcp.pop %v4297
    %v4299 = vmul.f32 1.0, %v4298
    %v4301 = vrot.slane %v4119, 6
    %v4303 = vmul.f32 %v4292, %v4301
    %v4304 = vmul.f32 %v4286, %v4293
    %v4305 = vadd.f32 %v4303, %v4304
    %v4306 = vtanh.pop %v4305
    %v4307 = vmul.f32 %v4299, %v4306
    %4308 = vst [vmem:[#allocation2] sm:$0xc] %v4307
    %v4310 = vrot.slane %v4307, 2
    %4312 = vmatprep.subr.mxu0 %v3949
    %4313 = vmatpush1.msra.mxu0 %v3948
    %4314 = vmatprep.subr.mxu0 %v3945
    %4315 = vmatpush1.msra.mxu0 %v3944
    %4316 = vmatprep.subr.mxu0 %v3941
    %4317 = vmatpush1.msra.mxu0 %v3940
    %4318 = vmatprep.subr.mxu0 %v3937
    %4319 = vmatpush1.msra.mxu0 %v3936
    %4320 = vmatprep.subr.mxu0 %v3933
    %4321 = vmatpush1.msra.mxu0 %v3932
    %4322 = vmatprep.subr.mxu0 %v3929
    %4323 = vmatpush1.msra.mxu0 %v3928
    %4324 = vmatprep.subr.mxu0 %v3925
    %4325 = vmatpush1.msra.mxu0 %v3924
    %4326 = vmatprep.subr.mxu0 %v3921
    %4327 = vmatpush1.msra.mxu0 %v3920
    %4328 = vmatprep.subr.mxu0 %v3917
    %4329 = vmatpush1.msra.mxu0 %v3916
    %4330 = vmatprep.subr.mxu0 %v3913
    %4331 = vmatpush1.msra.mxu0 %v3912
    %4332 = vmatprep.subr.mxu0 %v3909
    %4333 = vmatpush1.msra.mxu0 %v3908
    %4334 = vmatprep.subr.mxu0 %v3905
    %4335 = vmatpush1.msra.mxu0 %v3904
    %4336 = vmatprep.subr.mxu0 %v3901
    %4337 = vmatpush1.msra.mxu0 %v3900
    %4338 = vmatprep.subr.mxu0 %v3897
    %4339 = vmatpush1.msra.mxu0 %v3896
    %4340 = vmatprep.subr.mxu0 %v3893
    %4341 = vmatpush1.msra.mxu0 %v3892
    %4342 = vmatprep.subr.mxu0 %v3889
    %4343 = vmatpush1.msra.mxu0 %v3888
    %4344 = vmatprep.subr.mxu0 0.0
    %4345 = vmatpush2.msra.mxu0 0.0
    %4346 = vmatprep.subr.mxu0 0.0
    %4347 = vmatpush2.msra.mxu0 0.0
    %4348 = vmatprep.subr.mxu0 0.0
    %4349 = vmatpush2.msra.mxu0 0.0
    %4350 = vmatprep.subr.mxu0 0.0
    %4351 = vmatpush2.msra.mxu0 0.0
    %4352 = vmatprep.subr.mxu0 0.0
    %4353 = vmatpush2.msra.mxu0 0.0
    %4354 = vmatprep.subr.mxu0 0.0
    %4355 = vmatpush2.msra.mxu0 0.0
    %4356 = vmatprep.subr.mxu0 0.0
    %4357 = vmatpush2.msra.mxu0 0.0
    %4358 = vmatprep.subr.mxu0 0.0
    %4359 = vmatpush2.msra.mxu0 0.0
    %4360 = vmatprep.subr.mxu0 0.0
    %4361 = vmatpush2.msra.mxu0 0.0
    %4362 = vmatprep.subr.mxu0 0.0
    %4363 = vmatpush2.msra.mxu0 0.0
    %4364 = vmatprep.subr.mxu0 0.0
    %4365 = vmatpush2.msra.mxu0 0.0
    %4366 = vmatprep.subr.mxu0 0.0
    %4367 = vmatpush2.msra.mxu0 0.0
    %4368 = vmatprep.subr.mxu0 0.0
    %4369 = vmatpush2.msra.mxu0 0.0
    %4370 = vmatprep.subr.mxu0 0.0
    %4371 = vmatpush2.msra.mxu0 0.0
    %4372 = vmatprep.subr.mxu0 0.0
    %4373 = vmatpush2.msra.mxu0 0.0
    %4374 = vmatprep.subr.mxu0 0.0
    %4375 = vmatpush2.msra.mxu0 0.0
    %4376 = vmatprep.mubr.f32.mxu0 0.0
    %4377 = vmatmul.mubr.f32.gmra.mxu0 %v4310
    %v4378 = vpop.f32.mrf.mxu0
    %v4379 = vadd.f32 0.0, %v4378
    %v4380 = vpop.f32.mrf.mxu0
    %v4381 = vadd.f32 0.0, %v4380
    %4382 = vdwg.mxu0
    %4383 = vmatprep.subr.mxu0 %v3951
    %4384 = vmatpush1.msra.mxu0 %v3950
    %4385 = vmatprep.subr.mxu0 %v3947
    %4386 = vmatpush1.msra.mxu0 %v3946
    %4387 = vmatprep.subr.mxu0 %v3943
    %4388 = vmatpush1.msra.mxu0 %v3942
    %4389 = vmatprep.subr.mxu0 %v3939
    %4390 = vmatpush1.msra.mxu0 %v3938
    %4391 = vmatprep.subr.mxu0 %v3935
    %4392 = vmatpush1.msra.mxu0 %v3934
    %4393 = vmatprep.subr.mxu0 %v3931
    %4394 = vmatpush1.msra.mxu0 %v3930
    %4395 = vmatprep.subr.mxu0 %v3927
    %4396 = vmatpush1.msra.mxu0 %v3926
    %4397 = vmatprep.subr.mxu0 %v3923
    %4398 = vmatpush1.msra.mxu0 %v3922
    %4399 = vmatprep.subr.mxu0 %v3919
    %4400 = vmatpush1.msra.mxu0 %v3918
    %4401 = vmatprep.subr.mxu0 %v3915
    %4402 = vmatpush1.msra.mxu0 %v3914
    %4403 = vmatprep.subr.mxu0 %v3911
    %4404 = vmatpush1.msra.mxu0 %v3910
    %4405 = vmatprep.subr.mxu0 %v3907
    %4406 = vmatpush1.msra.mxu0 %v3906
    %4407 = vmatprep.subr.mxu0 %v3903
    %4408 = vmatpush1.msra.mxu0 %v3902
    %4409 = vmatprep.subr.mxu0 %v3899
    %4410 = vmatpush1.msra.mxu0 %v3898
    %4411 = vmatprep.subr.mxu0 %v3895
    %4412 = vmatpush1.msra.mxu0 %v3894
    %4413 = vmatprep.subr.mxu0 %v3891
    %4414 = vmatpush1.msra.mxu0 %v3890
    %4415 = vmatprep.subr.mxu0 0.0
    %4416 = vmatpush2.msra.mxu0 0.0
    %4417 = vmatprep.subr.mxu0 0.0
    %4418 = vmatpush2.msra.mxu0 0.0
    %4419 = vmatprep.subr.mxu0 0.0
    %4420 = vmatpush2.msra.mxu0 0.0
    %4421 = vmatprep.subr.mxu0 0.0
    %4422 = vmatpush2.msra.mxu0 0.0
    %4423 = vmatprep.subr.mxu0 0.0
    %4424 = vmatpush2.msra.mxu0 0.0
    %4425 = vmatprep.subr.mxu0 0.0
    %4426 = vmatpush2.msra.mxu0 0.0
    %4427 = vmatprep.subr.mxu0 0.0
    %4428 = vmatpush2.msra.mxu0 0.0
    %4429 = vmatprep.subr.mxu0 0.0
    %4430 = vmatpush2.msra.mxu0 0.0
    %4431 = vmatprep.subr.mxu0 0.0
    %4432 = vmatpush2.msra.mxu0 0.0
    %4433 = vmatprep.subr.mxu0 0.0
    %4434 = vmatpush2.msra.mxu0 0.0
    %4435 = vmatprep.subr.mxu0 0.0
    %4436 = vmatpush2.msra.mxu0 0.0
    %4437 = vmatprep.subr.mxu0 0.0
    %4438 = vmatpush2.msra.mxu0 0.0
    %4439 = vmatprep.subr.mxu0 0.0
    %4440 = vmatpush2.msra.mxu0 0.0
    %4441 = vmatprep.subr.mxu0 0.0
    %4442 = vmatpush2.msra.mxu0 0.0
    %4443 = vmatprep.subr.mxu0 0.0
    %4444 = vmatpush2.msra.mxu0 0.0
    %4445 = vmatprep.subr.mxu0 0.0
    %4446 = vmatpush2.msra.mxu0 0.0
    %4447 = vmatprep.mubr.f32.mxu0 0.0
    %4448 = vmatmul.mubr.f32.gmra.mxu0 %v4310
    %v4449 = vpop.f32.mrf.mxu0
    %v4450 = vadd.f32 0.0, %v4449
    %v4451 = vpop.f32.mrf.mxu0
    %v4452 = vadd.f32 0.0, %v4451
    %4453 = vdwg.mxu0
    %v4458 = vrot.slane %v4379, 4
    %v4459 = vrot.slane %v4381, 4
    %v4460 = vrot.slane %v4450, 4
    %v4461 = vrot.slane %v4452, 4
    %v4466 = vadd.f32 %v3801, %v4458
    %v4467 = vadd.f32 %v3803, %v4459
    %v4468 = vadd.f32 %v3878, %v4460
    %v4469 = vadd.f32 %v3880, %v4461
    %v4470 = vxor.u32 %v4466, 2147483648
    %v4471 = vmul.f32 %v4470, 1.442695
    %v4472 = vpow.pop %v4471
    %v4473 = vadd.f32 %v4472, 1.0
    %v4474 = vrcp.pop %v4473
    %v4475 = vmul.f32 1.0, %v4474
    %v4476 = vxor.u32 %v4467, 2147483648
    %v4477 = vmul.f32 %v4476, 1.442695
    %v4478 = vpow.pop %v4477
    %v4479 = vadd.f32 %v4478, 1.0
    %v4480 = vrcp.pop %v4479
    %v4481 = vmul.f32 1.0, %v4480
    %v4482 = vtanh.pop %v4468
    %v4483 = vxor.u32 %v4469, 2147483648
    %v4484 = vmul.f32 %v4483, 1.442695
    %v4485 = vpow.pop %v4484
    %v4486 = vadd.f32 %v4485, 1.0
    %v4487 = vrcp.pop %v4486
    %v4488 = vmul.f32 1.0, %v4487
    %v4490 = vrot.slane %v4305, 6
    %v4492 = vmul.f32 %v4481, %v4490
    %v4493 = vmul.f32 %v4475, %v4482
    %v4494 = vadd.f32 %v4492, %v4493
    %v4495 = vtanh.pop %v4494
    %v4496 = vmul.f32 %v4488, %v4495
    %4497 = vst [vmem:[#allocation2] sm:$0x30] %v4496
    %v4499 = vrot.slane %v4496, 4
    %4501 = vmatprep.subr.mxu0 %v3949
    %4502 = vmatpush1.msra.mxu0 %v3948
    %4503 = vmatprep.subr.mxu0 %v3945
    %4504 = vmatpush1.msra.mxu0 %v3944
    %4505 = vmatprep.subr.mxu0 %v3941
    %4506 = vmatpush1.msra.mxu0 %v3940
    %4507 = vmatprep.subr.mxu0 %v3937
    %4508 = vmatpush1.msra.mxu0 %v3936
    %4509 = vmatprep.subr.mxu0 %v3933
    %4510 = vmatpush1.msra.mxu0 %v3932
    %4511 = vmatprep.subr.mxu0 %v3929
    %4512 = vmatpush1.msra.mxu0 %v3928
    %4513 = vmatprep.subr.mxu0 %v3925
    %4514 = vmatpush1.msra.mxu0 %v3924
    %4515 = vmatprep.subr.mxu0 %v3921
    %4516 = vmatpush1.msra.mxu0 %v3920
    %4517 = vmatprep.subr.mxu0 %v3917
    %4518 = vmatpush1.msra.mxu0 %v3916
    %4519 = vmatprep.subr.mxu0 %v3913
    %4520 = vmatpush1.msra.mxu0 %v3912
    %4521 = vmatprep.subr.mxu0 %v3909
    %4522 = vmatpush1.msra.mxu0 %v3908
    %4523 = vmatprep.subr.mxu0 %v3905
    %4524 = vmatpush1.msra.mxu0 %v3904
    %4525 = vmatprep.subr.mxu0 %v3901
    %4526 = vmatpush1.msra.mxu0 %v3900
    %4527 = vmatprep.subr.mxu0 %v3897
    %4528 = vmatpush1.msra.mxu0 %v3896
    %4529 = vmatprep.subr.mxu0 %v3893
    %4530 = vmatpush1.msra.mxu0 %v3892
    %4531 = vmatprep.subr.mxu0 %v3889
    %4532 = vmatpush1.msra.mxu0 %v3888
    %4533 = vmatprep.subr.mxu0 0.0
    %4534 = vmatpush2.msra.mxu0 0.0
    %4535 = vmatprep.subr.mxu0 0.0
    %4536 = vmatpush2.msra.mxu0 0.0
    %4537 = vmatprep.subr.mxu0 0.0
    %4538 = vmatpush2.msra.mxu0 0.0
    %4539 = vmatprep.subr.mxu0 0.0
    %4540 = vmatpush2.msra.mxu0 0.0
    %4541 = vmatprep.subr.mxu0 0.0
    %4542 = vmatpush2.msra.mxu0 0.0
    %4543 = vmatprep.subr.mxu0 0.0
    %4544 = vmatpush2.msra.mxu0 0.0
    %4545 = vmatprep.subr.mxu0 0.0
    %4546 = vmatpush2.msra.mxu0 0.0
    %4547 = vmatprep.subr.mxu0 0.0
    %4548 = vmatpush2.msra.mxu0 0.0
    %4549 = vmatprep.subr.mxu0 0.0
    %4550 = vmatpush2.msra.mxu0 0.0
    %4551 = vmatprep.subr.mxu0 0.0
    %4552 = vmatpush2.msra.mxu0 0.0
    %4553 = vmatprep.subr.mxu0 0.0
    %4554 = vmatpush2.msra.mxu0 0.0
    %4555 = vmatprep.subr.mxu0 0.0
    %4556 = vmatpush2.msra.mxu0 0.0
    %4557 = vmatprep.subr.mxu0 0.0
    %4558 = vmatpush2.msra.mxu0 0.0
    %4559 = vmatprep.subr.mxu0 0.0
    %4560 = vmatpush2.msra.mxu0 0.0
    %4561 = vmatprep.subr.mxu0 0.0
    %4562 = vmatpush2.msra.mxu0 0.0
    %4563 = vmatprep.subr.mxu0 0.0
    %4564 = vmatpush2.msra.mxu0 0.0
    %4565 = vmatprep.mubr.f32.mxu0 0.0
    %4566 = vmatmul.mubr.f32.gmra.mxu0 %v4499
    %v4567 = vpop.f32.mrf.mxu0
    %v4568 = vadd.f32 0.0, %v4567
    %v4569 = vpop.f32.mrf.mxu0
    %v4570 = vadd.f32 0.0, %v4569
    %4571 = vdwg.mxu0
    %4572 = vmatprep.subr.mxu0 %v3951
    %4573 = vmatpush1.msra.mxu0 %v3950
    %4574 = vmatprep.subr.mxu0 %v3947
    %4575 = vmatpush1.msra.mxu0 %v3946
    %4576 = vmatprep.subr.mxu0 %v3943
    %4577 = vmatpush1.msra.mxu0 %v3942
    %4578 = vmatprep.subr.mxu0 %v3939
    %4579 = vmatpush1.msra.mxu0 %v3938
    %4580 = vmatprep.subr.mxu0 %v3935
    %4581 = vmatpush1.msra.mxu0 %v3934
    %4582 = vmatprep.subr.mxu0 %v3931
    %4583 = vmatpush1.msra.mxu0 %v3930
    %4584 = vmatprep.subr.mxu0 %v3927
    %4585 = vmatpush1.msra.mxu0 %v3926
    %4586 = vmatprep.subr.mxu0 %v3923
    %4587 = vmatpush1.msra.mxu0 %v3922
    %4588 = vmatprep.subr.mxu0 %v3919
    %4589 = vmatpush1.msra.mxu0 %v3918
    %4590 = vmatprep.subr.mxu0 %v3915
    %4591 = vmatpush1.msra.mxu0 %v3914
    %4592 = vmatprep.subr.mxu0 %v3911
    %4593 = vmatpush1.msra.mxu0 %v3910
    %4594 = vmatprep.subr.mxu0 %v3907
    %4595 = vmatpush1.msra.mxu0 %v3906
    %4596 = vmatprep.subr.mxu0 %v3903
    %4597 = vmatpush1.msra.mxu0 %v3902
    %4598 = vmatprep.subr.mxu0 %v3899
    %4599 = vmatpush1.msra.mxu0 %v3898
    %4600 = vmatprep.subr.mxu0 %v3895
    %4601 = vmatpush1.msra.mxu0 %v3894
    %4602 = vmatprep.subr.mxu0 %v3891
    %4603 = vmatpush1.msra.mxu0 %v3890
    %4604 = vmatprep.subr.mxu0 0.0
    %4605 = vmatpush2.msra.mxu0 0.0
    %4606 = vmatprep.subr.mxu0 0.0
    %4607 = vmatpush2.msra.mxu0 0.0
    %4608 = vmatprep.subr.mxu0 0.0
    %4609 = vmatpush2.msra.mxu0 0.0
    %4610 = vmatprep.subr.mxu0 0.0
    %4611 = vmatpush2.msra.mxu0 0.0
    %4612 = vmatprep.subr.mxu0 0.0
    %4613 = vmatpush2.msra.mxu0 0.0
    %4614 = vmatprep.subr.mxu0 0.0
    %4615 = vmatpush2.msra.mxu0 0.0
    %4616 = vmatprep.subr.mxu0 0.0
    %4617 = vmatpush2.msra.mxu0 0.0
    %4618 = vmatprep.subr.mxu0 0.0
    %4619 = vmatpush2.msra.mxu0 0.0
    %4620 = vmatprep.subr.mxu0 0.0
    %4621 = vmatpush2.msra.mxu0 0.0
    %4622 = vmatprep.subr.mxu0 0.0
    %4623 = vmatpush2.msra.mxu0 0.0
    %4624 = vmatprep.subr.mxu0 0.0
    %4625 = vmatpush2.msra.mxu0 0.0
    %4626 = vmatprep.subr.mxu0 0.0
    %4627 = vmatpush2.msra.mxu0 0.0
    %4628 = vmatprep.subr.mxu0 0.0
    %4629 = vmatpush2.msra.mxu0 0.0
    %4630 = vmatprep.subr.mxu0 0.0
    %4631 = vmatpush2.msra.mxu0 0.0
    %4632 = vmatprep.subr.mxu0 0.0
    %4633 = vmatpush2.msra.mxu0 0.0
    %4634 = vmatprep.subr.mxu0 0.0
    %4635 = vmatpush2.msra.mxu0 0.0
    %4636 = vmatprep.mubr.f32.mxu0 0.0
    %4637 = vmatmul.mubr.f32.gmra.mxu0 %v4499
    %v4638 = vpop.f32.mrf.mxu0
    %v4639 = vadd.f32 0.0, %v4638
    %v4640 = vpop.f32.mrf.mxu0
    %v4641 = vadd.f32 0.0, %v4640
    %4642 = vdwg.mxu0
    %v4647 = vrot.slane %v4568, 2
    %v4648 = vrot.slane %v4570, 2
    %v4649 = vrot.slane %v4639, 2
    %v4650 = vrot.slane %v4641, 2
    %v4655 = vadd.f32 %v3801, %v4647
    %v4656 = vadd.f32 %v3803, %v4648
    %v4657 = vadd.f32 %v3878, %v4649
    %v4658 = vadd.f32 %v3880, %v4650
    %v4659 = vxor.u32 %v4655, 2147483648
    %v4660 = vmul.f32 %v4659, 1.442695
    %v4661 = vpow.pop %v4660
    %v4662 = vadd.f32 %v4661, 1.0
    %v4663 = vrcp.pop %v4662
    %v4664 = vmul.f32 1.0, %v4663
    %v4665 = vxor.u32 %v4656, 2147483648
    %v4666 = vmul.f32 %v4665, 1.442695
    %v4667 = vpow.pop %v4666
    %v4668 = vadd.f32 %v4667, 1.0
    %v4669 = vrcp.pop %v4668
    %v4670 = vmul.f32 1.0, %v4669
    %v4671 = vtanh.pop %v4657
    %v4672 = vxor.u32 %v4658, 2147483648
    %v4673 = vmul.f32 %v4672, 1.442695
    %v4674 = vpow.pop %v4673
    %v4675 = vadd.f32 %v4674, 1.0
    %v4676 = vrcp.pop %v4675
    %v4677 = vmul.f32 1.0, %v4676
    %v4679 = vrot.slane %v4494, 6
    %v4681 = vmul.f32 %v4670, %v4679
    %v4682 = vmul.f32 %v4664, %v4671
    %v4683 = vadd.f32 %v4681, %v4682
    %v4684 = vtanh.pop %v4683
    %v4685 = vmul.f32 %v4677, %v4684
    %4686 = vst [vmem:[#allocation2] sm:$0xc0] %v4685
    %v4688 = vrot.slane %v4685, 6
    %4690 = vmatprep.subr.mxu0 %v3949
    %4691 = vmatpush1.msra.mxu0 %v3948
    %4692 = vmatprep.subr.mxu0 %v3945
    %4693 = vmatpush1.msra.mxu0 %v3944
    %4694 = vmatprep.subr.mxu0 %v3941
    %4695 = vmatpush1.msra.mxu0 %v3940
    %4696 = vmatprep.subr.mxu0 %v3937
    %4697 = vmatpush1.msra.mxu0 %v3936
    %4698 = vmatprep.subr.mxu0 %v3933
    %4699 = vmatpush1.msra.mxu0 %v3932
    %4700 = vmatprep.subr.mxu0 %v3929
    %4701 = vmatpush1.msra.mxu0 %v3928
    %4702 = vmatprep.subr.mxu0 %v3925
    %4703 = vmatpush1.msra.mxu0 %v3924
    %4704 = vmatprep.subr.mxu0 %v3921
    %4705 = vmatpush1.msra.mxu0 %v3920
    %4706 = vmatprep.subr.mxu0 %v3917
    %4707 = vmatpush1.msra.mxu0 %v3916
    %4708 = vmatprep.subr.mxu0 %v3913
    %4709 = vmatpush1.msra.mxu0 %v3912
    %4710 = vmatprep.subr.mxu0 %v3909
    %4711 = vmatpush1.msra.mxu0 %v3908
    %4712 = vmatprep.subr.mxu0 %v3905
    %4713 = vmatpush1.msra.mxu0 %v3904
    %4714 = vmatprep.subr.mxu0 %v3901
    %4715 = vmatpush1.msra.mxu0 %v3900
    %4716 = vmatprep.subr.mxu0 %v3897
    %4717 = vmatpush1.msra.mxu0 %v3896
    %4718 = vmatprep.subr.mxu0 %v3893
    %4719 = vmatpush1.msra.mxu0 %v3892
    %4720 = vmatprep.subr.mxu0 %v3889
    %4721 = vmatpush1.msra.mxu0 %v3888
    %4722 = vmatprep.subr.mxu0 0.0
    %4723 = vmatpush2.msra.mxu0 0.0
    %4724 = vmatprep.subr.mxu0 0.0
    %4725 = vmatpush2.msra.mxu0 0.0
    %4726 = vmatprep.subr.mxu0 0.0
    %4727 = vmatpush2.msra.mxu0 0.0
    %4728 = vmatprep.subr.mxu0 0.0
    %4729 = vmatpush2.msra.mxu0 0.0
    %4730 = vmatprep.subr.mxu0 0.0
    %4731 = vmatpush2.msra.mxu0 0.0
    %4732 = vmatprep.subr.mxu0 0.0
    %4733 = vmatpush2.msra.mxu0 0.0
    %4734 = vmatprep.subr.mxu0 0.0
    %4735 = vmatpush2.msra.mxu0 0.0
    %4736 = vmatprep.subr.mxu0 0.0
    %4737 = vmatpush2.msra.mxu0 0.0
    %4738 = vmatprep.subr.mxu0 0.0
    %4739 = vmatpush2.msra.mxu0 0.0
    %4740 = vmatprep.subr.mxu0 0.0
    %4741 = vmatpush2.msra.mxu0 0.0
    %4742 = vmatprep.subr.mxu0 0.0
    %4743 = vmatpush2.msra.mxu0 0.0
    %4744 = vmatprep.subr.mxu0 0.0
    %4745 = vmatpush2.msra.mxu0 0.0
    %4746 = vmatprep.subr.mxu0 0.0
    %4747 = vmatpush2.msra.mxu0 0.0
    %4748 = vmatprep.subr.mxu0 0.0
    %4749 = vmatpush2.msra.mxu0 0.0
    %4750 = vmatprep.subr.mxu0 0.0
    %4751 = vmatpush2.msra.mxu0 0.0
    %4752 = vmatprep.subr.mxu0 0.0
    %4753 = vmatpush2.msra.mxu0 0.0
    %4754 = vmatprep.mubr.f32.mxu0 0.0
    %4755 = vmatmul.mubr.f32.gmra.mxu0 %v4688
    %v4756 = vpop.f32.mrf.mxu0
    %v4757 = vadd.f32 0.0, %v4756
    %v4758 = vpop.f32.mrf.mxu0
    %v4759 = vadd.f32 0.0, %v4758
    %4760 = vdwg.mxu0
    %4761 = vmatprep.subr.mxu0 %v3951
    %4762 = vmatpush1.msra.mxu0 %v3950
    %4763 = vmatprep.subr.mxu0 %v3947
    %4764 = vmatpush1.msra.mxu0 %v3946
    %4765 = vmatprep.subr.mxu0 %v3943
    %4766 = vmatpush1.msra.mxu0 %v3942
    %4767 = vmatprep.subr.mxu0 %v3939
    %4768 = vmatpush1.msra.mxu0 %v3938
    %4769 = vmatprep.subr.mxu0 %v3935
    %4770 = vmatpush1.msra.mxu0 %v3934
    %4771 = vmatprep.subr.mxu0 %v3931
    %4772 = vmatpush1.msra.mxu0 %v3930
    %4773 = vmatprep.subr.mxu0 %v3927
    %4774 = vmatpush1.msra.mxu0 %v3926
    %4775 = vmatprep.subr.mxu0 %v3923
    %4776 = vmatpush1.msra.mxu0 %v3922
    %4777 = vmatprep.subr.mxu0 %v3919
    %4778 = vmatpush1.msra.mxu0 %v3918
    %4779 = vmatprep.subr.mxu0 %v3915
    %4780 = vmatpush1.msra.mxu0 %v3914
    %4781 = vmatprep.subr.mxu0 %v3911
    %4782 = vmatpush1.msra.mxu0 %v3910
    %4783 = vmatprep.subr.mxu0 %v3907
    %4784 = vmatpush1.msra.mxu0 %v3906
    %4785 = vmatprep.subr.mxu0 %v3903
    %4786 = vmatpush1.msra.mxu0 %v3902
    %4787 = vmatprep.subr.mxu0 %v3899
    %4788 = vmatpush1.msra.mxu0 %v3898
    %4789 = vmatprep.subr.mxu0 %v3895
    %4790 = vmatpush1.msra.mxu0 %v3894
    %4791 = vmatprep.subr.mxu0 %v3891
    %4792 = vmatpush1.msra.mxu0 %v3890
    %4793 = vmatprep.subr.mxu0 0.0
    %4794 = vmatpush2.msra.mxu0 0.0
    %4795 = vmatprep.subr.mxu0 0.0
    %4796 = vmatpush2.msra.mxu0 0.0
    %4797 = vmatprep.subr.mxu0 0.0
    %4798 = vmatpush2.msra.mxu0 0.0
    %4799 = vmatprep.subr.mxu0 0.0
    %4800 = vmatpush2.msra.mxu0 0.0
    %4801 = vmatprep.subr.mxu0 0.0
    %4802 = vmatpush2.msra.mxu0 0.0
    %4803 = vmatprep.subr.mxu0 0.0
    %4804 = vmatpush2.msra.mxu0 0.0
    %4805 = vmatprep.subr.mxu0 0.0
    %4806 = vmatpush2.msra.mxu0 0.0
    %4807 = vmatprep.subr.mxu0 0.0
    %4808 = vmatpush2.msra.mxu0 0.0
    %4809 = vmatprep.subr.mxu0 0.0
    %4810 = vmatpush2.msra.mxu0 0.0
    %4811 = vmatprep.subr.mxu0 0.0
    %4812 = vmatpush2.msra.mxu0 0.0
    %4813 = vmatprep.subr.mxu0 0.0
    %4814 = vmatpush2.msra.mxu0 0.0
    %4815 = vmatprep.subr.mxu0 0.0
    %4816 = vmatpush2.msra.mxu0 0.0
    %4817 = vmatprep.subr.mxu0 0.0
    %4818 = vmatpush2.msra.mxu0 0.0
    %4819 = vmatprep.subr.mxu0 0.0
    %4820 = vmatpush2.msra.mxu0 0.0
    %4821 = vmatprep.subr.mxu0 0.0
    %4822 = vmatpush2.msra.mxu0 0.0
    %4823 = vmatprep.subr.mxu0 0.0
    %4824 = vmatpush2.msra.mxu0 0.0
    %4825 = vmatprep.mubr.f32.mxu0 0.0
    %4826 = vmatmul.mubr.f32.gmra.mxu0 %v4688
    %v4827 = vpop.f32.mrf.mxu0
    %v4828 = vadd.f32 0.0, %v4827
    %v4829 = vpop.f32.mrf.mxu0
    %v4830 = vadd.f32 0.0, %v4829
    %4831 = vdwg.mxu0
    %v4832 = vadd.f32 %v3807, %v4757
    %v4833 = vadd.f32 %v3809, %v4759
    %v4834 = vadd.f32 %v3884, %v4828
    %v4835 = vadd.f32 %v3886, %v4830
    %v4836 = vxor.u32 %v4832, 2147483648
    %v4837 = vmul.f32 %v4836, 1.442695
    %v4838 = vpow.pop %v4837
    %v4839 = vadd.f32 %v4838, 1.0
    %v4840 = vrcp.pop %v4839
    %v4841 = vmul.f32 1.0, %v4840
    %v4842 = vxor.u32 %v4833, 2147483648
    %v4843 = vmul.f32 %v4842, 1.442695
    %v4844 = vpow.pop %v4843
    %v4845 = vadd.f32 %v4844, 1.0
    %v4846 = vrcp.pop %v4845
    %v4847 = vmul.f32 1.0, %v4846
    %v4848 = vtanh.pop %v4834
    %v4849 = vxor.u32 %v4835, 2147483648
    %v4850 = vmul.f32 %v4849, 1.442695
    %v4851 = vpow.pop %v4850
    %v4852 = vadd.f32 %v4851, 1.0
    %v4853 = vrcp.pop %v4852
    %v4854 = vmul.f32 1.0, %v4853
    %v4856 = vrot.slane %v4683, 6
    %v4858 = vmul.f32 %v4847, %v4856
    %v4859 = vmul.f32 %v4841, %v4848
    %v4860 = vadd.f32 %v4858, %v4859
    %v4861 = vtanh.pop %v4860
    %v4862 = vmul.f32 %v4854, %v4861
    %4863 = vst [vmem:[#allocation2 + $0x8] sm:$0x3] %v4862
    %4864 = vmatprep.subr.mxu0 %v3949
    %4865 = vmatpush1.msra.mxu0 %v3948
    %4866 = vmatprep.subr.mxu0 %v3945
    %4867 = vmatpush1.msra.mxu0 %v3944
    %4868 = vmatprep.subr.mxu0 %v3941
    %4869 = vmatpush1.msra.mxu0 %v3940
    %4870 = vmatprep.subr.mxu0 %v3937
    %4871 = vmatpush1.msra.mxu0 %v3936
    %4872 = vmatprep.subr.mxu0 %v3933
    %4873 = vmatpush1.msra.mxu0 %v3932
    %4874 = vmatprep.subr.mxu0 %v3929
    %4875 = vmatpush1.msra.mxu0 %v3928
    %4876 = vmatprep.subr.mxu0 %v3925
    %4877 = vmatpush1.msra.mxu0 %v3924
    %4878 = vmatprep.subr.mxu0 %v3921
    %4879 = vmatpush1.msra.mxu0 %v3920
    %4880 = vmatprep.subr.mxu0 %v3917
    %4881 = vmatpush1.msra.mxu0 %v3916
    %4882 = vmatprep.subr.mxu0 %v3913
    %4883 = vmatpush1.msra.mxu0 %v3912
    %4884 = vmatprep.subr.mxu0 %v3909
    %4885 = vmatpush1.msra.mxu0 %v3908
    %4886 = vmatprep.subr.mxu0 %v3905
    %4887 = vmatpush1.msra.mxu0 %v3904
    %4888 = vmatprep.subr.mxu0 %v3901
    %4889 = vmatpush1.msra.mxu0 %v3900
    %4890 = vmatprep.subr.mxu0 %v3897
    %4891 = vmatpush1.msra.mxu0 %v3896
    %4892 = vmatprep.subr.mxu0 %v3893
    %4893 = vmatpush1.msra.mxu0 %v3892
    %4894 = vmatprep.subr.mxu0 %v3889
    %4895 = vmatpush1.msra.mxu0 %v3888
    %4896 = vmatprep.subr.mxu0 0.0
    %4897 = vmatpush2.msra.mxu0 0.0
    %4898 = vmatprep.subr.mxu0 0.0
    %4899 = vmatpush2.msra.mxu0 0.0
    %4900 = vmatprep.subr.mxu0 0.0
    %4901 = vmatpush2.msra.mxu0 0.0
    %4902 = vmatprep.subr.mxu0 0.0
    %4903 = vmatpush2.msra.mxu0 0.0
    %4904 = vmatprep.subr.mxu0 0.0
    %4905 = vmatpush2.msra.mxu0 0.0
    %4906 = vmatprep.subr.mxu0 0.0
    %4907 = vmatpush2.msra.mxu0 0.0
    %4908 = vmatprep.subr.mxu0 0.0
    %4909 = vmatpush2.msra.mxu0 0.0
    %4910 = vmatprep.subr.mxu0 0.0
    %4911 = vmatpush2.msra.mxu0 0.0
    %4912 = vmatprep.subr.mxu0 0.0
    %4913 = vmatpush2.msra.mxu0 0.0
    %4914 = vmatprep.subr.mxu0 0.0
    %4915 = vmatpush2.msra.mxu0 0.0
    %4916 = vmatprep.subr.mxu0 0.0
    %4917 = vmatpush2.msra.mxu0 0.0
    %4918 = vmatprep.subr.mxu0 0.0
    %4919 = vmatpush2.msra.mxu0 0.0
    %4920 = vmatprep.subr.mxu0 0.0
    %4921 = vmatpush2.msra.mxu0 0.0
    %4922 = vmatprep.subr.mxu0 0.0
    %4923 = vmatpush2.msra.mxu0 0.0
    %4924 = vmatprep.subr.mxu0 0.0
    %4925 = vmatpush2.msra.mxu0 0.0
    %4926 = vmatprep.subr.mxu0 0.0
    %4927 = vmatpush2.msra.mxu0 0.0
    %4928 = vmatprep.mubr.f32.mxu0 0.0
    %4929 = vmatmul.mubr.f32.gmra.mxu0 %v4862
    %v4930 = vpop.f32.mrf.mxu0
    %v4931 = vadd.f32 0.0, %v4930
    %v4932 = vpop.f32.mrf.mxu0
    %v4933 = vadd.f32 0.0, %v4932
    %4934 = vdwg.mxu0
    %4935 = vmatprep.subr.mxu0 %v3951
    %4936 = vmatpush1.msra.mxu0 %v3950
    %4937 = vmatprep.subr.mxu0 %v3947
    %4938 = vmatpush1.msra.mxu0 %v3946
    %4939 = vmatprep.subr.mxu0 %v3943
    %4940 = vmatpush1.msra.mxu0 %v3942
    %4941 = vmatprep.subr.mxu0 %v3939
    %4942 = vmatpush1.msra.mxu0 %v3938
    %4943 = vmatprep.subr.mxu0 %v3935
    %4944 = vmatpush1.msra.mxu0 %v3934
    %4945 = vmatprep.subr.mxu0 %v3931
    %4946 = vmatpush1.msra.mxu0 %v3930
    %4947 = vmatprep.subr.mxu0 %v3927
    %4948 = vmatpush1.msra.mxu0 %v3926
    %4949 = vmatprep.subr.mxu0 %v3923
    %4950 = vmatpush1.msra.mxu0 %v3922
    %4951 = vmatprep.subr.mxu0 %v3919
    %4952 = vmatpush1.msra.mxu0 %v3918
    %4953 = vmatprep.subr.mxu0 %v3915
    %4954 = vmatpush1.msra.mxu0 %v3914
    %4955 = vmatprep.subr.mxu0 %v3911
    %4956 = vmatpush1.msra.mxu0 %v3910
    %4957 = vmatprep.subr.mxu0 %v3907
    %4958 = vmatpush1.msra.mxu0 %v3906
    %4959 = vmatprep.subr.mxu0 %v3903
    %4960 = vmatpush1.msra.mxu0 %v3902
    %4961 = vmatprep.subr.mxu0 %v3899
    %4962 = vmatpush1.msra.mxu0 %v3898
    %4963 = vmatprep.subr.mxu0 %v3895
    %4964 = vmatpush1.msra.mxu0 %v3894
    %4965 = vmatprep.subr.mxu0 %v3891
    %4966 = vmatpush1.msra.mxu0 %v3890
    %4967 = vmatprep.subr.mxu0 0.0
    %4968 = vmatpush2.msra.mxu0 0.0
    %4969 = vmatprep.subr.mxu0 0.0
    %4970 = vmatpush2.msra.mxu0 0.0
    %4971 = vmatprep.subr.mxu0 0.0
    %4972 = vmatpush2.msra.mxu0 0.0
    %4973 = vmatprep.subr.mxu0 0.0
    %4974 = vmatpush2.msra.mxu0 0.0
    %4975 = vmatprep.subr.mxu0 0.0
    %4976 = vmatpush2.msra.mxu0 0.0
    %4977 = vmatprep.subr.mxu0 0.0
    %4978 = vmatpush2.msra.mxu0 0.0
    %4979 = vmatprep.subr.mxu0 0.0
    %4980 = vmatpush2.msra.mxu0 0.0
    %4981 = vmatprep.subr.mxu0 0.0
    %4982 = vmatpush2.msra.mxu0 0.0
    %4983 = vmatprep.subr.mxu0 0.0
    %4984 = vmatpush2.msra.mxu0 0.0
    %4985 = vmatprep.subr.mxu0 0.0
    %4986 = vmatpush2.msra.mxu0 0.0
    %4987 = vmatprep.subr.mxu0 0.0
    %4988 = vmatpush2.msra.mxu0 0.0
    %4989 = vmatprep.subr.mxu0 0.0
    %4990 = vmatpush2.msra.mxu0 0.0
    %4991 = vmatprep.subr.mxu0 0.0
    %4992 = vmatpush2.msra.mxu0 0.0
    %4993 = vmatprep.subr.mxu0 0.0
    %4994 = vmatpush2.msra.mxu0 0.0
    %4995 = vmatprep.subr.mxu0 0.0
    %4996 = vmatpush2.msra.mxu0 0.0
    %4997 = vmatprep.subr.mxu0 0.0
    %4998 = vmatpush2.msra.mxu0 0.0
    %4999 = vmatprep.mubr.f32.mxu0 0.0
    %5000 = vmatmul.mubr.f32.gmra.mxu0 %v4862
    %v5001 = vpop.f32.mrf.mxu0
    %v5002 = vadd.f32 0.0, %v5001
    %v5003 = vpop.f32.mrf.mxu0
    %v5004 = vadd.f32 0.0, %v5003
    %5005 = vdwg.mxu0
    %v5010 = vrot.slane %v4931, 6
    %v5011 = vrot.slane %v4933, 6
    %v5012 = vrot.slane %v5002, 6
    %v5013 = vrot.slane %v5004, 6
    %v5018 = vadd.f32 %v3807, %v5010
    %v5019 = vadd.f32 %v3809, %v5011
    %v5020 = vadd.f32 %v3884, %v5012
    %v5021 = vadd.f32 %v3886, %v5013
    %v5022 = vxor.u32 %v5018, 2147483648
    %v5023 = vmul.f32 %v5022, 1.442695
    %v5024 = vpow.pop %v5023
    %v5025 = vadd.f32 %v5024, 1.0
    %v5026 = vrcp.pop %v5025
    %v5027 = vmul.f32 1.0, %v5026
    %v5028 = vxor.u32 %v5019, 2147483648
    %v5029 = vmul.f32 %v5028, 1.442695
    %v5030 = vpow.pop %v5029
    %v5031 = vadd.f32 %v5030, 1.0
    %v5032 = vrcp.pop %v5031
    %v5033 = vmul.f32 1.0, %v5032
    %v5034 = vtanh.pop %v5020
    %v5035 = vxor.u32 %v5021, 2147483648
    %v5036 = vmul.f32 %v5035, 1.442695
    %v5037 = vpow.pop %v5036
    %v5038 = vadd.f32 %v5037, 1.0
    %v5039 = vrcp.pop %v5038
    %v5040 = vmul.f32 1.0, %v5039
    %v5042 = vrot.slane %v4860, 6
    %v5044 = vmul.f32 %v5033, %v5042
    %v5045 = vmul.f32 %v5027, %v5034
    %v5046 = vadd.f32 %v5044, %v5045
    %v5047 = vtanh.pop %v5046
    %v5048 = vmul.f32 %v5040, %v5047
    %5049 = vst [vmem:[#allocation2 + $0x8] sm:$0xc] %v5048
    %v5051 = vrot.slane %v5048, 2
    %5053 = vmatprep.subr.mxu0 %v3949
    %5054 = vmatpush1.msra.mxu0 %v3948
    %5055 = vmatprep.subr.mxu0 %v3945
    %5056 = vmatpush1.msra.mxu0 %v3944
    %5057 = vmatprep.subr.mxu0 %v3941
    %5058 = vmatpush1.msra.mxu0 %v3940
    %5059 = vmatprep.subr.mxu0 %v3937
    %5060 = vmatpush1.msra.mxu0 %v3936
    %5061 = vmatprep.subr.mxu0 %v3933
    %5062 = vmatpush1.msra.mxu0 %v3932
    %5063 = vmatprep.subr.mxu0 %v3929
    %5064 = vmatpush1.msra.mxu0 %v3928
    %5065 = vmatprep.subr.mxu0 %v3925
    %5066 = vmatpush1.msra.mxu0 %v3924
    %5067 = vmatprep.subr.mxu0 %v3921
    %5068 = vmatpush1.msra.mxu0 %v3920
    %5069 = vmatprep.subr.mxu0 %v3917
    %5070 = vmatpush1.msra.mxu0 %v3916
    %5071 = vmatprep.subr.mxu0 %v3913
    %5072 = vmatpush1.msra.mxu0 %v3912
    %5073 = vmatprep.subr.mxu0 %v3909
    %5074 = vmatpush1.msra.mxu0 %v3908
    %5075 = vmatprep.subr.mxu0 %v3905
    %5076 = vmatpush1.msra.mxu0 %v3904
    %5077 = vmatprep.subr.mxu0 %v3901
    %5078 = vmatpush1.msra.mxu0 %v3900
    %5079 = vmatprep.subr.mxu0 %v3897
    %5080 = vmatpush1.msra.mxu0 %v3896
    %5081 = vmatprep.subr.mxu0 %v3893
    %5082 = vmatpush1.msra.mxu0 %v3892
    %5083 = vmatprep.subr.mxu0 %v3889
    %5084 = vmatpush1.msra.mxu0 %v3888
    %5085 = vmatprep.subr.mxu0 0.0
    %5086 = vmatpush2.msra.mxu0 0.0
    %5087 = vmatprep.subr.mxu0 0.0
    %5088 = vmatpush2.msra.mxu0 0.0
    %5089 = vmatprep.subr.mxu0 0.0
    %5090 = vmatpush2.msra.mxu0 0.0
    %5091 = vmatprep.subr.mxu0 0.0
    %5092 = vmatpush2.msra.mxu0 0.0
    %5093 = vmatprep.subr.mxu0 0.0
    %5094 = vmatpush2.msra.mxu0 0.0
    %5095 = vmatprep.subr.mxu0 0.0
    %5096 = vmatpush2.msra.mxu0 0.0
    %5097 = vmatprep.subr.mxu0 0.0
    %5098 = vmatpush2.msra.mxu0 0.0
    %5099 = vmatprep.subr.mxu0 0.0
    %5100 = vmatpush2.msra.mxu0 0.0
    %5101 = vmatprep.subr.mxu0 0.0
    %5102 = vmatpush2.msra.mxu0 0.0
    %5103 = vmatprep.subr.mxu0 0.0
    %5104 = vmatpush2.msra.mxu0 0.0
    %5105 = vmatprep.subr.mxu0 0.0
    %5106 = vmatpush2.msra.mxu0 0.0
    %5107 = vmatprep.subr.mxu0 0.0
    %5108 = vmatpush2.msra.mxu0 0.0
    %5109 = vmatprep.subr.mxu0 0.0
    %5110 = vmatpush2.msra.mxu0 0.0
    %5111 = vmatprep.subr.mxu0 0.0
    %5112 = vmatpush2.msra.mxu0 0.0
    %5113 = vmatprep.subr.mxu0 0.0
    %5114 = vmatpush2.msra.mxu0 0.0
    %5115 = vmatprep.subr.mxu0 0.0
    %5116 = vmatpush2.msra.mxu0 0.0
    %5117 = vmatprep.mubr.f32.mxu0 0.0
    %5118 = vmatmul.mubr.f32.gmra.mxu0 %v5051
    %v5119 = vpop.f32.mrf.mxu0
    %v5120 = vadd.f32 0.0, %v5119
    %v5121 = vpop.f32.mrf.mxu0
    %v5122 = vadd.f32 0.0, %v5121
    %5123 = vdwg.mxu0
    %5124 = vmatprep.subr.mxu0 %v3951
    %5125 = vmatpush1.msra.mxu0 %v3950
    %5126 = vmatprep.subr.mxu0 %v3947
    %5127 = vmatpush1.msra.mxu0 %v3946
    %5128 = vmatprep.subr.mxu0 %v3943
    %5129 = vmatpush1.msra.mxu0 %v3942
    %5130 = vmatprep.subr.mxu0 %v3939
    %5131 = vmatpush1.msra.mxu0 %v3938
    %5132 = vmatprep.subr.mxu0 %v3935
    %5133 = vmatpush1.msra.mxu0 %v3934
    %5134 = vmatprep.subr.mxu0 %v3931
    %5135 = vmatpush1.msra.mxu0 %v3930
    %5136 = vmatprep.subr.mxu0 %v3927
    %5137 = vmatpush1.msra.mxu0 %v3926
    %5138 = vmatprep.subr.mxu0 %v3923
    %5139 = vmatpush1.msra.mxu0 %v3922
    %5140 = vmatprep.subr.mxu0 %v3919
    %5141 = vmatpush1.msra.mxu0 %v3918
    %5142 = vmatprep.subr.mxu0 %v3915
    %5143 = vmatpush1.msra.mxu0 %v3914
    %5144 = vmatprep.subr.mxu0 %v3911
    %5145 = vmatpush1.msra.mxu0 %v3910
    %5146 = vmatprep.subr.mxu0 %v3907
    %5147 = vmatpush1.msra.mxu0 %v3906
    %5148 = vmatprep.subr.mxu0 %v3903
    %5149 = vmatpush1.msra.mxu0 %v3902
    %5150 = vmatprep.subr.mxu0 %v3899
    %5151 = vmatpush1.msra.mxu0 %v3898
    %5152 = vmatprep.subr.mxu0 %v3895
    %5153 = vmatpush1.msra.mxu0 %v3894
    %5154 = vmatprep.subr.mxu0 %v3891
    %5155 = vmatpush1.msra.mxu0 %v3890
    %5156 = vmatprep.subr.mxu0 0.0
    %5157 = vmatpush2.msra.mxu0 0.0
    %5158 = vmatprep.subr.mxu0 0.0
    %5159 = vmatpush2.msra.mxu0 0.0
    %5160 = vmatprep.subr.mxu0 0.0
    %5161 = vmatpush2.msra.mxu0 0.0
    %5162 = vmatprep.subr.mxu0 0.0
    %5163 = vmatpush2.msra.mxu0 0.0
    %5164 = vmatprep.subr.mxu0 0.0
    %5165 = vmatpush2.msra.mxu0 0.0
    %5166 = vmatprep.subr.mxu0 0.0
    %5167 = vmatpush2.msra.mxu0 0.0
    %5168 = vmatprep.subr.mxu0 0.0
    %5169 = vmatpush2.msra.mxu0 0.0
    %5170 = vmatprep.subr.mxu0 0.0
    %5171 = vmatpush2.msra.mxu0 0.0
    %5172 = vmatprep.subr.mxu0 0.0
    %5173 = vmatpush2.msra.mxu0 0.0
    %5174 = vmatprep.subr.mxu0 0.0
    %5175 = vmatpush2.msra.mxu0 0.0
    %5176 = vmatprep.subr.mxu0 0.0
    %5177 = vmatpush2.msra.mxu0 0.0
    %5178 = vmatprep.subr.mxu0 0.0
    %5179 = vmatpush2.msra.mxu0 0.0
    %5180 = vmatprep.subr.mxu0 0.0
    %5181 = vmatpush2.msra.mxu0 0.0
    %5182 = vmatprep.subr.mxu0 0.0
    %5183 = vmatpush2.msra.mxu0 0.0
    %5184 = vmatprep.subr.mxu0 0.0
    %5185 = vmatpush2.msra.mxu0 0.0
    %5186 = vmatprep.subr.mxu0 0.0
    %5187 = vmatpush2.msra.mxu0 0.0
    %5188 = vmatprep.mubr.f32.mxu0 0.0
    %5189 = vmatmul.mubr.f32.gmra.mxu0 %v5051
    %v5190 = vpop.f32.mrf.mxu0
    %v5191 = vadd.f32 0.0, %v5190
    %v5192 = vpop.f32.mrf.mxu0
    %v5193 = vadd.f32 0.0, %v5192
    %5194 = vdwg.mxu0
    %v5199 = vrot.slane %v5120, 4
    %v5200 = vrot.slane %v5122, 4
    %v5201 = vrot.slane %v5191, 4
    %v5202 = vrot.slane %v5193, 4
    %v5207 = vadd.f32 %v3807, %v5199
    %v5208 = vadd.f32 %v3809, %v5200
    %v5209 = vadd.f32 %v3884, %v5201
    %v5210 = vadd.f32 %v3886, %v5202
    %v5211 = vxor.u32 %v5207, 2147483648
    %v5212 = vmul.f32 %v5211, 1.442695
    %v5213 = vpow.pop %v5212
    %v5214 = vadd.f32 %v5213, 1.0
    %v5215 = vrcp.pop %v5214
    %v5216 = vmul.f32 1.0, %v5215
    %v5217 = vxor.u32 %v5208, 2147483648
    %v5218 = vmul.f32 %v5217, 1.442695
    %v5219 = vpow.pop %v5218
    %v5220 = vadd.f32 %v5219, 1.0
    %v5221 = vrcp.pop %v5220
    %v5222 = vmul.f32 1.0, %v5221
    %v5223 = vtanh.pop %v5209
    %v5224 = vxor.u32 %v5210, 2147483648
    %v5225 = vmul.f32 %v5224, 1.442695
    %v5226 = vpow.pop %v5225
    %v5227 = vadd.f32 %v5226, 1.0
    %v5228 = vrcp.pop %v5227
    %v5229 = vmul.f32 1.0, %v5228
    %v5231 = vrot.slane %v5046, 6
    %v5233 = vmul.f32 %v5222, %v5231
    %v5234 = vmul.f32 %v5216, %v5223
    %v5235 = vadd.f32 %v5233, %v5234
    %v5236 = vtanh.pop %v5235
    %v5237 = vmul.f32 %v5229, %v5236
    %5238 = vst [vmem:[#allocation2 + $0x8] sm:$0x30] %v5237
    %v5240 = vrot.slane %v5237, 4
    %5242 = vmatprep.subr.mxu0 %v3949
    %5243 = vmatpush1.msra.mxu0 %v3948
    %5244 = vmatprep.subr.mxu0 %v3945
    %5245 = vmatpush1.msra.mxu0 %v3944
    %5246 = vmatprep.subr.mxu0 %v3941
    %5247 = vmatpush1.msra.mxu0 %v3940
    %5248 = vmatprep.subr.mxu0 %v3937
    %5249 = vmatpush1.msra.mxu0 %v3936
    %5250 = vmatprep.subr.mxu0 %v3933
    %5251 = vmatpush1.msra.mxu0 %v3932
    %5252 = vmatprep.subr.mxu0 %v3929
    %5253 = vmatpush1.msra.mxu0 %v3928
    %5254 = vmatprep.subr.mxu0 %v3925
    %5255 = vmatpush1.msra.mxu0 %v3924
    %5256 = vmatprep.subr.mxu0 %v3921
    %5257 = vmatpush1.msra.mxu0 %v3920
    %5258 = vmatprep.subr.mxu0 %v3917
    %5259 = vmatpush1.msra.mxu0 %v3916
    %5260 = vmatprep.subr.mxu0 %v3913
    %5261 = vmatpush1.msra.mxu0 %v3912
    %5262 = vmatprep.subr.mxu0 %v3909
    %5263 = vmatpush1.msra.mxu0 %v3908
    %5264 = vmatprep.subr.mxu0 %v3905
    %5265 = vmatpush1.msra.mxu0 %v3904
    %5266 = vmatprep.subr.mxu0 %v3901
    %5267 = vmatpush1.msra.mxu0 %v3900
    %5268 = vmatprep.subr.mxu0 %v3897
    %5269 = vmatpush1.msra.mxu0 %v3896
    %5270 = vmatprep.subr.mxu0 %v3893
    %5271 = vmatpush1.msra.mxu0 %v3892
    %5272 = vmatprep.subr.mxu0 %v3889
    %5273 = vmatpush1.msra.mxu0 %v3888
    %5274 = vmatprep.subr.mxu0 0.0
    %5275 = vmatpush2.msra.mxu0 0.0
    %5276 = vmatprep.subr.mxu0 0.0
    %5277 = vmatpush2.msra.mxu0 0.0
    %5278 = vmatprep.subr.mxu0 0.0
    %5279 = vmatpush2.msra.mxu0 0.0
    %5280 = vmatprep.subr.mxu0 0.0
    %5281 = vmatpush2.msra.mxu0 0.0
    %5282 = vmatprep.subr.mxu0 0.0
    %5283 = vmatpush2.msra.mxu0 0.0
    %5284 = vmatprep.subr.mxu0 0.0
    %5285 = vmatpush2.msra.mxu0 0.0
    %5286 = vmatprep.subr.mxu0 0.0
    %5287 = vmatpush2.msra.mxu0 0.0
    %5288 = vmatprep.subr.mxu0 0.0
    %5289 = vmatpush2.msra.mxu0 0.0
    %5290 = vmatprep.subr.mxu0 0.0
    %5291 = vmatpush2.msra.mxu0 0.0
    %5292 = vmatprep.subr.mxu0 0.0
    %5293 = vmatpush2.msra.mxu0 0.0
    %5294 = vmatprep.subr.mxu0 0.0
    %5295 = vmatpush2.msra.mxu0 0.0
    %5296 = vmatprep.subr.mxu0 0.0
    %5297 = vmatpush2.msra.mxu0 0.0
    %5298 = vmatprep.subr.mxu0 0.0
    %5299 = vmatpush2.msra.mxu0 0.0
    %5300 = vmatprep.subr.mxu0 0.0
    %5301 = vmatpush2.msra.mxu0 0.0
    %5302 = vmatprep.subr.mxu0 0.0
    %5303 = vmatpush2.msra.mxu0 0.0
    %5304 = vmatprep.subr.mxu0 0.0
    %5305 = vmatpush2.msra.mxu0 0.0
    %5306 = vmatprep.mubr.f32.mxu0 0.0
    %5307 = vmatmul.mubr.f32.gmra.mxu0 %v5240
    %v5308 = vpop.f32.mrf.mxu0
    %v5309 = vadd.f32 0.0, %v5308
    %v5310 = vpop.f32.mrf.mxu0
    %v5311 = vadd.f32 0.0, %v5310
    %5312 = vdwg.mxu0
    %5313 = vmatprep.subr.mxu0 %v3951
    %5314 = vmatpush1.msra.mxu0 %v3950
    %5315 = vmatprep.subr.mxu0 %v3947
    %5316 = vmatpush1.msra.mxu0 %v3946
    %5317 = vmatprep.subr.mxu0 %v3943
    %5318 = vmatpush1.msra.mxu0 %v3942
    %5319 = vmatprep.subr.mxu0 %v3939
    %5320 = vmatpush1.msra.mxu0 %v3938
    %5321 = vmatprep.subr.mxu0 %v3935
    %5322 = vmatpush1.msra.mxu0 %v3934
    %5323 = vmatprep.subr.mxu0 %v3931
    %5324 = vmatpush1.msra.mxu0 %v3930
    %5325 = vmatprep.subr.mxu0 %v3927
    %5326 = vmatpush1.msra.mxu0 %v3926
    %5327 = vmatprep.subr.mxu0 %v3923
    %5328 = vmatpush1.msra.mxu0 %v3922
    %5329 = vmatprep.subr.mxu0 %v3919
    %5330 = vmatpush1.msra.mxu0 %v3918
    %5331 = vmatprep.subr.mxu0 %v3915
    %5332 = vmatpush1.msra.mxu0 %v3914
    %5333 = vmatprep.subr.mxu0 %v3911
    %5334 = vmatpush1.msra.mxu0 %v3910
    %5335 = vmatprep.subr.mxu0 %v3907
    %5336 = vmatpush1.msra.mxu0 %v3906
    %5337 = vmatprep.subr.mxu0 %v3903
    %5338 = vmatpush1.msra.mxu0 %v3902
    %5339 = vmatprep.subr.mxu0 %v3899
    %5340 = vmatpush1.msra.mxu0 %v3898
    %5341 = vmatprep.subr.mxu0 %v3895
    %5342 = vmatpush1.msra.mxu0 %v3894
    %5343 = vmatprep.subr.mxu0 %v3891
    %5344 = vmatpush1.msra.mxu0 %v3890
    %5345 = vmatprep.subr.mxu0 0.0
    %5346 = vmatpush2.msra.mxu0 0.0
    %5347 = vmatprep.subr.mxu0 0.0
    %5348 = vmatpush2.msra.mxu0 0.0
    %5349 = vmatprep.subr.mxu0 0.0
    %5350 = vmatpush2.msra.mxu0 0.0
    %5351 = vmatprep.subr.mxu0 0.0
    %5352 = vmatpush2.msra.mxu0 0.0
    %5353 = vmatprep.subr.mxu0 0.0
    %5354 = vmatpush2.msra.mxu0 0.0
    %5355 = vmatprep.subr.mxu0 0.0
    %5356 = vmatpush2.msra.mxu0 0.0
    %5357 = vmatprep.subr.mxu0 0.0
    %5358 = vmatpush2.msra.mxu0 0.0
    %5359 = vmatprep.subr.mxu0 0.0
    %5360 = vmatpush2.msra.mxu0 0.0
    %5361 = vmatprep.subr.mxu0 0.0
    %5362 = vmatpush2.msra.mxu0 0.0
    %5363 = vmatprep.subr.mxu0 0.0
    %5364 = vmatpush2.msra.mxu0 0.0
    %5365 = vmatprep.subr.mxu0 0.0
    %5366 = vmatpush2.msra.mxu0 0.0
    %5367 = vmatprep.subr.mxu0 0.0
    %5368 = vmatpush2.msra.mxu0 0.0
    %5369 = vmatprep.subr.mxu0 0.0
    %5370 = vmatpush2.msra.mxu0 0.0
    %5371 = vmatprep.subr.mxu0 0.0
    %5372 = vmatpush2.msra.mxu0 0.0
    %5373 = vmatprep.subr.mxu0 0.0
    %5374 = vmatpush2.msra.mxu0 0.0
    %5375 = vmatprep.subr.mxu0 0.0
    %5376 = vmatpush2.msra.mxu0 0.0
    %5377 = vmatprep.mubr.f32.mxu0 0.0
    %5378 = vmatmul.mubr.f32.gmra.mxu0 %v5240
    %v5379 = vpop.f32.mrf.mxu0
    %v5380 = vadd.f32 0.0, %v5379
    %v5381 = vpop.f32.mrf.mxu0
    %v5382 = vadd.f32 0.0, %v5381
    %5383 = vdwg.mxu0
    %v5388 = vrot.slane %v5309, 2
    %v5389 = vrot.slane %v5311, 2
    %v5390 = vrot.slane %v5380, 2
    %v5391 = vrot.slane %v5382, 2
    %v5396 = vadd.f32 %v3807, %v5388
    %v5397 = vadd.f32 %v3809, %v5389
    %v5398 = vadd.f32 %v3884, %v5390
    %v5399 = vadd.f32 %v3886, %v5391
    %v5400 = vxor.u32 %v5396, 2147483648
    %v5401 = vmul.f32 %v5400, 1.442695
    %v5402 = vpow.pop %v5401
    %v5403 = vadd.f32 %v5402, 1.0
    %v5404 = vrcp.pop %v5403
    %v5405 = vmul.f32 1.0, %v5404
    %v5406 = vxor.u32 %v5397, 2147483648
    %v5407 = vmul.f32 %v5406, 1.442695
    %v5408 = vpow.pop %v5407
    %v5409 = vadd.f32 %v5408, 1.0
    %v5410 = vrcp.pop %v5409
    %v5411 = vmul.f32 1.0, %v5410
    %v5412 = vtanh.pop %v5398
    %v5413 = vxor.u32 %v5399, 2147483648
    %v5414 = vmul.f32 %v5413, 1.442695
    %v5415 = vpow.pop %v5414
    %v5416 = vadd.f32 %v5415, 1.0
    %v5417 = vrcp.pop %v5416
    %v5418 = vmul.f32 1.0, %v5417
    %v5420 = vrot.slane %v5235, 6
    %v5422 = vmul.f32 %v5411, %v5420
    %v5423 = vmul.f32 %v5405, %v5412
    %v5424 = vadd.f32 %v5422, %v5423
    %v5425 = vtanh.pop %v5424
    %v5426 = vmul.f32 %v5418, %v5425
    %5427 = vst [vmem:[#allocation2 + $0x8] sm:$0xc0] %v5426
    %v5428 = vld [vmem:[#allocation2] sm:$0xff]
    %v5429 = vld [vmem:[#allocation2 + $0x8] sm:$0xff]
    %v5430 = vld [vmem:[#allocation14] sm:$0xff]
    %v5431 = vld [vmem:[#allocation14 + $0x8] sm:$0xff]
    %v5432 = vld [vmem:[#allocation14 + $0x10] sm:$0xff]
    %v5433 = vld [vmem:[#allocation14 + $0x18] sm:$0xff]
    %v5434 = vld [vmem:[#allocation14 + $0x20] sm:$0xff]
    %v5435 = vld [vmem:[#allocation14 + $0x28] sm:$0xff]
    %v5436 = vld [vmem:[#allocation14 + $0x30] sm:$0xff]
    %v5437 = vld [vmem:[#allocation14 + $0x38] sm:$0xff]
    %v5438 = vld [vmem:[#allocation14 + $0x40] sm:$0xff]
    %v5439 = vld [vmem:[#allocation14 + $0x48] sm:$0xff]
    %v5440 = vld [vmem:[#allocation14 + $0x50] sm:$0xff]
    %v5441 = vld [vmem:[#allocation14 + $0x58] sm:$0xff]
    %v5442 = vld [vmem:[#allocation14 + $0x60] sm:$0xff]
    %v5443 = vld [vmem:[#allocation14 + $0x68] sm:$0xff]
    %v5444 = vld [vmem:[#allocation14 + $0x70] sm:$0xff]
    %v5445 = vld [vmem:[#allocation14 + $0x78] sm:$0xff]
    %v5446 = vld [vmem:[%s11] sm:$0x1]
    %v5448 = vlaneseq
    %v5449 = vshrl.u32 %v5448, 7
    %v5450 = vsub.s32 0, %v5449
    %v5451 = vrot.slane %v5446, %v5450
    %5453 = vmatprep.subr.mxu0 0.0
    %5454 = vmatpush1.msra.mxu0 %v5445
    %5455 = vmatprep.subr.mxu0 0.0
    %5456 = vmatpush1.msra.mxu0 %v5444
    %5457 = vmatprep.subr.mxu0 0.0
    %5458 = vmatpush1.msra.mxu0 %v5443
    %5459 = vmatprep.subr.mxu0 0.0
    %5460 = vmatpush1.msra.mxu0 %v5442
    %5461 = vmatprep.subr.mxu0 0.0
    %5462 = vmatpush1.msra.mxu0 %v5441
    %5463 = vmatprep.subr.mxu0 0.0
    %5464 = vmatpush1.msra.mxu0 %v5440
    %5465 = vmatprep.subr.mxu0 0.0
    %5466 = vmatpush1.msra.mxu0 %v5439
    %5467 = vmatprep.subr.mxu0 0.0
    %5468 = vmatpush1.msra.mxu0 %v5438
    %5469 = vmatprep.subr.mxu0 0.0
    %5470 = vmatpush1.msra.mxu0 %v5437
    %5471 = vmatprep.subr.mxu0 0.0
    %5472 = vmatpush1.msra.mxu0 %v5436
    %5473 = vmatprep.subr.mxu0 0.0
    %5474 = vmatpush1.msra.mxu0 %v5435
    %5475 = vmatprep.subr.mxu0 0.0
    %5476 = vmatpush1.msra.mxu0 %v5434
    %5477 = vmatprep.subr.mxu0 0.0
    %5478 = vmatpush1.msra.mxu0 %v5433
    %5479 = vmatprep.subr.mxu0 0.0
    %5480 = vmatpush1.msra.mxu0 %v5432
    %5481 = vmatprep.subr.mxu0 0.0
    %5482 = vmatpush1.msra.mxu0 %v5431
    %5483 = vmatprep.subr.mxu0 0.0
    %5484 = vmatpush1.msra.mxu0 %v5430
    %5485 = vmatprep.subr.mxu0 0.0
    %5486 = vmatpush2.msra.mxu0 0.0
    %5487 = vmatprep.subr.mxu0 0.0
    %5488 = vmatpush2.msra.mxu0 0.0
    %5489 = vmatprep.subr.mxu0 0.0
    %5490 = vmatpush2.msra.mxu0 0.0
    %5491 = vmatprep.subr.mxu0 0.0
    %5492 = vmatpush2.msra.mxu0 0.0
    %5493 = vmatprep.subr.mxu0 0.0
    %5494 = vmatpush2.msra.mxu0 0.0
    %5495 = vmatprep.subr.mxu0 0.0
    %5496 = vmatpush2.msra.mxu0 0.0
    %5497 = vmatprep.subr.mxu0 0.0
    %5498 = vmatpush2.msra.mxu0 0.0
    %5499 = vmatprep.subr.mxu0 0.0
    %5500 = vmatpush2.msra.mxu0 0.0
    %5501 = vmatprep.subr.mxu0 0.0
    %5502 = vmatpush2.msra.mxu0 0.0
    %5503 = vmatprep.subr.mxu0 0.0
    %5504 = vmatpush2.msra.mxu0 0.0
    %5505 = vmatprep.subr.mxu0 0.0
    %5506 = vmatpush2.msra.mxu0 0.0
    %5507 = vmatprep.subr.mxu0 0.0
    %5508 = vmatpush2.msra.mxu0 0.0
    %5509 = vmatprep.subr.mxu0 0.0
    %5510 = vmatpush2.msra.mxu0 0.0
    %5511 = vmatprep.subr.mxu0 0.0
    %5512 = vmatpush2.msra.mxu0 0.0
    %5513 = vmatprep.subr.mxu0 0.0
    %5514 = vmatpush2.msra.mxu0 0.0
    %5515 = vmatprep.subr.mxu0 0.0
    %5516 = vmatpush2.msra.mxu0 0.0
    %5517 = vmatprep.mubr.f32.mxu0 0.0
    %5518 = vmatmul.mubr.f32.gmra.mxu0 %v5428
    %v5519 = vpop.f32.mrf.mxu0
    %v5520 = vadd.f32 %v5451, %v5519
    %v5521 = vpop.f32.mrf.mxu0
    %5522 = vmatprep.mubr.f32.mxu0 0.0
    %5523 = vmatmul.mubr.f32.gmra.mxu0 %v5429
    %v5524 = vpop.f32.mrf.mxu0
    %v5525 = vadd.f32 %v5451, %v5524
    %v5526 = vpop.f32.mrf.mxu0
    %5527 = vdwg.mxu0
    %v5528 = vtanh.pop %v5520
    %v5529 = vtanh.pop %v5525
    %5530 = vst [vmem:[#allocation15] sm:$0xff] %v5528
    %5531 = vst [vmem:[#allocation15 + $0x8] sm:$0xff] %v5529
    // Predicated region
    $region78: #{tpu_custom_call.1} parent=1 // pred_check
      _
    $region79: #{tpu_custom_call.1} parent=1 // pred_check_branch
      %5533 = sbr.rel (0) target = $region81
    $region80: #{tpu_custom_call.1} parent=1 // pred_region
      %s5535 = ssub.s32 256, 256
      %5536 = vsyncadd [#allocation5], %s5535
      %s5537 = sshll.u32 [#allocation15], 4
      %s5538 = int_to_ptr.vmem [resolvable:$true] %s5537
      %5543 = dma.vmem_to_hbm [thread:$0]  %s5538, 256, %s12, [#allocation5], 128, 128, 8
    $region81: #{tpu_custom_call.1} parent=1 // pred_fallthru
      _
    // Predicated region
    $region82: #{tpu_custom_call.1} parent=1 // pred_check
      _
    $region83: #{tpu_custom_call.1} parent=1 // pred_check_branch
      %5545 = sbr.rel (0) target = $region85
    $region84: #{tpu_custom_call.1} parent=1 // pred_region
      %5546 = dma.done [#allocation5], 256
    $region85: #{tpu_custom_call.1} parent=1 // pred_fallthru
      _
    %5547 = vsyncpa [#allocation4], 1
    %5548 = vsyncpa [#allocation7], 1
    %5549 = vsyncpa [#allocation10], 1
    %5550 = vsyncpa [#allocation13], 1
    %5551 = vsyncpa [#allocation5], 1

</llo_original>
